<compile_context>
chip_gen: v6e
topology: v6e:2x2x1
jax: 0.10.0
libtpu: 0.0.40
codegen_flags: <defaults>
</compile_context>

<pallas_src>
import functools

import jax
import jax.numpy as jnp
from jax.experimental import pallas as pl
from jax.experimental.pallas import tpu as pltpu


def _round_up(x, m):
    return -(-x // m) * m


# --------------------------------------------------------------------------
# Pallas kernel: fused GEMM + [scale]/shift (+residual) (+ReLU)
# --------------------------------------------------------------------------
def fused_matmul_kernel(a_ref, b_ref, shift_ref, *rest,
                        relu, has_scale, has_residual):
    idx = 0
    scale_ref = None
    if has_scale:
        scale_ref = rest[idx]
        idx += 1
    res_ref = None
    if has_residual:
        res_ref = rest[idx]
        idx += 1
    o_ref = rest[idx]

    # bf16 x bf16 -> f32 accumulation on the MXU; epilogue in f32.
    acc = jnp.dot(a_ref[...], b_ref[...], preferred_element_type=jnp.float32)
    if has_scale:
        acc = acc * scale_ref[...]
    out = acc + shift_ref[...]
    if has_residual:
        out = out + res_ref[...].astype(jnp.float32)
    if relu:
        out = jnp.maximum(out, 0.0)
    o_ref[...] = out.astype(o_ref.dtype)


def fused_matmul(A, B_p, scale_p, shift_p, *, relu=False, residual=None,
                 out_dtype=jnp.bfloat16):
    """out = epilogue(A @ B_p).

    A: (M, K) activation patches (bf16 or castable); B_p/scale_p/shift_p are
    already padded to (Kp, Np) / (1, Np) in prepare_params (Kp, Np multiples
    of 128).  Returns the padded (Mp, Np) buffer; caller slices [:M, :cout].
    """
    M, K = A.shape
    Kp, Np = B_p.shape
    assert K <= Kp
    has_scale = scale_p is not None
    has_residual = residual is not None

    Mp = _round_up(M, 16)
    # Split M when large: double-buffered pipelining on every chip, and the
    # second TensorCore picks up a tile on v7x (parallel grid axis).
    TM = 256 if (Mp > 256 and Mp % 256 == 0) else Mp

    A_p = A.astype(jnp.bfloat16)
    if Mp != M or Kp != K:
        A_p = jnp.pad(A_p, ((0, Mp - M), (0, Kp - K)))

    args = [A_p, B_p, shift_p]
    in_specs = [
        pl.BlockSpec((TM, Kp), lambda i: (i, 0)),
        pl.BlockSpec((Kp, Np), lambda i: (0, 0)),
        pl.BlockSpec((1, Np), lambda i: (0, 0)),
    ]
    if has_scale:
        args.append(scale_p)
        in_specs.append(pl.BlockSpec((1, Np), lambda i: (0, 0)))
    if has_residual:
        res_p = residual.astype(jnp.bfloat16)
        rM, rN = res_p.shape
        if rM != Mp or rN != Np:
            res_p = jnp.pad(res_p, ((0, Mp - rM), (0, Np - rN)))
        args.append(res_p)
        in_specs.append(pl.BlockSpec((TM, Np), lambda i: (i, 0)))

    out_bytes = Mp * Np * (2 if out_dtype == jnp.bfloat16 else 4)
    bytes_accessed = 2 * (Mp * Kp + Kp * Np) + out_bytes + 2 * 4 * Np
    if has_residual:
        bytes_accessed += 2 * Mp * Np

    kernel = functools.partial(fused_matmul_kernel, relu=relu,
                               has_scale=has_scale, has_residual=has_residual)
    out = pl.pallas_call(
        kernel,
        out_shape=jax.ShapeDtypeStruct((Mp, Np), out_dtype),
        grid=(Mp // TM,),
        in_specs=in_specs,
        out_specs=pl.BlockSpec((TM, Np), lambda i: (i, 0)),
        compiler_params=pltpu.CompilerParams(
            dimension_semantics=("parallel",)),
        cost_estimate=pl.CostEstimate(
            flops=2 * Mp * Kp * Np,
            transcendentals=0,
            bytes_accessed=int(bytes_accessed)),
    )(*args)
    return out


# --------------------------------------------------------------------------
# JAX glue: im2col (NHWC, bf16), conv / conv-transpose wrappers, maxpool
# --------------------------------------------------------------------------
def im2col_nhwc(x, kh, kw, stride, pad):
    """x: (N,H,W,C) bf16 -> (N*Ho*Wo, C*kh*kw) bf16; K ordered (c, kh, kw) to
    match PyTorch's weight.reshape(Cout, Cin*kh*kw)."""
    if pad:
        x = jnp.pad(x, ((0, 0), (pad, pad), (pad, pad), (0, 0)))
    N, H, W, C = x.shape
    Ho = (H - kh) // stride + 1
    Wo = (W - kw) // stride + 1
    cols = []
    for i in range(kh):
        for j in range(kw):
            cols.append(x[:, i:i + stride * Ho:stride,
                          j:j + stride * Wo:stride, :])
    p = jnp.stack(cols, axis=-1)                      # (N,Ho,Wo,C,kh*kw)
    return p.reshape(N * Ho * Wo, C * kh * kw), Ho, Wo


def conv2d_nhwc(x, lp, *, kh, kw, stride=1, pad=1, relu=False, residual=None,
                out_dtype=jnp.bfloat16):
    """Conv2d(+bias)+BN folded into scale/shift (+residual)(+ReLU). NHWC in/out."""
    N = x.shape[0]
    A, Ho, Wo = im2col_nhwc(x, kh, kw, stride, pad)
    cout = lp['cout']
    res = None if residual is None else residual.reshape(-1, cout)
    Y = fused_matmul(A, lp['B'], lp.get('s'), lp['sh'], relu=relu,
                     residual=res, out_dtype=out_dtype)
    M = N * Ho * Wo
    return Y[:M, :cout].reshape(N, Ho, Wo, cout)


def conv_transpose2x2_s2_nhwc(x, lp):
    """ConvTranspose2d(kernel=2, stride=2); B: (Cin, Cout*4), cols (cout,di,dj)."""
    N, H, W, Cin = x.shape
    cout = lp['cout']
    A = x.reshape(-1, Cin)
    Y = fused_matmul(A, lp['B'], None, lp['sh'], out_dtype=jnp.bfloat16)
    Y = Y[:N * H * W, :4 * cout].reshape(N, H, W, cout, 2, 2)
    Y = Y.transpose(0, 1, 4, 2, 5, 3)
    return Y.reshape(N, 2 * H, 2 * W, cout)


def maxpool_3x3_s2_p1_nhwc(x):
    """MaxPool2d(kernel=3, stride=2, padding=1) as an XLA-fused 9-way max tree."""
    N, H, W, C = x.shape
    neg = float(jnp.finfo(x.dtype).min)
    xp = jnp.pad(x, ((0, 0), (1, 1), (1, 1), (0, 0)), constant_values=neg)
    Ho = (H + 2 - 3) // 2 + 1
    Wo = (W + 2 - 3) // 2 + 1
    out = None
    for i in range(3):
        for j in range(3):
            s = xp[:, i:i + 2 * Ho:2, j:j + 2 * Wo:2, :]
            out = s if out is None else jnp.maximum(out, s)
    return out


# --------------------------------------------------------------------------
# Parameters (PyTorch layout) + one-time GEMM-layout preparation
# --------------------------------------------------------------------------
def fold_bn(bn, bias=None, eps=1e-5):
    scale = bn['gamma'] / jnp.sqrt(bn['var'] + eps)
    b = jnp.zeros_like(bn['mean']) if bias is None else bias
    shift = bn['beta'] + (b - bn['mean']) * scale
    return scale, shift


def init_bn(c):
    return dict(gamma=jnp.ones((c,), jnp.float32),
                beta=jnp.zeros((c,), jnp.float32),
                mean=jnp.zeros((c,), jnp.float32),
                var=jnp.ones((c,), jnp.float32))


def init_params(key):
    keys = iter(jax.random.split(key, 64))
    nk = lambda: next(keys)
    cw = lambda co, ci, kh, kw: 0.05 * jax.random.normal(nk(), (co, ci, kh, kw), jnp.float32)
    vec = lambda c: 0.05 * jax.random.normal(nk(), (c,), jnp.float32)

    def block(cin, cout):
        return dict(w1=cw(cout, cin, 3, 3), bn1=init_bn(cout),
                    w2=cw(cout, cout, 3, 3), bn2=init_bn(cout))

    p = {}
    # resnet18 stem (conv1 collapsed to 1 input channel) + layer1 + layer2
    p['conv1_w'] = cw(64, 1, 7, 7)
    p['bn1'] = init_bn(64)
    p['layer1'] = [block(64, 64), block(64, 64)]
    l2b1 = block(64, 128)
    l2b1['ds_w'] = cw(128, 64, 1, 1)
    l2b1['ds_bn'] = init_bn(128)
    p['layer2'] = [l2b1, block(128, 128)]

    # custom_layer
    def conv_p(co, ci, k): return dict(w=cw(co, ci, k, k), b=vec(co))
    def convT_p(ci, co):
        return dict(w=0.05 * jax.random.normal(nk(), (ci, co, 2, 2), jnp.float32),
                    b=vec(co))
    p['c1'] = conv_p(64, 128, 3); p['c1bn'] = init_bn(64)
    p['ct1'] = convT_p(64, 64)
    p['c2'] = conv_p(64, 64, 3);  p['c2bn'] = init_bn(64)
    p['c3'] = conv_p(32, 64, 3);  p['c3bn'] = init_bn(32)
    p['ct2'] = convT_p(32, 64)
    p['c4'] = conv_p(32, 64, 3);  p['c4bn'] = init_bn(32)
    p['c5'] = conv_p(2, 32, 3)
    p['ct3'] = convT_p(2, 2)
    return p


def _conv_gemm(w, scale, shift):
    """(Cout,Cin,kh,kw) f32 -> GEMM-ready: B (Kp,Np) bf16, scale/shift (1,Np) f32."""
    Cout = w.shape[0]
    B = w.reshape(Cout, -1).T                         # (K, Cout) f32
    K, N = B.shape
    Kp, Np = _round_up(K, 128), _round_up(N, 128)
    d = dict(B=jnp.pad(B, ((0, Kp - K), (0, Np - N))).astype(jnp.bfloat16),
             sh=jnp.pad(shift.astype(jnp.float32), (0, Np - N)).reshape(1, Np),
             cout=N)
    if scale is not None:
        d['s'] = jnp.pad(scale.astype(jnp.float32), (0, Np - N)).reshape(1, Np)
    return d


def _convT_gemm(w, bias):
    """(Cin,Cout,2,2) -> B (Kp, Np) bf16 with cols (cout,di,dj); bias-only shift."""
    Cin, Cout = w.shape[0], w.shape[1]
    B = w.reshape(Cin, -1)                            # (Cin, Cout*4)
    K, N = B.shape
    Kp, Np = _round_up(K, 128), _round_up(N, 128)
    shift = jnp.repeat(bias, 4)
    return dict(B=jnp.pad(B, ((0, Kp - K), (0, Np - N))).astype(jnp.bfloat16),
                sh=jnp.pad(shift.astype(jnp.float32), (0, Np - N)).reshape(1, Np),
                cout=Cout)


def prepare_params(p):
    """One-time conversion to GEMM-ready padded bf16 weights + folded BN
    scale/shift already shaped (1, Np) f32 — nothing weight-related is padded
    or cast inside the per-forward hot path."""
    pp = {}
    s, sh = fold_bn(p['bn1'])
    pp['conv1'] = _conv_gemm(p['conv1_w'], s, sh)

    def prep_block(b):
        q = {}
        s1, sh1 = fold_bn(b['bn1']); q['conv1'] = _conv_gemm(b['w1'], s1, sh1)
        s2, sh2 = fold_bn(b['bn2']); q['conv2'] = _conv_gemm(b['w2'], s2, sh2)
        if 'ds_w' in b:
            sd, shd = fold_bn(b['ds_bn']); q['ds'] = _conv_gemm(b['ds_w'], sd, shd)
        return q

    pp['layer1'] = [prep_block(b) for b in p['layer1']]
    pp['layer2'] = [prep_block(b) for b in p['layer2']]

    for name in ('c1', 'c2', 'c3', 'c4'):
        s, sh = fold_bn(p[name + 'bn'], p[name]['b'])
        pp[name] = _conv_gemm(p[name]['w'], s, sh)
    pp['ct1'] = _convT_gemm(p['ct1']['w'], p['ct1']['b'])
    pp['ct2'] = _convT_gemm(p['ct2']['w'], p['ct2']['b'])

    # Fuse c5 (3x3 conv + bias) with ct3 (convT 2x2 s2 + bias) — both linear,
    # nothing between them in the reference model:
    #   out = (patch @ B5 + b5) @ Bt + repeat(bt, 4)
    #       = patch @ (B5 @ Bt) + (b5 @ Bt + repeat(bt, 4))
    B5 = p['c5']['w'].reshape(2, -1).T                # (288, 2)
    Bt = p['ct3']['w'].reshape(2, -1)                 # (2, 8), cols (cout,di,dj)
    Bf = B5 @ Bt                                      # (288, 8)
    shift = p['c5']['b'] @ Bt + jnp.repeat(p['ct3']['b'], 4)
    K, N = Bf.shape
    Kp, Np = _round_up(K, 128), _round_up(N, 128)
    pp['c5ct3'] = dict(
        B=jnp.pad(Bf, ((0, Kp - K), (0, Np - N))).astype(jnp.bfloat16),
        sh=jnp.pad(shift.astype(jnp.float32), (0, Np - N)).reshape(1, Np),
        cout=N)
    return pp


# --------------------------------------------------------------------------
# Forward pass
# --------------------------------------------------------------------------
def basic_block(y, p, stride=1):
    out = conv2d_nhwc(y, p['conv1'], kh=3, kw=3, stride=stride, pad=1, relu=True)
    if 'ds' in p:
        identity = conv2d_nhwc(y, p['ds'], kh=1, kw=1, stride=stride, pad=0)
    else:
        identity = y
    # bn2(conv2(out)) + identity, then ReLU -- fused in the kernel epilogue
    return conv2d_nhwc(out, p['conv2'], kh=3, kw=3, stride=1, pad=1, relu=True,
                       residual=identity)


def forward(pp, x):
    # x: NCHW f32 -> internal NHWC bf16 -> output NCHW f32
    y = x.transpose(0, 2, 3, 1).astype(jnp.bfloat16)

    # ---- resnet backbone: conv1 / bn1 / relu / maxpool / layer1 / layer2 ----
    y = conv2d_nhwc(y, pp['conv1'], kh=7, kw=7, stride=2, pad=3, relu=True)
    y = maxpool_3x3_s2_p1_nhwc(y)
    for blk in pp['layer1']:
        y = basic_block(y, blk, stride=1)
    y = basic_block(y, pp['layer2'][0], stride=2)
    y = basic_block(y, pp['layer2'][1], stride=1)

    # ---- custom_layer ----
    y = conv2d_nhwc(y, pp['c1'], kh=3, kw=3, relu=True)
    y = conv_transpose2x2_s2_nhwc(y, pp['ct1'])
    y = conv2d_nhwc(y, pp['c2'], kh=3, kw=3, relu=True)
    # Dropout(0.5): identity in inference
    y = conv2d_nhwc(y, pp['c3'], kh=3, kw=3, relu=True)
    y = conv_transpose2x2_s2_nhwc(y, pp['ct2'])
    y = conv2d_nhwc(y, pp['c4'], kh=3, kw=3, relu=True)
    # Dropout(0.5): identity in inference

    # c5 + ct3 fused into one GEMM: (N*H*W, 288) @ (288, 8); final output f32
    N, H, W, _ = y.shape
    A, Ho, Wo = im2col_nhwc(y, 3, 3, 1, 1)
    Y = fused_matmul(A, pp['c5ct3']['B'], None, pp['c5ct3']['sh'],
                     out_dtype=jnp.float32)
    Y = Y[:N * Ho * Wo, :pp['c5ct3']['cout']].reshape(N, Ho, Wo, 2, 2, 2)
    Y = Y.transpose(0, 1, 4, 2, 5, 3)
    y = Y.reshape(N, 2 * Ho, 2 * Wo, 2)

    return y.transpose(0, 3, 1, 2)   # NHWC -> NCHW


if __name__ == "__main__":
    key = jax.random.PRNGKey(0)
    k_param, k_x = jax.random.split(key)
    params = init_params(k_param)
    prepared = prepare_params(params)
    # conv1 weight is collapsed to a single input channel -> x has 1 channel
    x = jax.random.normal(k_x, (2, 1, 32, 32), jnp.float32)

    # Close over the prepared params so the GEMM-ready weights (and their
    # python-int channel counts) stay compile-time constants.
    forward_fn = jax.jit(functools.partial(forward, prepared))
    out = forward_fn(x)
    out = jax.block_until_ready(out)
    assert out.shape == (2, 2, 32, 32), out.shape
    assert jnp.all(jnp.isfinite(out))
    print("KERNEL_OK")
</pallas_src>

<mosaic_0001>
module attributes {stable_mosaic.version = 11 : i64} {
  func.func @fused_matmul_kernel(%arg0: i32, %arg1: memref<256x128xbf16, #tpu.memory_space<vmem>>, %arg2: memref<128x128xbf16, #tpu.memory_space<vmem>>, %arg3: memref<1x128xf32, #tpu.memory_space<vmem>>, %arg4: memref<1x128xf32, #tpu.memory_space<vmem>>, %arg5: memref<256x128xbf16, #tpu.memory_space<vmem>>) attributes {dimension_semantics = [#tpu.dimension_semantics<parallel>], iteration_bounds = array<i64: 2>, scalar_prefetch = 0 : i64, scratch_operands = 0 : i64, tpu.core_type = #tpu.core_type<tc>, window_params = [{transform_indices = @transform_0, window_bounds = array<i64: 256, 128>}, {pipeline_mode = #tpu.pipeline_mode<synchronous>, transform_indices = @transform_1, window_bounds = array<i64: 128, 128>}, {pipeline_mode = #tpu.pipeline_mode<synchronous>, transform_indices = @transform_2, window_bounds = array<i64: 1, 128>}, {pipeline_mode = #tpu.pipeline_mode<synchronous>, transform_indices = @transform_3, window_bounds = array<i64: 1, 128>}, {transform_indices = @transform_4, window_bounds = array<i64: 256, 128>}]} {
    %c0 = arith.constant 0 : index
    %c0_0 = arith.constant 0 : index
    %0 = vector.load %arg1[%c0, %c0_0] : memref<256x128xbf16, #tpu.memory_space<vmem>>, vector<256x128xbf16>
    %c0_1 = arith.constant 0 : index
    %c0_2 = arith.constant 0 : index
    %1 = vector.load %arg2[%c0_1, %c0_2] : memref<128x128xbf16, #tpu.memory_space<vmem>>, vector<128x128xbf16>
    %cst = arith.constant dense<0.000000e+00> : vector<256x128xf32>
    %2 = tpu.matmul %0, %1, %cst {dimension_numbers = #tpu.dot_dimension_numbers<[1], [0], [0], [1], [0, 0, 1, 1], [], []>} : vector<256x128xbf16>, vector<128x128xbf16>, vector<256x128xf32> -> vector<256x128xf32>
    %c0_3 = arith.constant 0 : index
    %c0_4 = arith.constant 0 : index
    %3 = vector.load %arg4[%c0_3, %c0_4] : memref<1x128xf32, #tpu.memory_space<vmem>>, vector<1x128xf32>
    %4 = vector.broadcast %3 : vector<1x128xf32> to vector<256x128xf32>
    %5 = arith.mulf %2, %4 : vector<256x128xf32>
    %c0_5 = arith.constant 0 : index
    %c0_6 = arith.constant 0 : index
    %6 = vector.load %arg3[%c0_5, %c0_6] : memref<1x128xf32, #tpu.memory_space<vmem>>, vector<1x128xf32>
    %7 = vector.broadcast %6 : vector<1x128xf32> to vector<256x128xf32>
    %8 = arith.addf %5, %7 : vector<256x128xf32>
    %cst_7 = arith.constant 0.000000e+00 : f32
    %9 = vector.broadcast %cst_7 : f32 to vector<256x128xf32>
    %10 = arith.maximumf %8, %9 : vector<256x128xf32>
    %11 = arith.truncf %10 : vector<256x128xf32> to vector<256x128xbf16>
    %c0_8 = arith.constant 0 : index
    %c0_9 = arith.constant 0 : index
    %12 = vector.load %arg5[%c0_8, %c0_9] : memref<256x128xbf16, #tpu.memory_space<vmem>>, vector<256x128xbf16>
    tpu.vector_store %arg5[%c0_8, %c0_9], %11 {strides = array<i32>} : memref<256x128xbf16, #tpu.memory_space<vmem>>, vector<256x128xbf16>,
    return
  }
  func.func @transform_0(%arg0: i32) -> (i32, i32) {
    %c0_i32 = arith.constant 0 : i32
    %c0_i32_0 = arith.constant 0 : i32
    return %arg0, %c0_i32 : i32, i32
  }
  func.func @transform_1(%arg0: i32) -> (i32, i32) {
    %c0_i32 = arith.constant 0 : i32
    %c0_i32_0 = arith.constant 0 : i32
    %c0_i32_1 = arith.constant 0 : i32
    return %c0_i32, %c0_i32_0 : i32, i32
  }
  func.func @transform_2(%arg0: i32) -> (i32, i32) {
    %c0_i32 = arith.constant 0 : i32
    %c0_i32_0 = arith.constant 0 : i32
    %c0_i32_1 = arith.constant 0 : i32
    return %c0_i32, %c0_i32_0 : i32, i32
  }
  func.func @transform_3(%arg0: i32) -> (i32, i32) {
    %c0_i32 = arith.constant 0 : i32
    %c0_i32_0 = arith.constant 0 : i32
    %c0_i32_1 = arith.constant 0 : i32
    return %c0_i32, %c0_i32_0 : i32, i32
  }
  func.func @transform_4(%arg0: i32) -> (i32, i32) {
    %c0_i32 = arith.constant 0 : i32
    %c0_i32_0 = arith.constant 0 : i32
    return %arg0, %c0_i32 : i32, i32
  }
}

module attributes {stable_mosaic.version = 11 : i64} {
  func.func @fused_matmul_kernel(%arg0: i32, %arg1: memref<128x640xbf16, #tpu.memory_space<vmem>>, %arg2: memref<640x128xbf16, #tpu.memory_space<vmem>>, %arg3: memref<1x128xf32, #tpu.memory_space<vmem>>, %arg4: memref<1x128xf32, #tpu.memory_space<vmem>>, %arg5: memref<128x128xbf16, #tpu.memory_space<vmem>>, %arg6: memref<128x128xbf16, #tpu.memory_space<vmem>>) attributes {dimension_semantics = [#tpu.dimension_semantics<parallel>], iteration_bounds = array<i64: 1>, scalar_prefetch = 0 : i64, scratch_operands = 0 : i64, tpu.core_type = #tpu.core_type<tc>, window_params = [{transform_indices = @transform_0, window_bounds = array<i64: 128, 640>}, {pipeline_mode = #tpu.pipeline_mode<synchronous>, transform_indices = @transform_1, window_bounds = array<i64: 640, 128>}, {pipeline_mode = #tpu.pipeline_mode<synchronous>, transform_indices = @transform_2, window_bounds = array<i64: 1, 128>}, {pipeline_mode = #tpu.pipeline_mode<synchronous>, transform_indices = @transform_3, window_bounds = array<i64: 1, 128>}, {transform_indices = @transform_4, window_bounds = array<i64: 128, 128>}, {transform_indices = @transform_5, window_bounds = array<i64: 128, 128>}]} {
    %c0 = arith.constant 0 : index
    %c0_0 = arith.constant 0 : index
    %0 = vector.load %arg1[%c0, %c0_0] : memref<128x640xbf16, #tpu.memory_space<vmem>>, vector<128x640xbf16>
    %c0_1 = arith.constant 0 : index
    %c0_2 = arith.constant 0 : index
    %1 = vector.load %arg2[%c0_1, %c0_2] : memref<640x128xbf16, #tpu.memory_space<vmem>>, vector<640x128xbf16>
    %cst = arith.constant dense<0.000000e+00> : vector<128x128xf32>
    %2 = tpu.matmul %0, %1, %cst {dimension_numbers = #tpu.dot_dimension_numbers<[1], [0], [0], [1], [0, 0, 1, 1], [], []>} : vector<128x640xbf16>, vector<640x128xbf16>, vector<128x128xf32> -> vector<128x128xf32>
    %c0_3 = arith.constant 0 : index
    %c0_4 = arith.constant 0 : index
    %3 = vector.load %arg4[%c0_3, %c0_4] : memref<1x128xf32, #tpu.memory_space<vmem>>, vector<1x128xf32>
    %4 = vector.broadcast %3 : vector<1x128xf32> to vector<128x128xf32>
    %5 = arith.mulf %2, %4 : vector<128x128xf32>
    %c0_5 = arith.constant 0 : index
    %c0_6 = arith.constant 0 : index
    %6 = vector.load %arg3[%c0_5, %c0_6] : memref<1x128xf32, #tpu.memory_space<vmem>>, vector<1x128xf32>
    %7 = vector.broadcast %6 : vector<1x128xf32> to vector<128x128xf32>
    %8 = arith.addf %5, %7 : vector<128x128xf32>
    %c0_7 = arith.constant 0 : index
    %c0_8 = arith.constant 0 : index
    %9 = vector.load %arg5[%c0_7, %c0_8] : memref<128x128xbf16, #tpu.memory_space<vmem>>, vector<128x128xbf16>
    %10 = arith.extf %9 : vector<128x128xbf16> to vector<128x128xf32>
    %11 = arith.addf %8, %10 : vector<128x128xf32>
    %cst_9 = arith.constant 0.000000e+00 : f32
    %12 = vector.broadcast %cst_9 : f32 to vector<128x128xf32>
    %13 = arith.maximumf %11, %12 : vector<128x128xf32>
    %14 = arith.truncf %13 : vector<128x128xf32> to vector<128x128xbf16>
    %c0_10 = arith.constant 0 : index
    %c0_11 = arith.constant 0 : index
    %15 = vector.load %arg6[%c0_10, %c0_11] : memref<128x128xbf16, #tpu.memory_space<vmem>>, vector<128x128xbf16>
    tpu.vector_store %arg6[%c0_10, %c0_11], %14 {strides = array<i32>} : memref<128x128xbf16, #tpu.memory_space<vmem>>, vector<128x128xbf16>,
    return
  }
  func.func @transform_0(%arg0: i32) -> (i32, i32) {
    %c0_i32 = arith.constant 0 : i32
    %c0_i32_0 = arith.constant 0 : i32
    return %arg0, %c0_i32 : i32, i32
  }
  func.func @transform_1(%arg0: i32) -> (i32, i32) {
    %c0_i32 = arith.constant 0 : i32
    %c0_i32_0 = arith.constant 0 : i32
    %c0_i32_1 = arith.constant 0 : i32
    return %c0_i32, %c0_i32_0 : i32, i32
  }
  func.func @transform_2(%arg0: i32) -> (i32, i32) {
    %c0_i32 = arith.constant 0 : i32
    %c0_i32_0 = arith.constant 0 : i32
    %c0_i32_1 = arith.constant 0 : i32
    return %c0_i32, %c0_i32_0 : i32, i32
  }
  func.func @transform_3(%arg0: i32) -> (i32, i32) {
    %c0_i32 = arith.constant 0 : i32
    %c0_i32_0 = arith.constant 0 : i32
    %c0_i32_1 = arith.constant 0 : i32
    return %c0_i32, %c0_i32_0 : i32, i32
  }
  func.func @transform_4(%arg0: i32) -> (i32, i32) {
    %c0_i32 = arith.constant 0 : i32
    %c0_i32_0 = arith.constant 0 : i32
    return %arg0, %c0_i32 : i32, i32
  }
  func.func @transform_5(%arg0: i32) -> (i32, i32) {
    %c0_i32 = arith.constant 0 : i32
    %c0_i32_0 = arith.constant 0 : i32
    return %arg0, %c0_i32 : i32, i32
  }
}

module attributes {stable_mosaic.version = 11 : i64} {
  func.func @fused_matmul_kernel(%arg0: i32, %arg1: memref<128x640xbf16, #tpu.memory_space<vmem>>, %arg2: memref<640x128xbf16, #tpu.memory_space<vmem>>, %arg3: memref<1x128xf32, #tpu.memory_space<vmem>>, %arg4: memref<1x128xf32, #tpu.memory_space<vmem>>, %arg5: memref<128x128xbf16, #tpu.memory_space<vmem>>) attributes {dimension_semantics = [#tpu.dimension_semantics<parallel>], iteration_bounds = array<i64: 1>, scalar_prefetch = 0 : i64, scratch_operands = 0 : i64, tpu.core_type = #tpu.core_type<tc>, window_params = [{transform_indices = @transform_0, window_bounds = array<i64: 128, 640>}, {pipeline_mode = #tpu.pipeline_mode<synchronous>, transform_indices = @transform_1, window_bounds = array<i64: 640, 128>}, {pipeline_mode = #tpu.pipeline_mode<synchronous>, transform_indices = @transform_2, window_bounds = array<i64: 1, 128>}, {pipeline_mode = #tpu.pipeline_mode<synchronous>, transform_indices = @transform_3, window_bounds = array<i64: 1, 128>}, {transform_indices = @transform_4, window_bounds = array<i64: 128, 128>}]} {
    %c0 = arith.constant 0 : index
    %c0_0 = arith.constant 0 : index
    %0 = vector.load %arg1[%c0, %c0_0] : memref<128x640xbf16, #tpu.memory_space<vmem>>, vector<128x640xbf16>
    %c0_1 = arith.constant 0 : index
    %c0_2 = arith.constant 0 : index
    %1 = vector.load %arg2[%c0_1, %c0_2] : memref<640x128xbf16, #tpu.memory_space<vmem>>, vector<640x128xbf16>
    %cst = arith.constant dense<0.000000e+00> : vector<128x128xf32>
    %2 = tpu.matmul %0, %1, %cst {dimension_numbers = #tpu.dot_dimension_numbers<[1], [0], [0], [1], [0, 0, 1, 1], [], []>} : vector<128x640xbf16>, vector<640x128xbf16>, vector<128x128xf32> -> vector<128x128xf32>
    %c0_3 = arith.constant 0 : index
    %c0_4 = arith.constant 0 : index
    %3 = vector.load %arg4[%c0_3, %c0_4] : memref<1x128xf32, #tpu.memory_space<vmem>>, vector<1x128xf32>
    %4 = vector.broadcast %3 : vector<1x128xf32> to vector<128x128xf32>
    %5 = arith.mulf %2, %4 : vector<128x128xf32>
    %c0_5 = arith.constant 0 : index
    %c0_6 = arith.constant 0 : index
    %6 = vector.load %arg3[%c0_5, %c0_6] : memref<1x128xf32, #tpu.memory_space<vmem>>, vector<1x128xf32>
    %7 = vector.broadcast %6 : vector<1x128xf32> to vector<128x128xf32>
    %8 = arith.addf %5, %7 : vector<128x128xf32>
    %cst_7 = arith.constant 0.000000e+00 : f32
    %9 = vector.broadcast %cst_7 : f32 to vector<128x128xf32>
    %10 = arith.maximumf %8, %9 : vector<128x128xf32>
    %11 = arith.truncf %10 : vector<128x128xf32> to vector<128x128xbf16>
    %c0_8 = arith.constant 0 : index
    %c0_9 = arith.constant 0 : index
    %12 = vector.load %arg5[%c0_8, %c0_9] : memref<128x128xbf16, #tpu.memory_space<vmem>>, vector<128x128xbf16>
    tpu.vector_store %arg5[%c0_8, %c0_9], %11 {strides = array<i32>} : memref<128x128xbf16, #tpu.memory_space<vmem>>, vector<128x128xbf16>,
    return
  }
  func.func @transform_0(%arg0: i32) -> (i32, i32) {
    %c0_i32 = arith.constant 0 : i32
    %c0_i32_0 = arith.constant 0 : i32
    return %arg0, %c0_i32 : i32, i32
  }
  func.func @transform_1(%arg0: i32) -> (i32, i32) {
    %c0_i32 = arith.constant 0 : i32
    %c0_i32_0 = arith.constant 0 : i32
    %c0_i32_1 = arith.constant 0 : i32
    return %c0_i32, %c0_i32_0 : i32, i32
  }
  func.func @transform_2(%arg0: i32) -> (i32, i32) {
    %c0_i32 = arith.constant 0 : i32
    %c0_i32_0 = arith.constant 0 : i32
    %c0_i32_1 = arith.constant 0 : i32
    return %c0_i32, %c0_i32_0 : i32, i32
  }
  func.func @transform_3(%arg0: i32) -> (i32, i32) {
    %c0_i32 = arith.constant 0 : i32
    %c0_i32_0 = arith.constant 0 : i32
    %c0_i32_1 = arith.constant 0 : i32
    return %c0_i32, %c0_i32_0 : i32, i32
  }
  func.func @transform_4(%arg0: i32) -> (i32, i32) {
    %c0_i32 = arith.constant 0 : i32
    %c0_i32_0 = arith.constant 0 : i32
    return %arg0, %c0_i32 : i32, i32
  }
}

module attributes {stable_mosaic.version = 11 : i64} {
  func.func @fused_matmul_kernel(%arg0: i32, %arg1: memref<32x128xbf16, #tpu.memory_space<vmem>>, %arg2: memref<128x128xbf16, #tpu.memory_space<vmem>>, %arg3: memref<1x128xf32, #tpu.memory_space<vmem>>, %arg4: memref<1x128xf32, #tpu.memory_space<vmem>>, %arg5: memref<32x128xbf16, #tpu.memory_space<vmem>>) attributes {dimension_semantics = [#tpu.dimension_semantics<parallel>], iteration_bounds = array<i64: 1>, scalar_prefetch = 0 : i64, scratch_operands = 0 : i64, tpu.core_type = #tpu.core_type<tc>, window_params = [{transform_indices = @transform_0, window_bounds = array<i64: 32, 128>}, {pipeline_mode = #tpu.pipeline_mode<synchronous>, transform_indices = @transform_1, window_bounds = array<i64: 128, 128>}, {pipeline_mode = #tpu.pipeline_mode<synchronous>, transform_indices = @transform_2, window_bounds = array<i64: 1, 128>}, {pipeline_mode = #tpu.pipeline_mode<synchronous>, transform_indices = @transform_3, window_bounds = array<i64: 1, 128>}, {transform_indices = @transform_4, window_bounds = array<i64: 32, 128>}]} {
    %c0 = arith.constant 0 : index
    %c0_0 = arith.constant 0 : index
    %0 = vector.load %arg1[%c0, %c0_0] : memref<32x128xbf16, #tpu.memory_space<vmem>>, vector<32x128xbf16>
    %c0_1 = arith.constant 0 : index
    %c0_2 = arith.constant 0 : index
    %1 = vector.load %arg2[%c0_1, %c0_2] : memref<128x128xbf16, #tpu.memory_space<vmem>>, vector<128x128xbf16>
    %cst = arith.constant dense<0.000000e+00> : vector<32x128xf32>
    %2 = tpu.matmul %0, %1, %cst {dimension_numbers = #tpu.dot_dimension_numbers<[1], [0], [0], [1], [0, 0, 1, 1], [], []>} : vector<32x128xbf16>, vector<128x128xbf16>, vector<32x128xf32> -> vector<32x128xf32>
    %c0_3 = arith.constant 0 : index
    %c0_4 = arith.constant 0 : index
    %3 = vector.load %arg4[%c0_3, %c0_4] : memref<1x128xf32, #tpu.memory_space<vmem>>, vector<1x128xf32>
    %4 = vector.broadcast %3 : vector<1x128xf32> to vector<32x128xf32>
    %5 = arith.mulf %2, %4 : vector<32x128xf32>
    %c0_5 = arith.constant 0 : index
    %c0_6 = arith.constant 0 : index
    %6 = vector.load %arg3[%c0_5, %c0_6] : memref<1x128xf32, #tpu.memory_space<vmem>>, vector<1x128xf32>
    %7 = vector.broadcast %6 : vector<1x128xf32> to vector<32x128xf32>
    %8 = arith.addf %5, %7 : vector<32x128xf32>
    %9 = arith.truncf %8 : vector<32x128xf32> to vector<32x128xbf16>
    %c0_7 = arith.constant 0 : index
    %c0_8 = arith.constant 0 : index
    %10 = vector.load %arg5[%c0_7, %c0_8] : memref<32x128xbf16, #tpu.memory_space<vmem>>, vector<32x128xbf16>
    tpu.vector_store %arg5[%c0_7, %c0_8], %9 {strides = array<i32>} : memref<32x128xbf16, #tpu.memory_space<vmem>>, vector<32x128xbf16>,
    return
  }
  func.func @transform_0(%arg0: i32) -> (i32, i32) {
    %c0_i32 = arith.constant 0 : i32
    %c0_i32_0 = arith.constant 0 : i32
    return %arg0, %c0_i32 : i32, i32
  }
  func.func @transform_1(%arg0: i32) -> (i32, i32) {
    %c0_i32 = arith.constant 0 : i32
    %c0_i32_0 = arith.constant 0 : i32
    %c0_i32_1 = arith.constant 0 : i32
    return %c0_i32, %c0_i32_0 : i32, i32
  }
  func.func @transform_2(%arg0: i32) -> (i32, i32) {
    %c0_i32 = arith.constant 0 : i32
    %c0_i32_0 = arith.constant 0 : i32
    %c0_i32_1 = arith.constant 0 : i32
    return %c0_i32, %c0_i32_0 : i32, i32
  }
  func.func @transform_3(%arg0: i32) -> (i32, i32) {
    %c0_i32 = arith.constant 0 : i32
    %c0_i32_0 = arith.constant 0 : i32
    %c0_i32_1 = arith.constant 0 : i32
    return %c0_i32, %c0_i32_0 : i32, i32
  }
  func.func @transform_4(%arg0: i32) -> (i32, i32) {
    %c0_i32 = arith.constant 0 : i32
    %c0_i32_0 = arith.constant 0 : i32
    return %arg0, %c0_i32 : i32, i32
  }
}

module attributes {stable_mosaic.version = 11 : i64} {
  func.func @fused_matmul_kernel(%arg0: i32, %arg1: memref<32x640xbf16, #tpu.memory_space<vmem>>, %arg2: memref<640x128xbf16, #tpu.memory_space<vmem>>, %arg3: memref<1x128xf32, #tpu.memory_space<vmem>>, %arg4: memref<1x128xf32, #tpu.memory_space<vmem>>, %arg5: memref<32x128xbf16, #tpu.memory_space<vmem>>) attributes {dimension_semantics = [#tpu.dimension_semantics<parallel>], iteration_bounds = array<i64: 1>, scalar_prefetch = 0 : i64, scratch_operands = 0 : i64, tpu.core_type = #tpu.core_type<tc>, window_params = [{transform_indices = @transform_0, window_bounds = array<i64: 32, 640>}, {pipeline_mode = #tpu.pipeline_mode<synchronous>, transform_indices = @transform_1, window_bounds = array<i64: 640, 128>}, {pipeline_mode = #tpu.pipeline_mode<synchronous>, transform_indices = @transform_2, window_bounds = array<i64: 1, 128>}, {pipeline_mode = #tpu.pipeline_mode<synchronous>, transform_indices = @transform_3, window_bounds = array<i64: 1, 128>}, {transform_indices = @transform_4, window_bounds = array<i64: 32, 128>}]} {
    %c0 = arith.constant 0 : index
    %c0_0 = arith.constant 0 : index
    %0 = vector.load %arg1[%c0, %c0_0] : memref<32x640xbf16, #tpu.memory_space<vmem>>, vector<32x640xbf16>
    %c0_1 = arith.constant 0 : index
    %c0_2 = arith.constant 0 : index
    %1 = vector.load %arg2[%c0_1, %c0_2] : memref<640x128xbf16, #tpu.memory_space<vmem>>, vector<640x128xbf16>
    %cst = arith.constant dense<0.000000e+00> : vector<32x128xf32>
    %2 = tpu.matmul %0, %1, %cst {dimension_numbers = #tpu.dot_dimension_numbers<[1], [0], [0], [1], [0, 0, 1, 1], [], []>} : vector<32x640xbf16>, vector<640x128xbf16>, vector<32x128xf32> -> vector<32x128xf32>
    %c0_3 = arith.constant 0 : index
    %c0_4 = arith.constant 0 : index
    %3 = vector.load %arg4[%c0_3, %c0_4] : memref<1x128xf32, #tpu.memory_space<vmem>>, vector<1x128xf32>
    %4 = vector.broadcast %3 : vector<1x128xf32> to vector<32x128xf32>
    %5 = arith.mulf %2, %4 : vector<32x128xf32>
    %c0_5 = arith.constant 0 : index
    %c0_6 = arith.constant 0 : index
    %6 = vector.load %arg3[%c0_5, %c0_6] : memref<1x128xf32, #tpu.memory_space<vmem>>, vector<1x128xf32>
    %7 = vector.broadcast %6 : vector<1x128xf32> to vector<32x128xf32>
    %8 = arith.addf %5, %7 : vector<32x128xf32>
    %cst_7 = arith.constant 0.000000e+00 : f32
    %9 = vector.broadcast %cst_7 : f32 to vector<32x128xf32>
    %10 = arith.maximumf %8, %9 : vector<32x128xf32>
    %11 = arith.truncf %10 : vector<32x128xf32> to vector<32x128xbf16>
    %c0_8 = arith.constant 0 : index
    %c0_9 = arith.constant 0 : index
    %12 = vector.load %arg5[%c0_8, %c0_9] : memref<32x128xbf16, #tpu.memory_space<vmem>>, vector<32x128xbf16>
    tpu.vector_store %arg5[%c0_8, %c0_9], %11 {strides = array<i32>} : memref<32x128xbf16, #tpu.memory_space<vmem>>, vector<32x128xbf16>,
    return
  }
  func.func @transform_0(%arg0: i32) -> (i32, i32) {
    %c0_i32 = arith.constant 0 : i32
    %c0_i32_0 = arith.constant 0 : i32
    return %arg0, %c0_i32 : i32, i32
  }
  func.func @transform_1(%arg0: i32) -> (i32, i32) {
    %c0_i32 = arith.constant 0 : i32
    %c0_i32_0 = arith.constant 0 : i32
    %c0_i32_1 = arith.constant 0 : i32
    return %c0_i32, %c0_i32_0 : i32, i32
  }
  func.func @transform_2(%arg0: i32) -> (i32, i32) {
    %c0_i32 = arith.constant 0 : i32
    %c0_i32_0 = arith.constant 0 : i32
    %c0_i32_1 = arith.constant 0 : i32
    return %c0_i32, %c0_i32_0 : i32, i32
  }
  func.func @transform_3(%arg0: i32) -> (i32, i32) {
    %c0_i32 = arith.constant 0 : i32
    %c0_i32_0 = arith.constant 0 : i32
    %c0_i32_1 = arith.constant 0 : i32
    return %c0_i32, %c0_i32_0 : i32, i32
  }
  func.func @transform_4(%arg0: i32) -> (i32, i32) {
    %c0_i32 = arith.constant 0 : i32
    %c0_i32_0 = arith.constant 0 : i32
    return %arg0, %c0_i32 : i32, i32
  }
}

module attributes {stable_mosaic.version = 11 : i64} {
  func.func @fused_matmul_kernel(%arg0: i32, %arg1: memref<32x1152xbf16, #tpu.memory_space<vmem>>, %arg2: memref<1152x128xbf16, #tpu.memory_space<vmem>>, %arg3: memref<1x128xf32, #tpu.memory_space<vmem>>, %arg4: memref<1x128xf32, #tpu.memory_space<vmem>>, %arg5: memref<32x128xbf16, #tpu.memory_space<vmem>>, %arg6: memref<32x128xbf16, #tpu.memory_space<vmem>>) attributes {dimension_semantics = [#tpu.dimension_semantics<parallel>], iteration_bounds = array<i64: 1>, scalar_prefetch = 0 : i64, scratch_operands = 0 : i64, tpu.core_type = #tpu.core_type<tc>, window_params = [{transform_indices = @transform_0, window_bounds = array<i64: 32, 1152>}, {pipeline_mode = #tpu.pipeline_mode<synchronous>, transform_indices = @transform_1, window_bounds = array<i64: 1152, 128>}, {pipeline_mode = #tpu.pipeline_mode<synchronous>, transform_indices = @transform_2, window_bounds = array<i64: 1, 128>}, {pipeline_mode = #tpu.pipeline_mode<synchronous>, transform_indices = @transform_3, window_bounds = array<i64: 1, 128>}, {transform_indices = @transform_4, window_bounds = array<i64: 32, 128>}, {transform_indices = @transform_5, window_bounds = array<i64: 32, 128>}]} {
    %c0 = arith.constant 0 : index
    %c0_0 = arith.constant 0 : index
    %0 = vector.load %arg1[%c0, %c0_0] : memref<32x1152xbf16, #tpu.memory_space<vmem>>, vector<32x1152xbf16>
    %c0_1 = arith.constant 0 : index
    %c0_2 = arith.constant 0 : index
    %1 = vector.load %arg2[%c0_1, %c0_2] : memref<1152x128xbf16, #tpu.memory_space<vmem>>, vector<1152x128xbf16>
    %cst = arith.constant dense<0.000000e+00> : vector<32x128xf32>
    %2 = tpu.matmul %0, %1, %cst {dimension_numbers = #tpu.dot_dimension_numbers<[1], [0], [0], [1], [0, 0, 1, 1], [], []>} : vector<32x1152xbf16>, vector<1152x128xbf16>, vector<32x128xf32> -> vector<32x128xf32>
    %c0_3 = arith.constant 0 : index
    %c0_4 = arith.constant 0 : index
    %3 = vector.load %arg4[%c0_3, %c0_4] : memref<1x128xf32, #tpu.memory_space<vmem>>, vector<1x128xf32>
    %4 = vector.broadcast %3 : vector<1x128xf32> to vector<32x128xf32>
    %5 = arith.mulf %2, %4 : vector<32x128xf32>
    %c0_5 = arith.constant 0 : index
    %c0_6 = arith.constant 0 : index
    %6 = vector.load %arg3[%c0_5, %c0_6] : memref<1x128xf32, #tpu.memory_space<vmem>>, vector<1x128xf32>
    %7 = vector.broadcast %6 : vector<1x128xf32> to vector<32x128xf32>
    %8 = arith.addf %5, %7 : vector<32x128xf32>
    %c0_7 = arith.constant 0 : index
    %c0_8 = arith.constant 0 : index
    %9 = vector.load %arg5[%c0_7, %c0_8] : memref<32x128xbf16, #tpu.memory_space<vmem>>, vector<32x128xbf16>
    %10 = arith.extf %9 : vector<32x128xbf16> to vector<32x128xf32>
    %11 = arith.addf %8, %10 : vector<32x128xf32>
    %cst_9 = arith.constant 0.000000e+00 : f32
    %12 = vector.broadcast %cst_9 : f32 to vector<32x128xf32>
    %13 = arith.maximumf %11, %12 : vector<32x128xf32>
    %14 = arith.truncf %13 : vector<32x128xf32> to vector<32x128xbf16>
    %c0_10 = arith.constant 0 : index
    %c0_11 = arith.constant 0 : index
    %15 = vector.load %arg6[%c0_10, %c0_11] : memref<32x128xbf16, #tpu.memory_space<vmem>>, vector<32x128xbf16>
    tpu.vector_store %arg6[%c0_10, %c0_11], %14 {strides = array<i32>} : memref<32x128xbf16, #tpu.memory_space<vmem>>, vector<32x128xbf16>,
    return
  }
  func.func @transform_0(%arg0: i32) -> (i32, i32) {
    %c0_i32 = arith.constant 0 : i32
    %c0_i32_0 = arith.constant 0 : i32
    return %arg0, %c0_i32 : i32, i32
  }
  func.func @transform_1(%arg0: i32) -> (i32, i32) {
    %c0_i32 = arith.constant 0 : i32
    %c0_i32_0 = arith.constant 0 : i32
    %c0_i32_1 = arith.constant 0 : i32
    return %c0_i32, %c0_i32_0 : i32, i32
  }
  func.func @transform_2(%arg0: i32) -> (i32, i32) {
    %c0_i32 = arith.constant 0 : i32
    %c0_i32_0 = arith.constant 0 : i32
    %c0_i32_1 = arith.constant 0 : i32
    return %c0_i32, %c0_i32_0 : i32, i32
  }
  func.func @transform_3(%arg0: i32) -> (i32, i32) {
    %c0_i32 = arith.constant 0 : i32
    %c0_i32_0 = arith.constant 0 : i32
    %c0_i32_1 = arith.constant 0 : i32
    return %c0_i32, %c0_i32_0 : i32, i32
  }
  func.func @transform_4(%arg0: i32) -> (i32, i32) {
    %c0_i32 = arith.constant 0 : i32
    %c0_i32_0 = arith.constant 0 : i32
    return %arg0, %c0_i32 : i32, i32
  }
  func.func @transform_5(%arg0: i32) -> (i32, i32) {
    %c0_i32 = arith.constant 0 : i32
    %c0_i32_0 = arith.constant 0 : i32
    return %arg0, %c0_i32 : i32, i32
  }
}

module attributes {stable_mosaic.version = 11 : i64} {
  func.func @fused_matmul_kernel(%arg0: i32, %arg1: memref<32x1152xbf16, #tpu.memory_space<vmem>>, %arg2: memref<1152x128xbf16, #tpu.memory_space<vmem>>, %arg3: memref<1x128xf32, #tpu.memory_space<vmem>>, %arg4: memref<1x128xf32, #tpu.memory_space<vmem>>, %arg5: memref<32x128xbf16, #tpu.memory_space<vmem>>) attributes {dimension_semantics = [#tpu.dimension_semantics<parallel>], iteration_bounds = array<i64: 1>, scalar_prefetch = 0 : i64, scratch_operands = 0 : i64, tpu.core_type = #tpu.core_type<tc>, window_params = [{transform_indices = @transform_0, window_bounds = array<i64: 32, 1152>}, {pipeline_mode = #tpu.pipeline_mode<synchronous>, transform_indices = @transform_1, window_bounds = array<i64: 1152, 128>}, {pipeline_mode = #tpu.pipeline_mode<synchronous>, transform_indices = @transform_2, window_bounds = array<i64: 1, 128>}, {pipeline_mode = #tpu.pipeline_mode<synchronous>, transform_indices = @transform_3, window_bounds = array<i64: 1, 128>}, {transform_indices = @transform_4, window_bounds = array<i64: 32, 128>}]} {
    %c0 = arith.constant 0 : index
    %c0_0 = arith.constant 0 : index
    %0 = vector.load %arg1[%c0, %c0_0] : memref<32x1152xbf16, #tpu.memory_space<vmem>>, vector<32x1152xbf16>
    %c0_1 = arith.constant 0 : index
    %c0_2 = arith.constant 0 : index
    %1 = vector.load %arg2[%c0_1, %c0_2] : memref<1152x128xbf16, #tpu.memory_space<vmem>>, vector<1152x128xbf16>
    %cst = arith.constant dense<0.000000e+00> : vector<32x128xf32>
    %2 = tpu.matmul %0, %1, %cst {dimension_numbers = #tpu.dot_dimension_numbers<[1], [0], [0], [1], [0, 0, 1, 1], [], []>} : vector<32x1152xbf16>, vector<1152x128xbf16>, vector<32x128xf32> -> vector<32x128xf32>
    %c0_3 = arith.constant 0 : index
    %c0_4 = arith.constant 0 : index
    %3 = vector.load %arg4[%c0_3, %c0_4] : memref<1x128xf32, #tpu.memory_space<vmem>>, vector<1x128xf32>
    %4 = vector.broadcast %3 : vector<1x128xf32> to vector<32x128xf32>
    %5 = arith.mulf %2, %4 : vector<32x128xf32>
    %c0_5 = arith.constant 0 : index
    %c0_6 = arith.constant 0 : index
    %6 = vector.load %arg3[%c0_5, %c0_6] : memref<1x128xf32, #tpu.memory_space<vmem>>, vector<1x128xf32>
    %7 = vector.broadcast %6 : vector<1x128xf32> to vector<32x128xf32>
    %8 = arith.addf %5, %7 : vector<32x128xf32>
    %cst_7 = arith.constant 0.000000e+00 : f32
    %9 = vector.broadcast %cst_7 : f32 to vector<32x128xf32>
    %10 = arith.maximumf %8, %9 : vector<32x128xf32>
    %11 = arith.truncf %10 : vector<32x128xf32> to vector<32x128xbf16>
    %c0_8 = arith.constant 0 : index
    %c0_9 = arith.constant 0 : index
    %12 = vector.load %arg5[%c0_8, %c0_9] : memref<32x128xbf16, #tpu.memory_space<vmem>>, vector<32x128xbf16>
    tpu.vector_store %arg5[%c0_8, %c0_9], %11 {strides = array<i32>} : memref<32x128xbf16, #tpu.memory_space<vmem>>, vector<32x128xbf16>,
    return
  }
  func.func @transform_0(%arg0: i32) -> (i32, i32) {
    %c0_i32 = arith.constant 0 : i32
    %c0_i32_0 = arith.constant 0 : i32
    return %arg0, %c0_i32 : i32, i32
  }
  func.func @transform_1(%arg0: i32) -> (i32, i32) {
    %c0_i32 = arith.constant 0 : i32
    %c0_i32_0 = arith.constant 0 : i32
    %c0_i32_1 = arith.constant 0 : i32
    return %c0_i32, %c0_i32_0 : i32, i32
  }
  func.func @transform_2(%arg0: i32) -> (i32, i32) {
    %c0_i32 = arith.constant 0 : i32
    %c0_i32_0 = arith.constant 0 : i32
    %c0_i32_1 = arith.constant 0 : i32
    return %c0_i32, %c0_i32_0 : i32, i32
  }
  func.func @transform_3(%arg0: i32) -> (i32, i32) {
    %c0_i32 = arith.constant 0 : i32
    %c0_i32_0 = arith.constant 0 : i32
    %c0_i32_1 = arith.constant 0 : i32
    return %c0_i32, %c0_i32_0 : i32, i32
  }
  func.func @transform_4(%arg0: i32) -> (i32, i32) {
    %c0_i32 = arith.constant 0 : i32
    %c0_i32_0 = arith.constant 0 : i32
    return %arg0, %c0_i32 : i32, i32
  }
}

module attributes {stable_mosaic.version = 11 : i64} {
  func.func @fused_matmul_kernel(%arg0: i32, %arg1: memref<32x128xbf16, #tpu.memory_space<vmem>>, %arg2: memref<128x256xbf16, #tpu.memory_space<vmem>>, %arg3: memref<1x256xf32, #tpu.memory_space<vmem>>, %arg4: memref<32x256xbf16, #tpu.memory_space<vmem>>) attributes {dimension_semantics = [#tpu.dimension_semantics<parallel>], iteration_bounds = array<i64: 1>, scalar_prefetch = 0 : i64, scratch_operands = 0 : i64, tpu.core_type = #tpu.core_type<tc>, window_params = [{transform_indices = @transform_0, window_bounds = array<i64: 32, 128>}, {pipeline_mode = #tpu.pipeline_mode<synchronous>, transform_indices = @transform_1, window_bounds = array<i64: 128, 256>}, {pipeline_mode = #tpu.pipeline_mode<synchronous>, transform_indices = @transform_2, window_bounds = array<i64: 1, 256>}, {transform_indices = @transform_3, window_bounds = array<i64: 32, 256>}]} {
    %c0 = arith.constant 0 : index
    %c0_0 = arith.constant 0 : index
    %0 = vector.load %arg1[%c0, %c0_0] : memref<32x128xbf16, #tpu.memory_space<vmem>>, vector<32x128xbf16>
    %c0_1 = arith.constant 0 : index
    %c0_2 = arith.constant 0 : index
    %1 = vector.load %arg2[%c0_1, %c0_2] : memref<128x256xbf16, #tpu.memory_space<vmem>>, vector<128x256xbf16>
    %cst = arith.constant dense<0.000000e+00> : vector<32x256xf32>
    %2 = tpu.matmul %0, %1, %cst {dimension_numbers = #tpu.dot_dimension_numbers<[1], [0], [0], [1], [0, 0, 1, 1], [], []>} : vector<32x128xbf16>, vector<128x256xbf16>, vector<32x256xf32> -> vector<32x256xf32>
    %c0_3 = arith.constant 0 : index
    %c0_4 = arith.constant 0 : index
    %3 = vector.load %arg3[%c0_3, %c0_4] : memref<1x256xf32, #tpu.memory_space<vmem>>, vector<1x256xf32>
    %4 = vector.broadcast %3 : vector<1x256xf32> to vector<32x256xf32>
    %5 = arith.addf %2, %4 : vector<32x256xf32>
    %6 = arith.truncf %5 : vector<32x256xf32> to vector<32x256xbf16>
    %c0_5 = arith.constant 0 : index
    %c0_6 = arith.constant 0 : index
    %7 = vector.load %arg4[%c0_5, %c0_6] : memref<32x256xbf16, #tpu.memory_space<vmem>>, vector<32x256xbf16>
    tpu.vector_store %arg4[%c0_5, %c0_6], %6 {strides = array<i32>} : memref<32x256xbf16, #tpu.memory_space<vmem>>, vector<32x256xbf16>,
    return
  }
  func.func @transform_0(%arg0: i32) -> (i32, i32) {
    %c0_i32 = arith.constant 0 : i32
    %c0_i32_0 = arith.constant 0 : i32
    return %arg0, %c0_i32 : i32, i32
  }
  func.func @transform_1(%arg0: i32) -> (i32, i32) {
    %c0_i32 = arith.constant 0 : i32
    %c0_i32_0 = arith.constant 0 : i32
    %c0_i32_1 = arith.constant 0 : i32
    return %c0_i32, %c0_i32_0 : i32, i32
  }
  func.func @transform_2(%arg0: i32) -> (i32, i32) {
    %c0_i32 = arith.constant 0 : i32
    %c0_i32_0 = arith.constant 0 : i32
    %c0_i32_1 = arith.constant 0 : i32
    return %c0_i32, %c0_i32_0 : i32, i32
  }
  func.func @transform_3(%arg0: i32) -> (i32, i32) {
    %c0_i32 = arith.constant 0 : i32
    %c0_i32_0 = arith.constant 0 : i32
    return %arg0, %c0_i32 : i32, i32
  }
}

module attributes {stable_mosaic.version = 11 : i64} {
  func.func @fused_matmul_kernel(%arg0: i32, %arg1: memref<128x128xbf16, #tpu.memory_space<vmem>>, %arg2: memref<128x256xbf16, #tpu.memory_space<vmem>>, %arg3: memref<1x256xf32, #tpu.memory_space<vmem>>, %arg4: memref<128x256xbf16, #tpu.memory_space<vmem>>) attributes {dimension_semantics = [#tpu.dimension_semantics<parallel>], iteration_bounds = array<i64: 1>, scalar_prefetch = 0 : i64, scratch_operands = 0 : i64, tpu.core_type = #tpu.core_type<tc>, window_params = [{transform_indices = @transform_0, window_bounds = array<i64: 128, 128>}, {pipeline_mode = #tpu.pipeline_mode<synchronous>, transform_indices = @transform_1, window_bounds = array<i64: 128, 256>}, {pipeline_mode = #tpu.pipeline_mode<synchronous>, transform_indices = @transform_2, window_bounds = array<i64: 1, 256>}, {transform_indices = @transform_3, window_bounds = array<i64: 128, 256>}]} {
    %c0 = arith.constant 0 : index
    %c0_0 = arith.constant 0 : index
    %0 = vector.load %arg1[%c0, %c0_0] : memref<128x128xbf16, #tpu.memory_space<vmem>>, vector<128x128xbf16>
    %c0_1 = arith.constant 0 : index
    %c0_2 = arith.constant 0 : index
    %1 = vector.load %arg2[%c0_1, %c0_2] : memref<128x256xbf16, #tpu.memory_space<vmem>>, vector<128x256xbf16>
    %cst = arith.constant dense<0.000000e+00> : vector<128x256xf32>
    %2 = tpu.matmul %0, %1, %cst {dimension_numbers = #tpu.dot_dimension_numbers<[1], [0], [0], [1], [0, 0, 1, 1], [], []>} : vector<128x128xbf16>, vector<128x256xbf16>, vector<128x256xf32> -> vector<128x256xf32>
    %c0_3 = arith.constant 0 : index
    %c0_4 = arith.constant 0 : index
    %3 = vector.load %arg3[%c0_3, %c0_4] : memref<1x256xf32, #tpu.memory_space<vmem>>, vector<1x256xf32>
    %4 = vector.broadcast %3 : vector<1x256xf32> to vector<128x256xf32>
    %5 = arith.addf %2, %4 : vector<128x256xf32>
    %6 = arith.truncf %5 : vector<128x256xf32> to vector<128x256xbf16>
    %c0_5 = arith.constant 0 : index
    %c0_6 = arith.constant 0 : index
    %7 = vector.load %arg4[%c0_5, %c0_6] : memref<128x256xbf16, #tpu.memory_space<vmem>>, vector<128x256xbf16>
    tpu.vector_store %arg4[%c0_5, %c0_6], %6 {strides = array<i32>} : memref<128x256xbf16, #tpu.memory_space<vmem>>, vector<128x256xbf16>,
    return
  }
  func.func @transform_0(%arg0: i32) -> (i32, i32) {
    %c0_i32 = arith.constant 0 : i32
    %c0_i32_0 = arith.constant 0 : i32
    return %arg0, %c0_i32 : i32, i32
  }
  func.func @transform_1(%arg0: i32) -> (i32, i32) {
    %c0_i32 = arith.constant 0 : i32
    %c0_i32_0 = arith.constant 0 : i32
    %c0_i32_1 = arith.constant 0 : i32
    return %c0_i32, %c0_i32_0 : i32, i32
  }
  func.func @transform_2(%arg0: i32) -> (i32, i32) {
    %c0_i32 = arith.constant 0 : i32
    %c0_i32_0 = arith.constant 0 : i32
    %c0_i32_1 = arith.constant 0 : i32
    return %c0_i32, %c0_i32_0 : i32, i32
  }
  func.func @transform_3(%arg0: i32) -> (i32, i32) {
    %c0_i32 = arith.constant 0 : i32
    %c0_i32_0 = arith.constant 0 : i32
    return %arg0, %c0_i32 : i32, i32
  }
}

module attributes {stable_mosaic.version = 11 : i64} {
  func.func @fused_matmul_kernel(%arg0: i32, %arg1: memref<256x640xbf16, #tpu.memory_space<vmem>>, %arg2: memref<640x128xbf16, #tpu.memory_space<vmem>>, %arg3: memref<1x128xf32, #tpu.memory_space<vmem>>, %arg4: memref<1x128xf32, #tpu.memory_space<vmem>>, %arg5: memref<256x128xbf16, #tpu.memory_space<vmem>>) attributes {dimension_semantics = [#tpu.dimension_semantics<parallel>], iteration_bounds = array<i64: 2>, scalar_prefetch = 0 : i64, scratch_operands = 0 : i64, tpu.core_type = #tpu.core_type<tc>, window_params = [{transform_indices = @transform_0, window_bounds = array<i64: 256, 640>}, {pipeline_mode = #tpu.pipeline_mode<synchronous>, transform_indices = @transform_1, window_bounds = array<i64: 640, 128>}, {pipeline_mode = #tpu.pipeline_mode<synchronous>, transform_indices = @transform_2, window_bounds = array<i64: 1, 128>}, {pipeline_mode = #tpu.pipeline_mode<synchronous>, transform_indices = @transform_3, window_bounds = array<i64: 1, 128>}, {transform_indices = @transform_4, window_bounds = array<i64: 256, 128>}]} {
    %c0 = arith.constant 0 : index
    %c0_0 = arith.constant 0 : index
    %0 = vector.load %arg1[%c0, %c0_0] : memref<256x640xbf16, #tpu.memory_space<vmem>>, vector<256x640xbf16>
    %c0_1 = arith.constant 0 : index
    %c0_2 = arith.constant 0 : index
    %1 = vector.load %arg2[%c0_1, %c0_2] : memref<640x128xbf16, #tpu.memory_space<vmem>>, vector<640x128xbf16>
    %cst = arith.constant dense<0.000000e+00> : vector<256x128xf32>
    %2 = tpu.matmul %0, %1, %cst {dimension_numbers = #tpu.dot_dimension_numbers<[1], [0], [0], [1], [0, 0, 1, 1], [], []>} : vector<256x640xbf16>, vector<640x128xbf16>, vector<256x128xf32> -> vector<256x128xf32>
    %c0_3 = arith.constant 0 : index
    %c0_4 = arith.constant 0 : index
    %3 = vector.load %arg4[%c0_3, %c0_4] : memref<1x128xf32, #tpu.memory_space<vmem>>, vector<1x128xf32>
    %4 = vector.broadcast %3 : vector<1x128xf32> to vector<256x128xf32>
    %5 = arith.mulf %2, %4 : vector<256x128xf32>
    %c0_5 = arith.constant 0 : index
    %c0_6 = arith.constant 0 : index
    %6 = vector.load %arg3[%c0_5, %c0_6] : memref<1x128xf32, #tpu.memory_space<vmem>>, vector<1x128xf32>
    %7 = vector.broadcast %6 : vector<1x128xf32> to vector<256x128xf32>
    %8 = arith.addf %5, %7 : vector<256x128xf32>
    %cst_7 = arith.constant 0.000000e+00 : f32
    %9 = vector.broadcast %cst_7 : f32 to vector<256x128xf32>
    %10 = arith.maximumf %8, %9 : vector<256x128xf32>
    %11 = arith.truncf %10 : vector<256x128xf32> to vector<256x128xbf16>
    %c0_8 = arith.constant 0 : index
    %c0_9 = arith.constant 0 : index
    %12 = vector.load %arg5[%c0_8, %c0_9] : memref<256x128xbf16, #tpu.memory_space<vmem>>, vector<256x128xbf16>
    tpu.vector_store %arg5[%c0_8, %c0_9], %11 {strides = array<i32>} : memref<256x128xbf16, #tpu.memory_space<vmem>>, vector<256x128xbf16>,
    return
  }
  func.func @transform_0(%arg0: i32) -> (i32, i32) {
    %c0_i32 = arith.constant 0 : i32
    %c0_i32_0 = arith.constant 0 : i32
    return %arg0, %c0_i32 : i32, i32
  }
  func.func @transform_1(%arg0: i32) -> (i32, i32) {
    %c0_i32 = arith.constant 0 : i32
    %c0_i32_0 = arith.constant 0 : i32
    %c0_i32_1 = arith.constant 0 : i32
    return %c0_i32, %c0_i32_0 : i32, i32
  }
  func.func @transform_2(%arg0: i32) -> (i32, i32) {
    %c0_i32 = arith.constant 0 : i32
    %c0_i32_0 = arith.constant 0 : i32
    %c0_i32_1 = arith.constant 0 : i32
    return %c0_i32, %c0_i32_0 : i32, i32
  }
  func.func @transform_3(%arg0: i32) -> (i32, i32) {
    %c0_i32 = arith.constant 0 : i32
    %c0_i32_0 = arith.constant 0 : i32
    %c0_i32_1 = arith.constant 0 : i32
    return %c0_i32, %c0_i32_0 : i32, i32
  }
  func.func @transform_4(%arg0: i32) -> (i32, i32) {
    %c0_i32 = arith.constant 0 : i32
    %c0_i32_0 = arith.constant 0 : i32
    return %arg0, %c0_i32 : i32, i32
  }
}

module attributes {stable_mosaic.version = 11 : i64} {
  func.func @fused_matmul_kernel(%arg0: i32, %arg1: memref<256x384xbf16, #tpu.memory_space<vmem>>, %arg2: memref<384x128xbf16, #tpu.memory_space<vmem>>, %arg3: memref<1x128xf32, #tpu.memory_space<vmem>>, %arg4: memref<256x128xf32, #tpu.memory_space<vmem>>) attributes {dimension_semantics = [#tpu.dimension_semantics<parallel>], iteration_bounds = array<i64: 2>, scalar_prefetch = 0 : i64, scratch_operands = 0 : i64, tpu.core_type = #tpu.core_type<tc>, window_params = [{transform_indices = @transform_0, window_bounds = array<i64: 256, 384>}, {pipeline_mode = #tpu.pipeline_mode<synchronous>, transform_indices = @transform_1, window_bounds = array<i64: 384, 128>}, {pipeline_mode = #tpu.pipeline_mode<synchronous>, transform_indices = @transform_2, window_bounds = array<i64: 1, 128>}, {transform_indices = @transform_3, window_bounds = array<i64: 256, 128>}]} {
    %c0 = arith.constant 0 : index
    %c0_0 = arith.constant 0 : index
    %0 = vector.load %arg1[%c0, %c0_0] : memref<256x384xbf16, #tpu.memory_space<vmem>>, vector<256x384xbf16>
    %c0_1 = arith.constant 0 : index
    %c0_2 = arith.constant 0 : index
    %1 = vector.load %arg2[%c0_1, %c0_2] : memref<384x128xbf16, #tpu.memory_space<vmem>>, vector<384x128xbf16>
    %cst = arith.constant dense<0.000000e+00> : vector<256x128xf32>
    %2 = tpu.matmul %0, %1, %cst {dimension_numbers = #tpu.dot_dimension_numbers<[1], [0], [0], [1], [0, 0, 1, 1], [], []>} : vector<256x384xbf16>, vector<384x128xbf16>, vector<256x128xf32> -> vector<256x128xf32>
    %c0_3 = arith.constant 0 : index
    %c0_4 = arith.constant 0 : index
    %3 = vector.load %arg3[%c0_3, %c0_4] : memref<1x128xf32, #tpu.memory_space<vmem>>, vector<1x128xf32>
    %4 = vector.broadcast %3 : vector<1x128xf32> to vector<256x128xf32>
    %5 = arith.addf %2, %4 : vector<256x128xf32>
    %c0_5 = arith.constant 0 : index
    %c0_6 = arith.constant 0 : index
    %6 = vector.load %arg4[%c0_5, %c0_6] : memref<256x128xf32, #tpu.memory_space<vmem>>, vector<256x128xf32>
    tpu.vector_store %arg4[%c0_5, %c0_6], %5 {strides = array<i32>} : memref<256x128xf32, #tpu.memory_space<vmem>>, vector<256x128xf32>,
    return
  }
  func.func @transform_0(%arg0: i32) -> (i32, i32) {
    %c0_i32 = arith.constant 0 : i32
    %c0_i32_0 = arith.constant 0 : i32
    return %arg0, %c0_i32 : i32, i32
  }
  func.func @transform_1(%arg0: i32) -> (i32, i32) {
    %c0_i32 = arith.constant 0 : i32
    %c0_i32_0 = arith.constant 0 : i32
    %c0_i32_1 = arith.constant 0 : i32
    return %c0_i32, %c0_i32_0 : i32, i32
  }
  func.func @transform_2(%arg0: i32) -> (i32, i32) {
    %c0_i32 = arith.constant 0 : i32
    %c0_i32_0 = arith.constant 0 : i32
    %c0_i32_1 = arith.constant 0 : i32
    return %c0_i32, %c0_i32_0 : i32, i32
  }
  func.func @transform_3(%arg0: i32) -> (i32, i32) {
    %c0_i32 = arith.constant 0 : i32
    %c0_i32_0 = arith.constant 0 : i32
    return %arg0, %c0_i32 : i32, i32
  }
}

</mosaic_0001>

<llo_original>
// kernel: forward.17
$region0: #{forward.17}
  #allocation0 [shape = 'u32[]', space=smem, size = 0x4, offset = 0x4, fixed_abs, tag = 'smem constant byte address 0x4 - core index']
  #allocation1 [shape = 'u32[144,128]{1,0:T(1,128)}', space=vmem, size = 0x12000, scoped, tag = 'internal scratch']
  %s0 = inlined_call_operand.vmem [shape: bf16[512,128], index: 0, kind: input, shape index: {}]
  %s1 = inlined_call_operand.vmem [shape: bf16[128,128], index: 1, kind: input, shape index: {}]
  %s2 = inlined_call_operand.vmem [shape: f32[1,128], index: 2, kind: input, shape index: {}]
  %s3 = inlined_call_operand.vmem [shape: f32[1,128], index: 3, kind: input, shape index: {}]
  %s4 = inlined_call_operand.vmem [shape: bf16[512,128], index: 4, kind: output, shape index: {}]
  %s5 = sld [smem:[#allocation0]]
  $region49: #{forward.17} parent=0
    _
  %s7 = ssub.s32 1, %s5
  %s8 = scalar_select 0, %s7, %s5
  loop: start=0, step=1, limit=4
  $region2: #{forward.17} parent=0 // loop_pre_header
    _
  $region3: #{forward.17} parent=0 // loop_header
    %s10 = sphi 0, %s14
    %p11 = scmp.ge.s32.totalorder %s10, 4
    %s20 = sphi 0, %s22
    %s23 = sphi 0, %s20
    %s24 = sphi 0, %s23
    %s40 = sphi 0, %s24
    %s44 = sphi 0, %s44
    %s46 = sphi 0, %s44
    %s47 = sphi 0, %s46
    %s61 = sphi 0, %s47
    %s65 = sphi 0, %s65
    %s67 = sphi 0, %s65
    %s68 = sphi 0, %s67
    %s82 = sphi 0, %s68
    %s86 = sphi 0, %s86
    %s88 = sphi 0, %s86
    %s89 = sphi 0, %s88
    %s103 = sphi 0, %s89
    %s109 = sphi 0, %s111
    %s112 = sphi 0, %s109
    %s113 = sphi 0, %s112
    %s129 = sphi 0, %s113
  $region4: #{forward.17} parent=0 // loop_header_branch
    %13 = sbr.rel (%p11) target = $region8
  $region5: #{forward.17} parent=0 // loop_body
    %s15 = ssub.s32 %s10, 1
    %s16 = ssub.s32 %s10, 2
    %s17 = sadd.s32 %s10, 1
    %s18 = ssub.s32 %s10, %s17
    %p19 = scmp.eq.s32.totalorder %s18, 0
    %s21 = sadd.s32 %s20, 1
    %s22 = scalar_select %p19, %s20, %s21
    %p25 = pneg %p19
    %p26 = scmp.eq.s32.totalorder %s10, 1
    %p27 = por %p25, %p26
    %p28 = scmp.ne.s32.totalorder %s20, %s23
    %p29 = scmp.eq.s32.totalorder %s10, 0
    %p30 = por %p28, %p29
    %p31 = scmp.ne.s32.totalorder %s20, %s23
    %p32 = scmp.eq.s32.totalorder %s15, 1
    %p33 = por %p31, %p32
    %p34 = scmp.ne.s32.totalorder %s23, %s24
    %p35 = scmp.eq.s32.totalorder %s15, 0
    %p36 = por %p34, %p35
    %p37 = scmp.ne.s32.totalorder %s23, %s24
    %p38 = scmp.eq.s32.totalorder %s16, 1
    %p39 = por %p37, %p38
    %p41 = scmp.ne.s32.totalorder %s24, %s40
    %p42 = scmp.eq.s32.totalorder %s16, 0
    %p43 = por %p41, %p42
    %s45 = sadd.s32 %s44, 1
    %p48 = scmp.eq.s32.totalorder %s10, 1
    %p49 = scmp.ne.s32.totalorder %s44, %s46
    %p50 = scmp.eq.s32.totalorder %s10, 0
    %p51 = por %p49, %p50
    %p52 = scmp.ne.s32.totalorder %s44, %s46
    %p53 = scmp.eq.s32.totalorder %s15, 1
    %p54 = por %p52, %p53
    %p55 = scmp.ne.s32.totalorder %s46, %s47
    %p56 = scmp.eq.s32.totalorder %s15, 0
    %p57 = por %p55, %p56
    %p58 = scmp.ne.s32.totalorder %s46, %s47
    %p59 = scmp.eq.s32.totalorder %s16, 1
    %p60 = por %p58, %p59
    %p62 = scmp.ne.s32.totalorder %s47, %s61
    %p63 = scmp.eq.s32.totalorder %s16, 0
    %p64 = por %p62, %p63
    %s66 = sadd.s32 %s65, 1
    %p69 = scmp.eq.s32.totalorder %s10, 1
    %p70 = scmp.ne.s32.totalorder %s65, %s67
    %p71 = scmp.eq.s32.totalorder %s10, 0
    %p72 = por %p70, %p71
    %p73 = scmp.ne.s32.totalorder %s65, %s67
    %p74 = scmp.eq.s32.totalorder %s15, 1
    %p75 = por %p73, %p74
    %p76 = scmp.ne.s32.totalorder %s67, %s68
    %p77 = scmp.eq.s32.totalorder %s15, 0
    %p78 = por %p76, %p77
    %p79 = scmp.ne.s32.totalorder %s67, %s68
    %p80 = scmp.eq.s32.totalorder %s16, 1
    %p81 = por %p79, %p80
    %p83 = scmp.ne.s32.totalorder %s68, %s82
    %p84 = scmp.eq.s32.totalorder %s16, 0
    %p85 = por %p83, %p84
    %s87 = sadd.s32 %s86, 1
    %p90 = scmp.eq.s32.totalorder %s10, 1
    %p91 = scmp.ne.s32.totalorder %s86, %s88
    %p92 = scmp.eq.s32.totalorder %s10, 0
    %p93 = por %p91, %p92
    %p94 = scmp.ne.s32.totalorder %s86, %s88
    %p95 = scmp.eq.s32.totalorder %s15, 1
    %p96 = por %p94, %p95
    %p97 = scmp.ne.s32.totalorder %s88, %s89
    %p98 = scmp.eq.s32.totalorder %s15, 0
    %p99 = por %p97, %p98
    %p100 = scmp.ne.s32.totalorder %s88, %s89
    %p101 = scmp.eq.s32.totalorder %s16, 1
    %p102 = por %p100, %p101
    %p104 = scmp.ne.s32.totalorder %s89, %s103
    %p105 = scmp.eq.s32.totalorder %s16, 0
    %p106 = por %p104, %p105
    %s107 = ssub.s32 %s10, %s17
    %p108 = scmp.eq.s32.totalorder %s107, 0
    %s110 = sadd.s32 %s109, 1
    %s111 = scalar_select %p108, %s109, %s110
    %p114 = pneg %p108
    %p115 = scmp.eq.s32.totalorder %s10, 1
    %p116 = por %p114, %p115
    %p117 = scmp.ne.s32.totalorder %s109, %s112
    %p118 = scmp.eq.s32.totalorder %s10, 0
    %p119 = por %p117, %p118
    %p120 = scmp.ne.s32.totalorder %s109, %s112
    %p121 = scmp.eq.s32.totalorder %s15, 1
    %p122 = por %p120, %p121
    %p123 = scmp.ne.s32.totalorder %s112, %s113
    %p124 = scmp.eq.s32.totalorder %s15, 0
    %p125 = por %p123, %p124
    %p126 = scmp.ne.s32.totalorder %s112, %s113
    %p127 = scmp.eq.s32.totalorder %s16, 1
    %p128 = por %p126, %p127
    %p130 = scmp.ne.s32.totalorder %s113, %s129
    %p131 = scmp.eq.s32.totalorder %s16, 0
    %p132 = por %p130, %p131
    %p133 = scmp.le.s32.totalorder 1, %s10
    %p134 = scmp.lt.s32.totalorder %s10, 3
    %p135 = pnand %p133, %p134
    %p136 = pneg %p135
    // Predicated region
    $region9: #{forward.17} parent=5 // pred_check
      _
    $region10: #{forward.17} parent=5 // pred_check_branch
      %138 = sbr.rel (%p135) target = $region12
    $region11: #{forward.17} parent=5 // pred_region
      %s139 = ssub.s32 %s10, 1
      // Predicated region
      $region13: #{forward.17} parent=11 // pred_check
        %p140 = pneg %p57
      $region14: #{forward.17} parent=11 // pred_check_branch
        %142 = sbr.rel (%p140) target = $region16
      $region15: #{forward.17} parent=11 // pred_region
        _
      $region16: #{forward.17} parent=11 // pred_fallthru
        _
      // Predicated region
      $region17: #{forward.17} parent=11 // pred_check
        %p143 = pneg %p78
      $region18: #{forward.17} parent=11 // pred_check_branch
        %145 = sbr.rel (%p143) target = $region20
      $region19: #{forward.17} parent=11 // pred_region
        _
      $region20: #{forward.17} parent=11 // pred_fallthru
        _
      // Predicated region
      $region21: #{forward.17} parent=11 // pred_check
        %p146 = pneg %p99
      $region22: #{forward.17} parent=11 // pred_check_branch
        %148 = sbr.rel (%p146) target = $region24
      $region23: #{forward.17} parent=11 // pred_region
        _
      $region24: #{forward.17} parent=11 // pred_fallthru
        _
    $region12: #{forward.17} parent=5 // pred_fallthru
      _
    %p149 = scmp.lt.s32.totalorder %s10, 2
    // Predicated region
    $region25: #{forward.17} parent=5 // pred_check
      %p150 = pneg %p149
    $region26: #{forward.17} parent=5 // pred_check_branch
      %152 = sbr.rel (%p150) target = $region28
    $region27: #{forward.17} parent=5 // pred_region
      // Predicated region
      $region29: #{forward.17} parent=27 // pred_check
        %p153 = pneg %p30
      $region30: #{forward.17} parent=27 // pred_check_branch
        %155 = sbr.rel (%p153) target = $region32
      $region31: #{forward.17} parent=27 // pred_region
        %s156 = smul.u32 32, %s10
        %p157 = scmp.lt.s32.totalorder %s156, 63
        %s158 = scalar_select %p157, %s156, 63
        %s159 = smul.addr %s158, 4
        %s160 = scalar_lea.vmem %s0, %s159
        %s161 = smul.u32 32, %s10
      $region32: #{forward.17} parent=27 // pred_fallthru
        _
    $region28: #{forward.17} parent=5 // pred_fallthru
      _
    %p162 = scmp.le.s32.totalorder 1, %s10
    %p163 = scmp.lt.s32.totalorder %s10, 3
    %p164 = pnand %p162, %p163
    %p165 = pneg %p164
    // Predicated region
    $region33: #{forward.17} parent=5 // pred_check
      _
    $region34: #{forward.17} parent=5 // pred_check_branch
      %167 = sbr.rel (%p164) target = $region36
    $region35: #{forward.17} parent=5 // pred_region
      %s168 = ssub.s32 %s10, 1
      %s169 = smul.u32 32, %s15
      %p170 = scmp.lt.s32.totalorder %s169, 63
      %s171 = scalar_select %p170, %s169, 63
      %s172 = smul.addr %s171, 4
      %s173 = scalar_lea.vmem %s0, %s172
      %p174 = pneg %p36
      %p175 = pneg %p33
      %p176 = pneg %p57
      %p177 = pneg %p54
      %p178 = pneg %p78
      %p179 = pneg %p75
      %p180 = pneg %p99
      %p181 = pneg %p96
      %p182 = pneg %p125
      %p183 = pneg %p122
      %s184 = smul.u32 32, %s15
      %p185 = scmp.lt.s32.totalorder %s184, 63
      %s186 = scalar_select %p185, %s184, 63
      %s187 = smul.addr %s186, 4
      %s188 = scalar_lea.vmem %s4, %s187
      %s189 = smul.u32 32, %s15
      %p190 = scmp.lt.s32.totalorder %s189, 63
      %s191 = scalar_select %p190, %s189, 63
      %s192 = smul.addr %s191, 4
      %s193 = scalar_lea.vmem %s0, %s192
      %s194 = smul.u32 32, %s15
      %s195 = smul.u32 32, %s15
      %p196 = scmp.lt.s32.totalorder %s195, 63
      %s197 = scalar_select %p196, %s195, 63
      %s198 = smul.addr %s197, 4
      %s199 = scalar_lea.vmem %s4, %s198
      %s200 = smul.u32 32, %s15
      %v202 = vld [vmem:[%s193] sm:$0xf]
      %v203 = vld [vmem:[%s193 + $0x4] sm:$0xf]
      %v204 = vld [vmem:[%s193 + $0x8] sm:$0xf]
      %v205 = vld [vmem:[%s193 + $0xc] sm:$0xf]
      %v206 = vld [vmem:[%s193 + $0x10] sm:$0xf]
      %v207 = vld [vmem:[%s193 + $0x14] sm:$0xf]
      %v208 = vld [vmem:[%s193 + $0x18] sm:$0xf]
      %v209 = vld [vmem:[%s193 + $0x1c] sm:$0xf]
      %v210 = vld [vmem:[%s193 + $0x20] sm:$0xf]
      %v211 = vld [vmem:[%s193 + $0x24] sm:$0xf]
      %v212 = vld [vmem:[%s193 + $0x28] sm:$0xf]
      %v213 = vld [vmem:[%s193 + $0x2c] sm:$0xf]
      %v214 = vld [vmem:[%s193 + $0x30] sm:$0xf]
      %v215 = vld [vmem:[%s193 + $0x34] sm:$0xf]
      %v216 = vld [vmem:[%s193 + $0x38] sm:$0xf]
      %v217 = vld [vmem:[%s193 + $0x3c] sm:$0xf]
      %v218 = vld [vmem:[%s193 + $0x40] sm:$0xf]
      %v219 = vld [vmem:[%s193 + $0x44] sm:$0xf]
      %v220 = vld [vmem:[%s193 + $0x48] sm:$0xf]
      %v221 = vld [vmem:[%s193 + $0x4c] sm:$0xf]
      %v222 = vld [vmem:[%s193 + $0x50] sm:$0xf]
      %v223 = vld [vmem:[%s193 + $0x54] sm:$0xf]
      %v224 = vld [vmem:[%s193 + $0x58] sm:$0xf]
      %v225 = vld [vmem:[%s193 + $0x5c] sm:$0xf]
      %v226 = vld [vmem:[%s193 + $0x60] sm:$0xf]
      %v227 = vld [vmem:[%s193 + $0x64] sm:$0xf]
      %v228 = vld [vmem:[%s193 + $0x68] sm:$0xf]
      %v229 = vld [vmem:[%s193 + $0x6c] sm:$0xf]
      %v230 = vld [vmem:[%s193 + $0x70] sm:$0xf]
      %v231 = vld [vmem:[%s193 + $0x74] sm:$0xf]
      %v232 = vld [vmem:[%s193 + $0x78] sm:$0xf]
      %v233 = vld [vmem:[%s193 + $0x7c] sm:$0xf]
      %v234 = vld [vmem:[%s1] sm:$0xf]
      %v235 = vld [vmem:[%s1 + $0x4] sm:$0xf]
      %v236 = vld [vmem:[%s1 + $0x8] sm:$0xf]
      %v237 = vld [vmem:[%s1 + $0xc] sm:$0xf]
      %v238 = vld [vmem:[%s1 + $0x10] sm:$0xf]
      %v239 = vld [vmem:[%s1 + $0x14] sm:$0xf]
      %v240 = vld [vmem:[%s1 + $0x18] sm:$0xf]
      %v241 = vld [vmem:[%s1 + $0x1c] sm:$0xf]
      %v242 = vld [vmem:[%s1 + $0x20] sm:$0xf]
      %v243 = vld [vmem:[%s1 + $0x24] sm:$0xf]
      %v244 = vld [vmem:[%s1 + $0x28] sm:$0xf]
      %v245 = vld [vmem:[%s1 + $0x2c] sm:$0xf]
      %v246 = vld [vmem:[%s1 + $0x30] sm:$0xf]
      %v247 = vld [vmem:[%s1 + $0x34] sm:$0xf]
      %v248 = vld [vmem:[%s1 + $0x38] sm:$0xf]
      %v249 = vld [vmem:[%s1 + $0x3c] sm:$0xf]
      %v282 = vunpack.c.l.b16 %v202
      %v283 = vunpack.c.l.b16 %v203
      %v284 = vunpack.c.l.b16 %v204
      %v285 = vunpack.c.l.b16 %v205
      %v286 = vunpack.c.l.b16 %v206
      %v287 = vunpack.c.l.b16 %v207
      %v288 = vunpack.c.l.b16 %v208
      %v289 = vunpack.c.l.b16 %v209
      %v290 = vunpack.c.l.b16 %v210
      %v291 = vunpack.c.l.b16 %v211
      %v292 = vunpack.c.l.b16 %v212
      %v293 = vunpack.c.l.b16 %v213
      %v294 = vunpack.c.l.b16 %v214
      %v295 = vunpack.c.l.b16 %v215
      %v296 = vunpack.c.l.b16 %v216
      %v297 = vunpack.c.l.b16 %v217
      %v298 = vunpack.c.l.b16 %v218
      %v299 = vunpack.c.l.b16 %v219
      %v300 = vunpack.c.l.b16 %v220
      %v301 = vunpack.c.l.b16 %v221
      %v302 = vunpack.c.l.b16 %v222
      %v303 = vunpack.c.l.b16 %v223
      %v304 = vunpack.c.l.b16 %v224
      %v305 = vunpack.c.l.b16 %v225
      %v306 = vunpack.c.l.b16 %v226
      %v307 = vunpack.c.l.b16 %v227
      %v308 = vunpack.c.l.b16 %v228
      %v309 = vunpack.c.l.b16 %v229
      %v310 = vunpack.c.l.b16 %v230
      %v311 = vunpack.c.l.b16 %v231
      %v312 = vunpack.c.l.b16 %v232
      %v313 = vunpack.c.l.b16 %v233
      %v314 = vpack.c.b16 %v283, %v282
      %v315 = vpack.c.b16 %v285, %v284
      %v316 = vpack.c.b16 %v287, %v286
      %v317 = vpack.c.b16 %v289, %v288
      %v318 = vpack.c.b16 %v291, %v290
      %v319 = vpack.c.b16 %v293, %v292
      %v320 = vpack.c.b16 %v295, %v294
      %v321 = vpack.c.b16 %v297, %v296
      %v322 = vpack.c.b16 %v299, %v298
      %v323 = vpack.c.b16 %v301, %v300
      %v324 = vpack.c.b16 %v303, %v302
      %v325 = vpack.c.b16 %v305, %v304
      %v326 = vpack.c.b16 %v307, %v306
      %v327 = vpack.c.b16 %v309, %v308
      %v328 = vpack.c.b16 %v311, %v310
      %v329 = vpack.c.b16 %v313, %v312
      %v362 = vunpack.c.l.b16 %v234
      %v363 = vunpack.c.l.b16 %v235
      %v364 = vunpack.c.l.b16 %v236
      %v365 = vunpack.c.l.b16 %v237
      %v366 = vunpack.c.l.b16 %v238
      %v367 = vunpack.c.l.b16 %v239
      %v368 = vunpack.c.l.b16 %v240
      %v369 = vunpack.c.l.b16 %v241
      %v370 = vunpack.c.l.b16 %v242
      %v371 = vunpack.c.l.b16 %v243
      %v372 = vunpack.c.l.b16 %v244
      %v373 = vunpack.c.l.b16 %v245
      %v374 = vunpack.c.l.b16 %v246
      %v375 = vunpack.c.l.b16 %v247
      %v376 = vunpack.c.l.b16 %v248
      %v377 = vunpack.c.l.b16 %v249
      %v378 = vpack.c.b16 %v363, %v362
      %v379 = vpack.c.b16 %v365, %v364
      %v380 = vpack.c.b16 %v367, %v366
      %v381 = vpack.c.b16 %v369, %v368
      %v382 = vpack.c.b16 %v371, %v370
      %v383 = vpack.c.b16 %v373, %v372
      %v384 = vpack.c.b16 %v375, %v374
      %v385 = vpack.c.b16 %v377, %v376
      %394 = vmatprep.subr.bf16.mxu0 0
      %395 = vmatpush1.bf16.msra.mxu0 %v385
      %396 = vmatprep.subr.bf16.mxu0 0
      %397 = vmatpush1.bf16.msra.mxu0 %v384
      %398 = vmatprep.subr.bf16.mxu0 0
      %399 = vmatpush1.bf16.msra.mxu0 %v383
      %400 = vmatprep.subr.bf16.mxu0 0
      %401 = vmatpush1.bf16.msra.mxu0 %v382
      %402 = vmatprep.subr.bf16.mxu0 0
      %403 = vmatpush1.bf16.msra.mxu0 %v381
      %404 = vmatprep.subr.bf16.mxu0 0
      %405 = vmatpush1.bf16.msra.mxu0 %v380
      %406 = vmatprep.subr.bf16.mxu0 0
      %407 = vmatpush1.bf16.msra.mxu0 %v379
      %408 = vmatprep.subr.bf16.mxu0 0
      %409 = vmatpush1.bf16.msra.mxu0 %v378
      %410 = vmatprep.subr.bf16.mxu0 0
      %411 = vmatpush2.bf16.msra.mxu0 0
      %412 = vmatprep.subr.bf16.mxu0 0
      %413 = vmatpush2.bf16.msra.mxu0 0
      %414 = vmatprep.subr.bf16.mxu0 0
      %415 = vmatpush2.bf16.msra.mxu0 0
      %416 = vmatprep.subr.bf16.mxu0 0
      %417 = vmatpush2.bf16.msra.mxu0 0
      %418 = vmatprep.subr.bf16.mxu0 0
      %419 = vmatpush2.bf16.msra.mxu0 0
      %420 = vmatprep.subr.bf16.mxu0 0
      %421 = vmatpush2.bf16.msra.mxu0 0
      %422 = vmatprep.subr.bf16.mxu0 0
      %423 = vmatpush2.bf16.msra.mxu0 0
      %424 = vmatprep.subr.bf16.mxu0 0
      %425 = vmatpush2.bf16.msra.mxu0 0
      %426 = vmatprep.mubr.bf16.mxu0 0
      %427 = vmatmul.mubr.bf16.gmra.mxu0 %v314
      %v428 = vpop.f32.mrf.mxu0
      %v429 = vadd.f32 0.0, %v428
      %v430 = vpop.f32.mrf.mxu0
      %v431 = vpop.f32.mrf.mxu0
      %v432 = vadd.f32 0.0, %v431
      %v433 = vpop.f32.mrf.mxu0
      %434 = vmatprep.mubr.bf16.mxu0 0
      %435 = vmatmul.mubr.bf16.gmra.mxu0 %v315
      %v436 = vpop.f32.mrf.mxu0
      %v437 = vadd.f32 0.0, %v436
      %v438 = vpop.f32.mrf.mxu0
      %v439 = vpop.f32.mrf.mxu0
      %v440 = vadd.f32 0.0, %v439
      %v441 = vpop.f32.mrf.mxu0
      %442 = vmatprep.mubr.bf16.mxu0 0
      %443 = vmatmul.mubr.bf16.gmra.mxu0 %v316
      %v444 = vpop.f32.mrf.mxu0
      %v445 = vadd.f32 0.0, %v444
      %v446 = vpop.f32.mrf.mxu0
      %v447 = vpop.f32.mrf.mxu0
      %v448 = vadd.f32 0.0, %v447
      %v449 = vpop.f32.mrf.mxu0
      %450 = vmatprep.mubr.bf16.mxu0 0
      %451 = vmatmul.mubr.bf16.gmra.mxu0 %v317
      %v452 = vpop.f32.mrf.mxu0
      %v453 = vadd.f32 0.0, %v452
      %v454 = vpop.f32.mrf.mxu0
      %v455 = vpop.f32.mrf.mxu0
      %v456 = vadd.f32 0.0, %v455
      %v457 = vpop.f32.mrf.mxu0
      %458 = vmatprep.mubr.bf16.mxu0 0
      %459 = vmatmul.mubr.bf16.gmra.mxu0 %v318
      %v460 = vpop.f32.mrf.mxu0
      %v461 = vadd.f32 0.0, %v460
      %v462 = vpop.f32.mrf.mxu0
      %v463 = vpop.f32.mrf.mxu0
      %v464 = vadd.f32 0.0, %v463
      %v465 = vpop.f32.mrf.mxu0
      %466 = vmatprep.mubr.bf16.mxu0 0
      %467 = vmatmul.mubr.bf16.gmra.mxu0 %v319
      %v468 = vpop.f32.mrf.mxu0
      %v469 = vadd.f32 0.0, %v468
      %v470 = vpop.f32.mrf.mxu0
      %v471 = vpop.f32.mrf.mxu0
      %v472 = vadd.f32 0.0, %v471
      %v473 = vpop.f32.mrf.mxu0
      %474 = vmatprep.mubr.bf16.mxu0 0
      %475 = vmatmul.mubr.bf16.gmra.mxu0 %v320
      %v476 = vpop.f32.mrf.mxu0
      %v477 = vadd.f32 0.0, %v476
      %v478 = vpop.f32.mrf.mxu0
      %v479 = vpop.f32.mrf.mxu0
      %v480 = vadd.f32 0.0, %v479
      %v481 = vpop.f32.mrf.mxu0
      %482 = vmatprep.mubr.bf16.mxu0 0
      %483 = vmatmul.mubr.bf16.gmra.mxu0 %v321
      %v484 = vpop.f32.mrf.mxu0
      %v485 = vadd.f32 0.0, %v484
      %v486 = vpop.f32.mrf.mxu0
      %v487 = vpop.f32.mrf.mxu0
      %v488 = vadd.f32 0.0, %v487
      %v489 = vpop.f32.mrf.mxu0
      %490 = vmatprep.mubr.bf16.mxu0 0
      %491 = vmatmul.mubr.bf16.gmra.mxu0 %v322
      %v492 = vpop.f32.mrf.mxu0
      %v493 = vadd.f32 0.0, %v492
      %v494 = vpop.f32.mrf.mxu0
      %v495 = vpop.f32.mrf.mxu0
      %v496 = vadd.f32 0.0, %v495
      %v497 = vpop.f32.mrf.mxu0
      %498 = vmatprep.mubr.bf16.mxu0 0
      %499 = vmatmul.mubr.bf16.gmra.mxu0 %v323
      %v500 = vpop.f32.mrf.mxu0
      %v501 = vadd.f32 0.0, %v500
      %v502 = vpop.f32.mrf.mxu0
      %v503 = vpop.f32.mrf.mxu0
      %v504 = vadd.f32 0.0, %v503
      %v505 = vpop.f32.mrf.mxu0
      %506 = vmatprep.mubr.bf16.mxu0 0
      %507 = vmatmul.mubr.bf16.gmra.mxu0 %v324
      %v508 = vpop.f32.mrf.mxu0
      %v509 = vadd.f32 0.0, %v508
      %v510 = vpop.f32.mrf.mxu0
      %v511 = vpop.f32.mrf.mxu0
      %v512 = vadd.f32 0.0, %v511
      %v513 = vpop.f32.mrf.mxu0
      %514 = vmatprep.mubr.bf16.mxu0 0
      %515 = vmatmul.mubr.bf16.gmra.mxu0 %v325
      %v516 = vpop.f32.mrf.mxu0
      %v517 = vadd.f32 0.0, %v516
      %v518 = vpop.f32.mrf.mxu0
      %v519 = vpop.f32.mrf.mxu0
      %v520 = vadd.f32 0.0, %v519
      %v521 = vpop.f32.mrf.mxu0
      %522 = vmatprep.mubr.bf16.mxu0 0
      %523 = vmatmul.mubr.bf16.gmra.mxu0 %v326
      %v524 = vpop.f32.mrf.mxu0
      %v525 = vadd.f32 0.0, %v524
      %v526 = vpop.f32.mrf.mxu0
      %v527 = vpop.f32.mrf.mxu0
      %v528 = vadd.f32 0.0, %v527
      %v529 = vpop.f32.mrf.mxu0
      %530 = vmatprep.mubr.bf16.mxu0 0
      %531 = vmatmul.mubr.bf16.gmra.mxu0 %v327
      %v532 = vpop.f32.mrf.mxu0
      %v533 = vadd.f32 0.0, %v532
      %v534 = vpop.f32.mrf.mxu0
      %v535 = vpop.f32.mrf.mxu0
      %v536 = vadd.f32 0.0, %v535
      %v537 = vpop.f32.mrf.mxu0
      %538 = vmatprep.mubr.bf16.mxu0 0
      %539 = vmatmul.mubr.bf16.gmra.mxu0 %v328
      %v540 = vpop.f32.mrf.mxu0
      %v541 = vadd.f32 0.0, %v540
      %v542 = vpop.f32.mrf.mxu0
      %v543 = vpop.f32.mrf.mxu0
      %v544 = vadd.f32 0.0, %v543
      %v545 = vpop.f32.mrf.mxu0
      %546 = vmatprep.mubr.bf16.mxu0 0
      %547 = vmatmul.mubr.bf16.gmra.mxu0 %v329
      %v548 = vpop.f32.mrf.mxu0
      %v549 = vadd.f32 0.0, %v548
      %v550 = vpop.f32.mrf.mxu0
      %v551 = vpop.f32.mrf.mxu0
      %v552 = vadd.f32 0.0, %v551
      %v553 = vpop.f32.mrf.mxu0
      %554 = vdwg.mxu0
      %v555 = vld [vmem:[%s3] sm:$0x1]
      %v557 = vlaneseq
      %v558 = vshrl.u32 %v557, 7
      %v559 = vsub.s32 0, %v558
      %v560 = vrot.slane %v555, %v559
      %v562 = vmul.f32 %v429, %v560
      %v563 = vmul.f32 %v432, %v560
      %v564 = vmul.f32 %v437, %v560
      %v565 = vmul.f32 %v440, %v560
      %v566 = vmul.f32 %v445, %v560
      %v567 = vmul.f32 %v448, %v560
      %v568 = vmul.f32 %v453, %v560
      %v569 = vmul.f32 %v456, %v560
      %v570 = vmul.f32 %v461, %v560
      %v571 = vmul.f32 %v464, %v560
      %v572 = vmul.f32 %v469, %v560
      %v573 = vmul.f32 %v472, %v560
      %v574 = vmul.f32 %v477, %v560
      %v575 = vmul.f32 %v480, %v560
      %v576 = vmul.f32 %v485, %v560
      %v577 = vmul.f32 %v488, %v560
      %v578 = vmul.f32 %v493, %v560
      %v579 = vmul.f32 %v496, %v560
      %v580 = vmul.f32 %v501, %v560
      %v581 = vmul.f32 %v504, %v560
      %v582 = vmul.f32 %v509, %v560
      %v583 = vmul.f32 %v512, %v560
      %v584 = vmul.f32 %v517, %v560
      %v585 = vmul.f32 %v520, %v560
      %v586 = vmul.f32 %v525, %v560
      %v587 = vmul.f32 %v528, %v560
      %v588 = vmul.f32 %v533, %v560
      %v589 = vmul.f32 %v536, %v560
      %v590 = vmul.f32 %v541, %v560
      %v591 = vmul.f32 %v544, %v560
      %v592 = vmul.f32 %v549, %v560
      %v593 = vmul.f32 %v552, %v560
      %v594 = vld [vmem:[%s2] sm:$0x1]
      %v596 = vlaneseq
      %v597 = vshrl.u32 %v596, 7
      %v598 = vsub.s32 0, %v597
      %v599 = vrot.slane %v594, %v598
      %v601 = vadd.f32 %v562, %v599
      %v602 = vadd.f32 %v563, %v599
      %v603 = vadd.f32 %v564, %v599
      %v604 = vadd.f32 %v565, %v599
      %v605 = vadd.f32 %v566, %v599
      %v606 = vadd.f32 %v567, %v599
      %v607 = vadd.f32 %v568, %v599
      %v608 = vadd.f32 %v569, %v599
      %v609 = vadd.f32 %v570, %v599
      %v610 = vadd.f32 %v571, %v599
      %v611 = vadd.f32 %v572, %v599
      %v612 = vadd.f32 %v573, %v599
      %v613 = vadd.f32 %v574, %v599
      %v614 = vadd.f32 %v575, %v599
      %v615 = vadd.f32 %v576, %v599
      %v616 = vadd.f32 %v577, %v599
      %v617 = vadd.f32 %v578, %v599
      %v618 = vadd.f32 %v579, %v599
      %v619 = vadd.f32 %v580, %v599
      %v620 = vadd.f32 %v581, %v599
      %v621 = vadd.f32 %v582, %v599
      %v622 = vadd.f32 %v583, %v599
      %v623 = vadd.f32 %v584, %v599
      %v624 = vadd.f32 %v585, %v599
      %v625 = vadd.f32 %v586, %v599
      %v626 = vadd.f32 %v587, %v599
      %v627 = vadd.f32 %v588, %v599
      %v628 = vadd.f32 %v589, %v599
      %v629 = vadd.f32 %v590, %v599
      %v630 = vadd.f32 %v591, %v599
      %v631 = vadd.f32 %v592, %v599
      %v632 = vadd.f32 %v593, %v599
      %v633 = vmax.f32 %v601, 0.0
      %v634 = vmax.f32 %v602, 0.0
      %v635 = vmax.f32 %v603, 0.0
      %v636 = vmax.f32 %v604, 0.0
      %v637 = vmax.f32 %v605, 0.0
      %v638 = vmax.f32 %v606, 0.0
      %v639 = vmax.f32 %v607, 0.0
      %v640 = vmax.f32 %v608, 0.0
      %v641 = vmax.f32 %v609, 0.0
      %v642 = vmax.f32 %v610, 0.0
      %v643 = vmax.f32 %v611, 0.0
      %v644 = vmax.f32 %v612, 0.0
      %v645 = vmax.f32 %v613, 0.0
      %v646 = vmax.f32 %v614, 0.0
      %v647 = vmax.f32 %v615, 0.0
      %v648 = vmax.f32 %v616, 0.0
      %v649 = vmax.f32 %v617, 0.0
      %v650 = vmax.f32 %v618, 0.0
      %v651 = vmax.f32 %v619, 0.0
      %v652 = vmax.f32 %v620, 0.0
      %v653 = vmax.f32 %v621, 0.0
      %v654 = vmax.f32 %v622, 0.0
      %v655 = vmax.f32 %v623, 0.0
      %v656 = vmax.f32 %v624, 0.0
      %v657 = vmax.f32 %v625, 0.0
      %v658 = vmax.f32 %v626, 0.0
      %v659 = vmax.f32 %v627, 0.0
      %v660 = vmax.f32 %v628, 0.0
      %v661 = vmax.f32 %v629, 0.0
      %v662 = vmax.f32 %v630, 0.0
      %v663 = vmax.f32 %v631, 0.0
      %v664 = vmax.f32 %v632, 0.0
      %v665 = vpack.c.bf16 %v634, %v633
      %v666 = vpack.c.bf16 %v636, %v635
      %v667 = vpack.c.bf16 %v638, %v637
      %v668 = vpack.c.bf16 %v640, %v639
      %v669 = vpack.c.bf16 %v642, %v641
      %v670 = vpack.c.bf16 %v644, %v643
      %v671 = vpack.c.bf16 %v646, %v645
      %v672 = vpack.c.bf16 %v648, %v647
      %v673 = vpack.c.bf16 %v650, %v649
      %v674 = vpack.c.bf16 %v652, %v651
      %v675 = vpack.c.bf16 %v654, %v653
      %v676 = vpack.c.bf16 %v656, %v655
      %v677 = vpack.c.bf16 %v658, %v657
      %v678 = vpack.c.bf16 %v660, %v659
      %v679 = vpack.c.bf16 %v662, %v661
      %v680 = vpack.c.bf16 %v664, %v663
      %v697 = vunpack.c.l.b16 %v665
      %v698 = vunpack.c.h.b16 %v665
      %v699 = vunpack.c.l.b16 %v666
      %v700 = vunpack.c.h.b16 %v666
      %v701 = vunpack.c.l.b16 %v667
      %v702 = vunpack.c.h.b16 %v667
      %v703 = vunpack.c.l.b16 %v668
      %v704 = vunpack.c.h.b16 %v668
      %v705 = vunpack.c.l.b16 %v669
      %v706 = vunpack.c.h.b16 %v669
      %v707 = vunpack.c.l.b16 %v670
      %v708 = vunpack.c.h.b16 %v670
      %v709 = vunpack.c.l.b16 %v671
      %v710 = vunpack.c.h.b16 %v671
      %v711 = vunpack.c.l.b16 %v672
      %v712 = vunpack.c.h.b16 %v672
      %v713 = vunpack.c.l.b16 %v673
      %v714 = vunpack.c.h.b16 %v673
      %v715 = vunpack.c.l.b16 %v674
      %v716 = vunpack.c.h.b16 %v674
      %v717 = vunpack.c.l.b16 %v675
      %v718 = vunpack.c.h.b16 %v675
      %v719 = vunpack.c.l.b16 %v676
      %v720 = vunpack.c.h.b16 %v676
      %v721 = vunpack.c.l.b16 %v677
      %v722 = vunpack.c.h.b16 %v677
      %v723 = vunpack.c.l.b16 %v678
      %v724 = vunpack.c.h.b16 %v678
      %v725 = vunpack.c.l.b16 %v679
      %v726 = vunpack.c.h.b16 %v679
      %v727 = vunpack.c.l.b16 %v680
      %v728 = vunpack.c.h.b16 %v680
      %v729 = vpack.c.b16 %v697, %v697
      %v730 = vpack.c.b16 %v698, %v698
      %v731 = vpack.c.b16 %v699, %v699
      %v732 = vpack.c.b16 %v700, %v700
      %v733 = vpack.c.b16 %v701, %v701
      %v734 = vpack.c.b16 %v702, %v702
      %v735 = vpack.c.b16 %v703, %v703
      %v736 = vpack.c.b16 %v704, %v704
      %v737 = vpack.c.b16 %v705, %v705
      %v738 = vpack.c.b16 %v706, %v706
      %v739 = vpack.c.b16 %v707, %v707
      %v740 = vpack.c.b16 %v708, %v708
      %v741 = vpack.c.b16 %v709, %v709
      %v742 = vpack.c.b16 %v710, %v710
      %v743 = vpack.c.b16 %v711, %v711
      %v744 = vpack.c.b16 %v712, %v712
      %v745 = vpack.c.b16 %v713, %v713
      %v746 = vpack.c.b16 %v714, %v714
      %v747 = vpack.c.b16 %v715, %v715
      %v748 = vpack.c.b16 %v716, %v716
      %v749 = vpack.c.b16 %v717, %v717
      %v750 = vpack.c.b16 %v718, %v718
      %v751 = vpack.c.b16 %v719, %v719
      %v752 = vpack.c.b16 %v720, %v720
      %v753 = vpack.c.b16 %v721, %v721
      %v754 = vpack.c.b16 %v722, %v722
      %v755 = vpack.c.b16 %v723, %v723
      %v756 = vpack.c.b16 %v724, %v724
      %v757 = vpack.c.b16 %v725, %v725
      %v758 = vpack.c.b16 %v726, %v726
      %v759 = vpack.c.b16 %v727, %v727
      %v760 = vpack.c.b16 %v728, %v728
      %793 = vst [vmem:[%s199] sm:$0xf] %v729
      %794 = vst [vmem:[%s199 + $0x4] sm:$0xf] %v730
      %795 = vst [vmem:[%s199 + $0x8] sm:$0xf] %v731
      %796 = vst [vmem:[%s199 + $0xc] sm:$0xf] %v732
      %797 = vst [vmem:[%s199 + $0x10] sm:$0xf] %v733
      %798 = vst [vmem:[%s199 + $0x14] sm:$0xf] %v734
      %799 = vst [vmem:[%s199 + $0x18] sm:$0xf] %v735
      %800 = vst [vmem:[%s199 + $0x1c] sm:$0xf] %v736
      %801 = vst [vmem:[%s199 + $0x20] sm:$0xf] %v737
      %802 = vst [vmem:[%s199 + $0x24] sm:$0xf] %v738
      %803 = vst [vmem:[%s199 + $0x28] sm:$0xf] %v739
      %804 = vst [vmem:[%s199 + $0x2c] sm:$0xf] %v740
      %805 = vst [vmem:[%s199 + $0x30] sm:$0xf] %v741
      %806 = vst [vmem:[%s199 + $0x34] sm:$0xf] %v742
      %807 = vst [vmem:[%s199 + $0x38] sm:$0xf] %v743
      %808 = vst [vmem:[%s199 + $0x3c] sm:$0xf] %v744
      %809 = vst [vmem:[%s199 + $0x40] sm:$0xf] %v745
      %810 = vst [vmem:[%s199 + $0x44] sm:$0xf] %v746
      %811 = vst [vmem:[%s199 + $0x48] sm:$0xf] %v747
      %812 = vst [vmem:[%s199 + $0x4c] sm:$0xf] %v748
      %813 = vst [vmem:[%s199 + $0x50] sm:$0xf] %v749
      %814 = vst [vmem:[%s199 + $0x54] sm:$0xf] %v750
      %815 = vst [vmem:[%s199 + $0x58] sm:$0xf] %v751
      %816 = vst [vmem:[%s199 + $0x5c] sm:$0xf] %v752
      %817 = vst [vmem:[%s199 + $0x60] sm:$0xf] %v753
      %818 = vst [vmem:[%s199 + $0x64] sm:$0xf] %v754
      %819 = vst [vmem:[%s199 + $0x68] sm:$0xf] %v755
      %820 = vst [vmem:[%s199 + $0x6c] sm:$0xf] %v756
      %821 = vst [vmem:[%s199 + $0x70] sm:$0xf] %v757
      %822 = vst [vmem:[%s199 + $0x74] sm:$0xf] %v758
      %823 = vst [vmem:[%s199 + $0x78] sm:$0xf] %v759
      %824 = vst [vmem:[%s199 + $0x7c] sm:$0xf] %v760
      %s825 = smul.u32 32, %s15
      %p826 = scmp.lt.s32.totalorder %s825, 63
      %s827 = scalar_select %p826, %s825, 63
      %s828 = smul.addr %s827, 4
      %s829 = scalar_lea.vmem %s4, %s828
      // Predicated region
      $region37: #{forward.17} parent=35 // pred_check
        %p830 = pneg %p122
      $region38: #{forward.17} parent=35 // pred_check_branch
        %832 = sbr.rel (%p830) target = $region40
      $region39: #{forward.17} parent=35 // pred_region
        %s833 = smul.u32 32, %s15
      $region40: #{forward.17} parent=35 // pred_fallthru
        _
    $region36: #{forward.17} parent=5 // pred_fallthru
      _
    %p834 = scmp.le.s32.totalorder 2, %s10
    // Predicated region
    $region41: #{forward.17} parent=5 // pred_check
      %p835 = pneg %p834
    $region42: #{forward.17} parent=5 // pred_check_branch
      %837 = sbr.rel (%p835) target = $region44
    $region43: #{forward.17} parent=5 // pred_region
      %s838 = ssub.s32 %s10, 2
      // Predicated region
      $region45: #{forward.17} parent=43 // pred_check
        %p839 = pneg %p128
      $region46: #{forward.17} parent=43 // pred_check_branch
        %841 = sbr.rel (%p839) target = $region48
      $region47: #{forward.17} parent=43 // pred_region
        %s842 = smul.u32 32, %s16
        %p843 = scmp.lt.s32.totalorder %s842, 63
        %s844 = scalar_select %p843, %s842, 63
        %s845 = smul.addr %s844, 4
        %s846 = scalar_lea.vmem %s4, %s845
      $region48: #{forward.17} parent=43 // pred_fallthru
        _
    $region44: #{forward.17} parent=5 // pred_fallthru
      _
  $region6: #{forward.17} parent=0 // loop_footer
    %s14 = sadd.s32 1, %s10
  $region7: #{forward.17} parent=0 // loop_footer_branch
    %9 = sbr.rel target = $region3
  $region8: #{forward.17} parent=0 // loop_exit
    _

// kernel: forward.19
$region0: #{forward.19}
  #allocation0 [shape = 'u32[]', space=smem, size = 0x4, offset = 0x4, fixed_abs, tag = 'smem constant byte address 0x4 - core index']
  #allocation1 [shape = 'u32[144,128]{1,0:T(1,128)}', space=vmem, size = 0x12000, scoped, tag = 'internal scratch']
  %s0 = inlined_call_operand.vmem [shape: bf16[128,640], index: 0, kind: input, shape index: {}]
  %s1 = inlined_call_operand.vmem [shape: bf16[640,128], index: 1, kind: input, shape index: {}]
  %s2 = inlined_call_operand.vmem [shape: f32[1,128], index: 2, kind: input, shape index: {}]
  %s3 = inlined_call_operand.vmem [shape: f32[1,128], index: 3, kind: input, shape index: {}]
  %s4 = inlined_call_operand.vmem [shape: bf16[128,128], index: 4, kind: input, shape index: {}]
  %s5 = inlined_call_operand.vmem [shape: bf16[128,128], index: 5, kind: output, shape index: {}]
  %s6 = sld [smem:[#allocation0]]
  $region30: #{forward.19} parent=0
    _
  %s8 = ssub.s32 1, %s6
  %s9 = scalar_select 0, %s8, %s6
  // Predicated region
  $region2: #{forward.19} parent=0 // pred_check
    _
  $region3: #{forward.19} parent=0 // pred_check_branch
    %11 = sbr.rel (0) target = $region5
  $region4: #{forward.19} parent=0 // pred_region
    _
  $region5: #{forward.19} parent=0 // pred_fallthru
    _
  // Predicated region
  $region6: #{forward.19} parent=0 // pred_check
    _
  $region7: #{forward.19} parent=0 // pred_check_branch
    %13 = sbr.rel (0) target = $region9
  $region8: #{forward.19} parent=0 // pred_region
    _
  $region9: #{forward.19} parent=0 // pred_fallthru
    _
  // Predicated region
  $region10: #{forward.19} parent=0 // pred_check
    _
  $region11: #{forward.19} parent=0 // pred_check_branch
    %15 = sbr.rel (0) target = $region13
  $region12: #{forward.19} parent=0 // pred_region
    _
  $region13: #{forward.19} parent=0 // pred_fallthru
    _
  // Predicated region
  $region14: #{forward.19} parent=0 // pred_check
    _
  $region15: #{forward.19} parent=0 // pred_check_branch
    %17 = sbr.rel (0) target = $region17
  $region16: #{forward.19} parent=0 // pred_region
    _
  $region17: #{forward.19} parent=0 // pred_fallthru
    _
  // Predicated region
  $region18: #{forward.19} parent=0 // pred_check
    _
  $region19: #{forward.19} parent=0 // pred_check_branch
    %19 = sbr.rel (0) target = $region21
  $region20: #{forward.19} parent=0 // pred_region
    _
  $region21: #{forward.19} parent=0 // pred_fallthru
    _
  %v21 = vld [vmem:[%s0] sm:$0xff]
  %v22 = vld [vmem:[%s0 + $0x8] sm:$0xff]
  %v23 = vld [vmem:[%s0 + $0x10] sm:$0xf]
  %v24 = vld [vmem:[%s0 + $0x14] sm:$0xff]
  %v25 = vld [vmem:[%s0 + $0x1c] sm:$0xff]
  %v26 = vld [vmem:[%s0 + $0x24] sm:$0xf]
  %v27 = vld [vmem:[%s0 + $0x28] sm:$0xff]
  %v28 = vld [vmem:[%s0 + $0x30] sm:$0xff]
  %v29 = vld [vmem:[%s0 + $0x38] sm:$0xf]
  %v30 = vld [vmem:[%s0 + $0x3c] sm:$0xff]
  %v31 = vld [vmem:[%s0 + $0x44] sm:$0xff]
  %v32 = vld [vmem:[%s0 + $0x4c] sm:$0xf]
  %v33 = vld [vmem:[%s0 + $0x50] sm:$0xff]
  %v34 = vld [vmem:[%s0 + $0x58] sm:$0xff]
  %v35 = vld [vmem:[%s0 + $0x60] sm:$0xf]
  %v36 = vld [vmem:[%s0 + $0x64] sm:$0xff]
  %v37 = vld [vmem:[%s0 + $0x6c] sm:$0xff]
  %v38 = vld [vmem:[%s0 + $0x74] sm:$0xf]
  %v39 = vld [vmem:[%s0 + $0x78] sm:$0xff]
  %v40 = vld [vmem:[%s0 + $0x80] sm:$0xff]
  %v41 = vld [vmem:[%s0 + $0x88] sm:$0xf]
  %v42 = vld [vmem:[%s0 + $0x8c] sm:$0xff]
  %v43 = vld [vmem:[%s0 + $0x94] sm:$0xff]
  %v44 = vld [vmem:[%s0 + $0x9c] sm:$0xf]
  %v45 = vld [vmem:[%s0 + $0xa0] sm:$0xff]
  %v46 = vld [vmem:[%s0 + $0xa8] sm:$0xff]
  %v47 = vld [vmem:[%s0 + $0xb0] sm:$0xf]
  %v48 = vld [vmem:[%s0 + $0xb4] sm:$0xff]
  %v49 = vld [vmem:[%s0 + $0xbc] sm:$0xff]
  %v50 = vld [vmem:[%s0 + $0xc4] sm:$0xf]
  %v51 = vld [vmem:[%s0 + $0xc8] sm:$0xff]
  %v52 = vld [vmem:[%s0 + $0xd0] sm:$0xff]
  %v53 = vld [vmem:[%s0 + $0xd8] sm:$0xf]
  %v54 = vld [vmem:[%s0 + $0xdc] sm:$0xff]
  %v55 = vld [vmem:[%s0 + $0xe4] sm:$0xff]
  %v56 = vld [vmem:[%s0 + $0xec] sm:$0xf]
  %v57 = vld [vmem:[%s0 + $0xf0] sm:$0xff]
  %v58 = vld [vmem:[%s0 + $0xf8] sm:$0xff]
  %v59 = vld [vmem:[%s0 + $0x100] sm:$0xf]
  %v60 = vld [vmem:[%s0 + $0x104] sm:$0xff]
  %v61 = vld [vmem:[%s0 + $0x10c] sm:$0xff]
  %v62 = vld [vmem:[%s0 + $0x114] sm:$0xf]
  %v63 = vld [vmem:[%s0 + $0x118] sm:$0xff]
  %v64 = vld [vmem:[%s0 + $0x120] sm:$0xff]
  %v65 = vld [vmem:[%s0 + $0x128] sm:$0xf]
  %v66 = vld [vmem:[%s0 + $0x12c] sm:$0xff]
  %v67 = vld [vmem:[%s0 + $0x134] sm:$0xff]
  %v68 = vld [vmem:[%s0 + $0x13c] sm:$0xf]
  %v69 = vld [vmem:[%s1] sm:$0xf]
  %v70 = vld [vmem:[%s1 + $0x4] sm:$0xf]
  %v71 = vld [vmem:[%s1 + $0x8] sm:$0xf]
  %v72 = vld [vmem:[%s1 + $0xc] sm:$0xf]
  %v73 = vld [vmem:[%s1 + $0x10] sm:$0xf]
  %v74 = vld [vmem:[%s1 + $0x14] sm:$0xf]
  %v75 = vld [vmem:[%s1 + $0x18] sm:$0xf]
  %v76 = vld [vmem:[%s1 + $0x1c] sm:$0xf]
  %v77 = vld [vmem:[%s1 + $0x20] sm:$0xf]
  %v78 = vld [vmem:[%s1 + $0x24] sm:$0xf]
  %v79 = vld [vmem:[%s1 + $0x28] sm:$0xf]
  %v80 = vld [vmem:[%s1 + $0x2c] sm:$0xf]
  %v81 = vld [vmem:[%s1 + $0x30] sm:$0xf]
  %v82 = vld [vmem:[%s1 + $0x34] sm:$0xf]
  %v83 = vld [vmem:[%s1 + $0x38] sm:$0xf]
  %v84 = vld [vmem:[%s1 + $0x3c] sm:$0xf]
  %v85 = vld [vmem:[%s1 + $0x40] sm:$0xf]
  %v86 = vld [vmem:[%s1 + $0x44] sm:$0xf]
  %v87 = vld [vmem:[%s1 + $0x48] sm:$0xf]
  %v88 = vld [vmem:[%s1 + $0x4c] sm:$0xf]
  %v89 = vld [vmem:[%s1 + $0x50] sm:$0xf]
  %v90 = vld [vmem:[%s1 + $0x54] sm:$0xf]
  %v91 = vld [vmem:[%s1 + $0x58] sm:$0xf]
  %v92 = vld [vmem:[%s1 + $0x5c] sm:$0xf]
  %v93 = vld [vmem:[%s1 + $0x60] sm:$0xf]
  %v94 = vld [vmem:[%s1 + $0x64] sm:$0xf]
  %v95 = vld [vmem:[%s1 + $0x68] sm:$0xf]
  %v96 = vld [vmem:[%s1 + $0x6c] sm:$0xf]
  %v97 = vld [vmem:[%s1 + $0x70] sm:$0xf]
  %v98 = vld [vmem:[%s1 + $0x74] sm:$0xf]
  %v99 = vld [vmem:[%s1 + $0x78] sm:$0xf]
  %v100 = vld [vmem:[%s1 + $0x7c] sm:$0xf]
  %v101 = vld [vmem:[%s1 + $0x80] sm:$0xf]
  %v102 = vld [vmem:[%s1 + $0x84] sm:$0xf]
  %v103 = vld [vmem:[%s1 + $0x88] sm:$0xf]
  %v104 = vld [vmem:[%s1 + $0x8c] sm:$0xf]
  %v105 = vld [vmem:[%s1 + $0x90] sm:$0xf]
  %v106 = vld [vmem:[%s1 + $0x94] sm:$0xf]
  %v107 = vld [vmem:[%s1 + $0x98] sm:$0xf]
  %v108 = vld [vmem:[%s1 + $0x9c] sm:$0xf]
  %v109 = vld [vmem:[%s1 + $0xa0] sm:$0xf]
  %v110 = vld [vmem:[%s1 + $0xa4] sm:$0xf]
  %v111 = vld [vmem:[%s1 + $0xa8] sm:$0xf]
  %v112 = vld [vmem:[%s1 + $0xac] sm:$0xf]
  %v113 = vld [vmem:[%s1 + $0xb0] sm:$0xf]
  %v114 = vld [vmem:[%s1 + $0xb4] sm:$0xf]
  %v115 = vld [vmem:[%s1 + $0xb8] sm:$0xf]
  %v116 = vld [vmem:[%s1 + $0xbc] sm:$0xf]
  %v117 = vld [vmem:[%s1 + $0xc0] sm:$0xf]
  %v118 = vld [vmem:[%s1 + $0xc4] sm:$0xf]
  %v119 = vld [vmem:[%s1 + $0xc8] sm:$0xf]
  %v120 = vld [vmem:[%s1 + $0xcc] sm:$0xf]
  %v121 = vld [vmem:[%s1 + $0xd0] sm:$0xf]
  %v122 = vld [vmem:[%s1 + $0xd4] sm:$0xf]
  %v123 = vld [vmem:[%s1 + $0xd8] sm:$0xf]
  %v124 = vld [vmem:[%s1 + $0xdc] sm:$0xf]
  %v125 = vld [vmem:[%s1 + $0xe0] sm:$0xf]
  %v126 = vld [vmem:[%s1 + $0xe4] sm:$0xf]
  %v127 = vld [vmem:[%s1 + $0xe8] sm:$0xf]
  %v128 = vld [vmem:[%s1 + $0xec] sm:$0xf]
  %v129 = vld [vmem:[%s1 + $0xf0] sm:$0xf]
  %v130 = vld [vmem:[%s1 + $0xf4] sm:$0xf]
  %v131 = vld [vmem:[%s1 + $0xf8] sm:$0xf]
  %v132 = vld [vmem:[%s1 + $0xfc] sm:$0xf]
  %v133 = vld [vmem:[%s1 + $0x100] sm:$0xf]
  %v134 = vld [vmem:[%s1 + $0x104] sm:$0xf]
  %v135 = vld [vmem:[%s1 + $0x108] sm:$0xf]
  %v136 = vld [vmem:[%s1 + $0x10c] sm:$0xf]
  %v137 = vld [vmem:[%s1 + $0x110] sm:$0xf]
  %v138 = vld [vmem:[%s1 + $0x114] sm:$0xf]
  %v139 = vld [vmem:[%s1 + $0x118] sm:$0xf]
  %v140 = vld [vmem:[%s1 + $0x11c] sm:$0xf]
  %v141 = vld [vmem:[%s1 + $0x120] sm:$0xf]
  %v142 = vld [vmem:[%s1 + $0x124] sm:$0xf]
  %v143 = vld [vmem:[%s1 + $0x128] sm:$0xf]
  %v144 = vld [vmem:[%s1 + $0x12c] sm:$0xf]
  %v145 = vld [vmem:[%s1 + $0x130] sm:$0xf]
  %v146 = vld [vmem:[%s1 + $0x134] sm:$0xf]
  %v147 = vld [vmem:[%s1 + $0x138] sm:$0xf]
  %v148 = vld [vmem:[%s1 + $0x13c] sm:$0xf]
  %v197 = vunpack.c.l.b16 %v21
  %v198 = vunpack.c.h.b16 %v21
  %v199 = vunpack.c.l.b16 %v22
  %v200 = vunpack.c.h.b16 %v22
  %v201 = vunpack.c.l.b16 %v23
  %v202 = vunpack.c.l.b16 %v24
  %v203 = vunpack.c.h.b16 %v24
  %v204 = vunpack.c.l.b16 %v25
  %v205 = vunpack.c.h.b16 %v25
  %v206 = vunpack.c.l.b16 %v26
  %v207 = vunpack.c.l.b16 %v27
  %v208 = vunpack.c.h.b16 %v27
  %v209 = vunpack.c.l.b16 %v28
  %v210 = vunpack.c.h.b16 %v28
  %v211 = vunpack.c.l.b16 %v29
  %v212 = vunpack.c.l.b16 %v30
  %v213 = vunpack.c.h.b16 %v30
  %v214 = vunpack.c.l.b16 %v31
  %v215 = vunpack.c.h.b16 %v31
  %v216 = vunpack.c.l.b16 %v32
  %v217 = vunpack.c.l.b16 %v33
  %v218 = vunpack.c.h.b16 %v33
  %v219 = vunpack.c.l.b16 %v34
  %v220 = vunpack.c.h.b16 %v34
  %v221 = vunpack.c.l.b16 %v35
  %v222 = vunpack.c.l.b16 %v36
  %v223 = vunpack.c.h.b16 %v36
  %v224 = vunpack.c.l.b16 %v37
  %v225 = vunpack.c.h.b16 %v37
  %v226 = vunpack.c.l.b16 %v38
  %v227 = vunpack.c.l.b16 %v39
  %v228 = vunpack.c.h.b16 %v39
  %v229 = vunpack.c.l.b16 %v40
  %v230 = vunpack.c.h.b16 %v40
  %v231 = vunpack.c.l.b16 %v41
  %v232 = vunpack.c.l.b16 %v42
  %v233 = vunpack.c.h.b16 %v42
  %v234 = vunpack.c.l.b16 %v43
  %v235 = vunpack.c.h.b16 %v43
  %v236 = vunpack.c.l.b16 %v44
  %v237 = vunpack.c.l.b16 %v45
  %v238 = vunpack.c.h.b16 %v45
  %v239 = vunpack.c.l.b16 %v46
  %v240 = vunpack.c.h.b16 %v46
  %v241 = vunpack.c.l.b16 %v47
  %v242 = vunpack.c.l.b16 %v48
  %v243 = vunpack.c.h.b16 %v48
  %v244 = vunpack.c.l.b16 %v49
  %v245 = vunpack.c.h.b16 %v49
  %v246 = vunpack.c.l.b16 %v50
  %v247 = vunpack.c.l.b16 %v51
  %v248 = vunpack.c.h.b16 %v51
  %v249 = vunpack.c.l.b16 %v52
  %v250 = vunpack.c.h.b16 %v52
  %v251 = vunpack.c.l.b16 %v53
  %v252 = vunpack.c.l.b16 %v54
  %v253 = vunpack.c.h.b16 %v54
  %v254 = vunpack.c.l.b16 %v55
  %v255 = vunpack.c.h.b16 %v55
  %v256 = vunpack.c.l.b16 %v56
  %v257 = vunpack.c.l.b16 %v57
  %v258 = vunpack.c.h.b16 %v57
  %v259 = vunpack.c.l.b16 %v58
  %v260 = vunpack.c.h.b16 %v58
  %v261 = vunpack.c.l.b16 %v59
  %v262 = vunpack.c.l.b16 %v60
  %v263 = vunpack.c.h.b16 %v60
  %v264 = vunpack.c.l.b16 %v61
  %v265 = vunpack.c.h.b16 %v61
  %v266 = vunpack.c.l.b16 %v62
  %v267 = vunpack.c.l.b16 %v63
  %v268 = vunpack.c.h.b16 %v63
  %v269 = vunpack.c.l.b16 %v64
  %v270 = vunpack.c.h.b16 %v64
  %v271 = vunpack.c.l.b16 %v65
  %v272 = vunpack.c.l.b16 %v66
  %v273 = vunpack.c.h.b16 %v66
  %v274 = vunpack.c.l.b16 %v67
  %v275 = vunpack.c.h.b16 %v67
  %v276 = vunpack.c.l.b16 %v68
  %v277 = vpack.c.b16 %v202, %v197
  %v278 = vpack.c.b16 %v203, %v198
  %v279 = vpack.c.b16 %v204, %v199
  %v280 = vpack.c.b16 %v205, %v200
  %v281 = vpack.c.b16 %v206, %v201
  %v282 = vpack.c.b16 %v212, %v207
  %v283 = vpack.c.b16 %v213, %v208
  %v284 = vpack.c.b16 %v214, %v209
  %v285 = vpack.c.b16 %v215, %v210
  %v286 = vpack.c.b16 %v216, %v211
  %v287 = vpack.c.b16 %v222, %v217
  %v288 = vpack.c.b16 %v223, %v218
  %v289 = vpack.c.b16 %v224, %v219
  %v290 = vpack.c.b16 %v225, %v220
  %v291 = vpack.c.b16 %v226, %v221
  %v292 = vpack.c.b16 %v232, %v227
  %v293 = vpack.c.b16 %v233, %v228
  %v294 = vpack.c.b16 %v234, %v229
  %v295 = vpack.c.b16 %v235, %v230
  %v296 = vpack.c.b16 %v236, %v231
  %v297 = vpack.c.b16 %v242, %v237
  %v298 = vpack.c.b16 %v243, %v238
  %v299 = vpack.c.b16 %v244, %v239
  %v300 = vpack.c.b16 %v245, %v240
  %v301 = vpack.c.b16 %v246, %v241
  %v302 = vpack.c.b16 %v252, %v247
  %v303 = vpack.c.b16 %v253, %v248
  %v304 = vpack.c.b16 %v254, %v249
  %v305 = vpack.c.b16 %v255, %v250
  %v306 = vpack.c.b16 %v256, %v251
  %v307 = vpack.c.b16 %v262, %v257
  %v308 = vpack.c.b16 %v263, %v258
  %v309 = vpack.c.b16 %v264, %v259
  %v310 = vpack.c.b16 %v265, %v260
  %v311 = vpack.c.b16 %v266, %v261
  %v312 = vpack.c.b16 %v272, %v267
  %v313 = vpack.c.b16 %v273, %v268
  %v314 = vpack.c.b16 %v274, %v269
  %v315 = vpack.c.b16 %v275, %v270
  %v316 = vpack.c.b16 %v276, %v271
  %v437 = vunpack.c.l.b16 %v69
  %v438 = vunpack.c.l.b16 %v70
  %v439 = vunpack.c.l.b16 %v71
  %v440 = vunpack.c.l.b16 %v72
  %v441 = vunpack.c.l.b16 %v73
  %v442 = vunpack.c.l.b16 %v74
  %v443 = vunpack.c.l.b16 %v75
  %v444 = vunpack.c.l.b16 %v76
  %v445 = vunpack.c.l.b16 %v77
  %v446 = vunpack.c.l.b16 %v78
  %v447 = vunpack.c.l.b16 %v79
  %v448 = vunpack.c.l.b16 %v80
  %v449 = vunpack.c.l.b16 %v81
  %v450 = vunpack.c.l.b16 %v82
  %v451 = vunpack.c.l.b16 %v83
  %v452 = vunpack.c.l.b16 %v84
  %v453 = vunpack.c.l.b16 %v85
  %v454 = vunpack.c.l.b16 %v86
  %v455 = vunpack.c.l.b16 %v87
  %v456 = vunpack.c.l.b16 %v88
  %v457 = vunpack.c.l.b16 %v89
  %v458 = vunpack.c.l.b16 %v90
  %v459 = vunpack.c.l.b16 %v91
  %v460 = vunpack.c.l.b16 %v92
  %v461 = vunpack.c.l.b16 %v93
  %v462 = vunpack.c.l.b16 %v94
  %v463 = vunpack.c.l.b16 %v95
  %v464 = vunpack.c.l.b16 %v96
  %v465 = vunpack.c.l.b16 %v97
  %v466 = vunpack.c.l.b16 %v98
  %v467 = vunpack.c.l.b16 %v99
  %v468 = vunpack.c.l.b16 %v100
  %v469 = vunpack.c.l.b16 %v101
  %v470 = vunpack.c.l.b16 %v102
  %v471 = vunpack.c.l.b16 %v103
  %v472 = vunpack.c.l.b16 %v104
  %v473 = vunpack.c.l.b16 %v105
  %v474 = vunpack.c.l.b16 %v106
  %v475 = vunpack.c.l.b16 %v107
  %v476 = vunpack.c.l.b16 %v108
  %v477 = vunpack.c.l.b16 %v109
  %v478 = vunpack.c.l.b16 %v110
  %v479 = vunpack.c.l.b16 %v111
  %v480 = vunpack.c.l.b16 %v112
  %v481 = vunpack.c.l.b16 %v113
  %v482 = vunpack.c.l.b16 %v114
  %v483 = vunpack.c.l.b16 %v115
  %v484 = vunpack.c.l.b16 %v116
  %v485 = vunpack.c.l.b16 %v117
  %v486 = vunpack.c.l.b16 %v118
  %v487 = vunpack.c.l.b16 %v119
  %v488 = vunpack.c.l.b16 %v120
  %v489 = vunpack.c.l.b16 %v121
  %v490 = vunpack.c.l.b16 %v122
  %v491 = vunpack.c.l.b16 %v123
  %v492 = vunpack.c.l.b16 %v124
  %v493 = vunpack.c.l.b16 %v125
  %v494 = vunpack.c.l.b16 %v126
  %v495 = vunpack.c.l.b16 %v127
  %v496 = vunpack.c.l.b16 %v128
  %v497 = vunpack.c.l.b16 %v129
  %v498 = vunpack.c.l.b16 %v130
  %v499 = vunpack.c.l.b16 %v131
  %v500 = vunpack.c.l.b16 %v132
  %v501 = vunpack.c.l.b16 %v133
  %v502 = vunpack.c.l.b16 %v134
  %v503 = vunpack.c.l.b16 %v135
  %v504 = vunpack.c.l.b16 %v136
  %v505 = vunpack.c.l.b16 %v137
  %v506 = vunpack.c.l.b16 %v138
  %v507 = vunpack.c.l.b16 %v139
  %v508 = vunpack.c.l.b16 %v140
  %v509 = vunpack.c.l.b16 %v141
  %v510 = vunpack.c.l.b16 %v142
  %v511 = vunpack.c.l.b16 %v143
  %v512 = vunpack.c.l.b16 %v144
  %v513 = vunpack.c.l.b16 %v145
  %v514 = vunpack.c.l.b16 %v146
  %v515 = vunpack.c.l.b16 %v147
  %v516 = vunpack.c.l.b16 %v148
  %v517 = vpack.c.b16 %v438, %v437
  %v518 = vpack.c.b16 %v440, %v439
  %v519 = vpack.c.b16 %v442, %v441
  %v520 = vpack.c.b16 %v444, %v443
  %v521 = vpack.c.b16 %v446, %v445
  %v522 = vpack.c.b16 %v448, %v447
  %v523 = vpack.c.b16 %v450, %v449
  %v524 = vpack.c.b16 %v452, %v451
  %v525 = vpack.c.b16 %v454, %v453
  %v526 = vpack.c.b16 %v456, %v455
  %v527 = vpack.c.b16 %v458, %v457
  %v528 = vpack.c.b16 %v460, %v459
  %v529 = vpack.c.b16 %v462, %v461
  %v530 = vpack.c.b16 %v464, %v463
  %v531 = vpack.c.b16 %v466, %v465
  %v532 = vpack.c.b16 %v468, %v467
  %v533 = vpack.c.b16 %v470, %v469
  %v534 = vpack.c.b16 %v472, %v471
  %v535 = vpack.c.b16 %v474, %v473
  %v536 = vpack.c.b16 %v476, %v475
  %v537 = vpack.c.b16 %v478, %v477
  %v538 = vpack.c.b16 %v480, %v479
  %v539 = vpack.c.b16 %v482, %v481
  %v540 = vpack.c.b16 %v484, %v483
  %v541 = vpack.c.b16 %v486, %v485
  %v542 = vpack.c.b16 %v488, %v487
  %v543 = vpack.c.b16 %v490, %v489
  %v544 = vpack.c.b16 %v492, %v491
  %v545 = vpack.c.b16 %v494, %v493
  %v546 = vpack.c.b16 %v496, %v495
  %v547 = vpack.c.b16 %v498, %v497
  %v548 = vpack.c.b16 %v500, %v499
  %v549 = vpack.c.b16 %v502, %v501
  %v550 = vpack.c.b16 %v504, %v503
  %v551 = vpack.c.b16 %v506, %v505
  %v552 = vpack.c.b16 %v508, %v507
  %v553 = vpack.c.b16 %v510, %v509
  %v554 = vpack.c.b16 %v512, %v511
  %v555 = vpack.c.b16 %v514, %v513
  %v556 = vpack.c.b16 %v516, %v515
  %597 = vmatprep.subr.bf16.mxu0 0
  %598 = vmatpush1.bf16.msra.mxu0 %v524
  %599 = vmatprep.subr.bf16.mxu0 0
  %600 = vmatpush1.bf16.msra.mxu0 %v523
  %601 = vmatprep.subr.bf16.mxu0 0
  %602 = vmatpush1.bf16.msra.mxu0 %v522
  %603 = vmatprep.subr.bf16.mxu0 0
  %604 = vmatpush1.bf16.msra.mxu0 %v521
  %605 = vmatprep.subr.bf16.mxu0 0
  %606 = vmatpush1.bf16.msra.mxu0 %v520
  %607 = vmatprep.subr.bf16.mxu0 0
  %608 = vmatpush1.bf16.msra.mxu0 %v519
  %609 = vmatprep.subr.bf16.mxu0 0
  %610 = vmatpush1.bf16.msra.mxu0 %v518
  %611 = vmatprep.subr.bf16.mxu0 0
  %612 = vmatpush1.bf16.msra.mxu0 %v517
  %613 = vmatprep.subr.bf16.mxu0 0
  %614 = vmatpush2.bf16.msra.mxu0 %v532
  %615 = vmatprep.subr.bf16.mxu0 0
  %616 = vmatpush2.bf16.msra.mxu0 %v531
  %617 = vmatprep.subr.bf16.mxu0 0
  %618 = vmatpush2.bf16.msra.mxu0 %v530
  %619 = vmatprep.subr.bf16.mxu0 0
  %620 = vmatpush2.bf16.msra.mxu0 %v529
  %621 = vmatprep.subr.bf16.mxu0 0
  %622 = vmatpush2.bf16.msra.mxu0 %v528
  %623 = vmatprep.subr.bf16.mxu0 0
  %624 = vmatpush2.bf16.msra.mxu0 %v527
  %625 = vmatprep.subr.bf16.mxu0 0
  %626 = vmatpush2.bf16.msra.mxu0 %v526
  %627 = vmatprep.subr.bf16.mxu0 0
  %628 = vmatpush2.bf16.msra.mxu0 %v525
  %629 = vmatprep.mubr.bf16.mxu0 %v278
  %630 = vmatmul.mubr.bf16.gmra.mxu0 %v277
  %v631 = vpop.f32.mrf.mxu0
  %v632 = vadd.f32 0.0, %v631
  %v633 = vpop.f32.mrf.mxu0
  %v634 = vpop.f32.mrf.mxu0
  %v635 = vadd.f32 0.0, %v634
  %v636 = vpop.f32.mrf.mxu0
  %637 = vmatprep.mubr.bf16.mxu0 %v283
  %638 = vmatmul.mubr.bf16.gmra.mxu0 %v282
  %v639 = vpop.f32.mrf.mxu0
  %v640 = vadd.f32 0.0, %v639
  %v641 = vpop.f32.mrf.mxu0
  %v642 = vpop.f32.mrf.mxu0
  %v643 = vadd.f32 0.0, %v642
  %v644 = vpop.f32.mrf.mxu0
  %645 = vmatprep.mubr.bf16.mxu0 %v288
  %646 = vmatmul.mubr.bf16.gmra.mxu0 %v287
  %v647 = vpop.f32.mrf.mxu0
  %v648 = vadd.f32 0.0, %v647
  %v649 = vpop.f32.mrf.mxu0
  %v650 = vpop.f32.mrf.mxu0
  %v651 = vadd.f32 0.0, %v650
  %v652 = vpop.f32.mrf.mxu0
  %653 = vmatprep.mubr.bf16.mxu0 %v293
  %654 = vmatmul.mubr.bf16.gmra.mxu0 %v292
  %v655 = vpop.f32.mrf.mxu0
  %v656 = vadd.f32 0.0, %v655
  %v657 = vpop.f32.mrf.mxu0
  %v658 = vpop.f32.mrf.mxu0
  %v659 = vadd.f32 0.0, %v658
  %v660 = vpop.f32.mrf.mxu0
  %661 = vmatprep.mubr.bf16.mxu0 %v298
  %662 = vmatmul.mubr.bf16.gmra.mxu0 %v297
  %v663 = vpop.f32.mrf.mxu0
  %v664 = vadd.f32 0.0, %v663
  %v665 = vpop.f32.mrf.mxu0
  %v666 = vpop.f32.mrf.mxu0
  %v667 = vadd.f32 0.0, %v666
  %v668 = vpop.f32.mrf.mxu0
  %669 = vmatprep.mubr.bf16.mxu0 %v303
  %670 = vmatmul.mubr.bf16.gmra.mxu0 %v302
  %v671 = vpop.f32.mrf.mxu0
  %v672 = vadd.f32 0.0, %v671
  %v673 = vpop.f32.mrf.mxu0
  %v674 = vpop.f32.mrf.mxu0
  %v675 = vadd.f32 0.0, %v674
  %v676 = vpop.f32.mrf.mxu0
  %677 = vmatprep.mubr.bf16.mxu0 %v308
  %678 = vmatmul.mubr.bf16.gmra.mxu0 %v307
  %v679 = vpop.f32.mrf.mxu0
  %v680 = vadd.f32 0.0, %v679
  %v681 = vpop.f32.mrf.mxu0
  %v682 = vpop.f32.mrf.mxu0
  %v683 = vadd.f32 0.0, %v682
  %v684 = vpop.f32.mrf.mxu0
  %685 = vmatprep.mubr.bf16.mxu0 %v313
  %686 = vmatmul.mubr.bf16.gmra.mxu0 %v312
  %v687 = vpop.f32.mrf.mxu0
  %v688 = vadd.f32 0.0, %v687
  %v689 = vpop.f32.mrf.mxu0
  %v690 = vpop.f32.mrf.mxu0
  %v691 = vadd.f32 0.0, %v690
  %v692 = vpop.f32.mrf.mxu0
  %693 = vdwg.mxu0
  %694 = vmatprep.subr.bf16.mxu0 0
  %695 = vmatpush1.bf16.msra.mxu0 %v540
  %696 = vmatprep.subr.bf16.mxu0 0
  %697 = vmatpush1.bf16.msra.mxu0 %v539
  %698 = vmatprep.subr.bf16.mxu0 0
  %699 = vmatpush1.bf16.msra.mxu0 %v538
  %700 = vmatprep.subr.bf16.mxu0 0
  %701 = vmatpush1.bf16.msra.mxu0 %v537
  %702 = vmatprep.subr.bf16.mxu0 0
  %703 = vmatpush1.bf16.msra.mxu0 %v536
  %704 = vmatprep.subr.bf16.mxu0 0
  %705 = vmatpush1.bf16.msra.mxu0 %v535
  %706 = vmatprep.subr.bf16.mxu0 0
  %707 = vmatpush1.bf16.msra.mxu0 %v534
  %708 = vmatprep.subr.bf16.mxu0 0
  %709 = vmatpush1.bf16.msra.mxu0 %v533
  %710 = vmatprep.subr.bf16.mxu0 0
  %711 = vmatpush2.bf16.msra.mxu0 %v548
  %712 = vmatprep.subr.bf16.mxu0 0
  %713 = vmatpush2.bf16.msra.mxu0 %v547
  %714 = vmatprep.subr.bf16.mxu0 0
  %715 = vmatpush2.bf16.msra.mxu0 %v546
  %716 = vmatprep.subr.bf16.mxu0 0
  %717 = vmatpush2.bf16.msra.mxu0 %v545
  %718 = vmatprep.subr.bf16.mxu0 0
  %719 = vmatpush2.bf16.msra.mxu0 %v544
  %720 = vmatprep.subr.bf16.mxu0 0
  %721 = vmatpush2.bf16.msra.mxu0 %v543
  %722 = vmatprep.subr.bf16.mxu0 0
  %723 = vmatpush2.bf16.msra.mxu0 %v542
  %724 = vmatprep.subr.bf16.mxu0 0
  %725 = vmatpush2.bf16.msra.mxu0 %v541
  %726 = vmatprep.mubr.bf16.mxu0 %v280
  %727 = vmatmul.mubr.bf16.gmra.mxu0 %v279
  %v728 = vpop.f32.mrf.mxu0
  %v729 = vadd.f32 %v632, %v728
  %v730 = vpop.f32.mrf.mxu0
  %v731 = vpop.f32.mrf.mxu0
  %v732 = vadd.f32 %v635, %v731
  %v733 = vpop.f32.mrf.mxu0
  %734 = vmatprep.mubr.bf16.mxu0 %v285
  %735 = vmatmul.mubr.bf16.gmra.mxu0 %v284
  %v736 = vpop.f32.mrf.mxu0
  %v737 = vadd.f32 %v640, %v736
  %v738 = vpop.f32.mrf.mxu0
  %v739 = vpop.f32.mrf.mxu0
  %v740 = vadd.f32 %v643, %v739
  %v741 = vpop.f32.mrf.mxu0
  %742 = vmatprep.mubr.bf16.mxu0 %v290
  %743 = vmatmul.mubr.bf16.gmra.mxu0 %v289
  %v744 = vpop.f32.mrf.mxu0
  %v745 = vadd.f32 %v648, %v744
  %v746 = vpop.f32.mrf.mxu0
  %v747 = vpop.f32.mrf.mxu0
  %v748 = vadd.f32 %v651, %v747
  %v749 = vpop.f32.mrf.mxu0
  %750 = vmatprep.mubr.bf16.mxu0 %v295
  %751 = vmatmul.mubr.bf16.gmra.mxu0 %v294
  %v752 = vpop.f32.mrf.mxu0
  %v753 = vadd.f32 %v656, %v752
  %v754 = vpop.f32.mrf.mxu0
  %v755 = vpop.f32.mrf.mxu0
  %v756 = vadd.f32 %v659, %v755
  %v757 = vpop.f32.mrf.mxu0
  %758 = vmatprep.mubr.bf16.mxu0 %v300
  %759 = vmatmul.mubr.bf16.gmra.mxu0 %v299
  %v760 = vpop.f32.mrf.mxu0
  %v761 = vadd.f32 %v664, %v760
  %v762 = vpop.f32.mrf.mxu0
  %v763 = vpop.f32.mrf.mxu0
  %v764 = vadd.f32 %v667, %v763
  %v765 = vpop.f32.mrf.mxu0
  %766 = vmatprep.mubr.bf16.mxu0 %v305
  %767 = vmatmul.mubr.bf16.gmra.mxu0 %v304
  %v768 = vpop.f32.mrf.mxu0
  %v769 = vadd.f32 %v672, %v768
  %v770 = vpop.f32.mrf.mxu0
  %v771 = vpop.f32.mrf.mxu0
  %v772 = vadd.f32 %v675, %v771
  %v773 = vpop.f32.mrf.mxu0
  %774 = vmatprep.mubr.bf16.mxu0 %v310
  %775 = vmatmul.mubr.bf16.gmra.mxu0 %v309
  %v776 = vpop.f32.mrf.mxu0
  %v777 = vadd.f32 %v680, %v776
  %v778 = vpop.f32.mrf.mxu0
  %v779 = vpop.f32.mrf.mxu0
  %v780 = vadd.f32 %v683, %v779
  %v781 = vpop.f32.mrf.mxu0
  %782 = vmatprep.mubr.bf16.mxu0 %v315
  %783 = vmatmul.mubr.bf16.gmra.mxu0 %v314
  %v784 = vpop.f32.mrf.mxu0
  %v785 = vadd.f32 %v688, %v784
  %v786 = vpop.f32.mrf.mxu0
  %v787 = vpop.f32.mrf.mxu0
  %v788 = vadd.f32 %v691, %v787
  %v789 = vpop.f32.mrf.mxu0
  %790 = vdwg.mxu0
  %791 = vmatprep.subr.bf16.mxu0 0
  %792 = vmatpush1.bf16.msra.mxu0 %v556
  %793 = vmatprep.subr.bf16.mxu0 0
  %794 = vmatpush1.bf16.msra.mxu0 %v555
  %795 = vmatprep.subr.bf16.mxu0 0
  %796 = vmatpush1.bf16.msra.mxu0 %v554
  %797 = vmatprep.subr.bf16.mxu0 0
  %798 = vmatpush1.bf16.msra.mxu0 %v553
  %799 = vmatprep.subr.bf16.mxu0 0
  %800 = vmatpush1.bf16.msra.mxu0 %v552
  %801 = vmatprep.subr.bf16.mxu0 0
  %802 = vmatpush1.bf16.msra.mxu0 %v551
  %803 = vmatprep.subr.bf16.mxu0 0
  %804 = vmatpush1.bf16.msra.mxu0 %v550
  %805 = vmatprep.subr.bf16.mxu0 0
  %806 = vmatpush1.bf16.msra.mxu0 %v549
  %807 = vmatprep.subr.bf16.mxu0 0
  %808 = vmatpush2.bf16.msra.mxu0 0
  %809 = vmatprep.subr.bf16.mxu0 0
  %810 = vmatpush2.bf16.msra.mxu0 0
  %811 = vmatprep.subr.bf16.mxu0 0
  %812 = vmatpush2.bf16.msra.mxu0 0
  %813 = vmatprep.subr.bf16.mxu0 0
  %814 = vmatpush2.bf16.msra.mxu0 0
  %815 = vmatprep.subr.bf16.mxu0 0
  %816 = vmatpush2.bf16.msra.mxu0 0
  %817 = vmatprep.subr.bf16.mxu0 0
  %818 = vmatpush2.bf16.msra.mxu0 0
  %819 = vmatprep.subr.bf16.mxu0 0
  %820 = vmatpush2.bf16.msra.mxu0 0
  %821 = vmatprep.subr.bf16.mxu0 0
  %822 = vmatpush2.bf16.msra.mxu0 0
  %823 = vmatprep.mubr.bf16.mxu0 0
  %824 = vmatmul.mubr.bf16.gmra.mxu0 %v281
  %v825 = vpop.f32.mrf.mxu0
  %v826 = vadd.f32 %v729, %v825
  %v827 = vpop.f32.mrf.mxu0
  %v828 = vpop.f32.mrf.mxu0
  %v829 = vadd.f32 %v732, %v828
  %v830 = vpop.f32.mrf.mxu0
  %831 = vmatprep.mubr.bf16.mxu0 0
  %832 = vmatmul.mubr.bf16.gmra.mxu0 %v286
  %v833 = vpop.f32.mrf.mxu0
  %v834 = vadd.f32 %v737, %v833
  %v835 = vpop.f32.mrf.mxu0
  %v836 = vpop.f32.mrf.mxu0
  %v837 = vadd.f32 %v740, %v836
  %v838 = vpop.f32.mrf.mxu0
  %839 = vmatprep.mubr.bf16.mxu0 0
  %840 = vmatmul.mubr.bf16.gmra.mxu0 %v291
  %v841 = vpop.f32.mrf.mxu0
  %v842 = vadd.f32 %v745, %v841
  %v843 = vpop.f32.mrf.mxu0
  %v844 = vpop.f32.mrf.mxu0
  %v845 = vadd.f32 %v748, %v844
  %v846 = vpop.f32.mrf.mxu0
  %847 = vmatprep.mubr.bf16.mxu0 0
  %848 = vmatmul.mubr.bf16.gmra.mxu0 %v296
  %v849 = vpop.f32.mrf.mxu0
  %v850 = vadd.f32 %v753, %v849
  %v851 = vpop.f32.mrf.mxu0
  %v852 = vpop.f32.mrf.mxu0
  %v853 = vadd.f32 %v756, %v852
  %v854 = vpop.f32.mrf.mxu0
  %855 = vmatprep.mubr.bf16.mxu0 0
  %856 = vmatmul.mubr.bf16.gmra.mxu0 %v301
  %v857 = vpop.f32.mrf.mxu0
  %v858 = vadd.f32 %v761, %v857
  %v859 = vpop.f32.mrf.mxu0
  %v860 = vpop.f32.mrf.mxu0
  %v861 = vadd.f32 %v764, %v860
  %v862 = vpop.f32.mrf.mxu0
  %863 = vmatprep.mubr.bf16.mxu0 0
  %864 = vmatmul.mubr.bf16.gmra.mxu0 %v306
  %v865 = vpop.f32.mrf.mxu0
  %v866 = vadd.f32 %v769, %v865
  %v867 = vpop.f32.mrf.mxu0
  %v868 = vpop.f32.mrf.mxu0
  %v869 = vadd.f32 %v772, %v868
  %v870 = vpop.f32.mrf.mxu0
  %871 = vmatprep.mubr.bf16.mxu0 0
  %872 = vmatmul.mubr.bf16.gmra.mxu0 %v311
  %v873 = vpop.f32.mrf.mxu0
  %v874 = vadd.f32 %v777, %v873
  %v875 = vpop.f32.mrf.mxu0
  %v876 = vpop.f32.mrf.mxu0
  %v877 = vadd.f32 %v780, %v876
  %v878 = vpop.f32.mrf.mxu0
  %879 = vmatprep.mubr.bf16.mxu0 0
  %880 = vmatmul.mubr.bf16.gmra.mxu0 %v316
  %v881 = vpop.f32.mrf.mxu0
  %v882 = vadd.f32 %v785, %v881
  %v883 = vpop.f32.mrf.mxu0
  %v884 = vpop.f32.mrf.mxu0
  %v885 = vadd.f32 %v788, %v884
  %v886 = vpop.f32.mrf.mxu0
  %887 = vdwg.mxu0
  %v888 = vld [vmem:[%s3] sm:$0x1]
  %v890 = vlaneseq
  %v891 = vshrl.u32 %v890, 7
  %v892 = vsub.s32 0, %v891
  %v893 = vrot.slane %v888, %v892
  %v895 = vmul.f32 %v826, %v893
  %v896 = vmul.f32 %v829, %v893
  %v897 = vmul.f32 %v834, %v893
  %v898 = vmul.f32 %v837, %v893
  %v899 = vmul.f32 %v842, %v893
  %v900 = vmul.f32 %v845, %v893
  %v901 = vmul.f32 %v850, %v893
  %v902 = vmul.f32 %v853, %v893
  %v903 = vmul.f32 %v858, %v893
  %v904 = vmul.f32 %v861, %v893
  %v905 = vmul.f32 %v866, %v893
  %v906 = vmul.f32 %v869, %v893
  %v907 = vmul.f32 %v874, %v893
  %v908 = vmul.f32 %v877, %v893
  %v909 = vmul.f32 %v882, %v893
  %v910 = vmul.f32 %v885, %v893
  %v911 = vld [vmem:[%s2] sm:$0x1]
  %v913 = vlaneseq
  %v914 = vshrl.u32 %v913, 7
  %v915 = vsub.s32 0, %v914
  %v916 = vrot.slane %v911, %v915
  %v918 = vadd.f32 %v895, %v916
  %v919 = vadd.f32 %v896, %v916
  %v920 = vadd.f32 %v897, %v916
  %v921 = vadd.f32 %v898, %v916
  %v922 = vadd.f32 %v899, %v916
  %v923 = vadd.f32 %v900, %v916
  %v924 = vadd.f32 %v901, %v916
  %v925 = vadd.f32 %v902, %v916
  %v926 = vadd.f32 %v903, %v916
  %v927 = vadd.f32 %v904, %v916
  %v928 = vadd.f32 %v905, %v916
  %v929 = vadd.f32 %v906, %v916
  %v930 = vadd.f32 %v907, %v916
  %v931 = vadd.f32 %v908, %v916
  %v932 = vadd.f32 %v909, %v916
  %v933 = vadd.f32 %v910, %v916
  %v934 = vld [vmem:[%s4] sm:$0xf]
  %v935 = vld [vmem:[%s4 + $0x4] sm:$0xf]
  %v936 = vld [vmem:[%s4 + $0x8] sm:$0xf]
  %v937 = vld [vmem:[%s4 + $0xc] sm:$0xf]
  %v938 = vld [vmem:[%s4 + $0x10] sm:$0xf]
  %v939 = vld [vmem:[%s4 + $0x14] sm:$0xf]
  %v940 = vld [vmem:[%s4 + $0x18] sm:$0xf]
  %v941 = vld [vmem:[%s4 + $0x1c] sm:$0xf]
  %v942 = vld [vmem:[%s4 + $0x20] sm:$0xf]
  %v943 = vld [vmem:[%s4 + $0x24] sm:$0xf]
  %v944 = vld [vmem:[%s4 + $0x28] sm:$0xf]
  %v945 = vld [vmem:[%s4 + $0x2c] sm:$0xf]
  %v946 = vld [vmem:[%s4 + $0x30] sm:$0xf]
  %v947 = vld [vmem:[%s4 + $0x34] sm:$0xf]
  %v948 = vld [vmem:[%s4 + $0x38] sm:$0xf]
  %v949 = vld [vmem:[%s4 + $0x3c] sm:$0xf]
  %v950 = vunpack.c.l.bf16 %v934
  %v951 = vunpack.c.l.bf16 %v935
  %v952 = vunpack.c.l.bf16 %v936
  %v953 = vunpack.c.l.bf16 %v937
  %v954 = vunpack.c.l.bf16 %v938
  %v955 = vunpack.c.l.bf16 %v939
  %v956 = vunpack.c.l.bf16 %v940
  %v957 = vunpack.c.l.bf16 %v941
  %v958 = vunpack.c.l.bf16 %v942
  %v959 = vunpack.c.l.bf16 %v943
  %v960 = vunpack.c.l.bf16 %v944
  %v961 = vunpack.c.l.bf16 %v945
  %v962 = vunpack.c.l.bf16 %v946
  %v963 = vunpack.c.l.bf16 %v947
  %v964 = vunpack.c.l.bf16 %v948
  %v965 = vunpack.c.l.bf16 %v949
  %v966 = vadd.f32 %v918, %v950
  %v967 = vadd.f32 %v919, %v951
  %v968 = vadd.f32 %v920, %v952
  %v969 = vadd.f32 %v921, %v953
  %v970 = vadd.f32 %v922, %v954
  %v971 = vadd.f32 %v923, %v955
  %v972 = vadd.f32 %v924, %v956
  %v973 = vadd.f32 %v925, %v957
  %v974 = vadd.f32 %v926, %v958
  %v975 = vadd.f32 %v927, %v959
  %v976 = vadd.f32 %v928, %v960
  %v977 = vadd.f32 %v929, %v961
  %v978 = vadd.f32 %v930, %v962
  %v979 = vadd.f32 %v931, %v963
  %v980 = vadd.f32 %v932, %v964
  %v981 = vadd.f32 %v933, %v965
  %v982 = vmax.f32 %v966, 0.0
  %v983 = vmax.f32 %v967, 0.0
  %v984 = vmax.f32 %v968, 0.0
  %v985 = vmax.f32 %v969, 0.0
  %v986 = vmax.f32 %v970, 0.0
  %v987 = vmax.f32 %v971, 0.0
  %v988 = vmax.f32 %v972, 0.0
  %v989 = vmax.f32 %v973, 0.0
  %v990 = vmax.f32 %v974, 0.0
  %v991 = vmax.f32 %v975, 0.0
  %v992 = vmax.f32 %v976, 0.0
  %v993 = vmax.f32 %v977, 0.0
  %v994 = vmax.f32 %v978, 0.0
  %v995 = vmax.f32 %v979, 0.0
  %v996 = vmax.f32 %v980, 0.0
  %v997 = vmax.f32 %v981, 0.0
  %v998 = vpack.c.bf16 %v983, %v982
  %v999 = vpack.c.bf16 %v985, %v984
  %v1000 = vpack.c.bf16 %v987, %v986
  %v1001 = vpack.c.bf16 %v989, %v988
  %v1002 = vpack.c.bf16 %v991, %v990
  %v1003 = vpack.c.bf16 %v993, %v992
  %v1004 = vpack.c.bf16 %v995, %v994
  %v1005 = vpack.c.bf16 %v997, %v996
  %v1014 = vunpack.c.l.b16 %v998
  %v1015 = vunpack.c.h.b16 %v998
  %v1016 = vunpack.c.l.b16 %v999
  %v1017 = vunpack.c.h.b16 %v999
  %v1018 = vunpack.c.l.b16 %v1000
  %v1019 = vunpack.c.h.b16 %v1000
  %v1020 = vunpack.c.l.b16 %v1001
  %v1021 = vunpack.c.h.b16 %v1001
  %v1022 = vunpack.c.l.b16 %v1002
  %v1023 = vunpack.c.h.b16 %v1002
  %v1024 = vunpack.c.l.b16 %v1003
  %v1025 = vunpack.c.h.b16 %v1003
  %v1026 = vunpack.c.l.b16 %v1004
  %v1027 = vunpack.c.h.b16 %v1004
  %v1028 = vunpack.c.l.b16 %v1005
  %v1029 = vunpack.c.h.b16 %v1005
  %v1030 = vpack.c.b16 %v1014, %v1014
  %v1031 = vpack.c.b16 %v1015, %v1015
  %v1032 = vpack.c.b16 %v1016, %v1016
  %v1033 = vpack.c.b16 %v1017, %v1017
  %v1034 = vpack.c.b16 %v1018, %v1018
  %v1035 = vpack.c.b16 %v1019, %v1019
  %v1036 = vpack.c.b16 %v1020, %v1020
  %v1037 = vpack.c.b16 %v1021, %v1021
  %v1038 = vpack.c.b16 %v1022, %v1022
  %v1039 = vpack.c.b16 %v1023, %v1023
  %v1040 = vpack.c.b16 %v1024, %v1024
  %v1041 = vpack.c.b16 %v1025, %v1025
  %v1042 = vpack.c.b16 %v1026, %v1026
  %v1043 = vpack.c.b16 %v1027, %v1027
  %v1044 = vpack.c.b16 %v1028, %v1028
  %v1045 = vpack.c.b16 %v1029, %v1029
  %1062 = vst [vmem:[%s5] sm:$0xf] %v1030
  %1063 = vst [vmem:[%s5 + $0x4] sm:$0xf] %v1031
  %1064 = vst [vmem:[%s5 + $0x8] sm:$0xf] %v1032
  %1065 = vst [vmem:[%s5 + $0xc] sm:$0xf] %v1033
  %1066 = vst [vmem:[%s5 + $0x10] sm:$0xf] %v1034
  %1067 = vst [vmem:[%s5 + $0x14] sm:$0xf] %v1035
  %1068 = vst [vmem:[%s5 + $0x18] sm:$0xf] %v1036
  %1069 = vst [vmem:[%s5 + $0x1c] sm:$0xf] %v1037
  %1070 = vst [vmem:[%s5 + $0x20] sm:$0xf] %v1038
  %1071 = vst [vmem:[%s5 + $0x24] sm:$0xf] %v1039
  %1072 = vst [vmem:[%s5 + $0x28] sm:$0xf] %v1040
  %1073 = vst [vmem:[%s5 + $0x2c] sm:$0xf] %v1041
  %1074 = vst [vmem:[%s5 + $0x30] sm:$0xf] %v1042
  %1075 = vst [vmem:[%s5 + $0x34] sm:$0xf] %v1043
  %1076 = vst [vmem:[%s5 + $0x38] sm:$0xf] %v1044
  %1077 = vst [vmem:[%s5 + $0x3c] sm:$0xf] %v1045
  // Predicated region
  $region22: #{forward.19} parent=0 // pred_check
    _
  $region23: #{forward.19} parent=0 // pred_check_branch
    %1079 = sbr.rel (0) target = $region25
  $region24: #{forward.19} parent=0 // pred_region
    _
  $region25: #{forward.19} parent=0 // pred_fallthru
    _
  // Predicated region
  $region26: #{forward.19} parent=0 // pred_check
    _
  $region27: #{forward.19} parent=0 // pred_check_branch
    %1081 = sbr.rel (0) target = $region29
  $region28: #{forward.19} parent=0 // pred_region
    _
  $region29: #{forward.19} parent=0 // pred_fallthru
    _

// kernel: forward.18
$region0: #{forward.18}
  #allocation0 [shape = 'u32[]', space=smem, size = 0x4, offset = 0x4, fixed_abs, tag = 'smem constant byte address 0x4 - core index']
  #allocation1 [shape = 'u32[144,128]{1,0:T(1,128)}', space=vmem, size = 0x12000, scoped, tag = 'internal scratch']
  %s0 = inlined_call_operand.vmem [shape: bf16[128,640], index: 0, kind: input, shape index: {}]
  %s1 = inlined_call_operand.vmem [shape: bf16[640,128], index: 1, kind: input, shape index: {}]
  %s2 = inlined_call_operand.vmem [shape: f32[1,128], index: 2, kind: input, shape index: {}]
  %s3 = inlined_call_operand.vmem [shape: f32[1,128], index: 3, kind: input, shape index: {}]
  %s4 = inlined_call_operand.vmem [shape: bf16[128,128], index: 4, kind: output, shape index: {}]
  %s5 = sld [smem:[#allocation0]]
  $region26: #{forward.18} parent=0
    _
  %s7 = ssub.s32 1, %s5
  %s8 = scalar_select 0, %s7, %s5
  // Predicated region
  $region2: #{forward.18} parent=0 // pred_check
    _
  $region3: #{forward.18} parent=0 // pred_check_branch
    %10 = sbr.rel (0) target = $region5
  $region4: #{forward.18} parent=0 // pred_region
    _
  $region5: #{forward.18} parent=0 // pred_fallthru
    _
  // Predicated region
  $region6: #{forward.18} parent=0 // pred_check
    _
  $region7: #{forward.18} parent=0 // pred_check_branch
    %12 = sbr.rel (0) target = $region9
  $region8: #{forward.18} parent=0 // pred_region
    _
  $region9: #{forward.18} parent=0 // pred_fallthru
    _
  // Predicated region
  $region10: #{forward.18} parent=0 // pred_check
    _
  $region11: #{forward.18} parent=0 // pred_check_branch
    %14 = sbr.rel (0) target = $region13
  $region12: #{forward.18} parent=0 // pred_region
    _
  $region13: #{forward.18} parent=0 // pred_fallthru
    _
  // Predicated region
  $region14: #{forward.18} parent=0 // pred_check
    _
  $region15: #{forward.18} parent=0 // pred_check_branch
    %16 = sbr.rel (0) target = $region17
  $region16: #{forward.18} parent=0 // pred_region
    _
  $region17: #{forward.18} parent=0 // pred_fallthru
    _
  %v18 = vld [vmem:[%s0] sm:$0xff]
  %v19 = vld [vmem:[%s0 + $0x8] sm:$0xff]
  %v20 = vld [vmem:[%s0 + $0x10] sm:$0xf]
  %v21 = vld [vmem:[%s0 + $0x14] sm:$0xff]
  %v22 = vld [vmem:[%s0 + $0x1c] sm:$0xff]
  %v23 = vld [vmem:[%s0 + $0x24] sm:$0xf]
  %v24 = vld [vmem:[%s0 + $0x28] sm:$0xff]
  %v25 = vld [vmem:[%s0 + $0x30] sm:$0xff]
  %v26 = vld [vmem:[%s0 + $0x38] sm:$0xf]
  %v27 = vld [vmem:[%s0 + $0x3c] sm:$0xff]
  %v28 = vld [vmem:[%s0 + $0x44] sm:$0xff]
  %v29 = vld [vmem:[%s0 + $0x4c] sm:$0xf]
  %v30 = vld [vmem:[%s0 + $0x50] sm:$0xff]
  %v31 = vld [vmem:[%s0 + $0x58] sm:$0xff]
  %v32 = vld [vmem:[%s0 + $0x60] sm:$0xf]
  %v33 = vld [vmem:[%s0 + $0x64] sm:$0xff]
  %v34 = vld [vmem:[%s0 + $0x6c] sm:$0xff]
  %v35 = vld [vmem:[%s0 + $0x74] sm:$0xf]
  %v36 = vld [vmem:[%s0 + $0x78] sm:$0xff]
  %v37 = vld [vmem:[%s0 + $0x80] sm:$0xff]
  %v38 = vld [vmem:[%s0 + $0x88] sm:$0xf]
  %v39 = vld [vmem:[%s0 + $0x8c] sm:$0xff]
  %v40 = vld [vmem:[%s0 + $0x94] sm:$0xff]
  %v41 = vld [vmem:[%s0 + $0x9c] sm:$0xf]
  %v42 = vld [vmem:[%s0 + $0xa0] sm:$0xff]
  %v43 = vld [vmem:[%s0 + $0xa8] sm:$0xff]
  %v44 = vld [vmem:[%s0 + $0xb0] sm:$0xf]
  %v45 = vld [vmem:[%s0 + $0xb4] sm:$0xff]
  %v46 = vld [vmem:[%s0 + $0xbc] sm:$0xff]
  %v47 = vld [vmem:[%s0 + $0xc4] sm:$0xf]
  %v48 = vld [vmem:[%s0 + $0xc8] sm:$0xff]
  %v49 = vld [vmem:[%s0 + $0xd0] sm:$0xff]
  %v50 = vld [vmem:[%s0 + $0xd8] sm:$0xf]
  %v51 = vld [vmem:[%s0 + $0xdc] sm:$0xff]
  %v52 = vld [vmem:[%s0 + $0xe4] sm:$0xff]
  %v53 = vld [vmem:[%s0 + $0xec] sm:$0xf]
  %v54 = vld [vmem:[%s0 + $0xf0] sm:$0xff]
  %v55 = vld [vmem:[%s0 + $0xf8] sm:$0xff]
  %v56 = vld [vmem:[%s0 + $0x100] sm:$0xf]
  %v57 = vld [vmem:[%s0 + $0x104] sm:$0xff]
  %v58 = vld [vmem:[%s0 + $0x10c] sm:$0xff]
  %v59 = vld [vmem:[%s0 + $0x114] sm:$0xf]
  %v60 = vld [vmem:[%s0 + $0x118] sm:$0xff]
  %v61 = vld [vmem:[%s0 + $0x120] sm:$0xff]
  %v62 = vld [vmem:[%s0 + $0x128] sm:$0xf]
  %v63 = vld [vmem:[%s0 + $0x12c] sm:$0xff]
  %v64 = vld [vmem:[%s0 + $0x134] sm:$0xff]
  %v65 = vld [vmem:[%s0 + $0x13c] sm:$0xf]
  %v66 = vld [vmem:[%s1] sm:$0xf]
  %v67 = vld [vmem:[%s1 + $0x4] sm:$0xf]
  %v68 = vld [vmem:[%s1 + $0x8] sm:$0xf]
  %v69 = vld [vmem:[%s1 + $0xc] sm:$0xf]
  %v70 = vld [vmem:[%s1 + $0x10] sm:$0xf]
  %v71 = vld [vmem:[%s1 + $0x14] sm:$0xf]
  %v72 = vld [vmem:[%s1 + $0x18] sm:$0xf]
  %v73 = vld [vmem:[%s1 + $0x1c] sm:$0xf]
  %v74 = vld [vmem:[%s1 + $0x20] sm:$0xf]
  %v75 = vld [vmem:[%s1 + $0x24] sm:$0xf]
  %v76 = vld [vmem:[%s1 + $0x28] sm:$0xf]
  %v77 = vld [vmem:[%s1 + $0x2c] sm:$0xf]
  %v78 = vld [vmem:[%s1 + $0x30] sm:$0xf]
  %v79 = vld [vmem:[%s1 + $0x34] sm:$0xf]
  %v80 = vld [vmem:[%s1 + $0x38] sm:$0xf]
  %v81 = vld [vmem:[%s1 + $0x3c] sm:$0xf]
  %v82 = vld [vmem:[%s1 + $0x40] sm:$0xf]
  %v83 = vld [vmem:[%s1 + $0x44] sm:$0xf]
  %v84 = vld [vmem:[%s1 + $0x48] sm:$0xf]
  %v85 = vld [vmem:[%s1 + $0x4c] sm:$0xf]
  %v86 = vld [vmem:[%s1 + $0x50] sm:$0xf]
  %v87 = vld [vmem:[%s1 + $0x54] sm:$0xf]
  %v88 = vld [vmem:[%s1 + $0x58] sm:$0xf]
  %v89 = vld [vmem:[%s1 + $0x5c] sm:$0xf]
  %v90 = vld [vmem:[%s1 + $0x60] sm:$0xf]
  %v91 = vld [vmem:[%s1 + $0x64] sm:$0xf]
  %v92 = vld [vmem:[%s1 + $0x68] sm:$0xf]
  %v93 = vld [vmem:[%s1 + $0x6c] sm:$0xf]
  %v94 = vld [vmem:[%s1 + $0x70] sm:$0xf]
  %v95 = vld [vmem:[%s1 + $0x74] sm:$0xf]
  %v96 = vld [vmem:[%s1 + $0x78] sm:$0xf]
  %v97 = vld [vmem:[%s1 + $0x7c] sm:$0xf]
  %v98 = vld [vmem:[%s1 + $0x80] sm:$0xf]
  %v99 = vld [vmem:[%s1 + $0x84] sm:$0xf]
  %v100 = vld [vmem:[%s1 + $0x88] sm:$0xf]
  %v101 = vld [vmem:[%s1 + $0x8c] sm:$0xf]
  %v102 = vld [vmem:[%s1 + $0x90] sm:$0xf]
  %v103 = vld [vmem:[%s1 + $0x94] sm:$0xf]
  %v104 = vld [vmem:[%s1 + $0x98] sm:$0xf]
  %v105 = vld [vmem:[%s1 + $0x9c] sm:$0xf]
  %v106 = vld [vmem:[%s1 + $0xa0] sm:$0xf]
  %v107 = vld [vmem:[%s1 + $0xa4] sm:$0xf]
  %v108 = vld [vmem:[%s1 + $0xa8] sm:$0xf]
  %v109 = vld [vmem:[%s1 + $0xac] sm:$0xf]
  %v110 = vld [vmem:[%s1 + $0xb0] sm:$0xf]
  %v111 = vld [vmem:[%s1 + $0xb4] sm:$0xf]
  %v112 = vld [vmem:[%s1 + $0xb8] sm:$0xf]
  %v113 = vld [vmem:[%s1 + $0xbc] sm:$0xf]
  %v114 = vld [vmem:[%s1 + $0xc0] sm:$0xf]
  %v115 = vld [vmem:[%s1 + $0xc4] sm:$0xf]
  %v116 = vld [vmem:[%s1 + $0xc8] sm:$0xf]
  %v117 = vld [vmem:[%s1 + $0xcc] sm:$0xf]
  %v118 = vld [vmem:[%s1 + $0xd0] sm:$0xf]
  %v119 = vld [vmem:[%s1 + $0xd4] sm:$0xf]
  %v120 = vld [vmem:[%s1 + $0xd8] sm:$0xf]
  %v121 = vld [vmem:[%s1 + $0xdc] sm:$0xf]
  %v122 = vld [vmem:[%s1 + $0xe0] sm:$0xf]
  %v123 = vld [vmem:[%s1 + $0xe4] sm:$0xf]
  %v124 = vld [vmem:[%s1 + $0xe8] sm:$0xf]
  %v125 = vld [vmem:[%s1 + $0xec] sm:$0xf]
  %v126 = vld [vmem:[%s1 + $0xf0] sm:$0xf]
  %v127 = vld [vmem:[%s1 + $0xf4] sm:$0xf]
  %v128 = vld [vmem:[%s1 + $0xf8] sm:$0xf]
  %v129 = vld [vmem:[%s1 + $0xfc] sm:$0xf]
  %v130 = vld [vmem:[%s1 + $0x100] sm:$0xf]
  %v131 = vld [vmem:[%s1 + $0x104] sm:$0xf]
  %v132 = vld [vmem:[%s1 + $0x108] sm:$0xf]
  %v133 = vld [vmem:[%s1 + $0x10c] sm:$0xf]
  %v134 = vld [vmem:[%s1 + $0x110] sm:$0xf]
  %v135 = vld [vmem:[%s1 + $0x114] sm:$0xf]
  %v136 = vld [vmem:[%s1 + $0x118] sm:$0xf]
  %v137 = vld [vmem:[%s1 + $0x11c] sm:$0xf]
  %v138 = vld [vmem:[%s1 + $0x120] sm:$0xf]
  %v139 = vld [vmem:[%s1 + $0x124] sm:$0xf]
  %v140 = vld [vmem:[%s1 + $0x128] sm:$0xf]
  %v141 = vld [vmem:[%s1 + $0x12c] sm:$0xf]
  %v142 = vld [vmem:[%s1 + $0x130] sm:$0xf]
  %v143 = vld [vmem:[%s1 + $0x134] sm:$0xf]
  %v144 = vld [vmem:[%s1 + $0x138] sm:$0xf]
  %v145 = vld [vmem:[%s1 + $0x13c] sm:$0xf]
  %v194 = vunpack.c.l.b16 %v18
  %v195 = vunpack.c.h.b16 %v18
  %v196 = vunpack.c.l.b16 %v19
  %v197 = vunpack.c.h.b16 %v19
  %v198 = vunpack.c.l.b16 %v20
  %v199 = vunpack.c.l.b16 %v21
  %v200 = vunpack.c.h.b16 %v21
  %v201 = vunpack.c.l.b16 %v22
  %v202 = vunpack.c.h.b16 %v22
  %v203 = vunpack.c.l.b16 %v23
  %v204 = vunpack.c.l.b16 %v24
  %v205 = vunpack.c.h.b16 %v24
  %v206 = vunpack.c.l.b16 %v25
  %v207 = vunpack.c.h.b16 %v25
  %v208 = vunpack.c.l.b16 %v26
  %v209 = vunpack.c.l.b16 %v27
  %v210 = vunpack.c.h.b16 %v27
  %v211 = vunpack.c.l.b16 %v28
  %v212 = vunpack.c.h.b16 %v28
  %v213 = vunpack.c.l.b16 %v29
  %v214 = vunpack.c.l.b16 %v30
  %v215 = vunpack.c.h.b16 %v30
  %v216 = vunpack.c.l.b16 %v31
  %v217 = vunpack.c.h.b16 %v31
  %v218 = vunpack.c.l.b16 %v32
  %v219 = vunpack.c.l.b16 %v33
  %v220 = vunpack.c.h.b16 %v33
  %v221 = vunpack.c.l.b16 %v34
  %v222 = vunpack.c.h.b16 %v34
  %v223 = vunpack.c.l.b16 %v35
  %v224 = vunpack.c.l.b16 %v36
  %v225 = vunpack.c.h.b16 %v36
  %v226 = vunpack.c.l.b16 %v37
  %v227 = vunpack.c.h.b16 %v37
  %v228 = vunpack.c.l.b16 %v38
  %v229 = vunpack.c.l.b16 %v39
  %v230 = vunpack.c.h.b16 %v39
  %v231 = vunpack.c.l.b16 %v40
  %v232 = vunpack.c.h.b16 %v40
  %v233 = vunpack.c.l.b16 %v41
  %v234 = vunpack.c.l.b16 %v42
  %v235 = vunpack.c.h.b16 %v42
  %v236 = vunpack.c.l.b16 %v43
  %v237 = vunpack.c.h.b16 %v43
  %v238 = vunpack.c.l.b16 %v44
  %v239 = vunpack.c.l.b16 %v45
  %v240 = vunpack.c.h.b16 %v45
  %v241 = vunpack.c.l.b16 %v46
  %v242 = vunpack.c.h.b16 %v46
  %v243 = vunpack.c.l.b16 %v47
  %v244 = vunpack.c.l.b16 %v48
  %v245 = vunpack.c.h.b16 %v48
  %v246 = vunpack.c.l.b16 %v49
  %v247 = vunpack.c.h.b16 %v49
  %v248 = vunpack.c.l.b16 %v50
  %v249 = vunpack.c.l.b16 %v51
  %v250 = vunpack.c.h.b16 %v51
  %v251 = vunpack.c.l.b16 %v52
  %v252 = vunpack.c.h.b16 %v52
  %v253 = vunpack.c.l.b16 %v53
  %v254 = vunpack.c.l.b16 %v54
  %v255 = vunpack.c.h.b16 %v54
  %v256 = vunpack.c.l.b16 %v55
  %v257 = vunpack.c.h.b16 %v55
  %v258 = vunpack.c.l.b16 %v56
  %v259 = vunpack.c.l.b16 %v57
  %v260 = vunpack.c.h.b16 %v57
  %v261 = vunpack.c.l.b16 %v58
  %v262 = vunpack.c.h.b16 %v58
  %v263 = vunpack.c.l.b16 %v59
  %v264 = vunpack.c.l.b16 %v60
  %v265 = vunpack.c.h.b16 %v60
  %v266 = vunpack.c.l.b16 %v61
  %v267 = vunpack.c.h.b16 %v61
  %v268 = vunpack.c.l.b16 %v62
  %v269 = vunpack.c.l.b16 %v63
  %v270 = vunpack.c.h.b16 %v63
  %v271 = vunpack.c.l.b16 %v64
  %v272 = vunpack.c.h.b16 %v64
  %v273 = vunpack.c.l.b16 %v65
  %v274 = vpack.c.b16 %v199, %v194
  %v275 = vpack.c.b16 %v200, %v195
  %v276 = vpack.c.b16 %v201, %v196
  %v277 = vpack.c.b16 %v202, %v197
  %v278 = vpack.c.b16 %v203, %v198
  %v279 = vpack.c.b16 %v209, %v204
  %v280 = vpack.c.b16 %v210, %v205
  %v281 = vpack.c.b16 %v211, %v206
  %v282 = vpack.c.b16 %v212, %v207
  %v283 = vpack.c.b16 %v213, %v208
  %v284 = vpack.c.b16 %v219, %v214
  %v285 = vpack.c.b16 %v220, %v215
  %v286 = vpack.c.b16 %v221, %v216
  %v287 = vpack.c.b16 %v222, %v217
  %v288 = vpack.c.b16 %v223, %v218
  %v289 = vpack.c.b16 %v229, %v224
  %v290 = vpack.c.b16 %v230, %v225
  %v291 = vpack.c.b16 %v231, %v226
  %v292 = vpack.c.b16 %v232, %v227
  %v293 = vpack.c.b16 %v233, %v228
  %v294 = vpack.c.b16 %v239, %v234
  %v295 = vpack.c.b16 %v240, %v235
  %v296 = vpack.c.b16 %v241, %v236
  %v297 = vpack.c.b16 %v242, %v237
  %v298 = vpack.c.b16 %v243, %v238
  %v299 = vpack.c.b16 %v249, %v244
  %v300 = vpack.c.b16 %v250, %v245
  %v301 = vpack.c.b16 %v251, %v246
  %v302 = vpack.c.b16 %v252, %v247
  %v303 = vpack.c.b16 %v253, %v248
  %v304 = vpack.c.b16 %v259, %v254
  %v305 = vpack.c.b16 %v260, %v255
  %v306 = vpack.c.b16 %v261, %v256
  %v307 = vpack.c.b16 %v262, %v257
  %v308 = vpack.c.b16 %v263, %v258
  %v309 = vpack.c.b16 %v269, %v264
  %v310 = vpack.c.b16 %v270, %v265
  %v311 = vpack.c.b16 %v271, %v266
  %v312 = vpack.c.b16 %v272, %v267
  %v313 = vpack.c.b16 %v273, %v268
  %v434 = vunpack.c.l.b16 %v66
  %v435 = vunpack.c.l.b16 %v67
  %v436 = vunpack.c.l.b16 %v68
  %v437 = vunpack.c.l.b16 %v69
  %v438 = vunpack.c.l.b16 %v70
  %v439 = vunpack.c.l.b16 %v71
  %v440 = vunpack.c.l.b16 %v72
  %v441 = vunpack.c.l.b16 %v73
  %v442 = vunpack.c.l.b16 %v74
  %v443 = vunpack.c.l.b16 %v75
  %v444 = vunpack.c.l.b16 %v76
  %v445 = vunpack.c.l.b16 %v77
  %v446 = vunpack.c.l.b16 %v78
  %v447 = vunpack.c.l.b16 %v79
  %v448 = vunpack.c.l.b16 %v80
  %v449 = vunpack.c.l.b16 %v81
  %v450 = vunpack.c.l.b16 %v82
  %v451 = vunpack.c.l.b16 %v83
  %v452 = vunpack.c.l.b16 %v84
  %v453 = vunpack.c.l.b16 %v85
  %v454 = vunpack.c.l.b16 %v86
  %v455 = vunpack.c.l.b16 %v87
  %v456 = vunpack.c.l.b16 %v88
  %v457 = vunpack.c.l.b16 %v89
  %v458 = vunpack.c.l.b16 %v90
  %v459 = vunpack.c.l.b16 %v91
  %v460 = vunpack.c.l.b16 %v92
  %v461 = vunpack.c.l.b16 %v93
  %v462 = vunpack.c.l.b16 %v94
  %v463 = vunpack.c.l.b16 %v95
  %v464 = vunpack.c.l.b16 %v96
  %v465 = vunpack.c.l.b16 %v97
  %v466 = vunpack.c.l.b16 %v98
  %v467 = vunpack.c.l.b16 %v99
  %v468 = vunpack.c.l.b16 %v100
  %v469 = vunpack.c.l.b16 %v101
  %v470 = vunpack.c.l.b16 %v102
  %v471 = vunpack.c.l.b16 %v103
  %v472 = vunpack.c.l.b16 %v104
  %v473 = vunpack.c.l.b16 %v105
  %v474 = vunpack.c.l.b16 %v106
  %v475 = vunpack.c.l.b16 %v107
  %v476 = vunpack.c.l.b16 %v108
  %v477 = vunpack.c.l.b16 %v109
  %v478 = vunpack.c.l.b16 %v110
  %v479 = vunpack.c.l.b16 %v111
  %v480 = vunpack.c.l.b16 %v112
  %v481 = vunpack.c.l.b16 %v113
  %v482 = vunpack.c.l.b16 %v114
  %v483 = vunpack.c.l.b16 %v115
  %v484 = vunpack.c.l.b16 %v116
  %v485 = vunpack.c.l.b16 %v117
  %v486 = vunpack.c.l.b16 %v118
  %v487 = vunpack.c.l.b16 %v119
  %v488 = vunpack.c.l.b16 %v120
  %v489 = vunpack.c.l.b16 %v121
  %v490 = vunpack.c.l.b16 %v122
  %v491 = vunpack.c.l.b16 %v123
  %v492 = vunpack.c.l.b16 %v124
  %v493 = vunpack.c.l.b16 %v125
  %v494 = vunpack.c.l.b16 %v126
  %v495 = vunpack.c.l.b16 %v127
  %v496 = vunpack.c.l.b16 %v128
  %v497 = vunpack.c.l.b16 %v129
  %v498 = vunpack.c.l.b16 %v130
  %v499 = vunpack.c.l.b16 %v131
  %v500 = vunpack.c.l.b16 %v132
  %v501 = vunpack.c.l.b16 %v133
  %v502 = vunpack.c.l.b16 %v134
  %v503 = vunpack.c.l.b16 %v135
  %v504 = vunpack.c.l.b16 %v136
  %v505 = vunpack.c.l.b16 %v137
  %v506 = vunpack.c.l.b16 %v138
  %v507 = vunpack.c.l.b16 %v139
  %v508 = vunpack.c.l.b16 %v140
  %v509 = vunpack.c.l.b16 %v141
  %v510 = vunpack.c.l.b16 %v142
  %v511 = vunpack.c.l.b16 %v143
  %v512 = vunpack.c.l.b16 %v144
  %v513 = vunpack.c.l.b16 %v145
  %v514 = vpack.c.b16 %v435, %v434
  %v515 = vpack.c.b16 %v437, %v436
  %v516 = vpack.c.b16 %v439, %v438
  %v517 = vpack.c.b16 %v441, %v440
  %v518 = vpack.c.b16 %v443, %v442
  %v519 = vpack.c.b16 %v445, %v444
  %v520 = vpack.c.b16 %v447, %v446
  %v521 = vpack.c.b16 %v449, %v448
  %v522 = vpack.c.b16 %v451, %v450
  %v523 = vpack.c.b16 %v453, %v452
  %v524 = vpack.c.b16 %v455, %v454
  %v525 = vpack.c.b16 %v457, %v456
  %v526 = vpack.c.b16 %v459, %v458
  %v527 = vpack.c.b16 %v461, %v460
  %v528 = vpack.c.b16 %v463, %v462
  %v529 = vpack.c.b16 %v465, %v464
  %v530 = vpack.c.b16 %v467, %v466
  %v531 = vpack.c.b16 %v469, %v468
  %v532 = vpack.c.b16 %v471, %v470
  %v533 = vpack.c.b16 %v473, %v472
  %v534 = vpack.c.b16 %v475, %v474
  %v535 = vpack.c.b16 %v477, %v476
  %v536 = vpack.c.b16 %v479, %v478
  %v537 = vpack.c.b16 %v481, %v480
  %v538 = vpack.c.b16 %v483, %v482
  %v539 = vpack.c.b16 %v485, %v484
  %v540 = vpack.c.b16 %v487, %v486
  %v541 = vpack.c.b16 %v489, %v488
  %v542 = vpack.c.b16 %v491, %v490
  %v543 = vpack.c.b16 %v493, %v492
  %v544 = vpack.c.b16 %v495, %v494
  %v545 = vpack.c.b16 %v497, %v496
  %v546 = vpack.c.b16 %v499, %v498
  %v547 = vpack.c.b16 %v501, %v500
  %v548 = vpack.c.b16 %v503, %v502
  %v549 = vpack.c.b16 %v505, %v504
  %v550 = vpack.c.b16 %v507, %v506
  %v551 = vpack.c.b16 %v509, %v508
  %v552 = vpack.c.b16 %v511, %v510
  %v553 = vpack.c.b16 %v513, %v512
  %594 = vmatprep.subr.bf16.mxu0 0
  %595 = vmatpush1.bf16.msra.mxu0 %v521
  %596 = vmatprep.subr.bf16.mxu0 0
  %597 = vmatpush1.bf16.msra.mxu0 %v520
  %598 = vmatprep.subr.bf16.mxu0 0
  %599 = vmatpush1.bf16.msra.mxu0 %v519
  %600 = vmatprep.subr.bf16.mxu0 0
  %601 = vmatpush1.bf16.msra.mxu0 %v518
  %602 = vmatprep.subr.bf16.mxu0 0
  %603 = vmatpush1.bf16.msra.mxu0 %v517
  %604 = vmatprep.subr.bf16.mxu0 0
  %605 = vmatpush1.bf16.msra.mxu0 %v516
  %606 = vmatprep.subr.bf16.mxu0 0
  %607 = vmatpush1.bf16.msra.mxu0 %v515
  %608 = vmatprep.subr.bf16.mxu0 0
  %609 = vmatpush1.bf16.msra.mxu0 %v514
  %610 = vmatprep.subr.bf16.mxu0 0
  %611 = vmatpush2.bf16.msra.mxu0 %v529
  %612 = vmatprep.subr.bf16.mxu0 0
  %613 = vmatpush2.bf16.msra.mxu0 %v528
  %614 = vmatprep.subr.bf16.mxu0 0
  %615 = vmatpush2.bf16.msra.mxu0 %v527
  %616 = vmatprep.subr.bf16.mxu0 0
  %617 = vmatpush2.bf16.msra.mxu0 %v526
  %618 = vmatprep.subr.bf16.mxu0 0
  %619 = vmatpush2.bf16.msra.mxu0 %v525
  %620 = vmatprep.subr.bf16.mxu0 0
  %621 = vmatpush2.bf16.msra.mxu0 %v524
  %622 = vmatprep.subr.bf16.mxu0 0
  %623 = vmatpush2.bf16.msra.mxu0 %v523
  %624 = vmatprep.subr.bf16.mxu0 0
  %625 = vmatpush2.bf16.msra.mxu0 %v522
  %626 = vmatprep.mubr.bf16.mxu0 %v275
  %627 = vmatmul.mubr.bf16.gmra.mxu0 %v274
  %v628 = vpop.f32.mrf.mxu0
  %v629 = vadd.f32 0.0, %v628
  %v630 = vpop.f32.mrf.mxu0
  %v631 = vpop.f32.mrf.mxu0
  %v632 = vadd.f32 0.0, %v631
  %v633 = vpop.f32.mrf.mxu0
  %634 = vmatprep.mubr.bf16.mxu0 %v280
  %635 = vmatmul.mubr.bf16.gmra.mxu0 %v279
  %v636 = vpop.f32.mrf.mxu0
  %v637 = vadd.f32 0.0, %v636
  %v638 = vpop.f32.mrf.mxu0
  %v639 = vpop.f32.mrf.mxu0
  %v640 = vadd.f32 0.0, %v639
  %v641 = vpop.f32.mrf.mxu0
  %642 = vmatprep.mubr.bf16.mxu0 %v285
  %643 = vmatmul.mubr.bf16.gmra.mxu0 %v284
  %v644 = vpop.f32.mrf.mxu0
  %v645 = vadd.f32 0.0, %v644
  %v646 = vpop.f32.mrf.mxu0
  %v647 = vpop.f32.mrf.mxu0
  %v648 = vadd.f32 0.0, %v647
  %v649 = vpop.f32.mrf.mxu0
  %650 = vmatprep.mubr.bf16.mxu0 %v290
  %651 = vmatmul.mubr.bf16.gmra.mxu0 %v289
  %v652 = vpop.f32.mrf.mxu0
  %v653 = vadd.f32 0.0, %v652
  %v654 = vpop.f32.mrf.mxu0
  %v655 = vpop.f32.mrf.mxu0
  %v656 = vadd.f32 0.0, %v655
  %v657 = vpop.f32.mrf.mxu0
  %658 = vmatprep.mubr.bf16.mxu0 %v295
  %659 = vmatmul.mubr.bf16.gmra.mxu0 %v294
  %v660 = vpop.f32.mrf.mxu0
  %v661 = vadd.f32 0.0, %v660
  %v662 = vpop.f32.mrf.mxu0
  %v663 = vpop.f32.mrf.mxu0
  %v664 = vadd.f32 0.0, %v663
  %v665 = vpop.f32.mrf.mxu0
  %666 = vmatprep.mubr.bf16.mxu0 %v300
  %667 = vmatmul.mubr.bf16.gmra.mxu0 %v299
  %v668 = vpop.f32.mrf.mxu0
  %v669 = vadd.f32 0.0, %v668
  %v670 = vpop.f32.mrf.mxu0
  %v671 = vpop.f32.mrf.mxu0
  %v672 = vadd.f32 0.0, %v671
  %v673 = vpop.f32.mrf.mxu0
  %674 = vmatprep.mubr.bf16.mxu0 %v305
  %675 = vmatmul.mubr.bf16.gmra.mxu0 %v304
  %v676 = vpop.f32.mrf.mxu0
  %v677 = vadd.f32 0.0, %v676
  %v678 = vpop.f32.mrf.mxu0
  %v679 = vpop.f32.mrf.mxu0
  %v680 = vadd.f32 0.0, %v679
  %v681 = vpop.f32.mrf.mxu0
  %682 = vmatprep.mubr.bf16.mxu0 %v310
  %683 = vmatmul.mubr.bf16.gmra.mxu0 %v309
  %v684 = vpop.f32.mrf.mxu0
  %v685 = vadd.f32 0.0, %v684
  %v686 = vpop.f32.mrf.mxu0
  %v687 = vpop.f32.mrf.mxu0
  %v688 = vadd.f32 0.0, %v687
  %v689 = vpop.f32.mrf.mxu0
  %690 = vdwg.mxu0
  %691 = vmatprep.subr.bf16.mxu0 0
  %692 = vmatpush1.bf16.msra.mxu0 %v537
  %693 = vmatprep.subr.bf16.mxu0 0
  %694 = vmatpush1.bf16.msra.mxu0 %v536
  %695 = vmatprep.subr.bf16.mxu0 0
  %696 = vmatpush1.bf16.msra.mxu0 %v535
  %697 = vmatprep.subr.bf16.mxu0 0
  %698 = vmatpush1.bf16.msra.mxu0 %v534
  %699 = vmatprep.subr.bf16.mxu0 0
  %700 = vmatpush1.bf16.msra.mxu0 %v533
  %701 = vmatprep.subr.bf16.mxu0 0
  %702 = vmatpush1.bf16.msra.mxu0 %v532
  %703 = vmatprep.subr.bf16.mxu0 0
  %704 = vmatpush1.bf16.msra.mxu0 %v531
  %705 = vmatprep.subr.bf16.mxu0 0
  %706 = vmatpush1.bf16.msra.mxu0 %v530
  %707 = vmatprep.subr.bf16.mxu0 0
  %708 = vmatpush2.bf16.msra.mxu0 %v545
  %709 = vmatprep.subr.bf16.mxu0 0
  %710 = vmatpush2.bf16.msra.mxu0 %v544
  %711 = vmatprep.subr.bf16.mxu0 0
  %712 = vmatpush2.bf16.msra.mxu0 %v543
  %713 = vmatprep.subr.bf16.mxu0 0
  %714 = vmatpush2.bf16.msra.mxu0 %v542
  %715 = vmatprep.subr.bf16.mxu0 0
  %716 = vmatpush2.bf16.msra.mxu0 %v541
  %717 = vmatprep.subr.bf16.mxu0 0
  %718 = vmatpush2.bf16.msra.mxu0 %v540
  %719 = vmatprep.subr.bf16.mxu0 0
  %720 = vmatpush2.bf16.msra.mxu0 %v539
  %721 = vmatprep.subr.bf16.mxu0 0
  %722 = vmatpush2.bf16.msra.mxu0 %v538
  %723 = vmatprep.mubr.bf16.mxu0 %v277
  %724 = vmatmul.mubr.bf16.gmra.mxu0 %v276
  %v725 = vpop.f32.mrf.mxu0
  %v726 = vadd.f32 %v629, %v725
  %v727 = vpop.f32.mrf.mxu0
  %v728 = vpop.f32.mrf.mxu0
  %v729 = vadd.f32 %v632, %v728
  %v730 = vpop.f32.mrf.mxu0
  %731 = vmatprep.mubr.bf16.mxu0 %v282
  %732 = vmatmul.mubr.bf16.gmra.mxu0 %v281
  %v733 = vpop.f32.mrf.mxu0
  %v734 = vadd.f32 %v637, %v733
  %v735 = vpop.f32.mrf.mxu0
  %v736 = vpop.f32.mrf.mxu0
  %v737 = vadd.f32 %v640, %v736
  %v738 = vpop.f32.mrf.mxu0
  %739 = vmatprep.mubr.bf16.mxu0 %v287
  %740 = vmatmul.mubr.bf16.gmra.mxu0 %v286
  %v741 = vpop.f32.mrf.mxu0
  %v742 = vadd.f32 %v645, %v741
  %v743 = vpop.f32.mrf.mxu0
  %v744 = vpop.f32.mrf.mxu0
  %v745 = vadd.f32 %v648, %v744
  %v746 = vpop.f32.mrf.mxu0
  %747 = vmatprep.mubr.bf16.mxu0 %v292
  %748 = vmatmul.mubr.bf16.gmra.mxu0 %v291
  %v749 = vpop.f32.mrf.mxu0
  %v750 = vadd.f32 %v653, %v749
  %v751 = vpop.f32.mrf.mxu0
  %v752 = vpop.f32.mrf.mxu0
  %v753 = vadd.f32 %v656, %v752
  %v754 = vpop.f32.mrf.mxu0
  %755 = vmatprep.mubr.bf16.mxu0 %v297
  %756 = vmatmul.mubr.bf16.gmra.mxu0 %v296
  %v757 = vpop.f32.mrf.mxu0
  %v758 = vadd.f32 %v661, %v757
  %v759 = vpop.f32.mrf.mxu0
  %v760 = vpop.f32.mrf.mxu0
  %v761 = vadd.f32 %v664, %v760
  %v762 = vpop.f32.mrf.mxu0
  %763 = vmatprep.mubr.bf16.mxu0 %v302
  %764 = vmatmul.mubr.bf16.gmra.mxu0 %v301
  %v765 = vpop.f32.mrf.mxu0
  %v766 = vadd.f32 %v669, %v765
  %v767 = vpop.f32.mrf.mxu0
  %v768 = vpop.f32.mrf.mxu0
  %v769 = vadd.f32 %v672, %v768
  %v770 = vpop.f32.mrf.mxu0
  %771 = vmatprep.mubr.bf16.mxu0 %v307
  %772 = vmatmul.mubr.bf16.gmra.mxu0 %v306
  %v773 = vpop.f32.mrf.mxu0
  %v774 = vadd.f32 %v677, %v773
  %v775 = vpop.f32.mrf.mxu0
  %v776 = vpop.f32.mrf.mxu0
  %v777 = vadd.f32 %v680, %v776
  %v778 = vpop.f32.mrf.mxu0
  %779 = vmatprep.mubr.bf16.mxu0 %v312
  %780 = vmatmul.mubr.bf16.gmra.mxu0 %v311
  %v781 = vpop.f32.mrf.mxu0
  %v782 = vadd.f32 %v685, %v781
  %v783 = vpop.f32.mrf.mxu0
  %v784 = vpop.f32.mrf.mxu0
  %v785 = vadd.f32 %v688, %v784
  %v786 = vpop.f32.mrf.mxu0
  %787 = vdwg.mxu0
  %788 = vmatprep.subr.bf16.mxu0 0
  %789 = vmatpush1.bf16.msra.mxu0 %v553
  %790 = vmatprep.subr.bf16.mxu0 0
  %791 = vmatpush1.bf16.msra.mxu0 %v552
  %792 = vmatprep.subr.bf16.mxu0 0
  %793 = vmatpush1.bf16.msra.mxu0 %v551
  %794 = vmatprep.subr.bf16.mxu0 0
  %795 = vmatpush1.bf16.msra.mxu0 %v550
  %796 = vmatprep.subr.bf16.mxu0 0
  %797 = vmatpush1.bf16.msra.mxu0 %v549
  %798 = vmatprep.subr.bf16.mxu0 0
  %799 = vmatpush1.bf16.msra.mxu0 %v548
  %800 = vmatprep.subr.bf16.mxu0 0
  %801 = vmatpush1.bf16.msra.mxu0 %v547
  %802 = vmatprep.subr.bf16.mxu0 0
  %803 = vmatpush1.bf16.msra.mxu0 %v546
  %804 = vmatprep.subr.bf16.mxu0 0
  %805 = vmatpush2.bf16.msra.mxu0 0
  %806 = vmatprep.subr.bf16.mxu0 0
  %807 = vmatpush2.bf16.msra.mxu0 0
  %808 = vmatprep.subr.bf16.mxu0 0
  %809 = vmatpush2.bf16.msra.mxu0 0
  %810 = vmatprep.subr.bf16.mxu0 0
  %811 = vmatpush2.bf16.msra.mxu0 0
  %812 = vmatprep.subr.bf16.mxu0 0
  %813 = vmatpush2.bf16.msra.mxu0 0
  %814 = vmatprep.subr.bf16.mxu0 0
  %815 = vmatpush2.bf16.msra.mxu0 0
  %816 = vmatprep.subr.bf16.mxu0 0
  %817 = vmatpush2.bf16.msra.mxu0 0
  %818 = vmatprep.subr.bf16.mxu0 0
  %819 = vmatpush2.bf16.msra.mxu0 0
  %820 = vmatprep.mubr.bf16.mxu0 0
  %821 = vmatmul.mubr.bf16.gmra.mxu0 %v278
  %v822 = vpop.f32.mrf.mxu0
  %v823 = vadd.f32 %v726, %v822
  %v824 = vpop.f32.mrf.mxu0
  %v825 = vpop.f32.mrf.mxu0
  %v826 = vadd.f32 %v729, %v825
  %v827 = vpop.f32.mrf.mxu0
  %828 = vmatprep.mubr.bf16.mxu0 0
  %829 = vmatmul.mubr.bf16.gmra.mxu0 %v283
  %v830 = vpop.f32.mrf.mxu0
  %v831 = vadd.f32 %v734, %v830
  %v832 = vpop.f32.mrf.mxu0
  %v833 = vpop.f32.mrf.mxu0
  %v834 = vadd.f32 %v737, %v833
  %v835 = vpop.f32.mrf.mxu0
  %836 = vmatprep.mubr.bf16.mxu0 0
  %837 = vmatmul.mubr.bf16.gmra.mxu0 %v288
  %v838 = vpop.f32.mrf.mxu0
  %v839 = vadd.f32 %v742, %v838
  %v840 = vpop.f32.mrf.mxu0
  %v841 = vpop.f32.mrf.mxu0
  %v842 = vadd.f32 %v745, %v841
  %v843 = vpop.f32.mrf.mxu0
  %844 = vmatprep.mubr.bf16.mxu0 0
  %845 = vmatmul.mubr.bf16.gmra.mxu0 %v293
  %v846 = vpop.f32.mrf.mxu0
  %v847 = vadd.f32 %v750, %v846
  %v848 = vpop.f32.mrf.mxu0
  %v849 = vpop.f32.mrf.mxu0
  %v850 = vadd.f32 %v753, %v849
  %v851 = vpop.f32.mrf.mxu0
  %852 = vmatprep.mubr.bf16.mxu0 0
  %853 = vmatmul.mubr.bf16.gmra.mxu0 %v298
  %v854 = vpop.f32.mrf.mxu0
  %v855 = vadd.f32 %v758, %v854
  %v856 = vpop.f32.mrf.mxu0
  %v857 = vpop.f32.mrf.mxu0
  %v858 = vadd.f32 %v761, %v857
  %v859 = vpop.f32.mrf.mxu0
  %860 = vmatprep.mubr.bf16.mxu0 0
  %861 = vmatmul.mubr.bf16.gmra.mxu0 %v303
  %v862 = vpop.f32.mrf.mxu0
  %v863 = vadd.f32 %v766, %v862
  %v864 = vpop.f32.mrf.mxu0
  %v865 = vpop.f32.mrf.mxu0
  %v866 = vadd.f32 %v769, %v865
  %v867 = vpop.f32.mrf.mxu0
  %868 = vmatprep.mubr.bf16.mxu0 0
  %869 = vmatmul.mubr.bf16.gmra.mxu0 %v308
  %v870 = vpop.f32.mrf.mxu0
  %v871 = vadd.f32 %v774, %v870
  %v872 = vpop.f32.mrf.mxu0
  %v873 = vpop.f32.mrf.mxu0
  %v874 = vadd.f32 %v777, %v873
  %v875 = vpop.f32.mrf.mxu0
  %876 = vmatprep.mubr.bf16.mxu0 0
  %877 = vmatmul.mubr.bf16.gmra.mxu0 %v313
  %v878 = vpop.f32.mrf.mxu0
  %v879 = vadd.f32 %v782, %v878
  %v880 = vpop.f32.mrf.mxu0
  %v881 = vpop.f32.mrf.mxu0
  %v882 = vadd.f32 %v785, %v881
  %v883 = vpop.f32.mrf.mxu0
  %884 = vdwg.mxu0
  %v885 = vld [vmem:[%s3] sm:$0x1]
  %v887 = vlaneseq
  %v888 = vshrl.u32 %v887, 7
  %v889 = vsub.s32 0, %v888
  %v890 = vrot.slane %v885, %v889
  %v892 = vmul.f32 %v823, %v890
  %v893 = vmul.f32 %v826, %v890
  %v894 = vmul.f32 %v831, %v890
  %v895 = vmul.f32 %v834, %v890
  %v896 = vmul.f32 %v839, %v890
  %v897 = vmul.f32 %v842, %v890
  %v898 = vmul.f32 %v847, %v890
  %v899 = vmul.f32 %v850, %v890
  %v900 = vmul.f32 %v855, %v890
  %v901 = vmul.f32 %v858, %v890
  %v902 = vmul.f32 %v863, %v890
  %v903 = vmul.f32 %v866, %v890
  %v904 = vmul.f32 %v871, %v890
  %v905 = vmul.f32 %v874, %v890
  %v906 = vmul.f32 %v879, %v890
  %v907 = vmul.f32 %v882, %v890
  %v908 = vld [vmem:[%s2] sm:$0x1]
  %v910 = vlaneseq
  %v911 = vshrl.u32 %v910, 7
  %v912 = vsub.s32 0, %v911
  %v913 = vrot.slane %v908, %v912
  %v915 = vadd.f32 %v892, %v913
  %v916 = vadd.f32 %v893, %v913
  %v917 = vadd.f32 %v894, %v913
  %v918 = vadd.f32 %v895, %v913
  %v919 = vadd.f32 %v896, %v913
  %v920 = vadd.f32 %v897, %v913
  %v921 = vadd.f32 %v898, %v913
  %v922 = vadd.f32 %v899, %v913
  %v923 = vadd.f32 %v900, %v913
  %v924 = vadd.f32 %v901, %v913
  %v925 = vadd.f32 %v902, %v913
  %v926 = vadd.f32 %v903, %v913
  %v927 = vadd.f32 %v904, %v913
  %v928 = vadd.f32 %v905, %v913
  %v929 = vadd.f32 %v906, %v913
  %v930 = vadd.f32 %v907, %v913
  %v931 = vmax.f32 %v915, 0.0
  %v932 = vmax.f32 %v916, 0.0
  %v933 = vmax.f32 %v917, 0.0
  %v934 = vmax.f32 %v918, 0.0
  %v935 = vmax.f32 %v919, 0.0
  %v936 = vmax.f32 %v920, 0.0
  %v937 = vmax.f32 %v921, 0.0
  %v938 = vmax.f32 %v922, 0.0
  %v939 = vmax.f32 %v923, 0.0
  %v940 = vmax.f32 %v924, 0.0
  %v941 = vmax.f32 %v925, 0.0
  %v942 = vmax.f32 %v926, 0.0
  %v943 = vmax.f32 %v927, 0.0
  %v944 = vmax.f32 %v928, 0.0
  %v945 = vmax.f32 %v929, 0.0
  %v946 = vmax.f32 %v930, 0.0
  %v947 = vpack.c.bf16 %v932, %v931
  %v948 = vpack.c.bf16 %v934, %v933
  %v949 = vpack.c.bf16 %v936, %v935
  %v950 = vpack.c.bf16 %v938, %v937
  %v951 = vpack.c.bf16 %v940, %v939
  %v952 = vpack.c.bf16 %v942, %v941
  %v953 = vpack.c.bf16 %v944, %v943
  %v954 = vpack.c.bf16 %v946, %v945
  %v963 = vunpack.c.l.b16 %v947
  %v964 = vunpack.c.h.b16 %v947
  %v965 = vunpack.c.l.b16 %v948
  %v966 = vunpack.c.h.b16 %v948
  %v967 = vunpack.c.l.b16 %v949
  %v968 = vunpack.c.h.b16 %v949
  %v969 = vunpack.c.l.b16 %v950
  %v970 = vunpack.c.h.b16 %v950
  %v971 = vunpack.c.l.b16 %v951
  %v972 = vunpack.c.h.b16 %v951
  %v973 = vunpack.c.l.b16 %v952
  %v974 = vunpack.c.h.b16 %v952
  %v975 = vunpack.c.l.b16 %v953
  %v976 = vunpack.c.h.b16 %v953
  %v977 = vunpack.c.l.b16 %v954
  %v978 = vunpack.c.h.b16 %v954
  %v979 = vpack.c.b16 %v963, %v963
  %v980 = vpack.c.b16 %v964, %v964
  %v981 = vpack.c.b16 %v965, %v965
  %v982 = vpack.c.b16 %v966, %v966
  %v983 = vpack.c.b16 %v967, %v967
  %v984 = vpack.c.b16 %v968, %v968
  %v985 = vpack.c.b16 %v969, %v969
  %v986 = vpack.c.b16 %v970, %v970
  %v987 = vpack.c.b16 %v971, %v971
  %v988 = vpack.c.b16 %v972, %v972
  %v989 = vpack.c.b16 %v973, %v973
  %v990 = vpack.c.b16 %v974, %v974
  %v991 = vpack.c.b16 %v975, %v975
  %v992 = vpack.c.b16 %v976, %v976
  %v993 = vpack.c.b16 %v977, %v977
  %v994 = vpack.c.b16 %v978, %v978
  %1011 = vst [vmem:[%s4] sm:$0xf] %v979
  %1012 = vst [vmem:[%s4 + $0x4] sm:$0xf] %v980
  %1013 = vst [vmem:[%s4 + $0x8] sm:$0xf] %v981
  %1014 = vst [vmem:[%s4 + $0xc] sm:$0xf] %v982
  %1015 = vst [vmem:[%s4 + $0x10] sm:$0xf] %v983
  %1016 = vst [vmem:[%s4 + $0x14] sm:$0xf] %v984
  %1017 = vst [vmem:[%s4 + $0x18] sm:$0xf] %v985
  %1018 = vst [vmem:[%s4 + $0x1c] sm:$0xf] %v986
  %1019 = vst [vmem:[%s4 + $0x20] sm:$0xf] %v987
  %1020 = vst [vmem:[%s4 + $0x24] sm:$0xf] %v988
  %1021 = vst [vmem:[%s4 + $0x28] sm:$0xf] %v989
  %1022 = vst [vmem:[%s4 + $0x2c] sm:$0xf] %v990
  %1023 = vst [vmem:[%s4 + $0x30] sm:$0xf] %v991
  %1024 = vst [vmem:[%s4 + $0x34] sm:$0xf] %v992
  %1025 = vst [vmem:[%s4 + $0x38] sm:$0xf] %v993
  %1026 = vst [vmem:[%s4 + $0x3c] sm:$0xf] %v994
  // Predicated region
  $region18: #{forward.18} parent=0 // pred_check
    _
  $region19: #{forward.18} parent=0 // pred_check_branch
    %1028 = sbr.rel (0) target = $region21
  $region20: #{forward.18} parent=0 // pred_region
    _
  $region21: #{forward.18} parent=0 // pred_fallthru
    _
  // Predicated region
  $region22: #{forward.18} parent=0 // pred_check
    _
  $region23: #{forward.18} parent=0 // pred_check_branch
    %1030 = sbr.rel (0) target = $region25
  $region24: #{forward.18} parent=0 // pred_region
    _
  $region25: #{forward.18} parent=0 // pred_fallthru
    _

// kernel: forward.23
$region0: #{forward.23}
  #allocation0 [shape = 'u32[]', space=smem, size = 0x4, offset = 0x4, fixed_abs, tag = 'smem constant byte address 0x4 - core index']
  #allocation1 [shape = 'u32[144,128]{1,0:T(1,128)}', space=vmem, size = 0x12000, scoped, tag = 'internal scratch']
  %s0 = inlined_call_operand.vmem [shape: bf16[32,128], index: 0, kind: input, shape index: {}]
  %s1 = inlined_call_operand.vmem [shape: bf16[128,128], index: 1, kind: input, shape index: {}]
  %s2 = inlined_call_operand.vmem [shape: f32[1,128], index: 2, kind: input, shape index: {}]
  %s3 = inlined_call_operand.vmem [shape: f32[1,128], index: 3, kind: input, shape index: {}]
  %s4 = inlined_call_operand.vmem [shape: bf16[32,128], index: 4, kind: output, shape index: {}]
  %s5 = sld [smem:[#allocation0]]
  $region26: #{forward.23} parent=0
    _
  %s7 = ssub.s32 1, %s5
  %s8 = scalar_select 0, %s7, %s5
  // Predicated region
  $region2: #{forward.23} parent=0 // pred_check
    _
  $region3: #{forward.23} parent=0 // pred_check_branch
    %10 = sbr.rel (0) target = $region5
  $region4: #{forward.23} parent=0 // pred_region
    _
  $region5: #{forward.23} parent=0 // pred_fallthru
    _
  // Predicated region
  $region6: #{forward.23} parent=0 // pred_check
    _
  $region7: #{forward.23} parent=0 // pred_check_branch
    %12 = sbr.rel (0) target = $region9
  $region8: #{forward.23} parent=0 // pred_region
    _
  $region9: #{forward.23} parent=0 // pred_fallthru
    _
  // Predicated region
  $region10: #{forward.23} parent=0 // pred_check
    _
  $region11: #{forward.23} parent=0 // pred_check_branch
    %14 = sbr.rel (0) target = $region13
  $region12: #{forward.23} parent=0 // pred_region
    _
  $region13: #{forward.23} parent=0 // pred_fallthru
    _
  // Predicated region
  $region14: #{forward.23} parent=0 // pred_check
    _
  $region15: #{forward.23} parent=0 // pred_check_branch
    %16 = sbr.rel (0) target = $region17
  $region16: #{forward.23} parent=0 // pred_region
    _
  $region17: #{forward.23} parent=0 // pred_fallthru
    _
  %v18 = vld [vmem:[%s0] sm:$0xf]
  %v19 = vld [vmem:[%s0 + $0x4] sm:$0xf]
  %v20 = vld [vmem:[%s0 + $0x8] sm:$0xf]
  %v21 = vld [vmem:[%s0 + $0xc] sm:$0xf]
  %v22 = vld [vmem:[%s1] sm:$0xf]
  %v23 = vld [vmem:[%s1 + $0x4] sm:$0xf]
  %v24 = vld [vmem:[%s1 + $0x8] sm:$0xf]
  %v25 = vld [vmem:[%s1 + $0xc] sm:$0xf]
  %v26 = vld [vmem:[%s1 + $0x10] sm:$0xf]
  %v27 = vld [vmem:[%s1 + $0x14] sm:$0xf]
  %v28 = vld [vmem:[%s1 + $0x18] sm:$0xf]
  %v29 = vld [vmem:[%s1 + $0x1c] sm:$0xf]
  %v30 = vld [vmem:[%s1 + $0x20] sm:$0xf]
  %v31 = vld [vmem:[%s1 + $0x24] sm:$0xf]
  %v32 = vld [vmem:[%s1 + $0x28] sm:$0xf]
  %v33 = vld [vmem:[%s1 + $0x2c] sm:$0xf]
  %v34 = vld [vmem:[%s1 + $0x30] sm:$0xf]
  %v35 = vld [vmem:[%s1 + $0x34] sm:$0xf]
  %v36 = vld [vmem:[%s1 + $0x38] sm:$0xf]
  %v37 = vld [vmem:[%s1 + $0x3c] sm:$0xf]
  %v42 = vunpack.c.l.b16 %v18
  %v43 = vunpack.c.l.b16 %v19
  %v44 = vunpack.c.l.b16 %v20
  %v45 = vunpack.c.l.b16 %v21
  %v46 = vpack.c.b16 %v43, %v42
  %v47 = vpack.c.b16 %v45, %v44
  %v66 = vunpack.c.l.b16 %v22
  %v67 = vunpack.c.l.b16 %v23
  %v68 = vunpack.c.l.b16 %v24
  %v69 = vunpack.c.l.b16 %v25
  %v70 = vunpack.c.l.b16 %v26
  %v71 = vunpack.c.l.b16 %v27
  %v72 = vunpack.c.l.b16 %v28
  %v73 = vunpack.c.l.b16 %v29
  %v74 = vunpack.c.l.b16 %v30
  %v75 = vunpack.c.l.b16 %v31
  %v76 = vunpack.c.l.b16 %v32
  %v77 = vunpack.c.l.b16 %v33
  %v78 = vunpack.c.l.b16 %v34
  %v79 = vunpack.c.l.b16 %v35
  %v80 = vunpack.c.l.b16 %v36
  %v81 = vunpack.c.l.b16 %v37
  %v82 = vpack.c.b16 %v67, %v66
  %v83 = vpack.c.b16 %v69, %v68
  %v84 = vpack.c.b16 %v71, %v70
  %v85 = vpack.c.b16 %v73, %v72
  %v86 = vpack.c.b16 %v75, %v74
  %v87 = vpack.c.b16 %v77, %v76
  %v88 = vpack.c.b16 %v79, %v78
  %v89 = vpack.c.b16 %v81, %v80
  %98 = vmatprep.subr.bf16.mxu0 0
  %99 = vmatpush1.bf16.msra.mxu0 %v89
  %100 = vmatprep.subr.bf16.mxu0 0
  %101 = vmatpush1.bf16.msra.mxu0 %v88
  %102 = vmatprep.subr.bf16.mxu0 0
  %103 = vmatpush1.bf16.msra.mxu0 %v87
  %104 = vmatprep.subr.bf16.mxu0 0
  %105 = vmatpush1.bf16.msra.mxu0 %v86
  %106 = vmatprep.subr.bf16.mxu0 0
  %107 = vmatpush1.bf16.msra.mxu0 %v85
  %108 = vmatprep.subr.bf16.mxu0 0
  %109 = vmatpush1.bf16.msra.mxu0 %v84
  %110 = vmatprep.subr.bf16.mxu0 0
  %111 = vmatpush1.bf16.msra.mxu0 %v83
  %112 = vmatprep.subr.bf16.mxu0 0
  %113 = vmatpush1.bf16.msra.mxu0 %v82
  %114 = vmatprep.subr.bf16.mxu0 0
  %115 = vmatpush2.bf16.msra.mxu0 0
  %116 = vmatprep.subr.bf16.mxu0 0
  %117 = vmatpush2.bf16.msra.mxu0 0
  %118 = vmatprep.subr.bf16.mxu0 0
  %119 = vmatpush2.bf16.msra.mxu0 0
  %120 = vmatprep.subr.bf16.mxu0 0
  %121 = vmatpush2.bf16.msra.mxu0 0
  %122 = vmatprep.subr.bf16.mxu0 0
  %123 = vmatpush2.bf16.msra.mxu0 0
  %124 = vmatprep.subr.bf16.mxu0 0
  %125 = vmatpush2.bf16.msra.mxu0 0
  %126 = vmatprep.subr.bf16.mxu0 0
  %127 = vmatpush2.bf16.msra.mxu0 0
  %128 = vmatprep.subr.bf16.mxu0 0
  %129 = vmatpush2.bf16.msra.mxu0 0
  %130 = vmatprep.mubr.bf16.mxu0 0
  %131 = vmatmul.mubr.bf16.gmra.mxu0 %v46
  %v132 = vpop.f32.mrf.mxu0
  %v133 = vadd.f32 0.0, %v132
  %v134 = vpop.f32.mrf.mxu0
  %v135 = vpop.f32.mrf.mxu0
  %v136 = vadd.f32 0.0, %v135
  %v137 = vpop.f32.mrf.mxu0
  %138 = vmatprep.mubr.bf16.mxu0 0
  %139 = vmatmul.mubr.bf16.gmra.mxu0 %v47
  %v140 = vpop.f32.mrf.mxu0
  %v141 = vadd.f32 0.0, %v140
  %v142 = vpop.f32.mrf.mxu0
  %v143 = vpop.f32.mrf.mxu0
  %v144 = vadd.f32 0.0, %v143
  %v145 = vpop.f32.mrf.mxu0
  %146 = vdwg.mxu0
  %v147 = vld [vmem:[%s3] sm:$0x1]
  %v149 = vlaneseq
  %v150 = vshrl.u32 %v149, 7
  %v151 = vsub.s32 0, %v150
  %v152 = vrot.slane %v147, %v151
  %v154 = vmul.f32 %v133, %v152
  %v155 = vmul.f32 %v136, %v152
  %v156 = vmul.f32 %v141, %v152
  %v157 = vmul.f32 %v144, %v152
  %v158 = vld [vmem:[%s2] sm:$0x1]
  %v160 = vlaneseq
  %v161 = vshrl.u32 %v160, 7
  %v162 = vsub.s32 0, %v161
  %v163 = vrot.slane %v158, %v162
  %v165 = vadd.f32 %v154, %v163
  %v166 = vadd.f32 %v155, %v163
  %v167 = vadd.f32 %v156, %v163
  %v168 = vadd.f32 %v157, %v163
  %v169 = vpack.c.bf16 %v166, %v165
  %v170 = vpack.c.bf16 %v168, %v167
  %v173 = vunpack.c.l.b16 %v169
  %v174 = vunpack.c.h.b16 %v169
  %v175 = vunpack.c.l.b16 %v170
  %v176 = vunpack.c.h.b16 %v170
  %v177 = vpack.c.b16 %v173, %v173
  %v178 = vpack.c.b16 %v174, %v174
  %v179 = vpack.c.b16 %v175, %v175
  %v180 = vpack.c.b16 %v176, %v176
  %185 = vst [vmem:[%s4] sm:$0xf] %v177
  %186 = vst [vmem:[%s4 + $0x4] sm:$0xf] %v178
  %187 = vst [vmem:[%s4 + $0x8] sm:$0xf] %v179
  %188 = vst [vmem:[%s4 + $0xc] sm:$0xf] %v180
  // Predicated region
  $region18: #{forward.23} parent=0 // pred_check
    _
  $region19: #{forward.23} parent=0 // pred_check_branch
    %190 = sbr.rel (0) target = $region21
  $region20: #{forward.23} parent=0 // pred_region
    _
  $region21: #{forward.23} parent=0 // pred_fallthru
    _
  // Predicated region
  $region22: #{forward.23} parent=0 // pred_check
    _
  $region23: #{forward.23} parent=0 // pred_check_branch
    %192 = sbr.rel (0) target = $region25
  $region24: #{forward.23} parent=0 // pred_region
    _
  $region25: #{forward.23} parent=0 // pred_fallthru
    _

// kernel: forward.22
$region0: #{forward.22}
  #allocation0 [shape = 'u32[]', space=smem, size = 0x4, offset = 0x4, fixed_abs, tag = 'smem constant byte address 0x4 - core index']
  #allocation1 [shape = 'u32[144,128]{1,0:T(1,128)}', space=vmem, size = 0x12000, scoped, tag = 'internal scratch']
  %s0 = inlined_call_operand.vmem [shape: bf16[32,640], index: 0, kind: input, shape index: {}]
  %s1 = inlined_call_operand.vmem [shape: bf16[640,128], index: 1, kind: input, shape index: {}]
  %s2 = inlined_call_operand.vmem [shape: f32[1,128], index: 2, kind: input, shape index: {}]
  %s3 = inlined_call_operand.vmem [shape: f32[1,128], index: 3, kind: input, shape index: {}]
  %s4 = inlined_call_operand.vmem [shape: bf16[32,128], index: 4, kind: output, shape index: {}]
  %s5 = sld [smem:[#allocation0]]
  $region26: #{forward.22} parent=0
    _
  %s7 = ssub.s32 1, %s5
  %s8 = scalar_select 0, %s7, %s5
  // Predicated region
  $region2: #{forward.22} parent=0 // pred_check
    _
  $region3: #{forward.22} parent=0 // pred_check_branch
    %10 = sbr.rel (0) target = $region5
  $region4: #{forward.22} parent=0 // pred_region
    _
  $region5: #{forward.22} parent=0 // pred_fallthru
    _
  // Predicated region
  $region6: #{forward.22} parent=0 // pred_check
    _
  $region7: #{forward.22} parent=0 // pred_check_branch
    %12 = sbr.rel (0) target = $region9
  $region8: #{forward.22} parent=0 // pred_region
    _
  $region9: #{forward.22} parent=0 // pred_fallthru
    _
  // Predicated region
  $region10: #{forward.22} parent=0 // pred_check
    _
  $region11: #{forward.22} parent=0 // pred_check_branch
    %14 = sbr.rel (0) target = $region13
  $region12: #{forward.22} parent=0 // pred_region
    _
  $region13: #{forward.22} parent=0 // pred_fallthru
    _
  // Predicated region
  $region14: #{forward.22} parent=0 // pred_check
    _
  $region15: #{forward.22} parent=0 // pred_check_branch
    %16 = sbr.rel (0) target = $region17
  $region16: #{forward.22} parent=0 // pred_region
    _
  $region17: #{forward.22} parent=0 // pred_fallthru
    _
  %v18 = vld [vmem:[%s0] sm:$0xff]
  %v19 = vld [vmem:[%s0 + $0x8] sm:$0xff]
  %v20 = vld [vmem:[%s0 + $0x10] sm:$0xf]
  %v21 = vld [vmem:[%s0 + $0x14] sm:$0xff]
  %v22 = vld [vmem:[%s0 + $0x1c] sm:$0xff]
  %v23 = vld [vmem:[%s0 + $0x24] sm:$0xf]
  %v24 = vld [vmem:[%s0 + $0x28] sm:$0xff]
  %v25 = vld [vmem:[%s0 + $0x30] sm:$0xff]
  %v26 = vld [vmem:[%s0 + $0x38] sm:$0xf]
  %v27 = vld [vmem:[%s0 + $0x3c] sm:$0xff]
  %v28 = vld [vmem:[%s0 + $0x44] sm:$0xff]
  %v29 = vld [vmem:[%s0 + $0x4c] sm:$0xf]
  %v30 = vld [vmem:[%s1] sm:$0xf]
  %v31 = vld [vmem:[%s1 + $0x4] sm:$0xf]
  %v32 = vld [vmem:[%s1 + $0x8] sm:$0xf]
  %v33 = vld [vmem:[%s1 + $0xc] sm:$0xf]
  %v34 = vld [vmem:[%s1 + $0x10] sm:$0xf]
  %v35 = vld [vmem:[%s1 + $0x14] sm:$0xf]
  %v36 = vld [vmem:[%s1 + $0x18] sm:$0xf]
  %v37 = vld [vmem:[%s1 + $0x1c] sm:$0xf]
  %v38 = vld [vmem:[%s1 + $0x20] sm:$0xf]
  %v39 = vld [vmem:[%s1 + $0x24] sm:$0xf]
  %v40 = vld [vmem:[%s1 + $0x28] sm:$0xf]
  %v41 = vld [vmem:[%s1 + $0x2c] sm:$0xf]
  %v42 = vld [vmem:[%s1 + $0x30] sm:$0xf]
  %v43 = vld [vmem:[%s1 + $0x34] sm:$0xf]
  %v44 = vld [vmem:[%s1 + $0x38] sm:$0xf]
  %v45 = vld [vmem:[%s1 + $0x3c] sm:$0xf]
  %v46 = vld [vmem:[%s1 + $0x40] sm:$0xf]
  %v47 = vld [vmem:[%s1 + $0x44] sm:$0xf]
  %v48 = vld [vmem:[%s1 + $0x48] sm:$0xf]
  %v49 = vld [vmem:[%s1 + $0x4c] sm:$0xf]
  %v50 = vld [vmem:[%s1 + $0x50] sm:$0xf]
  %v51 = vld [vmem:[%s1 + $0x54] sm:$0xf]
  %v52 = vld [vmem:[%s1 + $0x58] sm:$0xf]
  %v53 = vld [vmem:[%s1 + $0x5c] sm:$0xf]
  %v54 = vld [vmem:[%s1 + $0x60] sm:$0xf]
  %v55 = vld [vmem:[%s1 + $0x64] sm:$0xf]
  %v56 = vld [vmem:[%s1 + $0x68] sm:$0xf]
  %v57 = vld [vmem:[%s1 + $0x6c] sm:$0xf]
  %v58 = vld [vmem:[%s1 + $0x70] sm:$0xf]
  %v59 = vld [vmem:[%s1 + $0x74] sm:$0xf]
  %v60 = vld [vmem:[%s1 + $0x78] sm:$0xf]
  %v61 = vld [vmem:[%s1 + $0x7c] sm:$0xf]
  %v62 = vld [vmem:[%s1 + $0x80] sm:$0xf]
  %v63 = vld [vmem:[%s1 + $0x84] sm:$0xf]
  %v64 = vld [vmem:[%s1 + $0x88] sm:$0xf]
  %v65 = vld [vmem:[%s1 + $0x8c] sm:$0xf]
  %v66 = vld [vmem:[%s1 + $0x90] sm:$0xf]
  %v67 = vld [vmem:[%s1 + $0x94] sm:$0xf]
  %v68 = vld [vmem:[%s1 + $0x98] sm:$0xf]
  %v69 = vld [vmem:[%s1 + $0x9c] sm:$0xf]
  %v70 = vld [vmem:[%s1 + $0xa0] sm:$0xf]
  %v71 = vld [vmem:[%s1 + $0xa4] sm:$0xf]
  %v72 = vld [vmem:[%s1 + $0xa8] sm:$0xf]
  %v73 = vld [vmem:[%s1 + $0xac] sm:$0xf]
  %v74 = vld [vmem:[%s1 + $0xb0] sm:$0xf]
  %v75 = vld [vmem:[%s1 + $0xb4] sm:$0xf]
  %v76 = vld [vmem:[%s1 + $0xb8] sm:$0xf]
  %v77 = vld [vmem:[%s1 + $0xbc] sm:$0xf]
  %v78 = vld [vmem:[%s1 + $0xc0] sm:$0xf]
  %v79 = vld [vmem:[%s1 + $0xc4] sm:$0xf]
  %v80 = vld [vmem:[%s1 + $0xc8] sm:$0xf]
  %v81 = vld [vmem:[%s1 + $0xcc] sm:$0xf]
  %v82 = vld [vmem:[%s1 + $0xd0] sm:$0xf]
  %v83 = vld [vmem:[%s1 + $0xd4] sm:$0xf]
  %v84 = vld [vmem:[%s1 + $0xd8] sm:$0xf]
  %v85 = vld [vmem:[%s1 + $0xdc] sm:$0xf]
  %v86 = vld [vmem:[%s1 + $0xe0] sm:$0xf]
  %v87 = vld [vmem:[%s1 + $0xe4] sm:$0xf]
  %v88 = vld [vmem:[%s1 + $0xe8] sm:$0xf]
  %v89 = vld [vmem:[%s1 + $0xec] sm:$0xf]
  %v90 = vld [vmem:[%s1 + $0xf0] sm:$0xf]
  %v91 = vld [vmem:[%s1 + $0xf4] sm:$0xf]
  %v92 = vld [vmem:[%s1 + $0xf8] sm:$0xf]
  %v93 = vld [vmem:[%s1 + $0xfc] sm:$0xf]
  %v94 = vld [vmem:[%s1 + $0x100] sm:$0xf]
  %v95 = vld [vmem:[%s1 + $0x104] sm:$0xf]
  %v96 = vld [vmem:[%s1 + $0x108] sm:$0xf]
  %v97 = vld [vmem:[%s1 + $0x10c] sm:$0xf]
  %v98 = vld [vmem:[%s1 + $0x110] sm:$0xf]
  %v99 = vld [vmem:[%s1 + $0x114] sm:$0xf]
  %v100 = vld [vmem:[%s1 + $0x118] sm:$0xf]
  %v101 = vld [vmem:[%s1 + $0x11c] sm:$0xf]
  %v102 = vld [vmem:[%s1 + $0x120] sm:$0xf]
  %v103 = vld [vmem:[%s1 + $0x124] sm:$0xf]
  %v104 = vld [vmem:[%s1 + $0x128] sm:$0xf]
  %v105 = vld [vmem:[%s1 + $0x12c] sm:$0xf]
  %v106 = vld [vmem:[%s1 + $0x130] sm:$0xf]
  %v107 = vld [vmem:[%s1 + $0x134] sm:$0xf]
  %v108 = vld [vmem:[%s1 + $0x138] sm:$0xf]
  %v109 = vld [vmem:[%s1 + $0x13c] sm:$0xf]
  %v122 = vunpack.c.l.b16 %v18
  %v123 = vunpack.c.h.b16 %v18
  %v124 = vunpack.c.l.b16 %v19
  %v125 = vunpack.c.h.b16 %v19
  %v126 = vunpack.c.l.b16 %v20
  %v127 = vunpack.c.l.b16 %v21
  %v128 = vunpack.c.h.b16 %v21
  %v129 = vunpack.c.l.b16 %v22
  %v130 = vunpack.c.h.b16 %v22
  %v131 = vunpack.c.l.b16 %v23
  %v132 = vunpack.c.l.b16 %v24
  %v133 = vunpack.c.h.b16 %v24
  %v134 = vunpack.c.l.b16 %v25
  %v135 = vunpack.c.h.b16 %v25
  %v136 = vunpack.c.l.b16 %v26
  %v137 = vunpack.c.l.b16 %v27
  %v138 = vunpack.c.h.b16 %v27
  %v139 = vunpack.c.l.b16 %v28
  %v140 = vunpack.c.h.b16 %v28
  %v141 = vunpack.c.l.b16 %v29
  %v142 = vpack.c.b16 %v127, %v122
  %v143 = vpack.c.b16 %v128, %v123
  %v144 = vpack.c.b16 %v129, %v124
  %v145 = vpack.c.b16 %v130, %v125
  %v146 = vpack.c.b16 %v131, %v126
  %v147 = vpack.c.b16 %v137, %v132
  %v148 = vpack.c.b16 %v138, %v133
  %v149 = vpack.c.b16 %v139, %v134
  %v150 = vpack.c.b16 %v140, %v135
  %v151 = vpack.c.b16 %v141, %v136
  %v242 = vunpack.c.l.b16 %v30
  %v243 = vunpack.c.l.b16 %v31
  %v244 = vunpack.c.l.b16 %v32
  %v245 = vunpack.c.l.b16 %v33
  %v246 = vunpack.c.l.b16 %v34
  %v247 = vunpack.c.l.b16 %v35
  %v248 = vunpack.c.l.b16 %v36
  %v249 = vunpack.c.l.b16 %v37
  %v250 = vunpack.c.l.b16 %v38
  %v251 = vunpack.c.l.b16 %v39
  %v252 = vunpack.c.l.b16 %v40
  %v253 = vunpack.c.l.b16 %v41
  %v254 = vunpack.c.l.b16 %v42
  %v255 = vunpack.c.l.b16 %v43
  %v256 = vunpack.c.l.b16 %v44
  %v257 = vunpack.c.l.b16 %v45
  %v258 = vunpack.c.l.b16 %v46
  %v259 = vunpack.c.l.b16 %v47
  %v260 = vunpack.c.l.b16 %v48
  %v261 = vunpack.c.l.b16 %v49
  %v262 = vunpack.c.l.b16 %v50
  %v263 = vunpack.c.l.b16 %v51
  %v264 = vunpack.c.l.b16 %v52
  %v265 = vunpack.c.l.b16 %v53
  %v266 = vunpack.c.l.b16 %v54
  %v267 = vunpack.c.l.b16 %v55
  %v268 = vunpack.c.l.b16 %v56
  %v269 = vunpack.c.l.b16 %v57
  %v270 = vunpack.c.l.b16 %v58
  %v271 = vunpack.c.l.b16 %v59
  %v272 = vunpack.c.l.b16 %v60
  %v273 = vunpack.c.l.b16 %v61
  %v274 = vunpack.c.l.b16 %v62
  %v275 = vunpack.c.l.b16 %v63
  %v276 = vunpack.c.l.b16 %v64
  %v277 = vunpack.c.l.b16 %v65
  %v278 = vunpack.c.l.b16 %v66
  %v279 = vunpack.c.l.b16 %v67
  %v280 = vunpack.c.l.b16 %v68
  %v281 = vunpack.c.l.b16 %v69
  %v282 = vunpack.c.l.b16 %v70
  %v283 = vunpack.c.l.b16 %v71
  %v284 = vunpack.c.l.b16 %v72
  %v285 = vunpack.c.l.b16 %v73
  %v286 = vunpack.c.l.b16 %v74
  %v287 = vunpack.c.l.b16 %v75
  %v288 = vunpack.c.l.b16 %v76
  %v289 = vunpack.c.l.b16 %v77
  %v290 = vunpack.c.l.b16 %v78
  %v291 = vunpack.c.l.b16 %v79
  %v292 = vunpack.c.l.b16 %v80
  %v293 = vunpack.c.l.b16 %v81
  %v294 = vunpack.c.l.b16 %v82
  %v295 = vunpack.c.l.b16 %v83
  %v296 = vunpack.c.l.b16 %v84
  %v297 = vunpack.c.l.b16 %v85
  %v298 = vunpack.c.l.b16 %v86
  %v299 = vunpack.c.l.b16 %v87
  %v300 = vunpack.c.l.b16 %v88
  %v301 = vunpack.c.l.b16 %v89
  %v302 = vunpack.c.l.b16 %v90
  %v303 = vunpack.c.l.b16 %v91
  %v304 = vunpack.c.l.b16 %v92
  %v305 = vunpack.c.l.b16 %v93
  %v306 = vunpack.c.l.b16 %v94
  %v307 = vunpack.c.l.b16 %v95
  %v308 = vunpack.c.l.b16 %v96
  %v309 = vunpack.c.l.b16 %v97
  %v310 = vunpack.c.l.b16 %v98
  %v311 = vunpack.c.l.b16 %v99
  %v312 = vunpack.c.l.b16 %v100
  %v313 = vunpack.c.l.b16 %v101
  %v314 = vunpack.c.l.b16 %v102
  %v315 = vunpack.c.l.b16 %v103
  %v316 = vunpack.c.l.b16 %v104
  %v317 = vunpack.c.l.b16 %v105
  %v318 = vunpack.c.l.b16 %v106
  %v319 = vunpack.c.l.b16 %v107
  %v320 = vunpack.c.l.b16 %v108
  %v321 = vunpack.c.l.b16 %v109
  %v322 = vpack.c.b16 %v243, %v242
  %v323 = vpack.c.b16 %v245, %v244
  %v324 = vpack.c.b16 %v247, %v246
  %v325 = vpack.c.b16 %v249, %v248
  %v326 = vpack.c.b16 %v251, %v250
  %v327 = vpack.c.b16 %v253, %v252
  %v328 = vpack.c.b16 %v255, %v254
  %v329 = vpack.c.b16 %v257, %v256
  %v330 = vpack.c.b16 %v259, %v258
  %v331 = vpack.c.b16 %v261, %v260
  %v332 = vpack.c.b16 %v263, %v262
  %v333 = vpack.c.b16 %v265, %v264
  %v334 = vpack.c.b16 %v267, %v266
  %v335 = vpack.c.b16 %v269, %v268
  %v336 = vpack.c.b16 %v271, %v270
  %v337 = vpack.c.b16 %v273, %v272
  %v338 = vpack.c.b16 %v275, %v274
  %v339 = vpack.c.b16 %v277, %v276
  %v340 = vpack.c.b16 %v279, %v278
  %v341 = vpack.c.b16 %v281, %v280
  %v342 = vpack.c.b16 %v283, %v282
  %v343 = vpack.c.b16 %v285, %v284
  %v344 = vpack.c.b16 %v287, %v286
  %v345 = vpack.c.b16 %v289, %v288
  %v346 = vpack.c.b16 %v291, %v290
  %v347 = vpack.c.b16 %v293, %v292
  %v348 = vpack.c.b16 %v295, %v294
  %v349 = vpack.c.b16 %v297, %v296
  %v350 = vpack.c.b16 %v299, %v298
  %v351 = vpack.c.b16 %v301, %v300
  %v352 = vpack.c.b16 %v303, %v302
  %v353 = vpack.c.b16 %v305, %v304
  %v354 = vpack.c.b16 %v307, %v306
  %v355 = vpack.c.b16 %v309, %v308
  %v356 = vpack.c.b16 %v311, %v310
  %v357 = vpack.c.b16 %v313, %v312
  %v358 = vpack.c.b16 %v315, %v314
  %v359 = vpack.c.b16 %v317, %v316
  %v360 = vpack.c.b16 %v319, %v318
  %v361 = vpack.c.b16 %v321, %v320
  %402 = vmatprep.subr.bf16.mxu0 0
  %403 = vmatpush1.bf16.msra.mxu0 %v329
  %404 = vmatprep.subr.bf16.mxu0 0
  %405 = vmatpush1.bf16.msra.mxu0 %v328
  %406 = vmatprep.subr.bf16.mxu0 0
  %407 = vmatpush1.bf16.msra.mxu0 %v327
  %408 = vmatprep.subr.bf16.mxu0 0
  %409 = vmatpush1.bf16.msra.mxu0 %v326
  %410 = vmatprep.subr.bf16.mxu0 0
  %411 = vmatpush1.bf16.msra.mxu0 %v325
  %412 = vmatprep.subr.bf16.mxu0 0
  %413 = vmatpush1.bf16.msra.mxu0 %v324
  %414 = vmatprep.subr.bf16.mxu0 0
  %415 = vmatpush1.bf16.msra.mxu0 %v323
  %416 = vmatprep.subr.bf16.mxu0 0
  %417 = vmatpush1.bf16.msra.mxu0 %v322
  %418 = vmatprep.subr.bf16.mxu0 0
  %419 = vmatpush2.bf16.msra.mxu0 %v337
  %420 = vmatprep.subr.bf16.mxu0 0
  %421 = vmatpush2.bf16.msra.mxu0 %v336
  %422 = vmatprep.subr.bf16.mxu0 0
  %423 = vmatpush2.bf16.msra.mxu0 %v335
  %424 = vmatprep.subr.bf16.mxu0 0
  %425 = vmatpush2.bf16.msra.mxu0 %v334
  %426 = vmatprep.subr.bf16.mxu0 0
  %427 = vmatpush2.bf16.msra.mxu0 %v333
  %428 = vmatprep.subr.bf16.mxu0 0
  %429 = vmatpush2.bf16.msra.mxu0 %v332
  %430 = vmatprep.subr.bf16.mxu0 0
  %431 = vmatpush2.bf16.msra.mxu0 %v331
  %432 = vmatprep.subr.bf16.mxu0 0
  %433 = vmatpush2.bf16.msra.mxu0 %v330
  %434 = vmatprep.mubr.bf16.mxu0 %v143
  %435 = vmatmul.mubr.bf16.gmra.mxu0 %v142
  %v436 = vpop.f32.mrf.mxu0
  %v437 = vadd.f32 0.0, %v436
  %v438 = vpop.f32.mrf.mxu0
  %v439 = vpop.f32.mrf.mxu0
  %v440 = vadd.f32 0.0, %v439
  %v441 = vpop.f32.mrf.mxu0
  %442 = vmatprep.mubr.bf16.mxu0 %v148
  %443 = vmatmul.mubr.bf16.gmra.mxu0 %v147
  %v444 = vpop.f32.mrf.mxu0
  %v445 = vadd.f32 0.0, %v444
  %v446 = vpop.f32.mrf.mxu0
  %v447 = vpop.f32.mrf.mxu0
  %v448 = vadd.f32 0.0, %v447
  %v449 = vpop.f32.mrf.mxu0
  %450 = vdwg.mxu0
  %451 = vmatprep.subr.bf16.mxu0 0
  %452 = vmatpush1.bf16.msra.mxu0 %v345
  %453 = vmatprep.subr.bf16.mxu0 0
  %454 = vmatpush1.bf16.msra.mxu0 %v344
  %455 = vmatprep.subr.bf16.mxu0 0
  %456 = vmatpush1.bf16.msra.mxu0 %v343
  %457 = vmatprep.subr.bf16.mxu0 0
  %458 = vmatpush1.bf16.msra.mxu0 %v342
  %459 = vmatprep.subr.bf16.mxu0 0
  %460 = vmatpush1.bf16.msra.mxu0 %v341
  %461 = vmatprep.subr.bf16.mxu0 0
  %462 = vmatpush1.bf16.msra.mxu0 %v340
  %463 = vmatprep.subr.bf16.mxu0 0
  %464 = vmatpush1.bf16.msra.mxu0 %v339
  %465 = vmatprep.subr.bf16.mxu0 0
  %466 = vmatpush1.bf16.msra.mxu0 %v338
  %467 = vmatprep.subr.bf16.mxu0 0
  %468 = vmatpush2.bf16.msra.mxu0 %v353
  %469 = vmatprep.subr.bf16.mxu0 0
  %470 = vmatpush2.bf16.msra.mxu0 %v352
  %471 = vmatprep.subr.bf16.mxu0 0
  %472 = vmatpush2.bf16.msra.mxu0 %v351
  %473 = vmatprep.subr.bf16.mxu0 0
  %474 = vmatpush2.bf16.msra.mxu0 %v350
  %475 = vmatprep.subr.bf16.mxu0 0
  %476 = vmatpush2.bf16.msra.mxu0 %v349
  %477 = vmatprep.subr.bf16.mxu0 0
  %478 = vmatpush2.bf16.msra.mxu0 %v348
  %479 = vmatprep.subr.bf16.mxu0 0
  %480 = vmatpush2.bf16.msra.mxu0 %v347
  %481 = vmatprep.subr.bf16.mxu0 0
  %482 = vmatpush2.bf16.msra.mxu0 %v346
  %483 = vmatprep.mubr.bf16.mxu0 %v145
  %484 = vmatmul.mubr.bf16.gmra.mxu0 %v144
  %v485 = vpop.f32.mrf.mxu0
  %v486 = vadd.f32 %v437, %v485
  %v487 = vpop.f32.mrf.mxu0
  %v488 = vpop.f32.mrf.mxu0
  %v489 = vadd.f32 %v440, %v488
  %v490 = vpop.f32.mrf.mxu0
  %491 = vmatprep.mubr.bf16.mxu0 %v150
  %492 = vmatmul.mubr.bf16.gmra.mxu0 %v149
  %v493 = vpop.f32.mrf.mxu0
  %v494 = vadd.f32 %v445, %v493
  %v495 = vpop.f32.mrf.mxu0
  %v496 = vpop.f32.mrf.mxu0
  %v497 = vadd.f32 %v448, %v496
  %v498 = vpop.f32.mrf.mxu0
  %499 = vdwg.mxu0
  %500 = vmatprep.subr.bf16.mxu0 0
  %501 = vmatpush1.bf16.msra.mxu0 %v361
  %502 = vmatprep.subr.bf16.mxu0 0
  %503 = vmatpush1.bf16.msra.mxu0 %v360
  %504 = vmatprep.subr.bf16.mxu0 0
  %505 = vmatpush1.bf16.msra.mxu0 %v359
  %506 = vmatprep.subr.bf16.mxu0 0
  %507 = vmatpush1.bf16.msra.mxu0 %v358
  %508 = vmatprep.subr.bf16.mxu0 0
  %509 = vmatpush1.bf16.msra.mxu0 %v357
  %510 = vmatprep.subr.bf16.mxu0 0
  %511 = vmatpush1.bf16.msra.mxu0 %v356
  %512 = vmatprep.subr.bf16.mxu0 0
  %513 = vmatpush1.bf16.msra.mxu0 %v355
  %514 = vmatprep.subr.bf16.mxu0 0
  %515 = vmatpush1.bf16.msra.mxu0 %v354
  %516 = vmatprep.subr.bf16.mxu0 0
  %517 = vmatpush2.bf16.msra.mxu0 0
  %518 = vmatprep.subr.bf16.mxu0 0
  %519 = vmatpush2.bf16.msra.mxu0 0
  %520 = vmatprep.subr.bf16.mxu0 0
  %521 = vmatpush2.bf16.msra.mxu0 0
  %522 = vmatprep.subr.bf16.mxu0 0
  %523 = vmatpush2.bf16.msra.mxu0 0
  %524 = vmatprep.subr.bf16.mxu0 0
  %525 = vmatpush2.bf16.msra.mxu0 0
  %526 = vmatprep.subr.bf16.mxu0 0
  %527 = vmatpush2.bf16.msra.mxu0 0
  %528 = vmatprep.subr.bf16.mxu0 0
  %529 = vmatpush2.bf16.msra.mxu0 0
  %530 = vmatprep.subr.bf16.mxu0 0
  %531 = vmatpush2.bf16.msra.mxu0 0
  %532 = vmatprep.mubr.bf16.mxu0 0
  %533 = vmatmul.mubr.bf16.gmra.mxu0 %v146
  %v534 = vpop.f32.mrf.mxu0
  %v535 = vadd.f32 %v486, %v534
  %v536 = vpop.f32.mrf.mxu0
  %v537 = vpop.f32.mrf.mxu0
  %v538 = vadd.f32 %v489, %v537
  %v539 = vpop.f32.mrf.mxu0
  %540 = vmatprep.mubr.bf16.mxu0 0
  %541 = vmatmul.mubr.bf16.gmra.mxu0 %v151
  %v542 = vpop.f32.mrf.mxu0
  %v543 = vadd.f32 %v494, %v542
  %v544 = vpop.f32.mrf.mxu0
  %v545 = vpop.f32.mrf.mxu0
  %v546 = vadd.f32 %v497, %v545
  %v547 = vpop.f32.mrf.mxu0
  %548 = vdwg.mxu0
  %v549 = vld [vmem:[%s3] sm:$0x1]
  %v551 = vlaneseq
  %v552 = vshrl.u32 %v551, 7
  %v553 = vsub.s32 0, %v552
  %v554 = vrot.slane %v549, %v553
  %v556 = vmul.f32 %v535, %v554
  %v557 = vmul.f32 %v538, %v554
  %v558 = vmul.f32 %v543, %v554
  %v559 = vmul.f32 %v546, %v554
  %v560 = vld [vmem:[%s2] sm:$0x1]
  %v562 = vlaneseq
  %v563 = vshrl.u32 %v562, 7
  %v564 = vsub.s32 0, %v563
  %v565 = vrot.slane %v560, %v564
  %v567 = vadd.f32 %v556, %v565
  %v568 = vadd.f32 %v557, %v565
  %v569 = vadd.f32 %v558, %v565
  %v570 = vadd.f32 %v559, %v565
  %v571 = vmax.f32 %v567, 0.0
  %v572 = vmax.f32 %v568, 0.0
  %v573 = vmax.f32 %v569, 0.0
  %v574 = vmax.f32 %v570, 0.0
  %v575 = vpack.c.bf16 %v572, %v571
  %v576 = vpack.c.bf16 %v574, %v573
  %v579 = vunpack.c.l.b16 %v575
  %v580 = vunpack.c.h.b16 %v575
  %v581 = vunpack.c.l.b16 %v576
  %v582 = vunpack.c.h.b16 %v576
  %v583 = vpack.c.b16 %v579, %v579
  %v584 = vpack.c.b16 %v580, %v580
  %v585 = vpack.c.b16 %v581, %v581
  %v586 = vpack.c.b16 %v582, %v582
  %591 = vst [vmem:[%s4] sm:$0xf] %v583
  %592 = vst [vmem:[%s4 + $0x4] sm:$0xf] %v584
  %593 = vst [vmem:[%s4 + $0x8] sm:$0xf] %v585
  %594 = vst [vmem:[%s4 + $0xc] sm:$0xf] %v586
  // Predicated region
  $region18: #{forward.22} parent=0 // pred_check
    _
  $region19: #{forward.22} parent=0 // pred_check_branch
    %596 = sbr.rel (0) target = $region21
  $region20: #{forward.22} parent=0 // pred_region
    _
  $region21: #{forward.22} parent=0 // pred_fallthru
    _
  // Predicated region
  $region22: #{forward.22} parent=0 // pred_check
    _
  $region23: #{forward.22} parent=0 // pred_check_branch
    %598 = sbr.rel (0) target = $region25
  $region24: #{forward.22} parent=0 // pred_region
    _
  $region25: #{forward.22} parent=0 // pred_fallthru
    _

// kernel: forward.24
$region0: #{forward.24}
  #allocation0 [shape = 'u32[]', space=smem, size = 0x4, offset = 0x4, fixed_abs, tag = 'smem constant byte address 0x4 - core index']
  #allocation1 [shape = 'u32[144,128]{1,0:T(1,128)}', space=vmem, size = 0x12000, scoped, tag = 'internal scratch']
  %s0 = inlined_call_operand.vmem [shape: bf16[32,1152], index: 0, kind: input, shape index: {}]
  %s1 = inlined_call_operand.vmem [shape: bf16[1152,128], index: 1, kind: input, shape index: {}]
  %s2 = inlined_call_operand.vmem [shape: f32[1,128], index: 2, kind: input, shape index: {}]
  %s3 = inlined_call_operand.vmem [shape: f32[1,128], index: 3, kind: input, shape index: {}]
  %s4 = inlined_call_operand.vmem [shape: bf16[32,128], index: 4, kind: input, shape index: {}]
  %s5 = inlined_call_operand.vmem [shape: bf16[32,128], index: 5, kind: output, shape index: {}]
  %s6 = sld [smem:[#allocation0]]
  $region30: #{forward.24} parent=0
    _
  %s8 = ssub.s32 1, %s6
  %s9 = scalar_select 0, %s8, %s6
  // Predicated region
  $region2: #{forward.24} parent=0 // pred_check
    _
  $region3: #{forward.24} parent=0 // pred_check_branch
    %11 = sbr.rel (0) target = $region5
  $region4: #{forward.24} parent=0 // pred_region
    _
  $region5: #{forward.24} parent=0 // pred_fallthru
    _
  // Predicated region
  $region6: #{forward.24} parent=0 // pred_check
    _
  $region7: #{forward.24} parent=0 // pred_check_branch
    %13 = sbr.rel (0) target = $region9
  $region8: #{forward.24} parent=0 // pred_region
    _
  $region9: #{forward.24} parent=0 // pred_fallthru
    _
  // Predicated region
  $region10: #{forward.24} parent=0 // pred_check
    _
  $region11: #{forward.24} parent=0 // pred_check_branch
    %15 = sbr.rel (0) target = $region13
  $region12: #{forward.24} parent=0 // pred_region
    _
  $region13: #{forward.24} parent=0 // pred_fallthru
    _
  // Predicated region
  $region14: #{forward.24} parent=0 // pred_check
    _
  $region15: #{forward.24} parent=0 // pred_check_branch
    %17 = sbr.rel (0) target = $region17
  $region16: #{forward.24} parent=0 // pred_region
    _
  $region17: #{forward.24} parent=0 // pred_fallthru
    _
  // Predicated region
  $region18: #{forward.24} parent=0 // pred_check
    _
  $region19: #{forward.24} parent=0 // pred_check_branch
    %19 = sbr.rel (0) target = $region21
  $region20: #{forward.24} parent=0 // pred_region
    _
  $region21: #{forward.24} parent=0 // pred_fallthru
    _
  %v21 = vld [vmem:[%s0] sm:$0xff]
  %v22 = vld [vmem:[%s0 + $0x8] sm:$0xff]
  %v23 = vld [vmem:[%s0 + $0x10] sm:$0xff]
  %v24 = vld [vmem:[%s0 + $0x18] sm:$0xff]
  %v25 = vld [vmem:[%s0 + $0x20] sm:$0xf]
  %v26 = vld [vmem:[%s0 + $0x24] sm:$0xff]
  %v27 = vld [vmem:[%s0 + $0x2c] sm:$0xff]
  %v28 = vld [vmem:[%s0 + $0x34] sm:$0xff]
  %v29 = vld [vmem:[%s0 + $0x3c] sm:$0xff]
  %v30 = vld [vmem:[%s0 + $0x44] sm:$0xf]
  %v31 = vld [vmem:[%s0 + $0x48] sm:$0xff]
  %v32 = vld [vmem:[%s0 + $0x50] sm:$0xff]
  %v33 = vld [vmem:[%s0 + $0x58] sm:$0xff]
  %v34 = vld [vmem:[%s0 + $0x60] sm:$0xff]
  %v35 = vld [vmem:[%s0 + $0x68] sm:$0xf]
  %v36 = vld [vmem:[%s0 + $0x6c] sm:$0xff]
  %v37 = vld [vmem:[%s0 + $0x74] sm:$0xff]
  %v38 = vld [vmem:[%s0 + $0x7c] sm:$0xff]
  %v39 = vld [vmem:[%s0 + $0x84] sm:$0xff]
  %v40 = vld [vmem:[%s0 + $0x8c] sm:$0xf]
  %v41 = vld [vmem:[%s1] sm:$0xf]
  %v42 = vld [vmem:[%s1 + $0x4] sm:$0xf]
  %v43 = vld [vmem:[%s1 + $0x8] sm:$0xf]
  %v44 = vld [vmem:[%s1 + $0xc] sm:$0xf]
  %v45 = vld [vmem:[%s1 + $0x10] sm:$0xf]
  %v46 = vld [vmem:[%s1 + $0x14] sm:$0xf]
  %v47 = vld [vmem:[%s1 + $0x18] sm:$0xf]
  %v48 = vld [vmem:[%s1 + $0x1c] sm:$0xf]
  %v49 = vld [vmem:[%s1 + $0x20] sm:$0xf]
  %v50 = vld [vmem:[%s1 + $0x24] sm:$0xf]
  %v51 = vld [vmem:[%s1 + $0x28] sm:$0xf]
  %v52 = vld [vmem:[%s1 + $0x2c] sm:$0xf]
  %v53 = vld [vmem:[%s1 + $0x30] sm:$0xf]
  %v54 = vld [vmem:[%s1 + $0x34] sm:$0xf]
  %v55 = vld [vmem:[%s1 + $0x38] sm:$0xf]
  %v56 = vld [vmem:[%s1 + $0x3c] sm:$0xf]
  %v57 = vld [vmem:[%s1 + $0x40] sm:$0xf]
  %v58 = vld [vmem:[%s1 + $0x44] sm:$0xf]
  %v59 = vld [vmem:[%s1 + $0x48] sm:$0xf]
  %v60 = vld [vmem:[%s1 + $0x4c] sm:$0xf]
  %v61 = vld [vmem:[%s1 + $0x50] sm:$0xf]
  %v62 = vld [vmem:[%s1 + $0x54] sm:$0xf]
  %v63 = vld [vmem:[%s1 + $0x58] sm:$0xf]
  %v64 = vld [vmem:[%s1 + $0x5c] sm:$0xf]
  %v65 = vld [vmem:[%s1 + $0x60] sm:$0xf]
  %v66 = vld [vmem:[%s1 + $0x64] sm:$0xf]
  %v67 = vld [vmem:[%s1 + $0x68] sm:$0xf]
  %v68 = vld [vmem:[%s1 + $0x6c] sm:$0xf]
  %v69 = vld [vmem:[%s1 + $0x70] sm:$0xf]
  %v70 = vld [vmem:[%s1 + $0x74] sm:$0xf]
  %v71 = vld [vmem:[%s1 + $0x78] sm:$0xf]
  %v72 = vld [vmem:[%s1 + $0x7c] sm:$0xf]
  %v73 = vld [vmem:[%s1 + $0x80] sm:$0xf]
  %v74 = vld [vmem:[%s1 + $0x84] sm:$0xf]
  %v75 = vld [vmem:[%s1 + $0x88] sm:$0xf]
  %v76 = vld [vmem:[%s1 + $0x8c] sm:$0xf]
  %v77 = vld [vmem:[%s1 + $0x90] sm:$0xf]
  %v78 = vld [vmem:[%s1 + $0x94] sm:$0xf]
  %v79 = vld [vmem:[%s1 + $0x98] sm:$0xf]
  %v80 = vld [vmem:[%s1 + $0x9c] sm:$0xf]
  %v81 = vld [vmem:[%s1 + $0xa0] sm:$0xf]
  %v82 = vld [vmem:[%s1 + $0xa4] sm:$0xf]
  %v83 = vld [vmem:[%s1 + $0xa8] sm:$0xf]
  %v84 = vld [vmem:[%s1 + $0xac] sm:$0xf]
  %v85 = vld [vmem:[%s1 + $0xb0] sm:$0xf]
  %v86 = vld [vmem:[%s1 + $0xb4] sm:$0xf]
  %v87 = vld [vmem:[%s1 + $0xb8] sm:$0xf]
  %v88 = vld [vmem:[%s1 + $0xbc] sm:$0xf]
  %v89 = vld [vmem:[%s1 + $0xc0] sm:$0xf]
  %v90 = vld [vmem:[%s1 + $0xc4] sm:$0xf]
  %v91 = vld [vmem:[%s1 + $0xc8] sm:$0xf]
  %v92 = vld [vmem:[%s1 + $0xcc] sm:$0xf]
  %v93 = vld [vmem:[%s1 + $0xd0] sm:$0xf]
  %v94 = vld [vmem:[%s1 + $0xd4] sm:$0xf]
  %v95 = vld [vmem:[%s1 + $0xd8] sm:$0xf]
  %v96 = vld [vmem:[%s1 + $0xdc] sm:$0xf]
  %v97 = vld [vmem:[%s1 + $0xe0] sm:$0xf]
  %v98 = vld [vmem:[%s1 + $0xe4] sm:$0xf]
  %v99 = vld [vmem:[%s1 + $0xe8] sm:$0xf]
  %v100 = vld [vmem:[%s1 + $0xec] sm:$0xf]
  %v101 = vld [vmem:[%s1 + $0xf0] sm:$0xf]
  %v102 = vld [vmem:[%s1 + $0xf4] sm:$0xf]
  %v103 = vld [vmem:[%s1 + $0xf8] sm:$0xf]
  %v104 = vld [vmem:[%s1 + $0xfc] sm:$0xf]
  %v105 = vld [vmem:[%s1 + $0x100] sm:$0xf]
  %v106 = vld [vmem:[%s1 + $0x104] sm:$0xf]
  %v107 = vld [vmem:[%s1 + $0x108] sm:$0xf]
  %v108 = vld [vmem:[%s1 + $0x10c] sm:$0xf]
  %v109 = vld [vmem:[%s1 + $0x110] sm:$0xf]
  %v110 = vld [vmem:[%s1 + $0x114] sm:$0xf]
  %v111 = vld [vmem:[%s1 + $0x118] sm:$0xf]
  %v112 = vld [vmem:[%s1 + $0x11c] sm:$0xf]
  %v113 = vld [vmem:[%s1 + $0x120] sm:$0xf]
  %v114 = vld [vmem:[%s1 + $0x124] sm:$0xf]
  %v115 = vld [vmem:[%s1 + $0x128] sm:$0xf]
  %v116 = vld [vmem:[%s1 + $0x12c] sm:$0xf]
  %v117 = vld [vmem:[%s1 + $0x130] sm:$0xf]
  %v118 = vld [vmem:[%s1 + $0x134] sm:$0xf]
  %v119 = vld [vmem:[%s1 + $0x138] sm:$0xf]
  %v120 = vld [vmem:[%s1 + $0x13c] sm:$0xf]
  %v121 = vld [vmem:[%s1 + $0x140] sm:$0xf]
  %v122 = vld [vmem:[%s1 + $0x144] sm:$0xf]
  %v123 = vld [vmem:[%s1 + $0x148] sm:$0xf]
  %v124 = vld [vmem:[%s1 + $0x14c] sm:$0xf]
  %v125 = vld [vmem:[%s1 + $0x150] sm:$0xf]
  %v126 = vld [vmem:[%s1 + $0x154] sm:$0xf]
  %v127 = vld [vmem:[%s1 + $0x158] sm:$0xf]
  %v128 = vld [vmem:[%s1 + $0x15c] sm:$0xf]
  %v129 = vld [vmem:[%s1 + $0x160] sm:$0xf]
  %v130 = vld [vmem:[%s1 + $0x164] sm:$0xf]
  %v131 = vld [vmem:[%s1 + $0x168] sm:$0xf]
  %v132 = vld [vmem:[%s1 + $0x16c] sm:$0xf]
  %v133 = vld [vmem:[%s1 + $0x170] sm:$0xf]
  %v134 = vld [vmem:[%s1 + $0x174] sm:$0xf]
  %v135 = vld [vmem:[%s1 + $0x178] sm:$0xf]
  %v136 = vld [vmem:[%s1 + $0x17c] sm:$0xf]
  %v137 = vld [vmem:[%s1 + $0x180] sm:$0xf]
  %v138 = vld [vmem:[%s1 + $0x184] sm:$0xf]
  %v139 = vld [vmem:[%s1 + $0x188] sm:$0xf]
  %v140 = vld [vmem:[%s1 + $0x18c] sm:$0xf]
  %v141 = vld [vmem:[%s1 + $0x190] sm:$0xf]
  %v142 = vld [vmem:[%s1 + $0x194] sm:$0xf]
  %v143 = vld [vmem:[%s1 + $0x198] sm:$0xf]
  %v144 = vld [vmem:[%s1 + $0x19c] sm:$0xf]
  %v145 = vld [vmem:[%s1 + $0x1a0] sm:$0xf]
  %v146 = vld [vmem:[%s1 + $0x1a4] sm:$0xf]
  %v147 = vld [vmem:[%s1 + $0x1a8] sm:$0xf]
  %v148 = vld [vmem:[%s1 + $0x1ac] sm:$0xf]
  %v149 = vld [vmem:[%s1 + $0x1b0] sm:$0xf]
  %v150 = vld [vmem:[%s1 + $0x1b4] sm:$0xf]
  %v151 = vld [vmem:[%s1 + $0x1b8] sm:$0xf]
  %v152 = vld [vmem:[%s1 + $0x1bc] sm:$0xf]
  %v153 = vld [vmem:[%s1 + $0x1c0] sm:$0xf]
  %v154 = vld [vmem:[%s1 + $0x1c4] sm:$0xf]
  %v155 = vld [vmem:[%s1 + $0x1c8] sm:$0xf]
  %v156 = vld [vmem:[%s1 + $0x1cc] sm:$0xf]
  %v157 = vld [vmem:[%s1 + $0x1d0] sm:$0xf]
  %v158 = vld [vmem:[%s1 + $0x1d4] sm:$0xf]
  %v159 = vld [vmem:[%s1 + $0x1d8] sm:$0xf]
  %v160 = vld [vmem:[%s1 + $0x1dc] sm:$0xf]
  %v161 = vld [vmem:[%s1 + $0x1e0] sm:$0xf]
  %v162 = vld [vmem:[%s1 + $0x1e4] sm:$0xf]
  %v163 = vld [vmem:[%s1 + $0x1e8] sm:$0xf]
  %v164 = vld [vmem:[%s1 + $0x1ec] sm:$0xf]
  %v165 = vld [vmem:[%s1 + $0x1f0] sm:$0xf]
  %v166 = vld [vmem:[%s1 + $0x1f4] sm:$0xf]
  %v167 = vld [vmem:[%s1 + $0x1f8] sm:$0xf]
  %v168 = vld [vmem:[%s1 + $0x1fc] sm:$0xf]
  %v169 = vld [vmem:[%s1 + $0x200] sm:$0xf]
  %v170 = vld [vmem:[%s1 + $0x204] sm:$0xf]
  %v171 = vld [vmem:[%s1 + $0x208] sm:$0xf]
  %v172 = vld [vmem:[%s1 + $0x20c] sm:$0xf]
  %v173 = vld [vmem:[%s1 + $0x210] sm:$0xf]
  %v174 = vld [vmem:[%s1 + $0x214] sm:$0xf]
  %v175 = vld [vmem:[%s1 + $0x218] sm:$0xf]
  %v176 = vld [vmem:[%s1 + $0x21c] sm:$0xf]
  %v177 = vld [vmem:[%s1 + $0x220] sm:$0xf]
  %v178 = vld [vmem:[%s1 + $0x224] sm:$0xf]
  %v179 = vld [vmem:[%s1 + $0x228] sm:$0xf]
  %v180 = vld [vmem:[%s1 + $0x22c] sm:$0xf]
  %v181 = vld [vmem:[%s1 + $0x230] sm:$0xf]
  %v182 = vld [vmem:[%s1 + $0x234] sm:$0xf]
  %v183 = vld [vmem:[%s1 + $0x238] sm:$0xf]
  %v184 = vld [vmem:[%s1 + $0x23c] sm:$0xf]
  %v205 = vunpack.c.l.b16 %v21
  %v206 = vunpack.c.h.b16 %v21
  %v207 = vunpack.c.l.b16 %v22
  %v208 = vunpack.c.h.b16 %v22
  %v209 = vunpack.c.l.b16 %v23
  %v210 = vunpack.c.h.b16 %v23
  %v211 = vunpack.c.l.b16 %v24
  %v212 = vunpack.c.h.b16 %v24
  %v213 = vunpack.c.l.b16 %v25
  %v214 = vunpack.c.l.b16 %v26
  %v215 = vunpack.c.h.b16 %v26
  %v216 = vunpack.c.l.b16 %v27
  %v217 = vunpack.c.h.b16 %v27
  %v218 = vunpack.c.l.b16 %v28
  %v219 = vunpack.c.h.b16 %v28
  %v220 = vunpack.c.l.b16 %v29
  %v221 = vunpack.c.h.b16 %v29
  %v222 = vunpack.c.l.b16 %v30
  %v223 = vunpack.c.l.b16 %v31
  %v224 = vunpack.c.h.b16 %v31
  %v225 = vunpack.c.l.b16 %v32
  %v226 = vunpack.c.h.b16 %v32
  %v227 = vunpack.c.l.b16 %v33
  %v228 = vunpack.c.h.b16 %v33
  %v229 = vunpack.c.l.b16 %v34
  %v230 = vunpack.c.h.b16 %v34
  %v231 = vunpack.c.l.b16 %v35
  %v232 = vunpack.c.l.b16 %v36
  %v233 = vunpack.c.h.b16 %v36
  %v234 = vunpack.c.l.b16 %v37
  %v235 = vunpack.c.h.b16 %v37
  %v236 = vunpack.c.l.b16 %v38
  %v237 = vunpack.c.h.b16 %v38
  %v238 = vunpack.c.l.b16 %v39
  %v239 = vunpack.c.h.b16 %v39
  %v240 = vunpack.c.l.b16 %v40
  %v241 = vpack.c.b16 %v214, %v205
  %v242 = vpack.c.b16 %v215, %v206
  %v243 = vpack.c.b16 %v216, %v207
  %v244 = vpack.c.b16 %v217, %v208
  %v245 = vpack.c.b16 %v218, %v209
  %v246 = vpack.c.b16 %v219, %v210
  %v247 = vpack.c.b16 %v220, %v211
  %v248 = vpack.c.b16 %v221, %v212
  %v249 = vpack.c.b16 %v222, %v213
  %v250 = vpack.c.b16 %v232, %v223
  %v251 = vpack.c.b16 %v233, %v224
  %v252 = vpack.c.b16 %v234, %v225
  %v253 = vpack.c.b16 %v235, %v226
  %v254 = vpack.c.b16 %v236, %v227
  %v255 = vpack.c.b16 %v237, %v228
  %v256 = vpack.c.b16 %v238, %v229
  %v257 = vpack.c.b16 %v239, %v230
  %v258 = vpack.c.b16 %v240, %v231
  %v421 = vunpack.c.l.b16 %v41
  %v422 = vunpack.c.l.b16 %v42
  %v423 = vunpack.c.l.b16 %v43
  %v424 = vunpack.c.l.b16 %v44
  %v425 = vunpack.c.l.b16 %v45
  %v426 = vunpack.c.l.b16 %v46
  %v427 = vunpack.c.l.b16 %v47
  %v428 = vunpack.c.l.b16 %v48
  %v429 = vunpack.c.l.b16 %v49
  %v430 = vunpack.c.l.b16 %v50
  %v431 = vunpack.c.l.b16 %v51
  %v432 = vunpack.c.l.b16 %v52
  %v433 = vunpack.c.l.b16 %v53
  %v434 = vunpack.c.l.b16 %v54
  %v435 = vunpack.c.l.b16 %v55
  %v436 = vunpack.c.l.b16 %v56
  %v437 = vunpack.c.l.b16 %v57
  %v438 = vunpack.c.l.b16 %v58
  %v439 = vunpack.c.l.b16 %v59
  %v440 = vunpack.c.l.b16 %v60
  %v441 = vunpack.c.l.b16 %v61
  %v442 = vunpack.c.l.b16 %v62
  %v443 = vunpack.c.l.b16 %v63
  %v444 = vunpack.c.l.b16 %v64
  %v445 = vunpack.c.l.b16 %v65
  %v446 = vunpack.c.l.b16 %v66
  %v447 = vunpack.c.l.b16 %v67
  %v448 = vunpack.c.l.b16 %v68
  %v449 = vunpack.c.l.b16 %v69
  %v450 = vunpack.c.l.b16 %v70
  %v451 = vunpack.c.l.b16 %v71
  %v452 = vunpack.c.l.b16 %v72
  %v453 = vunpack.c.l.b16 %v73
  %v454 = vunpack.c.l.b16 %v74
  %v455 = vunpack.c.l.b16 %v75
  %v456 = vunpack.c.l.b16 %v76
  %v457 = vunpack.c.l.b16 %v77
  %v458 = vunpack.c.l.b16 %v78
  %v459 = vunpack.c.l.b16 %v79
  %v460 = vunpack.c.l.b16 %v80
  %v461 = vunpack.c.l.b16 %v81
  %v462 = vunpack.c.l.b16 %v82
  %v463 = vunpack.c.l.b16 %v83
  %v464 = vunpack.c.l.b16 %v84
  %v465 = vunpack.c.l.b16 %v85
  %v466 = vunpack.c.l.b16 %v86
  %v467 = vunpack.c.l.b16 %v87
  %v468 = vunpack.c.l.b16 %v88
  %v469 = vunpack.c.l.b16 %v89
  %v470 = vunpack.c.l.b16 %v90
  %v471 = vunpack.c.l.b16 %v91
  %v472 = vunpack.c.l.b16 %v92
  %v473 = vunpack.c.l.b16 %v93
  %v474 = vunpack.c.l.b16 %v94
  %v475 = vunpack.c.l.b16 %v95
  %v476 = vunpack.c.l.b16 %v96
  %v477 = vunpack.c.l.b16 %v97
  %v478 = vunpack.c.l.b16 %v98
  %v479 = vunpack.c.l.b16 %v99
  %v480 = vunpack.c.l.b16 %v100
  %v481 = vunpack.c.l.b16 %v101
  %v482 = vunpack.c.l.b16 %v102
  %v483 = vunpack.c.l.b16 %v103
  %v484 = vunpack.c.l.b16 %v104
  %v485 = vunpack.c.l.b16 %v105
  %v486 = vunpack.c.l.b16 %v106
  %v487 = vunpack.c.l.b16 %v107
  %v488 = vunpack.c.l.b16 %v108
  %v489 = vunpack.c.l.b16 %v109
  %v490 = vunpack.c.l.b16 %v110
  %v491 = vunpack.c.l.b16 %v111
  %v492 = vunpack.c.l.b16 %v112
  %v493 = vunpack.c.l.b16 %v113
  %v494 = vunpack.c.l.b16 %v114
  %v495 = vunpack.c.l.b16 %v115
  %v496 = vunpack.c.l.b16 %v116
  %v497 = vunpack.c.l.b16 %v117
  %v498 = vunpack.c.l.b16 %v118
  %v499 = vunpack.c.l.b16 %v119
  %v500 = vunpack.c.l.b16 %v120
  %v501 = vunpack.c.l.b16 %v121
  %v502 = vunpack.c.l.b16 %v122
  %v503 = vunpack.c.l.b16 %v123
  %v504 = vunpack.c.l.b16 %v124
  %v505 = vunpack.c.l.b16 %v125
  %v506 = vunpack.c.l.b16 %v126
  %v507 = vunpack.c.l.b16 %v127
  %v508 = vunpack.c.l.b16 %v128
  %v509 = vunpack.c.l.b16 %v129
  %v510 = vunpack.c.l.b16 %v130
  %v511 = vunpack.c.l.b16 %v131
  %v512 = vunpack.c.l.b16 %v132
  %v513 = vunpack.c.l.b16 %v133
  %v514 = vunpack.c.l.b16 %v134
  %v515 = vunpack.c.l.b16 %v135
  %v516 = vunpack.c.l.b16 %v136
  %v517 = vunpack.c.l.b16 %v137
  %v518 = vunpack.c.l.b16 %v138
  %v519 = vunpack.c.l.b16 %v139
  %v520 = vunpack.c.l.b16 %v140
  %v521 = vunpack.c.l.b16 %v141
  %v522 = vunpack.c.l.b16 %v142
  %v523 = vunpack.c.l.b16 %v143
  %v524 = vunpack.c.l.b16 %v144
  %v525 = vunpack.c.l.b16 %v145
  %v526 = vunpack.c.l.b16 %v146
  %v527 = vunpack.c.l.b16 %v147
  %v528 = vunpack.c.l.b16 %v148
  %v529 = vunpack.c.l.b16 %v149
  %v530 = vunpack.c.l.b16 %v150
  %v531 = vunpack.c.l.b16 %v151
  %v532 = vunpack.c.l.b16 %v152
  %v533 = vunpack.c.l.b16 %v153
  %v534 = vunpack.c.l.b16 %v154
  %v535 = vunpack.c.l.b16 %v155
  %v536 = vunpack.c.l.b16 %v156
  %v537 = vunpack.c.l.b16 %v157
  %v538 = vunpack.c.l.b16 %v158
  %v539 = vunpack.c.l.b16 %v159
  %v540 = vunpack.c.l.b16 %v160
  %v541 = vunpack.c.l.b16 %v161
  %v542 = vunpack.c.l.b16 %v162
  %v543 = vunpack.c.l.b16 %v163
  %v544 = vunpack.c.l.b16 %v164
  %v545 = vunpack.c.l.b16 %v165
  %v546 = vunpack.c.l.b16 %v166
  %v547 = vunpack.c.l.b16 %v167
  %v548 = vunpack.c.l.b16 %v168
  %v549 = vunpack.c.l.b16 %v169
  %v550 = vunpack.c.l.b16 %v170
  %v551 = vunpack.c.l.b16 %v171
  %v552 = vunpack.c.l.b16 %v172
  %v553 = vunpack.c.l.b16 %v173
  %v554 = vunpack.c.l.b16 %v174
  %v555 = vunpack.c.l.b16 %v175
  %v556 = vunpack.c.l.b16 %v176
  %v557 = vunpack.c.l.b16 %v177
  %v558 = vunpack.c.l.b16 %v178
  %v559 = vunpack.c.l.b16 %v179
  %v560 = vunpack.c.l.b16 %v180
  %v561 = vunpack.c.l.b16 %v181
  %v562 = vunpack.c.l.b16 %v182
  %v563 = vunpack.c.l.b16 %v183
  %v564 = vunpack.c.l.b16 %v184
  %v565 = vpack.c.b16 %v422, %v421
  %v566 = vpack.c.b16 %v424, %v423
  %v567 = vpack.c.b16 %v426, %v425
  %v568 = vpack.c.b16 %v428, %v427
  %v569 = vpack.c.b16 %v430, %v429
  %v570 = vpack.c.b16 %v432, %v431
  %v571 = vpack.c.b16 %v434, %v433
  %v572 = vpack.c.b16 %v436, %v435
  %v573 = vpack.c.b16 %v438, %v437
  %v574 = vpack.c.b16 %v440, %v439
  %v575 = vpack.c.b16 %v442, %v441
  %v576 = vpack.c.b16 %v444, %v443
  %v577 = vpack.c.b16 %v446, %v445
  %v578 = vpack.c.b16 %v448, %v447
  %v579 = vpack.c.b16 %v450, %v449
  %v580 = vpack.c.b16 %v452, %v451
  %v581 = vpack.c.b16 %v454, %v453
  %v582 = vpack.c.b16 %v456, %v455
  %v583 = vpack.c.b16 %v458, %v457
  %v584 = vpack.c.b16 %v460, %v459
  %v585 = vpack.c.b16 %v462, %v461
  %v586 = vpack.c.b16 %v464, %v463
  %v587 = vpack.c.b16 %v466, %v465
  %v588 = vpack.c.b16 %v468, %v467
  %v589 = vpack.c.b16 %v470, %v469
  %v590 = vpack.c.b16 %v472, %v471
  %v591 = vpack.c.b16 %v474, %v473
  %v592 = vpack.c.b16 %v476, %v475
  %v593 = vpack.c.b16 %v478, %v477
  %v594 = vpack.c.b16 %v480, %v479
  %v595 = vpack.c.b16 %v482, %v481
  %v596 = vpack.c.b16 %v484, %v483
  %v597 = vpack.c.b16 %v486, %v485
  %v598 = vpack.c.b16 %v488, %v487
  %v599 = vpack.c.b16 %v490, %v489
  %v600 = vpack.c.b16 %v492, %v491
  %v601 = vpack.c.b16 %v494, %v493
  %v602 = vpack.c.b16 %v496, %v495
  %v603 = vpack.c.b16 %v498, %v497
  %v604 = vpack.c.b16 %v500, %v499
  %v605 = vpack.c.b16 %v502, %v501
  %v606 = vpack.c.b16 %v504, %v503
  %v607 = vpack.c.b16 %v506, %v505
  %v608 = vpack.c.b16 %v508, %v507
  %v609 = vpack.c.b16 %v510, %v509
  %v610 = vpack.c.b16 %v512, %v511
  %v611 = vpack.c.b16 %v514, %v513
  %v612 = vpack.c.b16 %v516, %v515
  %v613 = vpack.c.b16 %v518, %v517
  %v614 = vpack.c.b16 %v520, %v519
  %v615 = vpack.c.b16 %v522, %v521
  %v616 = vpack.c.b16 %v524, %v523
  %v617 = vpack.c.b16 %v526, %v525
  %v618 = vpack.c.b16 %v528, %v527
  %v619 = vpack.c.b16 %v530, %v529
  %v620 = vpack.c.b16 %v532, %v531
  %v621 = vpack.c.b16 %v534, %v533
  %v622 = vpack.c.b16 %v536, %v535
  %v623 = vpack.c.b16 %v538, %v537
  %v624 = vpack.c.b16 %v540, %v539
  %v625 = vpack.c.b16 %v542, %v541
  %v626 = vpack.c.b16 %v544, %v543
  %v627 = vpack.c.b16 %v546, %v545
  %v628 = vpack.c.b16 %v548, %v547
  %v629 = vpack.c.b16 %v550, %v549
  %v630 = vpack.c.b16 %v552, %v551
  %v631 = vpack.c.b16 %v554, %v553
  %v632 = vpack.c.b16 %v556, %v555
  %v633 = vpack.c.b16 %v558, %v557
  %v634 = vpack.c.b16 %v560, %v559
  %v635 = vpack.c.b16 %v562, %v561
  %v636 = vpack.c.b16 %v564, %v563
  %709 = vmatprep.subr.bf16.mxu0 0
  %710 = vmatpush1.bf16.msra.mxu0 %v572
  %711 = vmatprep.subr.bf16.mxu0 0
  %712 = vmatpush1.bf16.msra.mxu0 %v571
  %713 = vmatprep.subr.bf16.mxu0 0
  %714 = vmatpush1.bf16.msra.mxu0 %v570
  %715 = vmatprep.subr.bf16.mxu0 0
  %716 = vmatpush1.bf16.msra.mxu0 %v569
  %717 = vmatprep.subr.bf16.mxu0 0
  %718 = vmatpush1.bf16.msra.mxu0 %v568
  %719 = vmatprep.subr.bf16.mxu0 0
  %720 = vmatpush1.bf16.msra.mxu0 %v567
  %721 = vmatprep.subr.bf16.mxu0 0
  %722 = vmatpush1.bf16.msra.mxu0 %v566
  %723 = vmatprep.subr.bf16.mxu0 0
  %724 = vmatpush1.bf16.msra.mxu0 %v565
  %725 = vmatprep.subr.bf16.mxu0 0
  %726 = vmatpush2.bf16.msra.mxu0 %v580
  %727 = vmatprep.subr.bf16.mxu0 0
  %728 = vmatpush2.bf16.msra.mxu0 %v579
  %729 = vmatprep.subr.bf16.mxu0 0
  %730 = vmatpush2.bf16.msra.mxu0 %v578
  %731 = vmatprep.subr.bf16.mxu0 0
  %732 = vmatpush2.bf16.msra.mxu0 %v577
  %733 = vmatprep.subr.bf16.mxu0 0
  %734 = vmatpush2.bf16.msra.mxu0 %v576
  %735 = vmatprep.subr.bf16.mxu0 0
  %736 = vmatpush2.bf16.msra.mxu0 %v575
  %737 = vmatprep.subr.bf16.mxu0 0
  %738 = vmatpush2.bf16.msra.mxu0 %v574
  %739 = vmatprep.subr.bf16.mxu0 0
  %740 = vmatpush2.bf16.msra.mxu0 %v573
  %741 = vmatprep.mubr.bf16.mxu0 %v242
  %742 = vmatmul.mubr.bf16.gmra.mxu0 %v241
  %v743 = vpop.f32.mrf.mxu0
  %v744 = vadd.f32 0.0, %v743
  %v745 = vpop.f32.mrf.mxu0
  %v746 = vpop.f32.mrf.mxu0
  %v747 = vadd.f32 0.0, %v746
  %v748 = vpop.f32.mrf.mxu0
  %749 = vmatprep.mubr.bf16.mxu0 %v251
  %750 = vmatmul.mubr.bf16.gmra.mxu0 %v250
  %v751 = vpop.f32.mrf.mxu0
  %v752 = vadd.f32 0.0, %v751
  %v753 = vpop.f32.mrf.mxu0
  %v754 = vpop.f32.mrf.mxu0
  %v755 = vadd.f32 0.0, %v754
  %v756 = vpop.f32.mrf.mxu0
  %757 = vdwg.mxu0
  %758 = vmatprep.subr.bf16.mxu0 0
  %759 = vmatpush1.bf16.msra.mxu0 %v588
  %760 = vmatprep.subr.bf16.mxu0 0
  %761 = vmatpush1.bf16.msra.mxu0 %v587
  %762 = vmatprep.subr.bf16.mxu0 0
  %763 = vmatpush1.bf16.msra.mxu0 %v586
  %764 = vmatprep.subr.bf16.mxu0 0
  %765 = vmatpush1.bf16.msra.mxu0 %v585
  %766 = vmatprep.subr.bf16.mxu0 0
  %767 = vmatpush1.bf16.msra.mxu0 %v584
  %768 = vmatprep.subr.bf16.mxu0 0
  %769 = vmatpush1.bf16.msra.mxu0 %v583
  %770 = vmatprep.subr.bf16.mxu0 0
  %771 = vmatpush1.bf16.msra.mxu0 %v582
  %772 = vmatprep.subr.bf16.mxu0 0
  %773 = vmatpush1.bf16.msra.mxu0 %v581
  %774 = vmatprep.subr.bf16.mxu0 0
  %775 = vmatpush2.bf16.msra.mxu0 %v596
  %776 = vmatprep.subr.bf16.mxu0 0
  %777 = vmatpush2.bf16.msra.mxu0 %v595
  %778 = vmatprep.subr.bf16.mxu0 0
  %779 = vmatpush2.bf16.msra.mxu0 %v594
  %780 = vmatprep.subr.bf16.mxu0 0
  %781 = vmatpush2.bf16.msra.mxu0 %v593
  %782 = vmatprep.subr.bf16.mxu0 0
  %783 = vmatpush2.bf16.msra.mxu0 %v592
  %784 = vmatprep.subr.bf16.mxu0 0
  %785 = vmatpush2.bf16.msra.mxu0 %v591
  %786 = vmatprep.subr.bf16.mxu0 0
  %787 = vmatpush2.bf16.msra.mxu0 %v590
  %788 = vmatprep.subr.bf16.mxu0 0
  %789 = vmatpush2.bf16.msra.mxu0 %v589
  %790 = vmatprep.mubr.bf16.mxu0 %v244
  %791 = vmatmul.mubr.bf16.gmra.mxu0 %v243
  %v792 = vpop.f32.mrf.mxu0
  %v793 = vadd.f32 %v744, %v792
  %v794 = vpop.f32.mrf.mxu0
  %v795 = vpop.f32.mrf.mxu0
  %v796 = vadd.f32 %v747, %v795
  %v797 = vpop.f32.mrf.mxu0
  %798 = vmatprep.mubr.bf16.mxu0 %v253
  %799 = vmatmul.mubr.bf16.gmra.mxu0 %v252
  %v800 = vpop.f32.mrf.mxu0
  %v801 = vadd.f32 %v752, %v800
  %v802 = vpop.f32.mrf.mxu0
  %v803 = vpop.f32.mrf.mxu0
  %v804 = vadd.f32 %v755, %v803
  %v805 = vpop.f32.mrf.mxu0
  %806 = vdwg.mxu0
  %807 = vmatprep.subr.bf16.mxu0 0
  %808 = vmatpush1.bf16.msra.mxu0 %v604
  %809 = vmatprep.subr.bf16.mxu0 0
  %810 = vmatpush1.bf16.msra.mxu0 %v603
  %811 = vmatprep.subr.bf16.mxu0 0
  %812 = vmatpush1.bf16.msra.mxu0 %v602
  %813 = vmatprep.subr.bf16.mxu0 0
  %814 = vmatpush1.bf16.msra.mxu0 %v601
  %815 = vmatprep.subr.bf16.mxu0 0
  %816 = vmatpush1.bf16.msra.mxu0 %v600
  %817 = vmatprep.subr.bf16.mxu0 0
  %818 = vmatpush1.bf16.msra.mxu0 %v599
  %819 = vmatprep.subr.bf16.mxu0 0
  %820 = vmatpush1.bf16.msra.mxu0 %v598
  %821 = vmatprep.subr.bf16.mxu0 0
  %822 = vmatpush1.bf16.msra.mxu0 %v597
  %823 = vmatprep.subr.bf16.mxu0 0
  %824 = vmatpush2.bf16.msra.mxu0 %v612
  %825 = vmatprep.subr.bf16.mxu0 0
  %826 = vmatpush2.bf16.msra.mxu0 %v611
  %827 = vmatprep.subr.bf16.mxu0 0
  %828 = vmatpush2.bf16.msra.mxu0 %v610
  %829 = vmatprep.subr.bf16.mxu0 0
  %830 = vmatpush2.bf16.msra.mxu0 %v609
  %831 = vmatprep.subr.bf16.mxu0 0
  %832 = vmatpush2.bf16.msra.mxu0 %v608
  %833 = vmatprep.subr.bf16.mxu0 0
  %834 = vmatpush2.bf16.msra.mxu0 %v607
  %835 = vmatprep.subr.bf16.mxu0 0
  %836 = vmatpush2.bf16.msra.mxu0 %v606
  %837 = vmatprep.subr.bf16.mxu0 0
  %838 = vmatpush2.bf16.msra.mxu0 %v605
  %839 = vmatprep.mubr.bf16.mxu0 %v246
  %840 = vmatmul.mubr.bf16.gmra.mxu0 %v245
  %v841 = vpop.f32.mrf.mxu0
  %v842 = vadd.f32 %v793, %v841
  %v843 = vpop.f32.mrf.mxu0
  %v844 = vpop.f32.mrf.mxu0
  %v845 = vadd.f32 %v796, %v844
  %v846 = vpop.f32.mrf.mxu0
  %847 = vmatprep.mubr.bf16.mxu0 %v255
  %848 = vmatmul.mubr.bf16.gmra.mxu0 %v254
  %v849 = vpop.f32.mrf.mxu0
  %v850 = vadd.f32 %v801, %v849
  %v851 = vpop.f32.mrf.mxu0
  %v852 = vpop.f32.mrf.mxu0
  %v853 = vadd.f32 %v804, %v852
  %v854 = vpop.f32.mrf.mxu0
  %855 = vdwg.mxu0
  %856 = vmatprep.subr.bf16.mxu0 0
  %857 = vmatpush1.bf16.msra.mxu0 %v620
  %858 = vmatprep.subr.bf16.mxu0 0
  %859 = vmatpush1.bf16.msra.mxu0 %v619
  %860 = vmatprep.subr.bf16.mxu0 0
  %861 = vmatpush1.bf16.msra.mxu0 %v618
  %862 = vmatprep.subr.bf16.mxu0 0
  %863 = vmatpush1.bf16.msra.mxu0 %v617
  %864 = vmatprep.subr.bf16.mxu0 0
  %865 = vmatpush1.bf16.msra.mxu0 %v616
  %866 = vmatprep.subr.bf16.mxu0 0
  %867 = vmatpush1.bf16.msra.mxu0 %v615
  %868 = vmatprep.subr.bf16.mxu0 0
  %869 = vmatpush1.bf16.msra.mxu0 %v614
  %870 = vmatprep.subr.bf16.mxu0 0
  %871 = vmatpush1.bf16.msra.mxu0 %v613
  %872 = vmatprep.subr.bf16.mxu0 0
  %873 = vmatpush2.bf16.msra.mxu0 %v628
  %874 = vmatprep.subr.bf16.mxu0 0
  %875 = vmatpush2.bf16.msra.mxu0 %v627
  %876 = vmatprep.subr.bf16.mxu0 0
  %877 = vmatpush2.bf16.msra.mxu0 %v626
  %878 = vmatprep.subr.bf16.mxu0 0
  %879 = vmatpush2.bf16.msra.mxu0 %v625
  %880 = vmatprep.subr.bf16.mxu0 0
  %881 = vmatpush2.bf16.msra.mxu0 %v624
  %882 = vmatprep.subr.bf16.mxu0 0
  %883 = vmatpush2.bf16.msra.mxu0 %v623
  %884 = vmatprep.subr.bf16.mxu0 0
  %885 = vmatpush2.bf16.msra.mxu0 %v622
  %886 = vmatprep.subr.bf16.mxu0 0
  %887 = vmatpush2.bf16.msra.mxu0 %v621
  %888 = vmatprep.mubr.bf16.mxu0 %v248
  %889 = vmatmul.mubr.bf16.gmra.mxu0 %v247
  %v890 = vpop.f32.mrf.mxu0
  %v891 = vadd.f32 %v842, %v890
  %v892 = vpop.f32.mrf.mxu0
  %v893 = vpop.f32.mrf.mxu0
  %v894 = vadd.f32 %v845, %v893
  %v895 = vpop.f32.mrf.mxu0
  %896 = vmatprep.mubr.bf16.mxu0 %v257
  %897 = vmatmul.mubr.bf16.gmra.mxu0 %v256
  %v898 = vpop.f32.mrf.mxu0
  %v899 = vadd.f32 %v850, %v898
  %v900 = vpop.f32.mrf.mxu0
  %v901 = vpop.f32.mrf.mxu0
  %v902 = vadd.f32 %v853, %v901
  %v903 = vpop.f32.mrf.mxu0
  %904 = vdwg.mxu0
  %905 = vmatprep.subr.bf16.mxu0 0
  %906 = vmatpush1.bf16.msra.mxu0 %v636
  %907 = vmatprep.subr.bf16.mxu0 0
  %908 = vmatpush1.bf16.msra.mxu0 %v635
  %909 = vmatprep.subr.bf16.mxu0 0
  %910 = vmatpush1.bf16.msra.mxu0 %v634
  %911 = vmatprep.subr.bf16.mxu0 0
  %912 = vmatpush1.bf16.msra.mxu0 %v633
  %913 = vmatprep.subr.bf16.mxu0 0
  %914 = vmatpush1.bf16.msra.mxu0 %v632
  %915 = vmatprep.subr.bf16.mxu0 0
  %916 = vmatpush1.bf16.msra.mxu0 %v631
  %917 = vmatprep.subr.bf16.mxu0 0
  %918 = vmatpush1.bf16.msra.mxu0 %v630
  %919 = vmatprep.subr.bf16.mxu0 0
  %920 = vmatpush1.bf16.msra.mxu0 %v629
  %921 = vmatprep.subr.bf16.mxu0 0
  %922 = vmatpush2.bf16.msra.mxu0 0
  %923 = vmatprep.subr.bf16.mxu0 0
  %924 = vmatpush2.bf16.msra.mxu0 0
  %925 = vmatprep.subr.bf16.mxu0 0
  %926 = vmatpush2.bf16.msra.mxu0 0
  %927 = vmatprep.subr.bf16.mxu0 0
  %928 = vmatpush2.bf16.msra.mxu0 0
  %929 = vmatprep.subr.bf16.mxu0 0
  %930 = vmatpush2.bf16.msra.mxu0 0
  %931 = vmatprep.subr.bf16.mxu0 0
  %932 = vmatpush2.bf16.msra.mxu0 0
  %933 = vmatprep.subr.bf16.mxu0 0
  %934 = vmatpush2.bf16.msra.mxu0 0
  %935 = vmatprep.subr.bf16.mxu0 0
  %936 = vmatpush2.bf16.msra.mxu0 0
  %937 = vmatprep.mubr.bf16.mxu0 0
  %938 = vmatmul.mubr.bf16.gmra.mxu0 %v249
  %v939 = vpop.f32.mrf.mxu0
  %v940 = vadd.f32 %v891, %v939
  %v941 = vpop.f32.mrf.mxu0
  %v942 = vpop.f32.mrf.mxu0
  %v943 = vadd.f32 %v894, %v942
  %v944 = vpop.f32.mrf.mxu0
  %945 = vmatprep.mubr.bf16.mxu0 0
  %946 = vmatmul.mubr.bf16.gmra.mxu0 %v258
  %v947 = vpop.f32.mrf.mxu0
  %v948 = vadd.f32 %v899, %v947
  %v949 = vpop.f32.mrf.mxu0
  %v950 = vpop.f32.mrf.mxu0
  %v951 = vadd.f32 %v902, %v950
  %v952 = vpop.f32.mrf.mxu0
  %953 = vdwg.mxu0
  %v954 = vld [vmem:[%s3] sm:$0x1]
  %v956 = vlaneseq
  %v957 = vshrl.u32 %v956, 7
  %v958 = vsub.s32 0, %v957
  %v959 = vrot.slane %v954, %v958
  %v961 = vmul.f32 %v940, %v959
  %v962 = vmul.f32 %v943, %v959
  %v963 = vmul.f32 %v948, %v959
  %v964 = vmul.f32 %v951, %v959
  %v965 = vld [vmem:[%s2] sm:$0x1]
  %v967 = vlaneseq
  %v968 = vshrl.u32 %v967, 7
  %v969 = vsub.s32 0, %v968
  %v970 = vrot.slane %v965, %v969
  %v972 = vadd.f32 %v961, %v970
  %v973 = vadd.f32 %v962, %v970
  %v974 = vadd.f32 %v963, %v970
  %v975 = vadd.f32 %v964, %v970
  %v976 = vld [vmem:[%s4] sm:$0xf]
  %v977 = vld [vmem:[%s4 + $0x4] sm:$0xf]
  %v978 = vld [vmem:[%s4 + $0x8] sm:$0xf]
  %v979 = vld [vmem:[%s4 + $0xc] sm:$0xf]
  %v980 = vunpack.c.l.bf16 %v976
  %v981 = vunpack.c.l.bf16 %v977
  %v982 = vunpack.c.l.bf16 %v978
  %v983 = vunpack.c.l.bf16 %v979
  %v984 = vadd.f32 %v972, %v980
  %v985 = vadd.f32 %v973, %v981
  %v986 = vadd.f32 %v974, %v982
  %v987 = vadd.f32 %v975, %v983
  %v988 = vmax.f32 %v984, 0.0
  %v989 = vmax.f32 %v985, 0.0
  %v990 = vmax.f32 %v986, 0.0
  %v991 = vmax.f32 %v987, 0.0
  %v992 = vpack.c.bf16 %v989, %v988
  %v993 = vpack.c.bf16 %v991, %v990
  %v996 = vunpack.c.l.b16 %v992
  %v997 = vunpack.c.h.b16 %v992
  %v998 = vunpack.c.l.b16 %v993
  %v999 = vunpack.c.h.b16 %v993
  %v1000 = vpack.c.b16 %v996, %v996
  %v1001 = vpack.c.b16 %v997, %v997
  %v1002 = vpack.c.b16 %v998, %v998
  %v1003 = vpack.c.b16 %v999, %v999
  %1008 = vst [vmem:[%s5] sm:$0xf] %v1000
  %1009 = vst [vmem:[%s5 + $0x4] sm:$0xf] %v1001
  %1010 = vst [vmem:[%s5 + $0x8] sm:$0xf] %v1002
  %1011 = vst [vmem:[%s5 + $0xc] sm:$0xf] %v1003
  // Predicated region
  $region22: #{forward.24} parent=0 // pred_check
    _
  $region23: #{forward.24} parent=0 // pred_check_branch
    %1013 = sbr.rel (0) target = $region25
  $region24: #{forward.24} parent=0 // pred_region
    _
  $region25: #{forward.24} parent=0 // pred_fallthru
    _
  // Predicated region
  $region26: #{forward.24} parent=0 // pred_check
    _
  $region27: #{forward.24} parent=0 // pred_check_branch
    %1015 = sbr.rel (0) target = $region29
  $region28: #{forward.24} parent=0 // pred_region
    _
  $region29: #{forward.24} parent=0 // pred_fallthru
    _

// kernel: forward.25
$region0: #{forward.25}
  #allocation0 [shape = 'u32[]', space=smem, size = 0x4, offset = 0x4, fixed_abs, tag = 'smem constant byte address 0x4 - core index']
  #allocation1 [shape = 'u32[144,128]{1,0:T(1,128)}', space=vmem, size = 0x12000, scoped, tag = 'internal scratch']
  %s0 = inlined_call_operand.vmem [shape: bf16[32,1152], index: 0, kind: input, shape index: {}]
  %s1 = inlined_call_operand.vmem [shape: bf16[1152,128], index: 1, kind: input, shape index: {}]
  %s2 = inlined_call_operand.vmem [shape: f32[1,128], index: 2, kind: input, shape index: {}]
  %s3 = inlined_call_operand.vmem [shape: f32[1,128], index: 3, kind: input, shape index: {}]
  %s4 = inlined_call_operand.vmem [shape: bf16[32,128], index: 4, kind: output, shape index: {}]
  %s5 = sld [smem:[#allocation0]]
  $region26: #{forward.25} parent=0
    _
  %s7 = ssub.s32 1, %s5
  %s8 = scalar_select 0, %s7, %s5
  // Predicated region
  $region2: #{forward.25} parent=0 // pred_check
    _
  $region3: #{forward.25} parent=0 // pred_check_branch
    %10 = sbr.rel (0) target = $region5
  $region4: #{forward.25} parent=0 // pred_region
    _
  $region5: #{forward.25} parent=0 // pred_fallthru
    _
  // Predicated region
  $region6: #{forward.25} parent=0 // pred_check
    _
  $region7: #{forward.25} parent=0 // pred_check_branch
    %12 = sbr.rel (0) target = $region9
  $region8: #{forward.25} parent=0 // pred_region
    _
  $region9: #{forward.25} parent=0 // pred_fallthru
    _
  // Predicated region
  $region10: #{forward.25} parent=0 // pred_check
    _
  $region11: #{forward.25} parent=0 // pred_check_branch
    %14 = sbr.rel (0) target = $region13
  $region12: #{forward.25} parent=0 // pred_region
    _
  $region13: #{forward.25} parent=0 // pred_fallthru
    _
  // Predicated region
  $region14: #{forward.25} parent=0 // pred_check
    _
  $region15: #{forward.25} parent=0 // pred_check_branch
    %16 = sbr.rel (0) target = $region17
  $region16: #{forward.25} parent=0 // pred_region
    _
  $region17: #{forward.25} parent=0 // pred_fallthru
    _
  %v18 = vld [vmem:[%s0] sm:$0xff]
  %v19 = vld [vmem:[%s0 + $0x8] sm:$0xff]
  %v20 = vld [vmem:[%s0 + $0x10] sm:$0xff]
  %v21 = vld [vmem:[%s0 + $0x18] sm:$0xff]
  %v22 = vld [vmem:[%s0 + $0x20] sm:$0xf]
  %v23 = vld [vmem:[%s0 + $0x24] sm:$0xff]
  %v24 = vld [vmem:[%s0 + $0x2c] sm:$0xff]
  %v25 = vld [vmem:[%s0 + $0x34] sm:$0xff]
  %v26 = vld [vmem:[%s0 + $0x3c] sm:$0xff]
  %v27 = vld [vmem:[%s0 + $0x44] sm:$0xf]
  %v28 = vld [vmem:[%s0 + $0x48] sm:$0xff]
  %v29 = vld [vmem:[%s0 + $0x50] sm:$0xff]
  %v30 = vld [vmem:[%s0 + $0x58] sm:$0xff]
  %v31 = vld [vmem:[%s0 + $0x60] sm:$0xff]
  %v32 = vld [vmem:[%s0 + $0x68] sm:$0xf]
  %v33 = vld [vmem:[%s0 + $0x6c] sm:$0xff]
  %v34 = vld [vmem:[%s0 + $0x74] sm:$0xff]
  %v35 = vld [vmem:[%s0 + $0x7c] sm:$0xff]
  %v36 = vld [vmem:[%s0 + $0x84] sm:$0xff]
  %v37 = vld [vmem:[%s0 + $0x8c] sm:$0xf]
  %v38 = vld [vmem:[%s1] sm:$0xf]
  %v39 = vld [vmem:[%s1 + $0x4] sm:$0xf]
  %v40 = vld [vmem:[%s1 + $0x8] sm:$0xf]
  %v41 = vld [vmem:[%s1 + $0xc] sm:$0xf]
  %v42 = vld [vmem:[%s1 + $0x10] sm:$0xf]
  %v43 = vld [vmem:[%s1 + $0x14] sm:$0xf]
  %v44 = vld [vmem:[%s1 + $0x18] sm:$0xf]
  %v45 = vld [vmem:[%s1 + $0x1c] sm:$0xf]
  %v46 = vld [vmem:[%s1 + $0x20] sm:$0xf]
  %v47 = vld [vmem:[%s1 + $0x24] sm:$0xf]
  %v48 = vld [vmem:[%s1 + $0x28] sm:$0xf]
  %v49 = vld [vmem:[%s1 + $0x2c] sm:$0xf]
  %v50 = vld [vmem:[%s1 + $0x30] sm:$0xf]
  %v51 = vld [vmem:[%s1 + $0x34] sm:$0xf]
  %v52 = vld [vmem:[%s1 + $0x38] sm:$0xf]
  %v53 = vld [vmem:[%s1 + $0x3c] sm:$0xf]
  %v54 = vld [vmem:[%s1 + $0x40] sm:$0xf]
  %v55 = vld [vmem:[%s1 + $0x44] sm:$0xf]
  %v56 = vld [vmem:[%s1 + $0x48] sm:$0xf]
  %v57 = vld [vmem:[%s1 + $0x4c] sm:$0xf]
  %v58 = vld [vmem:[%s1 + $0x50] sm:$0xf]
  %v59 = vld [vmem:[%s1 + $0x54] sm:$0xf]
  %v60 = vld [vmem:[%s1 + $0x58] sm:$0xf]
  %v61 = vld [vmem:[%s1 + $0x5c] sm:$0xf]
  %v62 = vld [vmem:[%s1 + $0x60] sm:$0xf]
  %v63 = vld [vmem:[%s1 + $0x64] sm:$0xf]
  %v64 = vld [vmem:[%s1 + $0x68] sm:$0xf]
  %v65 = vld [vmem:[%s1 + $0x6c] sm:$0xf]
  %v66 = vld [vmem:[%s1 + $0x70] sm:$0xf]
  %v67 = vld [vmem:[%s1 + $0x74] sm:$0xf]
  %v68 = vld [vmem:[%s1 + $0x78] sm:$0xf]
  %v69 = vld [vmem:[%s1 + $0x7c] sm:$0xf]
  %v70 = vld [vmem:[%s1 + $0x80] sm:$0xf]
  %v71 = vld [vmem:[%s1 + $0x84] sm:$0xf]
  %v72 = vld [vmem:[%s1 + $0x88] sm:$0xf]
  %v73 = vld [vmem:[%s1 + $0x8c] sm:$0xf]
  %v74 = vld [vmem:[%s1 + $0x90] sm:$0xf]
  %v75 = vld [vmem:[%s1 + $0x94] sm:$0xf]
  %v76 = vld [vmem:[%s1 + $0x98] sm:$0xf]
  %v77 = vld [vmem:[%s1 + $0x9c] sm:$0xf]
  %v78 = vld [vmem:[%s1 + $0xa0] sm:$0xf]
  %v79 = vld [vmem:[%s1 + $0xa4] sm:$0xf]
  %v80 = vld [vmem:[%s1 + $0xa8] sm:$0xf]
  %v81 = vld [vmem:[%s1 + $0xac] sm:$0xf]
  %v82 = vld [vmem:[%s1 + $0xb0] sm:$0xf]
  %v83 = vld [vmem:[%s1 + $0xb4] sm:$0xf]
  %v84 = vld [vmem:[%s1 + $0xb8] sm:$0xf]
  %v85 = vld [vmem:[%s1 + $0xbc] sm:$0xf]
  %v86 = vld [vmem:[%s1 + $0xc0] sm:$0xf]
  %v87 = vld [vmem:[%s1 + $0xc4] sm:$0xf]
  %v88 = vld [vmem:[%s1 + $0xc8] sm:$0xf]
  %v89 = vld [vmem:[%s1 + $0xcc] sm:$0xf]
  %v90 = vld [vmem:[%s1 + $0xd0] sm:$0xf]
  %v91 = vld [vmem:[%s1 + $0xd4] sm:$0xf]
  %v92 = vld [vmem:[%s1 + $0xd8] sm:$0xf]
  %v93 = vld [vmem:[%s1 + $0xdc] sm:$0xf]
  %v94 = vld [vmem:[%s1 + $0xe0] sm:$0xf]
  %v95 = vld [vmem:[%s1 + $0xe4] sm:$0xf]
  %v96 = vld [vmem:[%s1 + $0xe8] sm:$0xf]
  %v97 = vld [vmem:[%s1 + $0xec] sm:$0xf]
  %v98 = vld [vmem:[%s1 + $0xf0] sm:$0xf]
  %v99 = vld [vmem:[%s1 + $0xf4] sm:$0xf]
  %v100 = vld [vmem:[%s1 + $0xf8] sm:$0xf]
  %v101 = vld [vmem:[%s1 + $0xfc] sm:$0xf]
  %v102 = vld [vmem:[%s1 + $0x100] sm:$0xf]
  %v103 = vld [vmem:[%s1 + $0x104] sm:$0xf]
  %v104 = vld [vmem:[%s1 + $0x108] sm:$0xf]
  %v105 = vld [vmem:[%s1 + $0x10c] sm:$0xf]
  %v106 = vld [vmem:[%s1 + $0x110] sm:$0xf]
  %v107 = vld [vmem:[%s1 + $0x114] sm:$0xf]
  %v108 = vld [vmem:[%s1 + $0x118] sm:$0xf]
  %v109 = vld [vmem:[%s1 + $0x11c] sm:$0xf]
  %v110 = vld [vmem:[%s1 + $0x120] sm:$0xf]
  %v111 = vld [vmem:[%s1 + $0x124] sm:$0xf]
  %v112 = vld [vmem:[%s1 + $0x128] sm:$0xf]
  %v113 = vld [vmem:[%s1 + $0x12c] sm:$0xf]
  %v114 = vld [vmem:[%s1 + $0x130] sm:$0xf]
  %v115 = vld [vmem:[%s1 + $0x134] sm:$0xf]
  %v116 = vld [vmem:[%s1 + $0x138] sm:$0xf]
  %v117 = vld [vmem:[%s1 + $0x13c] sm:$0xf]
  %v118 = vld [vmem:[%s1 + $0x140] sm:$0xf]
  %v119 = vld [vmem:[%s1 + $0x144] sm:$0xf]
  %v120 = vld [vmem:[%s1 + $0x148] sm:$0xf]
  %v121 = vld [vmem:[%s1 + $0x14c] sm:$0xf]
  %v122 = vld [vmem:[%s1 + $0x150] sm:$0xf]
  %v123 = vld [vmem:[%s1 + $0x154] sm:$0xf]
  %v124 = vld [vmem:[%s1 + $0x158] sm:$0xf]
  %v125 = vld [vmem:[%s1 + $0x15c] sm:$0xf]
  %v126 = vld [vmem:[%s1 + $0x160] sm:$0xf]
  %v127 = vld [vmem:[%s1 + $0x164] sm:$0xf]
  %v128 = vld [vmem:[%s1 + $0x168] sm:$0xf]
  %v129 = vld [vmem:[%s1 + $0x16c] sm:$0xf]
  %v130 = vld [vmem:[%s1 + $0x170] sm:$0xf]
  %v131 = vld [vmem:[%s1 + $0x174] sm:$0xf]
  %v132 = vld [vmem:[%s1 + $0x178] sm:$0xf]
  %v133 = vld [vmem:[%s1 + $0x17c] sm:$0xf]
  %v134 = vld [vmem:[%s1 + $0x180] sm:$0xf]
  %v135 = vld [vmem:[%s1 + $0x184] sm:$0xf]
  %v136 = vld [vmem:[%s1 + $0x188] sm:$0xf]
  %v137 = vld [vmem:[%s1 + $0x18c] sm:$0xf]
  %v138 = vld [vmem:[%s1 + $0x190] sm:$0xf]
  %v139 = vld [vmem:[%s1 + $0x194] sm:$0xf]
  %v140 = vld [vmem:[%s1 + $0x198] sm:$0xf]
  %v141 = vld [vmem:[%s1 + $0x19c] sm:$0xf]
  %v142 = vld [vmem:[%s1 + $0x1a0] sm:$0xf]
  %v143 = vld [vmem:[%s1 + $0x1a4] sm:$0xf]
  %v144 = vld [vmem:[%s1 + $0x1a8] sm:$0xf]
  %v145 = vld [vmem:[%s1 + $0x1ac] sm:$0xf]
  %v146 = vld [vmem:[%s1 + $0x1b0] sm:$0xf]
  %v147 = vld [vmem:[%s1 + $0x1b4] sm:$0xf]
  %v148 = vld [vmem:[%s1 + $0x1b8] sm:$0xf]
  %v149 = vld [vmem:[%s1 + $0x1bc] sm:$0xf]
  %v150 = vld [vmem:[%s1 + $0x1c0] sm:$0xf]
  %v151 = vld [vmem:[%s1 + $0x1c4] sm:$0xf]
  %v152 = vld [vmem:[%s1 + $0x1c8] sm:$0xf]
  %v153 = vld [vmem:[%s1 + $0x1cc] sm:$0xf]
  %v154 = vld [vmem:[%s1 + $0x1d0] sm:$0xf]
  %v155 = vld [vmem:[%s1 + $0x1d4] sm:$0xf]
  %v156 = vld [vmem:[%s1 + $0x1d8] sm:$0xf]
  %v157 = vld [vmem:[%s1 + $0x1dc] sm:$0xf]
  %v158 = vld [vmem:[%s1 + $0x1e0] sm:$0xf]
  %v159 = vld [vmem:[%s1 + $0x1e4] sm:$0xf]
  %v160 = vld [vmem:[%s1 + $0x1e8] sm:$0xf]
  %v161 = vld [vmem:[%s1 + $0x1ec] sm:$0xf]
  %v162 = vld [vmem:[%s1 + $0x1f0] sm:$0xf]
  %v163 = vld [vmem:[%s1 + $0x1f4] sm:$0xf]
  %v164 = vld [vmem:[%s1 + $0x1f8] sm:$0xf]
  %v165 = vld [vmem:[%s1 + $0x1fc] sm:$0xf]
  %v166 = vld [vmem:[%s1 + $0x200] sm:$0xf]
  %v167 = vld [vmem:[%s1 + $0x204] sm:$0xf]
  %v168 = vld [vmem:[%s1 + $0x208] sm:$0xf]
  %v169 = vld [vmem:[%s1 + $0x20c] sm:$0xf]
  %v170 = vld [vmem:[%s1 + $0x210] sm:$0xf]
  %v171 = vld [vmem:[%s1 + $0x214] sm:$0xf]
  %v172 = vld [vmem:[%s1 + $0x218] sm:$0xf]
  %v173 = vld [vmem:[%s1 + $0x21c] sm:$0xf]
  %v174 = vld [vmem:[%s1 + $0x220] sm:$0xf]
  %v175 = vld [vmem:[%s1 + $0x224] sm:$0xf]
  %v176 = vld [vmem:[%s1 + $0x228] sm:$0xf]
  %v177 = vld [vmem:[%s1 + $0x22c] sm:$0xf]
  %v178 = vld [vmem:[%s1 + $0x230] sm:$0xf]
  %v179 = vld [vmem:[%s1 + $0x234] sm:$0xf]
  %v180 = vld [vmem:[%s1 + $0x238] sm:$0xf]
  %v181 = vld [vmem:[%s1 + $0x23c] sm:$0xf]
  %v202 = vunpack.c.l.b16 %v18
  %v203 = vunpack.c.h.b16 %v18
  %v204 = vunpack.c.l.b16 %v19
  %v205 = vunpack.c.h.b16 %v19
  %v206 = vunpack.c.l.b16 %v20
  %v207 = vunpack.c.h.b16 %v20
  %v208 = vunpack.c.l.b16 %v21
  %v209 = vunpack.c.h.b16 %v21
  %v210 = vunpack.c.l.b16 %v22
  %v211 = vunpack.c.l.b16 %v23
  %v212 = vunpack.c.h.b16 %v23
  %v213 = vunpack.c.l.b16 %v24
  %v214 = vunpack.c.h.b16 %v24
  %v215 = vunpack.c.l.b16 %v25
  %v216 = vunpack.c.h.b16 %v25
  %v217 = vunpack.c.l.b16 %v26
  %v218 = vunpack.c.h.b16 %v26
  %v219 = vunpack.c.l.b16 %v27
  %v220 = vunpack.c.l.b16 %v28
  %v221 = vunpack.c.h.b16 %v28
  %v222 = vunpack.c.l.b16 %v29
  %v223 = vunpack.c.h.b16 %v29
  %v224 = vunpack.c.l.b16 %v30
  %v225 = vunpack.c.h.b16 %v30
  %v226 = vunpack.c.l.b16 %v31
  %v227 = vunpack.c.h.b16 %v31
  %v228 = vunpack.c.l.b16 %v32
  %v229 = vunpack.c.l.b16 %v33
  %v230 = vunpack.c.h.b16 %v33
  %v231 = vunpack.c.l.b16 %v34
  %v232 = vunpack.c.h.b16 %v34
  %v233 = vunpack.c.l.b16 %v35
  %v234 = vunpack.c.h.b16 %v35
  %v235 = vunpack.c.l.b16 %v36
  %v236 = vunpack.c.h.b16 %v36
  %v237 = vunpack.c.l.b16 %v37
  %v238 = vpack.c.b16 %v211, %v202
  %v239 = vpack.c.b16 %v212, %v203
  %v240 = vpack.c.b16 %v213, %v204
  %v241 = vpack.c.b16 %v214, %v205
  %v242 = vpack.c.b16 %v215, %v206
  %v243 = vpack.c.b16 %v216, %v207
  %v244 = vpack.c.b16 %v217, %v208
  %v245 = vpack.c.b16 %v218, %v209
  %v246 = vpack.c.b16 %v219, %v210
  %v247 = vpack.c.b16 %v229, %v220
  %v248 = vpack.c.b16 %v230, %v221
  %v249 = vpack.c.b16 %v231, %v222
  %v250 = vpack.c.b16 %v232, %v223
  %v251 = vpack.c.b16 %v233, %v224
  %v252 = vpack.c.b16 %v234, %v225
  %v253 = vpack.c.b16 %v235, %v226
  %v254 = vpack.c.b16 %v236, %v227
  %v255 = vpack.c.b16 %v237, %v228
  %v418 = vunpack.c.l.b16 %v38
  %v419 = vunpack.c.l.b16 %v39
  %v420 = vunpack.c.l.b16 %v40
  %v421 = vunpack.c.l.b16 %v41
  %v422 = vunpack.c.l.b16 %v42
  %v423 = vunpack.c.l.b16 %v43
  %v424 = vunpack.c.l.b16 %v44
  %v425 = vunpack.c.l.b16 %v45
  %v426 = vunpack.c.l.b16 %v46
  %v427 = vunpack.c.l.b16 %v47
  %v428 = vunpack.c.l.b16 %v48
  %v429 = vunpack.c.l.b16 %v49
  %v430 = vunpack.c.l.b16 %v50
  %v431 = vunpack.c.l.b16 %v51
  %v432 = vunpack.c.l.b16 %v52
  %v433 = vunpack.c.l.b16 %v53
  %v434 = vunpack.c.l.b16 %v54
  %v435 = vunpack.c.l.b16 %v55
  %v436 = vunpack.c.l.b16 %v56
  %v437 = vunpack.c.l.b16 %v57
  %v438 = vunpack.c.l.b16 %v58
  %v439 = vunpack.c.l.b16 %v59
  %v440 = vunpack.c.l.b16 %v60
  %v441 = vunpack.c.l.b16 %v61
  %v442 = vunpack.c.l.b16 %v62
  %v443 = vunpack.c.l.b16 %v63
  %v444 = vunpack.c.l.b16 %v64
  %v445 = vunpack.c.l.b16 %v65
  %v446 = vunpack.c.l.b16 %v66
  %v447 = vunpack.c.l.b16 %v67
  %v448 = vunpack.c.l.b16 %v68
  %v449 = vunpack.c.l.b16 %v69
  %v450 = vunpack.c.l.b16 %v70
  %v451 = vunpack.c.l.b16 %v71
  %v452 = vunpack.c.l.b16 %v72
  %v453 = vunpack.c.l.b16 %v73
  %v454 = vunpack.c.l.b16 %v74
  %v455 = vunpack.c.l.b16 %v75
  %v456 = vunpack.c.l.b16 %v76
  %v457 = vunpack.c.l.b16 %v77
  %v458 = vunpack.c.l.b16 %v78
  %v459 = vunpack.c.l.b16 %v79
  %v460 = vunpack.c.l.b16 %v80
  %v461 = vunpack.c.l.b16 %v81
  %v462 = vunpack.c.l.b16 %v82
  %v463 = vunpack.c.l.b16 %v83
  %v464 = vunpack.c.l.b16 %v84
  %v465 = vunpack.c.l.b16 %v85
  %v466 = vunpack.c.l.b16 %v86
  %v467 = vunpack.c.l.b16 %v87
  %v468 = vunpack.c.l.b16 %v88
  %v469 = vunpack.c.l.b16 %v89
  %v470 = vunpack.c.l.b16 %v90
  %v471 = vunpack.c.l.b16 %v91
  %v472 = vunpack.c.l.b16 %v92
  %v473 = vunpack.c.l.b16 %v93
  %v474 = vunpack.c.l.b16 %v94
  %v475 = vunpack.c.l.b16 %v95
  %v476 = vunpack.c.l.b16 %v96
  %v477 = vunpack.c.l.b16 %v97
  %v478 = vunpack.c.l.b16 %v98
  %v479 = vunpack.c.l.b16 %v99
  %v480 = vunpack.c.l.b16 %v100
  %v481 = vunpack.c.l.b16 %v101
  %v482 = vunpack.c.l.b16 %v102
  %v483 = vunpack.c.l.b16 %v103
  %v484 = vunpack.c.l.b16 %v104
  %v485 = vunpack.c.l.b16 %v105
  %v486 = vunpack.c.l.b16 %v106
  %v487 = vunpack.c.l.b16 %v107
  %v488 = vunpack.c.l.b16 %v108
  %v489 = vunpack.c.l.b16 %v109
  %v490 = vunpack.c.l.b16 %v110
  %v491 = vunpack.c.l.b16 %v111
  %v492 = vunpack.c.l.b16 %v112
  %v493 = vunpack.c.l.b16 %v113
  %v494 = vunpack.c.l.b16 %v114
  %v495 = vunpack.c.l.b16 %v115
  %v496 = vunpack.c.l.b16 %v116
  %v497 = vunpack.c.l.b16 %v117
  %v498 = vunpack.c.l.b16 %v118
  %v499 = vunpack.c.l.b16 %v119
  %v500 = vunpack.c.l.b16 %v120
  %v501 = vunpack.c.l.b16 %v121
  %v502 = vunpack.c.l.b16 %v122
  %v503 = vunpack.c.l.b16 %v123
  %v504 = vunpack.c.l.b16 %v124
  %v505 = vunpack.c.l.b16 %v125
  %v506 = vunpack.c.l.b16 %v126
  %v507 = vunpack.c.l.b16 %v127
  %v508 = vunpack.c.l.b16 %v128
  %v509 = vunpack.c.l.b16 %v129
  %v510 = vunpack.c.l.b16 %v130
  %v511 = vunpack.c.l.b16 %v131
  %v512 = vunpack.c.l.b16 %v132
  %v513 = vunpack.c.l.b16 %v133
  %v514 = vunpack.c.l.b16 %v134
  %v515 = vunpack.c.l.b16 %v135
  %v516 = vunpack.c.l.b16 %v136
  %v517 = vunpack.c.l.b16 %v137
  %v518 = vunpack.c.l.b16 %v138
  %v519 = vunpack.c.l.b16 %v139
  %v520 = vunpack.c.l.b16 %v140
  %v521 = vunpack.c.l.b16 %v141
  %v522 = vunpack.c.l.b16 %v142
  %v523 = vunpack.c.l.b16 %v143
  %v524 = vunpack.c.l.b16 %v144
  %v525 = vunpack.c.l.b16 %v145
  %v526 = vunpack.c.l.b16 %v146
  %v527 = vunpack.c.l.b16 %v147
  %v528 = vunpack.c.l.b16 %v148
  %v529 = vunpack.c.l.b16 %v149
  %v530 = vunpack.c.l.b16 %v150
  %v531 = vunpack.c.l.b16 %v151
  %v532 = vunpack.c.l.b16 %v152
  %v533 = vunpack.c.l.b16 %v153
  %v534 = vunpack.c.l.b16 %v154
  %v535 = vunpack.c.l.b16 %v155
  %v536 = vunpack.c.l.b16 %v156
  %v537 = vunpack.c.l.b16 %v157
  %v538 = vunpack.c.l.b16 %v158
  %v539 = vunpack.c.l.b16 %v159
  %v540 = vunpack.c.l.b16 %v160
  %v541 = vunpack.c.l.b16 %v161
  %v542 = vunpack.c.l.b16 %v162
  %v543 = vunpack.c.l.b16 %v163
  %v544 = vunpack.c.l.b16 %v164
  %v545 = vunpack.c.l.b16 %v165
  %v546 = vunpack.c.l.b16 %v166
  %v547 = vunpack.c.l.b16 %v167
  %v548 = vunpack.c.l.b16 %v168
  %v549 = vunpack.c.l.b16 %v169
  %v550 = vunpack.c.l.b16 %v170
  %v551 = vunpack.c.l.b16 %v171
  %v552 = vunpack.c.l.b16 %v172
  %v553 = vunpack.c.l.b16 %v173
  %v554 = vunpack.c.l.b16 %v174
  %v555 = vunpack.c.l.b16 %v175
  %v556 = vunpack.c.l.b16 %v176
  %v557 = vunpack.c.l.b16 %v177
  %v558 = vunpack.c.l.b16 %v178
  %v559 = vunpack.c.l.b16 %v179
  %v560 = vunpack.c.l.b16 %v180
  %v561 = vunpack.c.l.b16 %v181
  %v562 = vpack.c.b16 %v419, %v418
  %v563 = vpack.c.b16 %v421, %v420
  %v564 = vpack.c.b16 %v423, %v422
  %v565 = vpack.c.b16 %v425, %v424
  %v566 = vpack.c.b16 %v427, %v426
  %v567 = vpack.c.b16 %v429, %v428
  %v568 = vpack.c.b16 %v431, %v430
  %v569 = vpack.c.b16 %v433, %v432
  %v570 = vpack.c.b16 %v435, %v434
  %v571 = vpack.c.b16 %v437, %v436
  %v572 = vpack.c.b16 %v439, %v438
  %v573 = vpack.c.b16 %v441, %v440
  %v574 = vpack.c.b16 %v443, %v442
  %v575 = vpack.c.b16 %v445, %v444
  %v576 = vpack.c.b16 %v447, %v446
  %v577 = vpack.c.b16 %v449, %v448
  %v578 = vpack.c.b16 %v451, %v450
  %v579 = vpack.c.b16 %v453, %v452
  %v580 = vpack.c.b16 %v455, %v454
  %v581 = vpack.c.b16 %v457, %v456
  %v582 = vpack.c.b16 %v459, %v458
  %v583 = vpack.c.b16 %v461, %v460
  %v584 = vpack.c.b16 %v463, %v462
  %v585 = vpack.c.b16 %v465, %v464
  %v586 = vpack.c.b16 %v467, %v466
  %v587 = vpack.c.b16 %v469, %v468
  %v588 = vpack.c.b16 %v471, %v470
  %v589 = vpack.c.b16 %v473, %v472
  %v590 = vpack.c.b16 %v475, %v474
  %v591 = vpack.c.b16 %v477, %v476
  %v592 = vpack.c.b16 %v479, %v478
  %v593 = vpack.c.b16 %v481, %v480
  %v594 = vpack.c.b16 %v483, %v482
  %v595 = vpack.c.b16 %v485, %v484
  %v596 = vpack.c.b16 %v487, %v486
  %v597 = vpack.c.b16 %v489, %v488
  %v598 = vpack.c.b16 %v491, %v490
  %v599 = vpack.c.b16 %v493, %v492
  %v600 = vpack.c.b16 %v495, %v494
  %v601 = vpack.c.b16 %v497, %v496
  %v602 = vpack.c.b16 %v499, %v498
  %v603 = vpack.c.b16 %v501, %v500
  %v604 = vpack.c.b16 %v503, %v502
  %v605 = vpack.c.b16 %v505, %v504
  %v606 = vpack.c.b16 %v507, %v506
  %v607 = vpack.c.b16 %v509, %v508
  %v608 = vpack.c.b16 %v511, %v510
  %v609 = vpack.c.b16 %v513, %v512
  %v610 = vpack.c.b16 %v515, %v514
  %v611 = vpack.c.b16 %v517, %v516
  %v612 = vpack.c.b16 %v519, %v518
  %v613 = vpack.c.b16 %v521, %v520
  %v614 = vpack.c.b16 %v523, %v522
  %v615 = vpack.c.b16 %v525, %v524
  %v616 = vpack.c.b16 %v527, %v526
  %v617 = vpack.c.b16 %v529, %v528
  %v618 = vpack.c.b16 %v531, %v530
  %v619 = vpack.c.b16 %v533, %v532
  %v620 = vpack.c.b16 %v535, %v534
  %v621 = vpack.c.b16 %v537, %v536
  %v622 = vpack.c.b16 %v539, %v538
  %v623 = vpack.c.b16 %v541, %v540
  %v624 = vpack.c.b16 %v543, %v542
  %v625 = vpack.c.b16 %v545, %v544
  %v626 = vpack.c.b16 %v547, %v546
  %v627 = vpack.c.b16 %v549, %v548
  %v628 = vpack.c.b16 %v551, %v550
  %v629 = vpack.c.b16 %v553, %v552
  %v630 = vpack.c.b16 %v555, %v554
  %v631 = vpack.c.b16 %v557, %v556
  %v632 = vpack.c.b16 %v559, %v558
  %v633 = vpack.c.b16 %v561, %v560
  %706 = vmatprep.subr.bf16.mxu0 0
  %707 = vmatpush1.bf16.msra.mxu0 %v569
  %708 = vmatprep.subr.bf16.mxu0 0
  %709 = vmatpush1.bf16.msra.mxu0 %v568
  %710 = vmatprep.subr.bf16.mxu0 0
  %711 = vmatpush1.bf16.msra.mxu0 %v567
  %712 = vmatprep.subr.bf16.mxu0 0
  %713 = vmatpush1.bf16.msra.mxu0 %v566
  %714 = vmatprep.subr.bf16.mxu0 0
  %715 = vmatpush1.bf16.msra.mxu0 %v565
  %716 = vmatprep.subr.bf16.mxu0 0
  %717 = vmatpush1.bf16.msra.mxu0 %v564
  %718 = vmatprep.subr.bf16.mxu0 0
  %719 = vmatpush1.bf16.msra.mxu0 %v563
  %720 = vmatprep.subr.bf16.mxu0 0
  %721 = vmatpush1.bf16.msra.mxu0 %v562
  %722 = vmatprep.subr.bf16.mxu0 0
  %723 = vmatpush2.bf16.msra.mxu0 %v577
  %724 = vmatprep.subr.bf16.mxu0 0
  %725 = vmatpush2.bf16.msra.mxu0 %v576
  %726 = vmatprep.subr.bf16.mxu0 0
  %727 = vmatpush2.bf16.msra.mxu0 %v575
  %728 = vmatprep.subr.bf16.mxu0 0
  %729 = vmatpush2.bf16.msra.mxu0 %v574
  %730 = vmatprep.subr.bf16.mxu0 0
  %731 = vmatpush2.bf16.msra.mxu0 %v573
  %732 = vmatprep.subr.bf16.mxu0 0
  %733 = vmatpush2.bf16.msra.mxu0 %v572
  %734 = vmatprep.subr.bf16.mxu0 0
  %735 = vmatpush2.bf16.msra.mxu0 %v571
  %736 = vmatprep.subr.bf16.mxu0 0
  %737 = vmatpush2.bf16.msra.mxu0 %v570
  %738 = vmatprep.mubr.bf16.mxu0 %v239
  %739 = vmatmul.mubr.bf16.gmra.mxu0 %v238
  %v740 = vpop.f32.mrf.mxu0
  %v741 = vadd.f32 0.0, %v740
  %v742 = vpop.f32.mrf.mxu0
  %v743 = vpop.f32.mrf.mxu0
  %v744 = vadd.f32 0.0, %v743
  %v745 = vpop.f32.mrf.mxu0
  %746 = vmatprep.mubr.bf16.mxu0 %v248
  %747 = vmatmul.mubr.bf16.gmra.mxu0 %v247
  %v748 = vpop.f32.mrf.mxu0
  %v749 = vadd.f32 0.0, %v748
  %v750 = vpop.f32.mrf.mxu0
  %v751 = vpop.f32.mrf.mxu0
  %v752 = vadd.f32 0.0, %v751
  %v753 = vpop.f32.mrf.mxu0
  %754 = vdwg.mxu0
  %755 = vmatprep.subr.bf16.mxu0 0
  %756 = vmatpush1.bf16.msra.mxu0 %v585
  %757 = vmatprep.subr.bf16.mxu0 0
  %758 = vmatpush1.bf16.msra.mxu0 %v584
  %759 = vmatprep.subr.bf16.mxu0 0
  %760 = vmatpush1.bf16.msra.mxu0 %v583
  %761 = vmatprep.subr.bf16.mxu0 0
  %762 = vmatpush1.bf16.msra.mxu0 %v582
  %763 = vmatprep.subr.bf16.mxu0 0
  %764 = vmatpush1.bf16.msra.mxu0 %v581
  %765 = vmatprep.subr.bf16.mxu0 0
  %766 = vmatpush1.bf16.msra.mxu0 %v580
  %767 = vmatprep.subr.bf16.mxu0 0
  %768 = vmatpush1.bf16.msra.mxu0 %v579
  %769 = vmatprep.subr.bf16.mxu0 0
  %770 = vmatpush1.bf16.msra.mxu0 %v578
  %771 = vmatprep.subr.bf16.mxu0 0
  %772 = vmatpush2.bf16.msra.mxu0 %v593
  %773 = vmatprep.subr.bf16.mxu0 0
  %774 = vmatpush2.bf16.msra.mxu0 %v592
  %775 = vmatprep.subr.bf16.mxu0 0
  %776 = vmatpush2.bf16.msra.mxu0 %v591
  %777 = vmatprep.subr.bf16.mxu0 0
  %778 = vmatpush2.bf16.msra.mxu0 %v590
  %779 = vmatprep.subr.bf16.mxu0 0
  %780 = vmatpush2.bf16.msra.mxu0 %v589
  %781 = vmatprep.subr.bf16.mxu0 0
  %782 = vmatpush2.bf16.msra.mxu0 %v588
  %783 = vmatprep.subr.bf16.mxu0 0
  %784 = vmatpush2.bf16.msra.mxu0 %v587
  %785 = vmatprep.subr.bf16.mxu0 0
  %786 = vmatpush2.bf16.msra.mxu0 %v586
  %787 = vmatprep.mubr.bf16.mxu0 %v241
  %788 = vmatmul.mubr.bf16.gmra.mxu0 %v240
  %v789 = vpop.f32.mrf.mxu0
  %v790 = vadd.f32 %v741, %v789
  %v791 = vpop.f32.mrf.mxu0
  %v792 = vpop.f32.mrf.mxu0
  %v793 = vadd.f32 %v744, %v792
  %v794 = vpop.f32.mrf.mxu0
  %795 = vmatprep.mubr.bf16.mxu0 %v250
  %796 = vmatmul.mubr.bf16.gmra.mxu0 %v249
  %v797 = vpop.f32.mrf.mxu0
  %v798 = vadd.f32 %v749, %v797
  %v799 = vpop.f32.mrf.mxu0
  %v800 = vpop.f32.mrf.mxu0
  %v801 = vadd.f32 %v752, %v800
  %v802 = vpop.f32.mrf.mxu0
  %803 = vdwg.mxu0
  %804 = vmatprep.subr.bf16.mxu0 0
  %805 = vmatpush1.bf16.msra.mxu0 %v601
  %806 = vmatprep.subr.bf16.mxu0 0
  %807 = vmatpush1.bf16.msra.mxu0 %v600
  %808 = vmatprep.subr.bf16.mxu0 0
  %809 = vmatpush1.bf16.msra.mxu0 %v599
  %810 = vmatprep.subr.bf16.mxu0 0
  %811 = vmatpush1.bf16.msra.mxu0 %v598
  %812 = vmatprep.subr.bf16.mxu0 0
  %813 = vmatpush1.bf16.msra.mxu0 %v597
  %814 = vmatprep.subr.bf16.mxu0 0
  %815 = vmatpush1.bf16.msra.mxu0 %v596
  %816 = vmatprep.subr.bf16.mxu0 0
  %817 = vmatpush1.bf16.msra.mxu0 %v595
  %818 = vmatprep.subr.bf16.mxu0 0
  %819 = vmatpush1.bf16.msra.mxu0 %v594
  %820 = vmatprep.subr.bf16.mxu0 0
  %821 = vmatpush2.bf16.msra.mxu0 %v609
  %822 = vmatprep.subr.bf16.mxu0 0
  %823 = vmatpush2.bf16.msra.mxu0 %v608
  %824 = vmatprep.subr.bf16.mxu0 0
  %825 = vmatpush2.bf16.msra.mxu0 %v607
  %826 = vmatprep.subr.bf16.mxu0 0
  %827 = vmatpush2.bf16.msra.mxu0 %v606
  %828 = vmatprep.subr.bf16.mxu0 0
  %829 = vmatpush2.bf16.msra.mxu0 %v605
  %830 = vmatprep.subr.bf16.mxu0 0
  %831 = vmatpush2.bf16.msra.mxu0 %v604
  %832 = vmatprep.subr.bf16.mxu0 0
  %833 = vmatpush2.bf16.msra.mxu0 %v603
  %834 = vmatprep.subr.bf16.mxu0 0
  %835 = vmatpush2.bf16.msra.mxu0 %v602
  %836 = vmatprep.mubr.bf16.mxu0 %v243
  %837 = vmatmul.mubr.bf16.gmra.mxu0 %v242
  %v838 = vpop.f32.mrf.mxu0
  %v839 = vadd.f32 %v790, %v838
  %v840 = vpop.f32.mrf.mxu0
  %v841 = vpop.f32.mrf.mxu0
  %v842 = vadd.f32 %v793, %v841
  %v843 = vpop.f32.mrf.mxu0
  %844 = vmatprep.mubr.bf16.mxu0 %v252
  %845 = vmatmul.mubr.bf16.gmra.mxu0 %v251
  %v846 = vpop.f32.mrf.mxu0
  %v847 = vadd.f32 %v798, %v846
  %v848 = vpop.f32.mrf.mxu0
  %v849 = vpop.f32.mrf.mxu0
  %v850 = vadd.f32 %v801, %v849
  %v851 = vpop.f32.mrf.mxu0
  %852 = vdwg.mxu0
  %853 = vmatprep.subr.bf16.mxu0 0
  %854 = vmatpush1.bf16.msra.mxu0 %v617
  %855 = vmatprep.subr.bf16.mxu0 0
  %856 = vmatpush1.bf16.msra.mxu0 %v616
  %857 = vmatprep.subr.bf16.mxu0 0
  %858 = vmatpush1.bf16.msra.mxu0 %v615
  %859 = vmatprep.subr.bf16.mxu0 0
  %860 = vmatpush1.bf16.msra.mxu0 %v614
  %861 = vmatprep.subr.bf16.mxu0 0
  %862 = vmatpush1.bf16.msra.mxu0 %v613
  %863 = vmatprep.subr.bf16.mxu0 0
  %864 = vmatpush1.bf16.msra.mxu0 %v612
  %865 = vmatprep.subr.bf16.mxu0 0
  %866 = vmatpush1.bf16.msra.mxu0 %v611
  %867 = vmatprep.subr.bf16.mxu0 0
  %868 = vmatpush1.bf16.msra.mxu0 %v610
  %869 = vmatprep.subr.bf16.mxu0 0
  %870 = vmatpush2.bf16.msra.mxu0 %v625
  %871 = vmatprep.subr.bf16.mxu0 0
  %872 = vmatpush2.bf16.msra.mxu0 %v624
  %873 = vmatprep.subr.bf16.mxu0 0
  %874 = vmatpush2.bf16.msra.mxu0 %v623
  %875 = vmatprep.subr.bf16.mxu0 0
  %876 = vmatpush2.bf16.msra.mxu0 %v622
  %877 = vmatprep.subr.bf16.mxu0 0
  %878 = vmatpush2.bf16.msra.mxu0 %v621
  %879 = vmatprep.subr.bf16.mxu0 0
  %880 = vmatpush2.bf16.msra.mxu0 %v620
  %881 = vmatprep.subr.bf16.mxu0 0
  %882 = vmatpush2.bf16.msra.mxu0 %v619
  %883 = vmatprep.subr.bf16.mxu0 0
  %884 = vmatpush2.bf16.msra.mxu0 %v618
  %885 = vmatprep.mubr.bf16.mxu0 %v245
  %886 = vmatmul.mubr.bf16.gmra.mxu0 %v244
  %v887 = vpop.f32.mrf.mxu0
  %v888 = vadd.f32 %v839, %v887
  %v889 = vpop.f32.mrf.mxu0
  %v890 = vpop.f32.mrf.mxu0
  %v891 = vadd.f32 %v842, %v890
  %v892 = vpop.f32.mrf.mxu0
  %893 = vmatprep.mubr.bf16.mxu0 %v254
  %894 = vmatmul.mubr.bf16.gmra.mxu0 %v253
  %v895 = vpop.f32.mrf.mxu0
  %v896 = vadd.f32 %v847, %v895
  %v897 = vpop.f32.mrf.mxu0
  %v898 = vpop.f32.mrf.mxu0
  %v899 = vadd.f32 %v850, %v898
  %v900 = vpop.f32.mrf.mxu0
  %901 = vdwg.mxu0
  %902 = vmatprep.subr.bf16.mxu0 0
  %903 = vmatpush1.bf16.msra.mxu0 %v633
  %904 = vmatprep.subr.bf16.mxu0 0
  %905 = vmatpush1.bf16.msra.mxu0 %v632
  %906 = vmatprep.subr.bf16.mxu0 0
  %907 = vmatpush1.bf16.msra.mxu0 %v631
  %908 = vmatprep.subr.bf16.mxu0 0
  %909 = vmatpush1.bf16.msra.mxu0 %v630
  %910 = vmatprep.subr.bf16.mxu0 0
  %911 = vmatpush1.bf16.msra.mxu0 %v629
  %912 = vmatprep.subr.bf16.mxu0 0
  %913 = vmatpush1.bf16.msra.mxu0 %v628
  %914 = vmatprep.subr.bf16.mxu0 0
  %915 = vmatpush1.bf16.msra.mxu0 %v627
  %916 = vmatprep.subr.bf16.mxu0 0
  %917 = vmatpush1.bf16.msra.mxu0 %v626
  %918 = vmatprep.subr.bf16.mxu0 0
  %919 = vmatpush2.bf16.msra.mxu0 0
  %920 = vmatprep.subr.bf16.mxu0 0
  %921 = vmatpush2.bf16.msra.mxu0 0
  %922 = vmatprep.subr.bf16.mxu0 0
  %923 = vmatpush2.bf16.msra.mxu0 0
  %924 = vmatprep.subr.bf16.mxu0 0
  %925 = vmatpush2.bf16.msra.mxu0 0
  %926 = vmatprep.subr.bf16.mxu0 0
  %927 = vmatpush2.bf16.msra.mxu0 0
  %928 = vmatprep.subr.bf16.mxu0 0
  %929 = vmatpush2.bf16.msra.mxu0 0
  %930 = vmatprep.subr.bf16.mxu0 0
  %931 = vmatpush2.bf16.msra.mxu0 0
  %932 = vmatprep.subr.bf16.mxu0 0
  %933 = vmatpush2.bf16.msra.mxu0 0
  %934 = vmatprep.mubr.bf16.mxu0 0
  %935 = vmatmul.mubr.bf16.gmra.mxu0 %v246
  %v936 = vpop.f32.mrf.mxu0
  %v937 = vadd.f32 %v888, %v936
  %v938 = vpop.f32.mrf.mxu0
  %v939 = vpop.f32.mrf.mxu0
  %v940 = vadd.f32 %v891, %v939
  %v941 = vpop.f32.mrf.mxu0
  %942 = vmatprep.mubr.bf16.mxu0 0
  %943 = vmatmul.mubr.bf16.gmra.mxu0 %v255
  %v944 = vpop.f32.mrf.mxu0
  %v945 = vadd.f32 %v896, %v944
  %v946 = vpop.f32.mrf.mxu0
  %v947 = vpop.f32.mrf.mxu0
  %v948 = vadd.f32 %v899, %v947
  %v949 = vpop.f32.mrf.mxu0
  %950 = vdwg.mxu0
  %v951 = vld [vmem:[%s3] sm:$0x1]
  %v953 = vlaneseq
  %v954 = vshrl.u32 %v953, 7
  %v955 = vsub.s32 0, %v954
  %v956 = vrot.slane %v951, %v955
  %v958 = vmul.f32 %v937, %v956
  %v959 = vmul.f32 %v940, %v956
  %v960 = vmul.f32 %v945, %v956
  %v961 = vmul.f32 %v948, %v956
  %v962 = vld [vmem:[%s2] sm:$0x1]
  %v964 = vlaneseq
  %v965 = vshrl.u32 %v964, 7
  %v966 = vsub.s32 0, %v965
  %v967 = vrot.slane %v962, %v966
  %v969 = vadd.f32 %v958, %v967
  %v970 = vadd.f32 %v959, %v967
  %v971 = vadd.f32 %v960, %v967
  %v972 = vadd.f32 %v961, %v967
  %v973 = vmax.f32 %v969, 0.0
  %v974 = vmax.f32 %v970, 0.0
  %v975 = vmax.f32 %v971, 0.0
  %v976 = vmax.f32 %v972, 0.0
  %v977 = vpack.c.bf16 %v974, %v973
  %v978 = vpack.c.bf16 %v976, %v975
  %v981 = vunpack.c.l.b16 %v977
  %v982 = vunpack.c.h.b16 %v977
  %v983 = vunpack.c.l.b16 %v978
  %v984 = vunpack.c.h.b16 %v978
  %v985 = vpack.c.b16 %v981, %v981
  %v986 = vpack.c.b16 %v982, %v982
  %v987 = vpack.c.b16 %v983, %v983
  %v988 = vpack.c.b16 %v984, %v984
  %993 = vst [vmem:[%s4] sm:$0xf] %v985
  %994 = vst [vmem:[%s4 + $0x4] sm:$0xf] %v986
  %995 = vst [vmem:[%s4 + $0x8] sm:$0xf] %v987
  %996 = vst [vmem:[%s4 + $0xc] sm:$0xf] %v988
  // Predicated region
  $region18: #{forward.25} parent=0 // pred_check
    _
  $region19: #{forward.25} parent=0 // pred_check_branch
    %998 = sbr.rel (0) target = $region21
  $region20: #{forward.25} parent=0 // pred_region
    _
  $region21: #{forward.25} parent=0 // pred_fallthru
    _
  // Predicated region
  $region22: #{forward.25} parent=0 // pred_check
    _
  $region23: #{forward.25} parent=0 // pred_check_branch
    %1000 = sbr.rel (0) target = $region25
  $region24: #{forward.25} parent=0 // pred_region
    _
  $region25: #{forward.25} parent=0 // pred_fallthru
    _

// kernel: forward.28
$region0: #{forward.28}
  #allocation0 [shape = 'u32[]', space=smem, size = 0x4, offset = 0x4, fixed_abs, tag = 'smem constant byte address 0x4 - core index']
  #allocation1 [shape = 'u32[144,128]{1,0:T(1,128)}', space=vmem, size = 0x12000, scoped, tag = 'internal scratch']
  %s0 = inlined_call_operand.vmem [shape: bf16[32,128], index: 0, kind: input, shape index: {}]
  %s1 = inlined_call_operand.vmem [shape: bf16[128,256], index: 1, kind: input, shape index: {}]
  %s2 = inlined_call_operand.vmem [shape: f32[1,256], index: 2, kind: input, shape index: {}]
  %s3 = inlined_call_operand.vmem [shape: bf16[32,256], index: 3, kind: output, shape index: {}]
  %s4 = sld [smem:[#allocation0]]
  $region22: #{forward.28} parent=0
    _
  %s6 = ssub.s32 1, %s4
  %s7 = scalar_select 0, %s6, %s4
  // Predicated region
  $region2: #{forward.28} parent=0 // pred_check
    _
  $region3: #{forward.28} parent=0 // pred_check_branch
    %9 = sbr.rel (0) target = $region5
  $region4: #{forward.28} parent=0 // pred_region
    _
  $region5: #{forward.28} parent=0 // pred_fallthru
    _
  // Predicated region
  $region6: #{forward.28} parent=0 // pred_check
    _
  $region7: #{forward.28} parent=0 // pred_check_branch
    %11 = sbr.rel (0) target = $region9
  $region8: #{forward.28} parent=0 // pred_region
    _
  $region9: #{forward.28} parent=0 // pred_fallthru
    _
  // Predicated region
  $region10: #{forward.28} parent=0 // pred_check
    _
  $region11: #{forward.28} parent=0 // pred_check_branch
    %13 = sbr.rel (0) target = $region13
  $region12: #{forward.28} parent=0 // pred_region
    _
  $region13: #{forward.28} parent=0 // pred_fallthru
    _
  %v15 = vld [vmem:[%s0] sm:$0xf]
  %v16 = vld [vmem:[%s0 + $0x4] sm:$0xf]
  %v17 = vld [vmem:[%s0 + $0x8] sm:$0xf]
  %v18 = vld [vmem:[%s0 + $0xc] sm:$0xf]
  %v19 = vld [vmem:[%s1] sm:$0xff]
  %v20 = vld [vmem:[%s1 + $0x8] sm:$0xff]
  %v21 = vld [vmem:[%s1 + $0x10] sm:$0xff]
  %v22 = vld [vmem:[%s1 + $0x18] sm:$0xff]
  %v23 = vld [vmem:[%s1 + $0x20] sm:$0xff]
  %v24 = vld [vmem:[%s1 + $0x28] sm:$0xff]
  %v25 = vld [vmem:[%s1 + $0x30] sm:$0xff]
  %v26 = vld [vmem:[%s1 + $0x38] sm:$0xff]
  %v27 = vld [vmem:[%s1 + $0x40] sm:$0xff]
  %v28 = vld [vmem:[%s1 + $0x48] sm:$0xff]
  %v29 = vld [vmem:[%s1 + $0x50] sm:$0xff]
  %v30 = vld [vmem:[%s1 + $0x58] sm:$0xff]
  %v31 = vld [vmem:[%s1 + $0x60] sm:$0xff]
  %v32 = vld [vmem:[%s1 + $0x68] sm:$0xff]
  %v33 = vld [vmem:[%s1 + $0x70] sm:$0xff]
  %v34 = vld [vmem:[%s1 + $0x78] sm:$0xff]
  %v35 = vld [vmem:[%s2] sm:$0x3]
  %v37 = vlaneseq
  %v38 = vshrl.u32 %v37, 7
  %v39 = vsub.s32 0, %v38
  %v40 = vrot.slane %v35, %v39
  %v41 = vlaneseq
  %v42 = vshrl.u32 %v41, 7
  %v43 = vsub.s32 1, %v42
  %v44 = vrot.slane %v35, %v43
  %v51 = vunpack.c.l.b16 %v15
  %v52 = vunpack.c.l.b16 %v16
  %v53 = vunpack.c.l.b16 %v17
  %v54 = vunpack.c.l.b16 %v18
  %v55 = vpack.c.b16 %v52, %v51
  %v56 = vpack.c.b16 %v54, %v53
  %v75 = vunpack.c.l.b16 %v19
  %v76 = vunpack.c.h.b16 %v19
  %v77 = vunpack.c.l.b16 %v20
  %v78 = vunpack.c.h.b16 %v20
  %v79 = vunpack.c.l.b16 %v21
  %v80 = vunpack.c.h.b16 %v21
  %v81 = vunpack.c.l.b16 %v22
  %v82 = vunpack.c.h.b16 %v22
  %v83 = vunpack.c.l.b16 %v23
  %v84 = vunpack.c.h.b16 %v23
  %v85 = vunpack.c.l.b16 %v24
  %v86 = vunpack.c.h.b16 %v24
  %v87 = vunpack.c.l.b16 %v25
  %v88 = vunpack.c.h.b16 %v25
  %v89 = vunpack.c.l.b16 %v26
  %v90 = vunpack.c.h.b16 %v26
  %v91 = vunpack.c.l.b16 %v27
  %v92 = vunpack.c.h.b16 %v27
  %v93 = vunpack.c.l.b16 %v28
  %v94 = vunpack.c.h.b16 %v28
  %v95 = vunpack.c.l.b16 %v29
  %v96 = vunpack.c.h.b16 %v29
  %v97 = vunpack.c.l.b16 %v30
  %v98 = vunpack.c.h.b16 %v30
  %v99 = vunpack.c.l.b16 %v31
  %v100 = vunpack.c.h.b16 %v31
  %v101 = vunpack.c.l.b16 %v32
  %v102 = vunpack.c.h.b16 %v32
  %v103 = vunpack.c.l.b16 %v33
  %v104 = vunpack.c.h.b16 %v33
  %v105 = vunpack.c.l.b16 %v34
  %v106 = vunpack.c.h.b16 %v34
  %v107 = vpack.c.b16 %v77, %v75
  %v108 = vpack.c.b16 %v78, %v76
  %v109 = vpack.c.b16 %v81, %v79
  %v110 = vpack.c.b16 %v82, %v80
  %v111 = vpack.c.b16 %v85, %v83
  %v112 = vpack.c.b16 %v86, %v84
  %v113 = vpack.c.b16 %v89, %v87
  %v114 = vpack.c.b16 %v90, %v88
  %v115 = vpack.c.b16 %v93, %v91
  %v116 = vpack.c.b16 %v94, %v92
  %v117 = vpack.c.b16 %v97, %v95
  %v118 = vpack.c.b16 %v98, %v96
  %v119 = vpack.c.b16 %v101, %v99
  %v120 = vpack.c.b16 %v102, %v100
  %v121 = vpack.c.b16 %v105, %v103
  %v122 = vpack.c.b16 %v106, %v104
  %139 = vmatprep.subr.bf16.mxu0 %v122
  %140 = vmatpush1.bf16.msra.mxu0 %v121
  %141 = vmatprep.subr.bf16.mxu0 %v120
  %142 = vmatpush1.bf16.msra.mxu0 %v119
  %143 = vmatprep.subr.bf16.mxu0 %v118
  %144 = vmatpush1.bf16.msra.mxu0 %v117
  %145 = vmatprep.subr.bf16.mxu0 %v116
  %146 = vmatpush1.bf16.msra.mxu0 %v115
  %147 = vmatprep.subr.bf16.mxu0 %v114
  %148 = vmatpush1.bf16.msra.mxu0 %v113
  %149 = vmatprep.subr.bf16.mxu0 %v112
  %150 = vmatpush1.bf16.msra.mxu0 %v111
  %151 = vmatprep.subr.bf16.mxu0 %v110
  %152 = vmatpush1.bf16.msra.mxu0 %v109
  %153 = vmatprep.subr.bf16.mxu0 %v108
  %154 = vmatpush1.bf16.msra.mxu0 %v107
  %155 = vmatprep.subr.bf16.mxu0 0
  %156 = vmatpush2.bf16.msra.mxu0 0
  %157 = vmatprep.subr.bf16.mxu0 0
  %158 = vmatpush2.bf16.msra.mxu0 0
  %159 = vmatprep.subr.bf16.mxu0 0
  %160 = vmatpush2.bf16.msra.mxu0 0
  %161 = vmatprep.subr.bf16.mxu0 0
  %162 = vmatpush2.bf16.msra.mxu0 0
  %163 = vmatprep.subr.bf16.mxu0 0
  %164 = vmatpush2.bf16.msra.mxu0 0
  %165 = vmatprep.subr.bf16.mxu0 0
  %166 = vmatpush2.bf16.msra.mxu0 0
  %167 = vmatprep.subr.bf16.mxu0 0
  %168 = vmatpush2.bf16.msra.mxu0 0
  %169 = vmatprep.subr.bf16.mxu0 0
  %170 = vmatpush2.bf16.msra.mxu0 0
  %171 = vmatprep.mubr.bf16.mxu0 0
  %172 = vmatmul.mubr.bf16.gmra.mxu0 %v55
  %v173 = vpop.f32.mrf.mxu0
  %v174 = vadd.f32 %v40, %v173
  %v175 = vpop.f32.mrf.mxu0
  %v176 = vadd.f32 %v44, %v175
  %v177 = vpop.f32.mrf.mxu0
  %v178 = vadd.f32 %v40, %v177
  %v179 = vpop.f32.mrf.mxu0
  %v180 = vadd.f32 %v44, %v179
  %181 = vmatprep.mubr.bf16.mxu0 0
  %182 = vmatmul.mubr.bf16.gmra.mxu0 %v56
  %v183 = vpop.f32.mrf.mxu0
  %v184 = vadd.f32 %v40, %v183
  %v185 = vpop.f32.mrf.mxu0
  %v186 = vadd.f32 %v44, %v185
  %v187 = vpop.f32.mrf.mxu0
  %v188 = vadd.f32 %v40, %v187
  %v189 = vpop.f32.mrf.mxu0
  %v190 = vadd.f32 %v44, %v189
  %191 = vdwg.mxu0
  %v192 = vpack.c.bf16 %v178, %v174
  %v193 = vpack.c.bf16 %v180, %v176
  %v194 = vpack.c.bf16 %v188, %v184
  %v195 = vpack.c.bf16 %v190, %v186
  %v200 = vunpack.c.l.b16 %v192
  %v201 = vunpack.c.l.b16 %v193
  %v202 = vunpack.c.h.b16 %v192
  %v203 = vunpack.c.h.b16 %v193
  %v204 = vunpack.c.l.b16 %v194
  %v205 = vunpack.c.l.b16 %v195
  %v206 = vunpack.c.h.b16 %v194
  %v207 = vunpack.c.h.b16 %v195
  %v208 = vpack.c.b16 %v201, %v200
  %v209 = vpack.c.b16 %v203, %v202
  %v210 = vpack.c.b16 %v205, %v204
  %v211 = vpack.c.b16 %v207, %v206
  %216 = vst [vmem:[%s3] sm:$0xff] %v208
  %217 = vst [vmem:[%s3 + $0x8] sm:$0xff] %v209
  %218 = vst [vmem:[%s3 + $0x10] sm:$0xff] %v210
  %219 = vst [vmem:[%s3 + $0x18] sm:$0xff] %v211
  // Predicated region
  $region14: #{forward.28} parent=0 // pred_check
    _
  $region15: #{forward.28} parent=0 // pred_check_branch
    %221 = sbr.rel (0) target = $region17
  $region16: #{forward.28} parent=0 // pred_region
    _
  $region17: #{forward.28} parent=0 // pred_fallthru
    _
  // Predicated region
  $region18: #{forward.28} parent=0 // pred_check
    _
  $region19: #{forward.28} parent=0 // pred_check_branch
    %223 = sbr.rel (0) target = $region21
  $region20: #{forward.28} parent=0 // pred_region
    _
  $region21: #{forward.28} parent=0 // pred_fallthru
    _

// kernel: forward.31
$region0: #{forward.31}
  #allocation0 [shape = 'u32[]', space=smem, size = 0x4, offset = 0x4, fixed_abs, tag = 'smem constant byte address 0x4 - core index']
  #allocation1 [shape = 'u32[144,128]{1,0:T(1,128)}', space=vmem, size = 0x12000, scoped, tag = 'internal scratch']
  %s0 = inlined_call_operand.vmem [shape: bf16[128,128], index: 0, kind: input, shape index: {}]
  %s1 = inlined_call_operand.vmem [shape: bf16[128,256], index: 1, kind: input, shape index: {}]
  %s2 = inlined_call_operand.vmem [shape: f32[1,256], index: 2, kind: input, shape index: {}]
  %s3 = inlined_call_operand.vmem [shape: bf16[128,256], index: 3, kind: output, shape index: {}]
  %s4 = sld [smem:[#allocation0]]
  $region22: #{forward.31} parent=0
    _
  %s6 = ssub.s32 1, %s4
  %s7 = scalar_select 0, %s6, %s4
  // Predicated region
  $region2: #{forward.31} parent=0 // pred_check
    _
  $region3: #{forward.31} parent=0 // pred_check_branch
    %9 = sbr.rel (0) target = $region5
  $region4: #{forward.31} parent=0 // pred_region
    _
  $region5: #{forward.31} parent=0 // pred_fallthru
    _
  // Predicated region
  $region6: #{forward.31} parent=0 // pred_check
    _
  $region7: #{forward.31} parent=0 // pred_check_branch
    %11 = sbr.rel (0) target = $region9
  $region8: #{forward.31} parent=0 // pred_region
    _
  $region9: #{forward.31} parent=0 // pred_fallthru
    _
  // Predicated region
  $region10: #{forward.31} parent=0 // pred_check
    _
  $region11: #{forward.31} parent=0 // pred_check_branch
    %13 = sbr.rel (0) target = $region13
  $region12: #{forward.31} parent=0 // pred_region
    _
  $region13: #{forward.31} parent=0 // pred_fallthru
    _
  %v15 = vld [vmem:[%s0] sm:$0xf]
  %v16 = vld [vmem:[%s0 + $0x4] sm:$0xf]
  %v17 = vld [vmem:[%s0 + $0x8] sm:$0xf]
  %v18 = vld [vmem:[%s0 + $0xc] sm:$0xf]
  %v19 = vld [vmem:[%s0 + $0x10] sm:$0xf]
  %v20 = vld [vmem:[%s0 + $0x14] sm:$0xf]
  %v21 = vld [vmem:[%s0 + $0x18] sm:$0xf]
  %v22 = vld [vmem:[%s0 + $0x1c] sm:$0xf]
  %v23 = vld [vmem:[%s0 + $0x20] sm:$0xf]
  %v24 = vld [vmem:[%s0 + $0x24] sm:$0xf]
  %v25 = vld [vmem:[%s0 + $0x28] sm:$0xf]
  %v26 = vld [vmem:[%s0 + $0x2c] sm:$0xf]
  %v27 = vld [vmem:[%s0 + $0x30] sm:$0xf]
  %v28 = vld [vmem:[%s0 + $0x34] sm:$0xf]
  %v29 = vld [vmem:[%s0 + $0x38] sm:$0xf]
  %v30 = vld [vmem:[%s0 + $0x3c] sm:$0xf]
  %v31 = vld [vmem:[%s1] sm:$0xff]
  %v32 = vld [vmem:[%s1 + $0x8] sm:$0xff]
  %v33 = vld [vmem:[%s1 + $0x10] sm:$0xff]
  %v34 = vld [vmem:[%s1 + $0x18] sm:$0xff]
  %v35 = vld [vmem:[%s1 + $0x20] sm:$0xff]
  %v36 = vld [vmem:[%s1 + $0x28] sm:$0xff]
  %v37 = vld [vmem:[%s1 + $0x30] sm:$0xff]
  %v38 = vld [vmem:[%s1 + $0x38] sm:$0xff]
  %v39 = vld [vmem:[%s1 + $0x40] sm:$0xff]
  %v40 = vld [vmem:[%s1 + $0x48] sm:$0xff]
  %v41 = vld [vmem:[%s1 + $0x50] sm:$0xff]
  %v42 = vld [vmem:[%s1 + $0x58] sm:$0xff]
  %v43 = vld [vmem:[%s1 + $0x60] sm:$0xff]
  %v44 = vld [vmem:[%s1 + $0x68] sm:$0xff]
  %v45 = vld [vmem:[%s1 + $0x70] sm:$0xff]
  %v46 = vld [vmem:[%s1 + $0x78] sm:$0xff]
  %v47 = vld [vmem:[%s2] sm:$0x3]
  %v49 = vlaneseq
  %v50 = vshrl.u32 %v49, 7
  %v51 = vsub.s32 0, %v50
  %v52 = vrot.slane %v47, %v51
  %v53 = vlaneseq
  %v54 = vshrl.u32 %v53, 7
  %v55 = vsub.s32 1, %v54
  %v56 = vrot.slane %v47, %v55
  %v75 = vunpack.c.l.b16 %v15
  %v76 = vunpack.c.l.b16 %v16
  %v77 = vunpack.c.l.b16 %v17
  %v78 = vunpack.c.l.b16 %v18
  %v79 = vunpack.c.l.b16 %v19
  %v80 = vunpack.c.l.b16 %v20
  %v81 = vunpack.c.l.b16 %v21
  %v82 = vunpack.c.l.b16 %v22
  %v83 = vunpack.c.l.b16 %v23
  %v84 = vunpack.c.l.b16 %v24
  %v85 = vunpack.c.l.b16 %v25
  %v86 = vunpack.c.l.b16 %v26
  %v87 = vunpack.c.l.b16 %v27
  %v88 = vunpack.c.l.b16 %v28
  %v89 = vunpack.c.l.b16 %v29
  %v90 = vunpack.c.l.b16 %v30
  %v91 = vpack.c.b16 %v76, %v75
  %v92 = vpack.c.b16 %v78, %v77
  %v93 = vpack.c.b16 %v80, %v79
  %v94 = vpack.c.b16 %v82, %v81
  %v95 = vpack.c.b16 %v84, %v83
  %v96 = vpack.c.b16 %v86, %v85
  %v97 = vpack.c.b16 %v88, %v87
  %v98 = vpack.c.b16 %v90, %v89
  %v123 = vunpack.c.l.b16 %v31
  %v124 = vunpack.c.h.b16 %v31
  %v125 = vunpack.c.l.b16 %v32
  %v126 = vunpack.c.h.b16 %v32
  %v127 = vunpack.c.l.b16 %v33
  %v128 = vunpack.c.h.b16 %v33
  %v129 = vunpack.c.l.b16 %v34
  %v130 = vunpack.c.h.b16 %v34
  %v131 = vunpack.c.l.b16 %v35
  %v132 = vunpack.c.h.b16 %v35
  %v133 = vunpack.c.l.b16 %v36
  %v134 = vunpack.c.h.b16 %v36
  %v135 = vunpack.c.l.b16 %v37
  %v136 = vunpack.c.h.b16 %v37
  %v137 = vunpack.c.l.b16 %v38
  %v138 = vunpack.c.h.b16 %v38
  %v139 = vunpack.c.l.b16 %v39
  %v140 = vunpack.c.h.b16 %v39
  %v141 = vunpack.c.l.b16 %v40
  %v142 = vunpack.c.h.b16 %v40
  %v143 = vunpack.c.l.b16 %v41
  %v144 = vunpack.c.h.b16 %v41
  %v145 = vunpack.c.l.b16 %v42
  %v146 = vunpack.c.h.b16 %v42
  %v147 = vunpack.c.l.b16 %v43
  %v148 = vunpack.c.h.b16 %v43
  %v149 = vunpack.c.l.b16 %v44
  %v150 = vunpack.c.h.b16 %v44
  %v151 = vunpack.c.l.b16 %v45
  %v152 = vunpack.c.h.b16 %v45
  %v153 = vunpack.c.l.b16 %v46
  %v154 = vunpack.c.h.b16 %v46
  %v155 = vpack.c.b16 %v125, %v123
  %v156 = vpack.c.b16 %v126, %v124
  %v157 = vpack.c.b16 %v129, %v127
  %v158 = vpack.c.b16 %v130, %v128
  %v159 = vpack.c.b16 %v133, %v131
  %v160 = vpack.c.b16 %v134, %v132
  %v161 = vpack.c.b16 %v137, %v135
  %v162 = vpack.c.b16 %v138, %v136
  %v163 = vpack.c.b16 %v141, %v139
  %v164 = vpack.c.b16 %v142, %v140
  %v165 = vpack.c.b16 %v145, %v143
  %v166 = vpack.c.b16 %v146, %v144
  %v167 = vpack.c.b16 %v149, %v147
  %v168 = vpack.c.b16 %v150, %v148
  %v169 = vpack.c.b16 %v153, %v151
  %v170 = vpack.c.b16 %v154, %v152
  %187 = vmatprep.subr.bf16.mxu0 %v170
  %188 = vmatpush1.bf16.msra.mxu0 %v169
  %189 = vmatprep.subr.bf16.mxu0 %v168
  %190 = vmatpush1.bf16.msra.mxu0 %v167
  %191 = vmatprep.subr.bf16.mxu0 %v166
  %192 = vmatpush1.bf16.msra.mxu0 %v165
  %193 = vmatprep.subr.bf16.mxu0 %v164
  %194 = vmatpush1.bf16.msra.mxu0 %v163
  %195 = vmatprep.subr.bf16.mxu0 %v162
  %196 = vmatpush1.bf16.msra.mxu0 %v161
  %197 = vmatprep.subr.bf16.mxu0 %v160
  %198 = vmatpush1.bf16.msra.mxu0 %v159
  %199 = vmatprep.subr.bf16.mxu0 %v158
  %200 = vmatpush1.bf16.msra.mxu0 %v157
  %201 = vmatprep.subr.bf16.mxu0 %v156
  %202 = vmatpush1.bf16.msra.mxu0 %v155
  %203 = vmatprep.subr.bf16.mxu0 0
  %204 = vmatpush2.bf16.msra.mxu0 0
  %205 = vmatprep.subr.bf16.mxu0 0
  %206 = vmatpush2.bf16.msra.mxu0 0
  %207 = vmatprep.subr.bf16.mxu0 0
  %208 = vmatpush2.bf16.msra.mxu0 0
  %209 = vmatprep.subr.bf16.mxu0 0
  %210 = vmatpush2.bf16.msra.mxu0 0
  %211 = vmatprep.subr.bf16.mxu0 0
  %212 = vmatpush2.bf16.msra.mxu0 0
  %213 = vmatprep.subr.bf16.mxu0 0
  %214 = vmatpush2.bf16.msra.mxu0 0
  %215 = vmatprep.subr.bf16.mxu0 0
  %216 = vmatpush2.bf16.msra.mxu0 0
  %217 = vmatprep.subr.bf16.mxu0 0
  %218 = vmatpush2.bf16.msra.mxu0 0
  %219 = vmatprep.mubr.bf16.mxu0 0
  %220 = vmatmul.mubr.bf16.gmra.mxu0 %v91
  %v221 = vpop.f32.mrf.mxu0
  %v222 = vadd.f32 %v52, %v221
  %v223 = vpop.f32.mrf.mxu0
  %v224 = vadd.f32 %v56, %v223
  %v225 = vpop.f32.mrf.mxu0
  %v226 = vadd.f32 %v52, %v225
  %v227 = vpop.f32.mrf.mxu0
  %v228 = vadd.f32 %v56, %v227
  %229 = vmatprep.mubr.bf16.mxu0 0
  %230 = vmatmul.mubr.bf16.gmra.mxu0 %v92
  %v231 = vpop.f32.mrf.mxu0
  %v232 = vadd.f32 %v52, %v231
  %v233 = vpop.f32.mrf.mxu0
  %v234 = vadd.f32 %v56, %v233
  %v235 = vpop.f32.mrf.mxu0
  %v236 = vadd.f32 %v52, %v235
  %v237 = vpop.f32.mrf.mxu0
  %v238 = vadd.f32 %v56, %v237
  %239 = vmatprep.mubr.bf16.mxu0 0
  %240 = vmatmul.mubr.bf16.gmra.mxu0 %v93
  %v241 = vpop.f32.mrf.mxu0
  %v242 = vadd.f32 %v52, %v241
  %v243 = vpop.f32.mrf.mxu0
  %v244 = vadd.f32 %v56, %v243
  %v245 = vpop.f32.mrf.mxu0
  %v246 = vadd.f32 %v52, %v245
  %v247 = vpop.f32.mrf.mxu0
  %v248 = vadd.f32 %v56, %v247
  %249 = vmatprep.mubr.bf16.mxu0 0
  %250 = vmatmul.mubr.bf16.gmra.mxu0 %v94
  %v251 = vpop.f32.mrf.mxu0
  %v252 = vadd.f32 %v52, %v251
  %v253 = vpop.f32.mrf.mxu0
  %v254 = vadd.f32 %v56, %v253
  %v255 = vpop.f32.mrf.mxu0
  %v256 = vadd.f32 %v52, %v255
  %v257 = vpop.f32.mrf.mxu0
  %v258 = vadd.f32 %v56, %v257
  %259 = vmatprep.mubr.bf16.mxu0 0
  %260 = vmatmul.mubr.bf16.gmra.mxu0 %v95
  %v261 = vpop.f32.mrf.mxu0
  %v262 = vadd.f32 %v52, %v261
  %v263 = vpop.f32.mrf.mxu0
  %v264 = vadd.f32 %v56, %v263
  %v265 = vpop.f32.mrf.mxu0
  %v266 = vadd.f32 %v52, %v265
  %v267 = vpop.f32.mrf.mxu0
  %v268 = vadd.f32 %v56, %v267
  %269 = vmatprep.mubr.bf16.mxu0 0
  %270 = vmatmul.mubr.bf16.gmra.mxu0 %v96
  %v271 = vpop.f32.mrf.mxu0
  %v272 = vadd.f32 %v52, %v271
  %v273 = vpop.f32.mrf.mxu0
  %v274 = vadd.f32 %v56, %v273
  %v275 = vpop.f32.mrf.mxu0
  %v276 = vadd.f32 %v52, %v275
  %v277 = vpop.f32.mrf.mxu0
  %v278 = vadd.f32 %v56, %v277
  %279 = vmatprep.mubr.bf16.mxu0 0
  %280 = vmatmul.mubr.bf16.gmra.mxu0 %v97
  %v281 = vpop.f32.mrf.mxu0
  %v282 = vadd.f32 %v52, %v281
  %v283 = vpop.f32.mrf.mxu0
  %v284 = vadd.f32 %v56, %v283
  %v285 = vpop.f32.mrf.mxu0
  %v286 = vadd.f32 %v52, %v285
  %v287 = vpop.f32.mrf.mxu0
  %v288 = vadd.f32 %v56, %v287
  %289 = vmatprep.mubr.bf16.mxu0 0
  %290 = vmatmul.mubr.bf16.gmra.mxu0 %v98
  %v291 = vpop.f32.mrf.mxu0
  %v292 = vadd.f32 %v52, %v291
  %v293 = vpop.f32.mrf.mxu0
  %v294 = vadd.f32 %v56, %v293
  %v295 = vpop.f32.mrf.mxu0
  %v296 = vadd.f32 %v52, %v295
  %v297 = vpop.f32.mrf.mxu0
  %v298 = vadd.f32 %v56, %v297
  %299 = vdwg.mxu0
  %v300 = vpack.c.bf16 %v226, %v222
  %v301 = vpack.c.bf16 %v228, %v224
  %v302 = vpack.c.bf16 %v236, %v232
  %v303 = vpack.c.bf16 %v238, %v234
  %v304 = vpack.c.bf16 %v246, %v242
  %v305 = vpack.c.bf16 %v248, %v244
  %v306 = vpack.c.bf16 %v256, %v252
  %v307 = vpack.c.bf16 %v258, %v254
  %v308 = vpack.c.bf16 %v266, %v262
  %v309 = vpack.c.bf16 %v268, %v264
  %v310 = vpack.c.bf16 %v276, %v272
  %v311 = vpack.c.bf16 %v278, %v274
  %v312 = vpack.c.bf16 %v286, %v282
  %v313 = vpack.c.bf16 %v288, %v284
  %v314 = vpack.c.bf16 %v296, %v292
  %v315 = vpack.c.bf16 %v298, %v294
  %v332 = vunpack.c.l.b16 %v300
  %v333 = vunpack.c.l.b16 %v301
  %v334 = vunpack.c.h.b16 %v300
  %v335 = vunpack.c.h.b16 %v301
  %v336 = vunpack.c.l.b16 %v302
  %v337 = vunpack.c.l.b16 %v303
  %v338 = vunpack.c.h.b16 %v302
  %v339 = vunpack.c.h.b16 %v303
  %v340 = vunpack.c.l.b16 %v304
  %v341 = vunpack.c.l.b16 %v305
  %v342 = vunpack.c.h.b16 %v304
  %v343 = vunpack.c.h.b16 %v305
  %v344 = vunpack.c.l.b16 %v306
  %v345 = vunpack.c.l.b16 %v307
  %v346 = vunpack.c.h.b16 %v306
  %v347 = vunpack.c.h.b16 %v307
  %v348 = vunpack.c.l.b16 %v308
  %v349 = vunpack.c.l.b16 %v309
  %v350 = vunpack.c.h.b16 %v308
  %v351 = vunpack.c.h.b16 %v309
  %v352 = vunpack.c.l.b16 %v310
  %v353 = vunpack.c.l.b16 %v311
  %v354 = vunpack.c.h.b16 %v310
  %v355 = vunpack.c.h.b16 %v311
  %v356 = vunpack.c.l.b16 %v312
  %v357 = vunpack.c.l.b16 %v313
  %v358 = vunpack.c.h.b16 %v312
  %v359 = vunpack.c.h.b16 %v313
  %v360 = vunpack.c.l.b16 %v314
  %v361 = vunpack.c.l.b16 %v315
  %v362 = vunpack.c.h.b16 %v314
  %v363 = vunpack.c.h.b16 %v315
  %v364 = vpack.c.b16 %v333, %v332
  %v365 = vpack.c.b16 %v335, %v334
  %v366 = vpack.c.b16 %v337, %v336
  %v367 = vpack.c.b16 %v339, %v338
  %v368 = vpack.c.b16 %v341, %v340
  %v369 = vpack.c.b16 %v343, %v342
  %v370 = vpack.c.b16 %v345, %v344
  %v371 = vpack.c.b16 %v347, %v346
  %v372 = vpack.c.b16 %v349, %v348
  %v373 = vpack.c.b16 %v351, %v350
  %v374 = vpack.c.b16 %v353, %v352
  %v375 = vpack.c.b16 %v355, %v354
  %v376 = vpack.c.b16 %v357, %v356
  %v377 = vpack.c.b16 %v359, %v358
  %v378 = vpack.c.b16 %v361, %v360
  %v379 = vpack.c.b16 %v363, %v362
  %396 = vst [vmem:[%s3] sm:$0xff] %v364
  %397 = vst [vmem:[%s3 + $0x8] sm:$0xff] %v365
  %398 = vst [vmem:[%s3 + $0x10] sm:$0xff] %v366
  %399 = vst [vmem:[%s3 + $0x18] sm:$0xff] %v367
  %400 = vst [vmem:[%s3 + $0x20] sm:$0xff] %v368
  %401 = vst [vmem:[%s3 + $0x28] sm:$0xff] %v369
  %402 = vst [vmem:[%s3 + $0x30] sm:$0xff] %v370
  %403 = vst [vmem:[%s3 + $0x38] sm:$0xff] %v371
  %404 = vst [vmem:[%s3 + $0x40] sm:$0xff] %v372
  %405 = vst [vmem:[%s3 + $0x48] sm:$0xff] %v373
  %406 = vst [vmem:[%s3 + $0x50] sm:$0xff] %v374
  %407 = vst [vmem:[%s3 + $0x58] sm:$0xff] %v375
  %408 = vst [vmem:[%s3 + $0x60] sm:$0xff] %v376
  %409 = vst [vmem:[%s3 + $0x68] sm:$0xff] %v377
  %410 = vst [vmem:[%s3 + $0x70] sm:$0xff] %v378
  %411 = vst [vmem:[%s3 + $0x78] sm:$0xff] %v379
  // Predicated region
  $region14: #{forward.31} parent=0 // pred_check
    _
  $region15: #{forward.31} parent=0 // pred_check_branch
    %413 = sbr.rel (0) target = $region17
  $region16: #{forward.31} parent=0 // pred_region
    _
  $region17: #{forward.31} parent=0 // pred_fallthru
    _
  // Predicated region
  $region18: #{forward.31} parent=0 // pred_check
    _
  $region19: #{forward.31} parent=0 // pred_check_branch
    %415 = sbr.rel (0) target = $region21
  $region20: #{forward.31} parent=0 // pred_region
    _
  $region21: #{forward.31} parent=0 // pred_fallthru
    _

// kernel: forward.32
$region0: #{forward.32}
  #allocation0 [shape = 'u32[]', space=smem, size = 0x4, offset = 0x4, fixed_abs, tag = 'smem constant byte address 0x4 - core index']
  #allocation1 [shape = 'u32[144,128]{1,0:T(1,128)}', space=vmem, size = 0x12000, scoped, tag = 'internal scratch']
  %s0 = inlined_call_operand.vmem [shape: bf16[512,640], index: 0, kind: input, shape index: {}]
  %s1 = inlined_call_operand.vmem [shape: bf16[640,128], index: 1, kind: input, shape index: {}]
  %s2 = inlined_call_operand.vmem [shape: f32[1,128], index: 2, kind: input, shape index: {}]
  %s3 = inlined_call_operand.vmem [shape: f32[1,128], index: 3, kind: input, shape index: {}]
  %s4 = inlined_call_operand.vmem [shape: bf16[512,128], index: 4, kind: output, shape index: {}]
  %s5 = sld [smem:[#allocation0]]
  $region49: #{forward.32} parent=0
    _
  %s7 = ssub.s32 1, %s5
  %s8 = scalar_select 0, %s7, %s5
  loop: start=0, step=1, limit=4
  $region2: #{forward.32} parent=0 // loop_pre_header
    _
  $region3: #{forward.32} parent=0 // loop_header
    %s10 = sphi 0, %s14
    %p11 = scmp.ge.s32.totalorder %s10, 4
    %s20 = sphi 0, %s22
    %s23 = sphi 0, %s20
    %s24 = sphi 0, %s23
    %s40 = sphi 0, %s24
    %s44 = sphi 0, %s44
    %s46 = sphi 0, %s44
    %s47 = sphi 0, %s46
    %s61 = sphi 0, %s47
    %s65 = sphi 0, %s65
    %s67 = sphi 0, %s65
    %s68 = sphi 0, %s67
    %s82 = sphi 0, %s68
    %s86 = sphi 0, %s86
    %s88 = sphi 0, %s86
    %s89 = sphi 0, %s88
    %s103 = sphi 0, %s89
    %s109 = sphi 0, %s111
    %s112 = sphi 0, %s109
    %s113 = sphi 0, %s112
    %s129 = sphi 0, %s113
  $region4: #{forward.32} parent=0 // loop_header_branch
    %13 = sbr.rel (%p11) target = $region8
  $region5: #{forward.32} parent=0 // loop_body
    %s15 = ssub.s32 %s10, 1
    %s16 = ssub.s32 %s10, 2
    %s17 = sadd.s32 %s10, 1
    %s18 = ssub.s32 %s10, %s17
    %p19 = scmp.eq.s32.totalorder %s18, 0
    %s21 = sadd.s32 %s20, 1
    %s22 = scalar_select %p19, %s20, %s21
    %p25 = pneg %p19
    %p26 = scmp.eq.s32.totalorder %s10, 1
    %p27 = por %p25, %p26
    %p28 = scmp.ne.s32.totalorder %s20, %s23
    %p29 = scmp.eq.s32.totalorder %s10, 0
    %p30 = por %p28, %p29
    %p31 = scmp.ne.s32.totalorder %s20, %s23
    %p32 = scmp.eq.s32.totalorder %s15, 1
    %p33 = por %p31, %p32
    %p34 = scmp.ne.s32.totalorder %s23, %s24
    %p35 = scmp.eq.s32.totalorder %s15, 0
    %p36 = por %p34, %p35
    %p37 = scmp.ne.s32.totalorder %s23, %s24
    %p38 = scmp.eq.s32.totalorder %s16, 1
    %p39 = por %p37, %p38
    %p41 = scmp.ne.s32.totalorder %s24, %s40
    %p42 = scmp.eq.s32.totalorder %s16, 0
    %p43 = por %p41, %p42
    %s45 = sadd.s32 %s44, 1
    %p48 = scmp.eq.s32.totalorder %s10, 1
    %p49 = scmp.ne.s32.totalorder %s44, %s46
    %p50 = scmp.eq.s32.totalorder %s10, 0
    %p51 = por %p49, %p50
    %p52 = scmp.ne.s32.totalorder %s44, %s46
    %p53 = scmp.eq.s32.totalorder %s15, 1
    %p54 = por %p52, %p53
    %p55 = scmp.ne.s32.totalorder %s46, %s47
    %p56 = scmp.eq.s32.totalorder %s15, 0
    %p57 = por %p55, %p56
    %p58 = scmp.ne.s32.totalorder %s46, %s47
    %p59 = scmp.eq.s32.totalorder %s16, 1
    %p60 = por %p58, %p59
    %p62 = scmp.ne.s32.totalorder %s47, %s61
    %p63 = scmp.eq.s32.totalorder %s16, 0
    %p64 = por %p62, %p63
    %s66 = sadd.s32 %s65, 1
    %p69 = scmp.eq.s32.totalorder %s10, 1
    %p70 = scmp.ne.s32.totalorder %s65, %s67
    %p71 = scmp.eq.s32.totalorder %s10, 0
    %p72 = por %p70, %p71
    %p73 = scmp.ne.s32.totalorder %s65, %s67
    %p74 = scmp.eq.s32.totalorder %s15, 1
    %p75 = por %p73, %p74
    %p76 = scmp.ne.s32.totalorder %s67, %s68
    %p77 = scmp.eq.s32.totalorder %s15, 0
    %p78 = por %p76, %p77
    %p79 = scmp.ne.s32.totalorder %s67, %s68
    %p80 = scmp.eq.s32.totalorder %s16, 1
    %p81 = por %p79, %p80
    %p83 = scmp.ne.s32.totalorder %s68, %s82
    %p84 = scmp.eq.s32.totalorder %s16, 0
    %p85 = por %p83, %p84
    %s87 = sadd.s32 %s86, 1
    %p90 = scmp.eq.s32.totalorder %s10, 1
    %p91 = scmp.ne.s32.totalorder %s86, %s88
    %p92 = scmp.eq.s32.totalorder %s10, 0
    %p93 = por %p91, %p92
    %p94 = scmp.ne.s32.totalorder %s86, %s88
    %p95 = scmp.eq.s32.totalorder %s15, 1
    %p96 = por %p94, %p95
    %p97 = scmp.ne.s32.totalorder %s88, %s89
    %p98 = scmp.eq.s32.totalorder %s15, 0
    %p99 = por %p97, %p98
    %p100 = scmp.ne.s32.totalorder %s88, %s89
    %p101 = scmp.eq.s32.totalorder %s16, 1
    %p102 = por %p100, %p101
    %p104 = scmp.ne.s32.totalorder %s89, %s103
    %p105 = scmp.eq.s32.totalorder %s16, 0
    %p106 = por %p104, %p105
    %s107 = ssub.s32 %s10, %s17
    %p108 = scmp.eq.s32.totalorder %s107, 0
    %s110 = sadd.s32 %s109, 1
    %s111 = scalar_select %p108, %s109, %s110
    %p114 = pneg %p108
    %p115 = scmp.eq.s32.totalorder %s10, 1
    %p116 = por %p114, %p115
    %p117 = scmp.ne.s32.totalorder %s109, %s112
    %p118 = scmp.eq.s32.totalorder %s10, 0
    %p119 = por %p117, %p118
    %p120 = scmp.ne.s32.totalorder %s109, %s112
    %p121 = scmp.eq.s32.totalorder %s15, 1
    %p122 = por %p120, %p121
    %p123 = scmp.ne.s32.totalorder %s112, %s113
    %p124 = scmp.eq.s32.totalorder %s15, 0
    %p125 = por %p123, %p124
    %p126 = scmp.ne.s32.totalorder %s112, %s113
    %p127 = scmp.eq.s32.totalorder %s16, 1
    %p128 = por %p126, %p127
    %p130 = scmp.ne.s32.totalorder %s113, %s129
    %p131 = scmp.eq.s32.totalorder %s16, 0
    %p132 = por %p130, %p131
    %p133 = scmp.le.s32.totalorder 1, %s10
    %p134 = scmp.lt.s32.totalorder %s10, 3
    %p135 = pnand %p133, %p134
    %p136 = pneg %p135
    // Predicated region
    $region9: #{forward.32} parent=5 // pred_check
      _
    $region10: #{forward.32} parent=5 // pred_check_branch
      %138 = sbr.rel (%p135) target = $region12
    $region11: #{forward.32} parent=5 // pred_region
      %s139 = ssub.s32 %s10, 1
      // Predicated region
      $region13: #{forward.32} parent=11 // pred_check
        %p140 = pneg %p57
      $region14: #{forward.32} parent=11 // pred_check_branch
        %142 = sbr.rel (%p140) target = $region16
      $region15: #{forward.32} parent=11 // pred_region
        _
      $region16: #{forward.32} parent=11 // pred_fallthru
        _
      // Predicated region
      $region17: #{forward.32} parent=11 // pred_check
        %p143 = pneg %p78
      $region18: #{forward.32} parent=11 // pred_check_branch
        %145 = sbr.rel (%p143) target = $region20
      $region19: #{forward.32} parent=11 // pred_region
        _
      $region20: #{forward.32} parent=11 // pred_fallthru
        _
      // Predicated region
      $region21: #{forward.32} parent=11 // pred_check
        %p146 = pneg %p99
      $region22: #{forward.32} parent=11 // pred_check_branch
        %148 = sbr.rel (%p146) target = $region24
      $region23: #{forward.32} parent=11 // pred_region
        _
      $region24: #{forward.32} parent=11 // pred_fallthru
        _
    $region12: #{forward.32} parent=5 // pred_fallthru
      _
    %p149 = scmp.lt.s32.totalorder %s10, 2
    // Predicated region
    $region25: #{forward.32} parent=5 // pred_check
      %p150 = pneg %p149
    $region26: #{forward.32} parent=5 // pred_check_branch
      %152 = sbr.rel (%p150) target = $region28
    $region27: #{forward.32} parent=5 // pred_region
      // Predicated region
      $region29: #{forward.32} parent=27 // pred_check
        %p153 = pneg %p30
      $region30: #{forward.32} parent=27 // pred_check_branch
        %155 = sbr.rel (%p153) target = $region32
      $region31: #{forward.32} parent=27 // pred_region
        %s156 = smul.u32 32, %s10
        %p157 = scmp.lt.s32.totalorder %s156, 63
        %s158 = scalar_select %p157, %s156, 63
        %s159 = smul.addr %s158, 5
        %s160 = smul.addr %s159, 4
        %s161 = scalar_lea.vmem %s0, %s160
        %s162 = smul.u32 32, %s10
      $region32: #{forward.32} parent=27 // pred_fallthru
        _
    $region28: #{forward.32} parent=5 // pred_fallthru
      _
    %p163 = scmp.le.s32.totalorder 1, %s10
    %p164 = scmp.lt.s32.totalorder %s10, 3
    %p165 = pnand %p163, %p164
    %p166 = pneg %p165
    // Predicated region
    $region33: #{forward.32} parent=5 // pred_check
      _
    $region34: #{forward.32} parent=5 // pred_check_branch
      %168 = sbr.rel (%p165) target = $region36
    $region35: #{forward.32} parent=5 // pred_region
      %s169 = ssub.s32 %s10, 1
      %s170 = smul.u32 32, %s15
      %p171 = scmp.lt.s32.totalorder %s170, 63
      %s172 = scalar_select %p171, %s170, 63
      %s173 = smul.addr %s172, 5
      %s174 = smul.addr %s173, 4
      %s175 = scalar_lea.vmem %s0, %s174
      %p176 = pneg %p36
      %p177 = pneg %p33
      %p178 = pneg %p57
      %p179 = pneg %p54
      %p180 = pneg %p78
      %p181 = pneg %p75
      %p182 = pneg %p99
      %p183 = pneg %p96
      %p184 = pneg %p125
      %p185 = pneg %p122
      %s186 = smul.u32 32, %s15
      %p187 = scmp.lt.s32.totalorder %s186, 63
      %s188 = scalar_select %p187, %s186, 63
      %s189 = smul.addr %s188, 4
      %s190 = scalar_lea.vmem %s4, %s189
      %s191 = smul.u32 32, %s15
      %p192 = scmp.lt.s32.totalorder %s191, 63
      %s193 = scalar_select %p192, %s191, 63
      %s194 = smul.addr %s193, 5
      %s195 = smul.addr %s194, 4
      %s196 = scalar_lea.vmem %s0, %s195
      %s197 = smul.u32 32, %s15
      %s198 = smul.u32 32, %s15
      %p199 = scmp.lt.s32.totalorder %s198, 63
      %s200 = scalar_select %p199, %s198, 63
      %s201 = smul.addr %s200, 4
      %s202 = scalar_lea.vmem %s4, %s201
      %s203 = smul.u32 32, %s15
      %v205 = vld [vmem:[%s196] sm:$0xff]
      %v206 = vld [vmem:[%s196 + $0x8] sm:$0xff]
      %v207 = vld [vmem:[%s196 + $0x10] sm:$0xf]
      %v208 = vld [vmem:[%s196 + $0x14] sm:$0xff]
      %v209 = vld [vmem:[%s196 + $0x1c] sm:$0xff]
      %v210 = vld [vmem:[%s196 + $0x24] sm:$0xf]
      %v211 = vld [vmem:[%s196 + $0x28] sm:$0xff]
      %v212 = vld [vmem:[%s196 + $0x30] sm:$0xff]
      %v213 = vld [vmem:[%s196 + $0x38] sm:$0xf]
      %v214 = vld [vmem:[%s196 + $0x3c] sm:$0xff]
      %v215 = vld [vmem:[%s196 + $0x44] sm:$0xff]
      %v216 = vld [vmem:[%s196 + $0x4c] sm:$0xf]
      %v217 = vld [vmem:[%s196 + $0x50] sm:$0xff]
      %v218 = vld [vmem:[%s196 + $0x58] sm:$0xff]
      %v219 = vld [vmem:[%s196 + $0x60] sm:$0xf]
      %v220 = vld [vmem:[%s196 + $0x64] sm:$0xff]
      %v221 = vld [vmem:[%s196 + $0x6c] sm:$0xff]
      %v222 = vld [vmem:[%s196 + $0x74] sm:$0xf]
      %v223 = vld [vmem:[%s196 + $0x78] sm:$0xff]
      %v224 = vld [vmem:[%s196 + $0x80] sm:$0xff]
      %v225 = vld [vmem:[%s196 + $0x88] sm:$0xf]
      %v226 = vld [vmem:[%s196 + $0x8c] sm:$0xff]
      %v227 = vld [vmem:[%s196 + $0x94] sm:$0xff]
      %v228 = vld [vmem:[%s196 + $0x9c] sm:$0xf]
      %v229 = vld [vmem:[%s196 + $0xa0] sm:$0xff]
      %v230 = vld [vmem:[%s196 + $0xa8] sm:$0xff]
      %v231 = vld [vmem:[%s196 + $0xb0] sm:$0xf]
      %v232 = vld [vmem:[%s196 + $0xb4] sm:$0xff]
      %v233 = vld [vmem:[%s196 + $0xbc] sm:$0xff]
      %v234 = vld [vmem:[%s196 + $0xc4] sm:$0xf]
      %v235 = vld [vmem:[%s196 + $0xc8] sm:$0xff]
      %v236 = vld [vmem:[%s196 + $0xd0] sm:$0xff]
      %v237 = vld [vmem:[%s196 + $0xd8] sm:$0xf]
      %v238 = vld [vmem:[%s196 + $0xdc] sm:$0xff]
      %v239 = vld [vmem:[%s196 + $0xe4] sm:$0xff]
      %v240 = vld [vmem:[%s196 + $0xec] sm:$0xf]
      %v241 = vld [vmem:[%s196 + $0xf0] sm:$0xff]
      %v242 = vld [vmem:[%s196 + $0xf8] sm:$0xff]
      %v243 = vld [vmem:[%s196 + $0x100] sm:$0xf]
      %v244 = vld [vmem:[%s196 + $0x104] sm:$0xff]
      %v245 = vld [vmem:[%s196 + $0x10c] sm:$0xff]
      %v246 = vld [vmem:[%s196 + $0x114] sm:$0xf]
      %v247 = vld [vmem:[%s196 + $0x118] sm:$0xff]
      %v248 = vld [vmem:[%s196 + $0x120] sm:$0xff]
      %v249 = vld [vmem:[%s196 + $0x128] sm:$0xf]
      %v250 = vld [vmem:[%s196 + $0x12c] sm:$0xff]
      %v251 = vld [vmem:[%s196 + $0x134] sm:$0xff]
      %v252 = vld [vmem:[%s196 + $0x13c] sm:$0xf]
      %v253 = vld [vmem:[%s196 + $0x140] sm:$0xff]
      %v254 = vld [vmem:[%s196 + $0x148] sm:$0xff]
      %v255 = vld [vmem:[%s196 + $0x150] sm:$0xf]
      %v256 = vld [vmem:[%s196 + $0x154] sm:$0xff]
      %v257 = vld [vmem:[%s196 + $0x15c] sm:$0xff]
      %v258 = vld [vmem:[%s196 + $0x164] sm:$0xf]
      %v259 = vld [vmem:[%s196 + $0x168] sm:$0xff]
      %v260 = vld [vmem:[%s196 + $0x170] sm:$0xff]
      %v261 = vld [vmem:[%s196 + $0x178] sm:$0xf]
      %v262 = vld [vmem:[%s196 + $0x17c] sm:$0xff]
      %v263 = vld [vmem:[%s196 + $0x184] sm:$0xff]
      %v264 = vld [vmem:[%s196 + $0x18c] sm:$0xf]
      %v265 = vld [vmem:[%s196 + $0x190] sm:$0xff]
      %v266 = vld [vmem:[%s196 + $0x198] sm:$0xff]
      %v267 = vld [vmem:[%s196 + $0x1a0] sm:$0xf]
      %v268 = vld [vmem:[%s196 + $0x1a4] sm:$0xff]
      %v269 = vld [vmem:[%s196 + $0x1ac] sm:$0xff]
      %v270 = vld [vmem:[%s196 + $0x1b4] sm:$0xf]
      %v271 = vld [vmem:[%s196 + $0x1b8] sm:$0xff]
      %v272 = vld [vmem:[%s196 + $0x1c0] sm:$0xff]
      %v273 = vld [vmem:[%s196 + $0x1c8] sm:$0xf]
      %v274 = vld [vmem:[%s196 + $0x1cc] sm:$0xff]
      %v275 = vld [vmem:[%s196 + $0x1d4] sm:$0xff]
      %v276 = vld [vmem:[%s196 + $0x1dc] sm:$0xf]
      %v277 = vld [vmem:[%s196 + $0x1e0] sm:$0xff]
      %v278 = vld [vmem:[%s196 + $0x1e8] sm:$0xff]
      %v279 = vld [vmem:[%s196 + $0x1f0] sm:$0xf]
      %v280 = vld [vmem:[%s196 + $0x1f4] sm:$0xff]
      %v281 = vld [vmem:[%s196 + $0x1fc] sm:$0xff]
      %v282 = vld [vmem:[%s196 + $0x204] sm:$0xf]
      %v283 = vld [vmem:[%s196 + $0x208] sm:$0xff]
      %v284 = vld [vmem:[%s196 + $0x210] sm:$0xff]
      %v285 = vld [vmem:[%s196 + $0x218] sm:$0xf]
      %v286 = vld [vmem:[%s196 + $0x21c] sm:$0xff]
      %v287 = vld [vmem:[%s196 + $0x224] sm:$0xff]
      %v288 = vld [vmem:[%s196 + $0x22c] sm:$0xf]
      %v289 = vld [vmem:[%s196 + $0x230] sm:$0xff]
      %v290 = vld [vmem:[%s196 + $0x238] sm:$0xff]
      %v291 = vld [vmem:[%s196 + $0x240] sm:$0xf]
      %v292 = vld [vmem:[%s196 + $0x244] sm:$0xff]
      %v293 = vld [vmem:[%s196 + $0x24c] sm:$0xff]
      %v294 = vld [vmem:[%s196 + $0x254] sm:$0xf]
      %v295 = vld [vmem:[%s196 + $0x258] sm:$0xff]
      %v296 = vld [vmem:[%s196 + $0x260] sm:$0xff]
      %v297 = vld [vmem:[%s196 + $0x268] sm:$0xf]
      %v298 = vld [vmem:[%s196 + $0x26c] sm:$0xff]
      %v299 = vld [vmem:[%s196 + $0x274] sm:$0xff]
      %v300 = vld [vmem:[%s196 + $0x27c] sm:$0xf]
      %v301 = vld [vmem:[%s1] sm:$0xf]
      %v302 = vld [vmem:[%s1 + $0x4] sm:$0xf]
      %v303 = vld [vmem:[%s1 + $0x8] sm:$0xf]
      %v304 = vld [vmem:[%s1 + $0xc] sm:$0xf]
      %v305 = vld [vmem:[%s1 + $0x10] sm:$0xf]
      %v306 = vld [vmem:[%s1 + $0x14] sm:$0xf]
      %v307 = vld [vmem:[%s1 + $0x18] sm:$0xf]
      %v308 = vld [vmem:[%s1 + $0x1c] sm:$0xf]
      %v309 = vld [vmem:[%s1 + $0x20] sm:$0xf]
      %v310 = vld [vmem:[%s1 + $0x24] sm:$0xf]
      %v311 = vld [vmem:[%s1 + $0x28] sm:$0xf]
      %v312 = vld [vmem:[%s1 + $0x2c] sm:$0xf]
      %v313 = vld [vmem:[%s1 + $0x30] sm:$0xf]
      %v314 = vld [vmem:[%s1 + $0x34] sm:$0xf]
      %v315 = vld [vmem:[%s1 + $0x38] sm:$0xf]
      %v316 = vld [vmem:[%s1 + $0x3c] sm:$0xf]
      %v317 = vld [vmem:[%s1 + $0x40] sm:$0xf]
      %v318 = vld [vmem:[%s1 + $0x44] sm:$0xf]
      %v319 = vld [vmem:[%s1 + $0x48] sm:$0xf]
      %v320 = vld [vmem:[%s1 + $0x4c] sm:$0xf]
      %v321 = vld [vmem:[%s1 + $0x50] sm:$0xf]
      %v322 = vld [vmem:[%s1 + $0x54] sm:$0xf]
      %v323 = vld [vmem:[%s1 + $0x58] sm:$0xf]
      %v324 = vld [vmem:[%s1 + $0x5c] sm:$0xf]
      %v325 = vld [vmem:[%s1 + $0x60] sm:$0xf]
      %v326 = vld [vmem:[%s1 + $0x64] sm:$0xf]
      %v327 = vld [vmem:[%s1 + $0x68] sm:$0xf]
      %v328 = vld [vmem:[%s1 + $0x6c] sm:$0xf]
      %v329 = vld [vmem:[%s1 + $0x70] sm:$0xf]
      %v330 = vld [vmem:[%s1 + $0x74] sm:$0xf]
      %v331 = vld [vmem:[%s1 + $0x78] sm:$0xf]
      %v332 = vld [vmem:[%s1 + $0x7c] sm:$0xf]
      %v333 = vld [vmem:[%s1 + $0x80] sm:$0xf]
      %v334 = vld [vmem:[%s1 + $0x84] sm:$0xf]
      %v335 = vld [vmem:[%s1 + $0x88] sm:$0xf]
      %v336 = vld [vmem:[%s1 + $0x8c] sm:$0xf]
      %v337 = vld [vmem:[%s1 + $0x90] sm:$0xf]
      %v338 = vld [vmem:[%s1 + $0x94] sm:$0xf]
      %v339 = vld [vmem:[%s1 + $0x98] sm:$0xf]
      %v340 = vld [vmem:[%s1 + $0x9c] sm:$0xf]
      %v341 = vld [vmem:[%s1 + $0xa0] sm:$0xf]
      %v342 = vld [vmem:[%s1 + $0xa4] sm:$0xf]
      %v343 = vld [vmem:[%s1 + $0xa8] sm:$0xf]
      %v344 = vld [vmem:[%s1 + $0xac] sm:$0xf]
      %v345 = vld [vmem:[%s1 + $0xb0] sm:$0xf]
      %v346 = vld [vmem:[%s1 + $0xb4] sm:$0xf]
      %v347 = vld [vmem:[%s1 + $0xb8] sm:$0xf]
      %v348 = vld [vmem:[%s1 + $0xbc] sm:$0xf]
      %v349 = vld [vmem:[%s1 + $0xc0] sm:$0xf]
      %v350 = vld [vmem:[%s1 + $0xc4] sm:$0xf]
      %v351 = vld [vmem:[%s1 + $0xc8] sm:$0xf]
      %v352 = vld [vmem:[%s1 + $0xcc] sm:$0xf]
      %v353 = vld [vmem:[%s1 + $0xd0] sm:$0xf]
      %v354 = vld [vmem:[%s1 + $0xd4] sm:$0xf]
      %v355 = vld [vmem:[%s1 + $0xd8] sm:$0xf]
      %v356 = vld [vmem:[%s1 + $0xdc] sm:$0xf]
      %v357 = vld [vmem:[%s1 + $0xe0] sm:$0xf]
      %v358 = vld [vmem:[%s1 + $0xe4] sm:$0xf]
      %v359 = vld [vmem:[%s1 + $0xe8] sm:$0xf]
      %v360 = vld [vmem:[%s1 + $0xec] sm:$0xf]
      %v361 = vld [vmem:[%s1 + $0xf0] sm:$0xf]
      %v362 = vld [vmem:[%s1 + $0xf4] sm:$0xf]
      %v363 = vld [vmem:[%s1 + $0xf8] sm:$0xf]
      %v364 = vld [vmem:[%s1 + $0xfc] sm:$0xf]
      %v365 = vld [vmem:[%s1 + $0x100] sm:$0xf]
      %v366 = vld [vmem:[%s1 + $0x104] sm:$0xf]
      %v367 = vld [vmem:[%s1 + $0x108] sm:$0xf]
      %v368 = vld [vmem:[%s1 + $0x10c] sm:$0xf]
      %v369 = vld [vmem:[%s1 + $0x110] sm:$0xf]
      %v370 = vld [vmem:[%s1 + $0x114] sm:$0xf]
      %v371 = vld [vmem:[%s1 + $0x118] sm:$0xf]
      %v372 = vld [vmem:[%s1 + $0x11c] sm:$0xf]
      %v373 = vld [vmem:[%s1 + $0x120] sm:$0xf]
      %v374 = vld [vmem:[%s1 + $0x124] sm:$0xf]
      %v375 = vld [vmem:[%s1 + $0x128] sm:$0xf]
      %v376 = vld [vmem:[%s1 + $0x12c] sm:$0xf]
      %v377 = vld [vmem:[%s1 + $0x130] sm:$0xf]
      %v378 = vld [vmem:[%s1 + $0x134] sm:$0xf]
      %v379 = vld [vmem:[%s1 + $0x138] sm:$0xf]
      %v380 = vld [vmem:[%s1 + $0x13c] sm:$0xf]
      %v477 = vunpack.c.l.b16 %v205
      %v478 = vunpack.c.h.b16 %v205
      %v479 = vunpack.c.l.b16 %v206
      %v480 = vunpack.c.h.b16 %v206
      %v481 = vunpack.c.l.b16 %v207
      %v482 = vunpack.c.l.b16 %v208
      %v483 = vunpack.c.h.b16 %v208
      %v484 = vunpack.c.l.b16 %v209
      %v485 = vunpack.c.h.b16 %v209
      %v486 = vunpack.c.l.b16 %v210
      %v487 = vunpack.c.l.b16 %v211
      %v488 = vunpack.c.h.b16 %v211
      %v489 = vunpack.c.l.b16 %v212
      %v490 = vunpack.c.h.b16 %v212
      %v491 = vunpack.c.l.b16 %v213
      %v492 = vunpack.c.l.b16 %v214
      %v493 = vunpack.c.h.b16 %v214
      %v494 = vunpack.c.l.b16 %v215
      %v495 = vunpack.c.h.b16 %v215
      %v496 = vunpack.c.l.b16 %v216
      %v497 = vunpack.c.l.b16 %v217
      %v498 = vunpack.c.h.b16 %v217
      %v499 = vunpack.c.l.b16 %v218
      %v500 = vunpack.c.h.b16 %v218
      %v501 = vunpack.c.l.b16 %v219
      %v502 = vunpack.c.l.b16 %v220
      %v503 = vunpack.c.h.b16 %v220
      %v504 = vunpack.c.l.b16 %v221
      %v505 = vunpack.c.h.b16 %v221
      %v506 = vunpack.c.l.b16 %v222
      %v507 = vunpack.c.l.b16 %v223
      %v508 = vunpack.c.h.b16 %v223
      %v509 = vunpack.c.l.b16 %v224
      %v510 = vunpack.c.h.b16 %v224
      %v511 = vunpack.c.l.b16 %v225
      %v512 = vunpack.c.l.b16 %v226
      %v513 = vunpack.c.h.b16 %v226
      %v514 = vunpack.c.l.b16 %v227
      %v515 = vunpack.c.h.b16 %v227
      %v516 = vunpack.c.l.b16 %v228
      %v517 = vunpack.c.l.b16 %v229
      %v518 = vunpack.c.h.b16 %v229
      %v519 = vunpack.c.l.b16 %v230
      %v520 = vunpack.c.h.b16 %v230
      %v521 = vunpack.c.l.b16 %v231
      %v522 = vunpack.c.l.b16 %v232
      %v523 = vunpack.c.h.b16 %v232
      %v524 = vunpack.c.l.b16 %v233
      %v525 = vunpack.c.h.b16 %v233
      %v526 = vunpack.c.l.b16 %v234
      %v527 = vunpack.c.l.b16 %v235
      %v528 = vunpack.c.h.b16 %v235
      %v529 = vunpack.c.l.b16 %v236
      %v530 = vunpack.c.h.b16 %v236
      %v531 = vunpack.c.l.b16 %v237
      %v532 = vunpack.c.l.b16 %v238
      %v533 = vunpack.c.h.b16 %v238
      %v534 = vunpack.c.l.b16 %v239
      %v535 = vunpack.c.h.b16 %v239
      %v536 = vunpack.c.l.b16 %v240
      %v537 = vunpack.c.l.b16 %v241
      %v538 = vunpack.c.h.b16 %v241
      %v539 = vunpack.c.l.b16 %v242
      %v540 = vunpack.c.h.b16 %v242
      %v541 = vunpack.c.l.b16 %v243
      %v542 = vunpack.c.l.b16 %v244
      %v543 = vunpack.c.h.b16 %v244
      %v544 = vunpack.c.l.b16 %v245
      %v545 = vunpack.c.h.b16 %v245
      %v546 = vunpack.c.l.b16 %v246
      %v547 = vunpack.c.l.b16 %v247
      %v548 = vunpack.c.h.b16 %v247
      %v549 = vunpack.c.l.b16 %v248
      %v550 = vunpack.c.h.b16 %v248
      %v551 = vunpack.c.l.b16 %v249
      %v552 = vunpack.c.l.b16 %v250
      %v553 = vunpack.c.h.b16 %v250
      %v554 = vunpack.c.l.b16 %v251
      %v555 = vunpack.c.h.b16 %v251
      %v556 = vunpack.c.l.b16 %v252
      %v557 = vunpack.c.l.b16 %v253
      %v558 = vunpack.c.h.b16 %v253
      %v559 = vunpack.c.l.b16 %v254
      %v560 = vunpack.c.h.b16 %v254
      %v561 = vunpack.c.l.b16 %v255
      %v562 = vunpack.c.l.b16 %v256
      %v563 = vunpack.c.h.b16 %v256
      %v564 = vunpack.c.l.b16 %v257
      %v565 = vunpack.c.h.b16 %v257
      %v566 = vunpack.c.l.b16 %v258
      %v567 = vunpack.c.l.b16 %v259
      %v568 = vunpack.c.h.b16 %v259
      %v569 = vunpack.c.l.b16 %v260
      %v570 = vunpack.c.h.b16 %v260
      %v571 = vunpack.c.l.b16 %v261
      %v572 = vunpack.c.l.b16 %v262
      %v573 = vunpack.c.h.b16 %v262
      %v574 = vunpack.c.l.b16 %v263
      %v575 = vunpack.c.h.b16 %v263
      %v576 = vunpack.c.l.b16 %v264
      %v577 = vunpack.c.l.b16 %v265
      %v578 = vunpack.c.h.b16 %v265
      %v579 = vunpack.c.l.b16 %v266
      %v580 = vunpack.c.h.b16 %v266
      %v581 = vunpack.c.l.b16 %v267
      %v582 = vunpack.c.l.b16 %v268
      %v583 = vunpack.c.h.b16 %v268
      %v584 = vunpack.c.l.b16 %v269
      %v585 = vunpack.c.h.b16 %v269
      %v586 = vunpack.c.l.b16 %v270
      %v587 = vunpack.c.l.b16 %v271
      %v588 = vunpack.c.h.b16 %v271
      %v589 = vunpack.c.l.b16 %v272
      %v590 = vunpack.c.h.b16 %v272
      %v591 = vunpack.c.l.b16 %v273
      %v592 = vunpack.c.l.b16 %v274
      %v593 = vunpack.c.h.b16 %v274
      %v594 = vunpack.c.l.b16 %v275
      %v595 = vunpack.c.h.b16 %v275
      %v596 = vunpack.c.l.b16 %v276
      %v597 = vunpack.c.l.b16 %v277
      %v598 = vunpack.c.h.b16 %v277
      %v599 = vunpack.c.l.b16 %v278
      %v600 = vunpack.c.h.b16 %v278
      %v601 = vunpack.c.l.b16 %v279
      %v602 = vunpack.c.l.b16 %v280
      %v603 = vunpack.c.h.b16 %v280
      %v604 = vunpack.c.l.b16 %v281
      %v605 = vunpack.c.h.b16 %v281
      %v606 = vunpack.c.l.b16 %v282
      %v607 = vunpack.c.l.b16 %v283
      %v608 = vunpack.c.h.b16 %v283
      %v609 = vunpack.c.l.b16 %v284
      %v610 = vunpack.c.h.b16 %v284
      %v611 = vunpack.c.l.b16 %v285
      %v612 = vunpack.c.l.b16 %v286
      %v613 = vunpack.c.h.b16 %v286
      %v614 = vunpack.c.l.b16 %v287
      %v615 = vunpack.c.h.b16 %v287
      %v616 = vunpack.c.l.b16 %v288
      %v617 = vunpack.c.l.b16 %v289
      %v618 = vunpack.c.h.b16 %v289
      %v619 = vunpack.c.l.b16 %v290
      %v620 = vunpack.c.h.b16 %v290
      %v621 = vunpack.c.l.b16 %v291
      %v622 = vunpack.c.l.b16 %v292
      %v623 = vunpack.c.h.b16 %v292
      %v624 = vunpack.c.l.b16 %v293
      %v625 = vunpack.c.h.b16 %v293
      %v626 = vunpack.c.l.b16 %v294
      %v627 = vunpack.c.l.b16 %v295
      %v628 = vunpack.c.h.b16 %v295
      %v629 = vunpack.c.l.b16 %v296
      %v630 = vunpack.c.h.b16 %v296
      %v631 = vunpack.c.l.b16 %v297
      %v632 = vunpack.c.l.b16 %v298
      %v633 = vunpack.c.h.b16 %v298
      %v634 = vunpack.c.l.b16 %v299
      %v635 = vunpack.c.h.b16 %v299
      %v636 = vunpack.c.l.b16 %v300
      %v637 = vpack.c.b16 %v482, %v477
      %v638 = vpack.c.b16 %v483, %v478
      %v639 = vpack.c.b16 %v484, %v479
      %v640 = vpack.c.b16 %v485, %v480
      %v641 = vpack.c.b16 %v486, %v481
      %v642 = vpack.c.b16 %v492, %v487
      %v643 = vpack.c.b16 %v493, %v488
      %v644 = vpack.c.b16 %v494, %v489
      %v645 = vpack.c.b16 %v495, %v490
      %v646 = vpack.c.b16 %v496, %v491
      %v647 = vpack.c.b16 %v502, %v497
      %v648 = vpack.c.b16 %v503, %v498
      %v649 = vpack.c.b16 %v504, %v499
      %v650 = vpack.c.b16 %v505, %v500
      %v651 = vpack.c.b16 %v506, %v501
      %v652 = vpack.c.b16 %v512, %v507
      %v653 = vpack.c.b16 %v513, %v508
      %v654 = vpack.c.b16 %v514, %v509
      %v655 = vpack.c.b16 %v515, %v510
      %v656 = vpack.c.b16 %v516, %v511
      %v657 = vpack.c.b16 %v522, %v517
      %v658 = vpack.c.b16 %v523, %v518
      %v659 = vpack.c.b16 %v524, %v519
      %v660 = vpack.c.b16 %v525, %v520
      %v661 = vpack.c.b16 %v526, %v521
      %v662 = vpack.c.b16 %v532, %v527
      %v663 = vpack.c.b16 %v533, %v528
      %v664 = vpack.c.b16 %v534, %v529
      %v665 = vpack.c.b16 %v535, %v530
      %v666 = vpack.c.b16 %v536, %v531
      %v667 = vpack.c.b16 %v542, %v537
      %v668 = vpack.c.b16 %v543, %v538
      %v669 = vpack.c.b16 %v544, %v539
      %v670 = vpack.c.b16 %v545, %v540
      %v671 = vpack.c.b16 %v546, %v541
      %v672 = vpack.c.b16 %v552, %v547
      %v673 = vpack.c.b16 %v553, %v548
      %v674 = vpack.c.b16 %v554, %v549
      %v675 = vpack.c.b16 %v555, %v550
      %v676 = vpack.c.b16 %v556, %v551
      %v677 = vpack.c.b16 %v562, %v557
      %v678 = vpack.c.b16 %v563, %v558
      %v679 = vpack.c.b16 %v564, %v559
      %v680 = vpack.c.b16 %v565, %v560
      %v681 = vpack.c.b16 %v566, %v561
      %v682 = vpack.c.b16 %v572, %v567
      %v683 = vpack.c.b16 %v573, %v568
      %v684 = vpack.c.b16 %v574, %v569
      %v685 = vpack.c.b16 %v575, %v570
      %v686 = vpack.c.b16 %v576, %v571
      %v687 = vpack.c.b16 %v582, %v577
      %v688 = vpack.c.b16 %v583, %v578
      %v689 = vpack.c.b16 %v584, %v579
      %v690 = vpack.c.b16 %v585, %v580
      %v691 = vpack.c.b16 %v586, %v581
      %v692 = vpack.c.b16 %v592, %v587
      %v693 = vpack.c.b16 %v593, %v588
      %v694 = vpack.c.b16 %v594, %v589
      %v695 = vpack.c.b16 %v595, %v590
      %v696 = vpack.c.b16 %v596, %v591
      %v697 = vpack.c.b16 %v602, %v597
      %v698 = vpack.c.b16 %v603, %v598
      %v699 = vpack.c.b16 %v604, %v599
      %v700 = vpack.c.b16 %v605, %v600
      %v701 = vpack.c.b16 %v606, %v601
      %v702 = vpack.c.b16 %v612, %v607
      %v703 = vpack.c.b16 %v613, %v608
      %v704 = vpack.c.b16 %v614, %v609
      %v705 = vpack.c.b16 %v615, %v610
      %v706 = vpack.c.b16 %v616, %v611
      %v707 = vpack.c.b16 %v622, %v617
      %v708 = vpack.c.b16 %v623, %v618
      %v709 = vpack.c.b16 %v624, %v619
      %v710 = vpack.c.b16 %v625, %v620
      %v711 = vpack.c.b16 %v626, %v621
      %v712 = vpack.c.b16 %v632, %v627
      %v713 = vpack.c.b16 %v633, %v628
      %v714 = vpack.c.b16 %v634, %v629
      %v715 = vpack.c.b16 %v635, %v630
      %v716 = vpack.c.b16 %v636, %v631
      %v877 = vunpack.c.l.b16 %v301
      %v878 = vunpack.c.l.b16 %v302
      %v879 = vunpack.c.l.b16 %v303
      %v880 = vunpack.c.l.b16 %v304
      %v881 = vunpack.c.l.b16 %v305
      %v882 = vunpack.c.l.b16 %v306
      %v883 = vunpack.c.l.b16 %v307
      %v884 = vunpack.c.l.b16 %v308
      %v885 = vunpack.c.l.b16 %v309
      %v886 = vunpack.c.l.b16 %v310
      %v887 = vunpack.c.l.b16 %v311
      %v888 = vunpack.c.l.b16 %v312
      %v889 = vunpack.c.l.b16 %v313
      %v890 = vunpack.c.l.b16 %v314
      %v891 = vunpack.c.l.b16 %v315
      %v892 = vunpack.c.l.b16 %v316
      %v893 = vunpack.c.l.b16 %v317
      %v894 = vunpack.c.l.b16 %v318
      %v895 = vunpack.c.l.b16 %v319
      %v896 = vunpack.c.l.b16 %v320
      %v897 = vunpack.c.l.b16 %v321
      %v898 = vunpack.c.l.b16 %v322
      %v899 = vunpack.c.l.b16 %v323
      %v900 = vunpack.c.l.b16 %v324
      %v901 = vunpack.c.l.b16 %v325
      %v902 = vunpack.c.l.b16 %v326
      %v903 = vunpack.c.l.b16 %v327
      %v904 = vunpack.c.l.b16 %v328
      %v905 = vunpack.c.l.b16 %v329
      %v906 = vunpack.c.l.b16 %v330
      %v907 = vunpack.c.l.b16 %v331
      %v908 = vunpack.c.l.b16 %v332
      %v909 = vunpack.c.l.b16 %v333
      %v910 = vunpack.c.l.b16 %v334
      %v911 = vunpack.c.l.b16 %v335
      %v912 = vunpack.c.l.b16 %v336
      %v913 = vunpack.c.l.b16 %v337
      %v914 = vunpack.c.l.b16 %v338
      %v915 = vunpack.c.l.b16 %v339
      %v916 = vunpack.c.l.b16 %v340
      %v917 = vunpack.c.l.b16 %v341
      %v918 = vunpack.c.l.b16 %v342
      %v919 = vunpack.c.l.b16 %v343
      %v920 = vunpack.c.l.b16 %v344
      %v921 = vunpack.c.l.b16 %v345
      %v922 = vunpack.c.l.b16 %v346
      %v923 = vunpack.c.l.b16 %v347
      %v924 = vunpack.c.l.b16 %v348
      %v925 = vunpack.c.l.b16 %v349
      %v926 = vunpack.c.l.b16 %v350
      %v927 = vunpack.c.l.b16 %v351
      %v928 = vunpack.c.l.b16 %v352
      %v929 = vunpack.c.l.b16 %v353
      %v930 = vunpack.c.l.b16 %v354
      %v931 = vunpack.c.l.b16 %v355
      %v932 = vunpack.c.l.b16 %v356
      %v933 = vunpack.c.l.b16 %v357
      %v934 = vunpack.c.l.b16 %v358
      %v935 = vunpack.c.l.b16 %v359
      %v936 = vunpack.c.l.b16 %v360
      %v937 = vunpack.c.l.b16 %v361
      %v938 = vunpack.c.l.b16 %v362
      %v939 = vunpack.c.l.b16 %v363
      %v940 = vunpack.c.l.b16 %v364
      %v941 = vunpack.c.l.b16 %v365
      %v942 = vunpack.c.l.b16 %v366
      %v943 = vunpack.c.l.b16 %v367
      %v944 = vunpack.c.l.b16 %v368
      %v945 = vunpack.c.l.b16 %v369
      %v946 = vunpack.c.l.b16 %v370
      %v947 = vunpack.c.l.b16 %v371
      %v948 = vunpack.c.l.b16 %v372
      %v949 = vunpack.c.l.b16 %v373
      %v950 = vunpack.c.l.b16 %v374
      %v951 = vunpack.c.l.b16 %v375
      %v952 = vunpack.c.l.b16 %v376
      %v953 = vunpack.c.l.b16 %v377
      %v954 = vunpack.c.l.b16 %v378
      %v955 = vunpack.c.l.b16 %v379
      %v956 = vunpack.c.l.b16 %v380
      %v957 = vpack.c.b16 %v878, %v877
      %v958 = vpack.c.b16 %v880, %v879
      %v959 = vpack.c.b16 %v882, %v881
      %v960 = vpack.c.b16 %v884, %v883
      %v961 = vpack.c.b16 %v886, %v885
      %v962 = vpack.c.b16 %v888, %v887
      %v963 = vpack.c.b16 %v890, %v889
      %v964 = vpack.c.b16 %v892, %v891
      %v965 = vpack.c.b16 %v894, %v893
      %v966 = vpack.c.b16 %v896, %v895
      %v967 = vpack.c.b16 %v898, %v897
      %v968 = vpack.c.b16 %v900, %v899
      %v969 = vpack.c.b16 %v902, %v901
      %v970 = vpack.c.b16 %v904, %v903
      %v971 = vpack.c.b16 %v906, %v905
      %v972 = vpack.c.b16 %v908, %v907
      %v973 = vpack.c.b16 %v910, %v909
      %v974 = vpack.c.b16 %v912, %v911
      %v975 = vpack.c.b16 %v914, %v913
      %v976 = vpack.c.b16 %v916, %v915
      %v977 = vpack.c.b16 %v918, %v917
      %v978 = vpack.c.b16 %v920, %v919
      %v979 = vpack.c.b16 %v922, %v921
      %v980 = vpack.c.b16 %v924, %v923
      %v981 = vpack.c.b16 %v926, %v925
      %v982 = vpack.c.b16 %v928, %v927
      %v983 = vpack.c.b16 %v930, %v929
      %v984 = vpack.c.b16 %v932, %v931
      %v985 = vpack.c.b16 %v934, %v933
      %v986 = vpack.c.b16 %v936, %v935
      %v987 = vpack.c.b16 %v938, %v937
      %v988 = vpack.c.b16 %v940, %v939
      %v989 = vpack.c.b16 %v942, %v941
      %v990 = vpack.c.b16 %v944, %v943
      %v991 = vpack.c.b16 %v946, %v945
      %v992 = vpack.c.b16 %v948, %v947
      %v993 = vpack.c.b16 %v950, %v949
      %v994 = vpack.c.b16 %v952, %v951
      %v995 = vpack.c.b16 %v954, %v953
      %v996 = vpack.c.b16 %v956, %v955
      %1037 = vmatprep.subr.bf16.mxu0 0
      %1038 = vmatpush1.bf16.msra.mxu0 %v964
      %1039 = vmatprep.subr.bf16.mxu0 0
      %1040 = vmatpush1.bf16.msra.mxu0 %v963
      %1041 = vmatprep.subr.bf16.mxu0 0
      %1042 = vmatpush1.bf16.msra.mxu0 %v962
      %1043 = vmatprep.subr.bf16.mxu0 0
      %1044 = vmatpush1.bf16.msra.mxu0 %v961
      %1045 = vmatprep.subr.bf16.mxu0 0
      %1046 = vmatpush1.bf16.msra.mxu0 %v960
      %1047 = vmatprep.subr.bf16.mxu0 0
      %1048 = vmatpush1.bf16.msra.mxu0 %v959
      %1049 = vmatprep.subr.bf16.mxu0 0
      %1050 = vmatpush1.bf16.msra.mxu0 %v958
      %1051 = vmatprep.subr.bf16.mxu0 0
      %1052 = vmatpush1.bf16.msra.mxu0 %v957
      %1053 = vmatprep.subr.bf16.mxu0 0
      %1054 = vmatpush2.bf16.msra.mxu0 %v972
      %1055 = vmatprep.subr.bf16.mxu0 0
      %1056 = vmatpush2.bf16.msra.mxu0 %v971
      %1057 = vmatprep.subr.bf16.mxu0 0
      %1058 = vmatpush2.bf16.msra.mxu0 %v970
      %1059 = vmatprep.subr.bf16.mxu0 0
      %1060 = vmatpush2.bf16.msra.mxu0 %v969
      %1061 = vmatprep.subr.bf16.mxu0 0
      %1062 = vmatpush2.bf16.msra.mxu0 %v968
      %1063 = vmatprep.subr.bf16.mxu0 0
      %1064 = vmatpush2.bf16.msra.mxu0 %v967
      %1065 = vmatprep.subr.bf16.mxu0 0
      %1066 = vmatpush2.bf16.msra.mxu0 %v966
      %1067 = vmatprep.subr.bf16.mxu0 0
      %1068 = vmatpush2.bf16.msra.mxu0 %v965
      %1069 = vmatprep.mubr.bf16.mxu0 %v638
      %1070 = vmatmul.mubr.bf16.gmra.mxu0 %v637
      %v1071 = vpop.f32.mrf.mxu0
      %v1072 = vadd.f32 0.0, %v1071
      %v1073 = vpop.f32.mrf.mxu0
      %v1074 = vpop.f32.mrf.mxu0
      %v1075 = vadd.f32 0.0, %v1074
      %v1076 = vpop.f32.mrf.mxu0
      %1077 = vmatprep.mubr.bf16.mxu0 %v643
      %1078 = vmatmul.mubr.bf16.gmra.mxu0 %v642
      %v1079 = vpop.f32.mrf.mxu0
      %v1080 = vadd.f32 0.0, %v1079
      %v1081 = vpop.f32.mrf.mxu0
      %v1082 = vpop.f32.mrf.mxu0
      %v1083 = vadd.f32 0.0, %v1082
      %v1084 = vpop.f32.mrf.mxu0
      %1085 = vmatprep.mubr.bf16.mxu0 %v648
      %1086 = vmatmul.mubr.bf16.gmra.mxu0 %v647
      %v1087 = vpop.f32.mrf.mxu0
      %v1088 = vadd.f32 0.0, %v1087
      %v1089 = vpop.f32.mrf.mxu0
      %v1090 = vpop.f32.mrf.mxu0
      %v1091 = vadd.f32 0.0, %v1090
      %v1092 = vpop.f32.mrf.mxu0
      %1093 = vmatprep.mubr.bf16.mxu0 %v653
      %1094 = vmatmul.mubr.bf16.gmra.mxu0 %v652
      %v1095 = vpop.f32.mrf.mxu0
      %v1096 = vadd.f32 0.0, %v1095
      %v1097 = vpop.f32.mrf.mxu0
      %v1098 = vpop.f32.mrf.mxu0
      %v1099 = vadd.f32 0.0, %v1098
      %v1100 = vpop.f32.mrf.mxu0
      %1101 = vmatprep.mubr.bf16.mxu0 %v658
      %1102 = vmatmul.mubr.bf16.gmra.mxu0 %v657
      %v1103 = vpop.f32.mrf.mxu0
      %v1104 = vadd.f32 0.0, %v1103
      %v1105 = vpop.f32.mrf.mxu0
      %v1106 = vpop.f32.mrf.mxu0
      %v1107 = vadd.f32 0.0, %v1106
      %v1108 = vpop.f32.mrf.mxu0
      %1109 = vmatprep.mubr.bf16.mxu0 %v663
      %1110 = vmatmul.mubr.bf16.gmra.mxu0 %v662
      %v1111 = vpop.f32.mrf.mxu0
      %v1112 = vadd.f32 0.0, %v1111
      %v1113 = vpop.f32.mrf.mxu0
      %v1114 = vpop.f32.mrf.mxu0
      %v1115 = vadd.f32 0.0, %v1114
      %v1116 = vpop.f32.mrf.mxu0
      %1117 = vmatprep.mubr.bf16.mxu0 %v668
      %1118 = vmatmul.mubr.bf16.gmra.mxu0 %v667
      %v1119 = vpop.f32.mrf.mxu0
      %v1120 = vadd.f32 0.0, %v1119
      %v1121 = vpop.f32.mrf.mxu0
      %v1122 = vpop.f32.mrf.mxu0
      %v1123 = vadd.f32 0.0, %v1122
      %v1124 = vpop.f32.mrf.mxu0
      %1125 = vmatprep.mubr.bf16.mxu0 %v673
      %1126 = vmatmul.mubr.bf16.gmra.mxu0 %v672
      %v1127 = vpop.f32.mrf.mxu0
      %v1128 = vadd.f32 0.0, %v1127
      %v1129 = vpop.f32.mrf.mxu0
      %v1130 = vpop.f32.mrf.mxu0
      %v1131 = vadd.f32 0.0, %v1130
      %v1132 = vpop.f32.mrf.mxu0
      %1133 = vmatprep.mubr.bf16.mxu0 %v678
      %1134 = vmatmul.mubr.bf16.gmra.mxu0 %v677
      %v1135 = vpop.f32.mrf.mxu0
      %v1136 = vadd.f32 0.0, %v1135
      %v1137 = vpop.f32.mrf.mxu0
      %v1138 = vpop.f32.mrf.mxu0
      %v1139 = vadd.f32 0.0, %v1138
      %v1140 = vpop.f32.mrf.mxu0
      %1141 = vmatprep.mubr.bf16.mxu0 %v683
      %1142 = vmatmul.mubr.bf16.gmra.mxu0 %v682
      %v1143 = vpop.f32.mrf.mxu0
      %v1144 = vadd.f32 0.0, %v1143
      %v1145 = vpop.f32.mrf.mxu0
      %v1146 = vpop.f32.mrf.mxu0
      %v1147 = vadd.f32 0.0, %v1146
      %v1148 = vpop.f32.mrf.mxu0
      %1149 = vmatprep.mubr.bf16.mxu0 %v688
      %1150 = vmatmul.mubr.bf16.gmra.mxu0 %v687
      %v1151 = vpop.f32.mrf.mxu0
      %v1152 = vadd.f32 0.0, %v1151
      %v1153 = vpop.f32.mrf.mxu0
      %v1154 = vpop.f32.mrf.mxu0
      %v1155 = vadd.f32 0.0, %v1154
      %v1156 = vpop.f32.mrf.mxu0
      %1157 = vmatprep.mubr.bf16.mxu0 %v693
      %1158 = vmatmul.mubr.bf16.gmra.mxu0 %v692
      %v1159 = vpop.f32.mrf.mxu0
      %v1160 = vadd.f32 0.0, %v1159
      %v1161 = vpop.f32.mrf.mxu0
      %v1162 = vpop.f32.mrf.mxu0
      %v1163 = vadd.f32 0.0, %v1162
      %v1164 = vpop.f32.mrf.mxu0
      %1165 = vmatprep.mubr.bf16.mxu0 %v698
      %1166 = vmatmul.mubr.bf16.gmra.mxu0 %v697
      %v1167 = vpop.f32.mrf.mxu0
      %v1168 = vadd.f32 0.0, %v1167
      %v1169 = vpop.f32.mrf.mxu0
      %v1170 = vpop.f32.mrf.mxu0
      %v1171 = vadd.f32 0.0, %v1170
      %v1172 = vpop.f32.mrf.mxu0
      %1173 = vmatprep.mubr.bf16.mxu0 %v703
      %1174 = vmatmul.mubr.bf16.gmra.mxu0 %v702
      %v1175 = vpop.f32.mrf.mxu0
      %v1176 = vadd.f32 0.0, %v1175
      %v1177 = vpop.f32.mrf.mxu0
      %v1178 = vpop.f32.mrf.mxu0
      %v1179 = vadd.f32 0.0, %v1178
      %v1180 = vpop.f32.mrf.mxu0
      %1181 = vmatprep.mubr.bf16.mxu0 %v708
      %1182 = vmatmul.mubr.bf16.gmra.mxu0 %v707
      %v1183 = vpop.f32.mrf.mxu0
      %v1184 = vadd.f32 0.0, %v1183
      %v1185 = vpop.f32.mrf.mxu0
      %v1186 = vpop.f32.mrf.mxu0
      %v1187 = vadd.f32 0.0, %v1186
      %v1188 = vpop.f32.mrf.mxu0
      %1189 = vmatprep.mubr.bf16.mxu0 %v713
      %1190 = vmatmul.mubr.bf16.gmra.mxu0 %v712
      %v1191 = vpop.f32.mrf.mxu0
      %v1192 = vadd.f32 0.0, %v1191
      %v1193 = vpop.f32.mrf.mxu0
      %v1194 = vpop.f32.mrf.mxu0
      %v1195 = vadd.f32 0.0, %v1194
      %v1196 = vpop.f32.mrf.mxu0
      %1197 = vdwg.mxu0
      %1198 = vmatprep.subr.bf16.mxu0 0
      %1199 = vmatpush1.bf16.msra.mxu0 %v980
      %1200 = vmatprep.subr.bf16.mxu0 0
      %1201 = vmatpush1.bf16.msra.mxu0 %v979
      %1202 = vmatprep.subr.bf16.mxu0 0
      %1203 = vmatpush1.bf16.msra.mxu0 %v978
      %1204 = vmatprep.subr.bf16.mxu0 0
      %1205 = vmatpush1.bf16.msra.mxu0 %v977
      %1206 = vmatprep.subr.bf16.mxu0 0
      %1207 = vmatpush1.bf16.msra.mxu0 %v976
      %1208 = vmatprep.subr.bf16.mxu0 0
      %1209 = vmatpush1.bf16.msra.mxu0 %v975
      %1210 = vmatprep.subr.bf16.mxu0 0
      %1211 = vmatpush1.bf16.msra.mxu0 %v974
      %1212 = vmatprep.subr.bf16.mxu0 0
      %1213 = vmatpush1.bf16.msra.mxu0 %v973
      %1214 = vmatprep.subr.bf16.mxu0 0
      %1215 = vmatpush2.bf16.msra.mxu0 %v988
      %1216 = vmatprep.subr.bf16.mxu0 0
      %1217 = vmatpush2.bf16.msra.mxu0 %v987
      %1218 = vmatprep.subr.bf16.mxu0 0
      %1219 = vmatpush2.bf16.msra.mxu0 %v986
      %1220 = vmatprep.subr.bf16.mxu0 0
      %1221 = vmatpush2.bf16.msra.mxu0 %v985
      %1222 = vmatprep.subr.bf16.mxu0 0
      %1223 = vmatpush2.bf16.msra.mxu0 %v984
      %1224 = vmatprep.subr.bf16.mxu0 0
      %1225 = vmatpush2.bf16.msra.mxu0 %v983
      %1226 = vmatprep.subr.bf16.mxu0 0
      %1227 = vmatpush2.bf16.msra.mxu0 %v982
      %1228 = vmatprep.subr.bf16.mxu0 0
      %1229 = vmatpush2.bf16.msra.mxu0 %v981
      %1230 = vmatprep.mubr.bf16.mxu0 %v640
      %1231 = vmatmul.mubr.bf16.gmra.mxu0 %v639
      %v1232 = vpop.f32.mrf.mxu0
      %v1233 = vadd.f32 %v1072, %v1232
      %v1234 = vpop.f32.mrf.mxu0
      %v1235 = vpop.f32.mrf.mxu0
      %v1236 = vadd.f32 %v1075, %v1235
      %v1237 = vpop.f32.mrf.mxu0
      %1238 = vmatprep.mubr.bf16.mxu0 %v645
      %1239 = vmatmul.mubr.bf16.gmra.mxu0 %v644
      %v1240 = vpop.f32.mrf.mxu0
      %v1241 = vadd.f32 %v1080, %v1240
      %v1242 = vpop.f32.mrf.mxu0
      %v1243 = vpop.f32.mrf.mxu0
      %v1244 = vadd.f32 %v1083, %v1243
      %v1245 = vpop.f32.mrf.mxu0
      %1246 = vmatprep.mubr.bf16.mxu0 %v650
      %1247 = vmatmul.mubr.bf16.gmra.mxu0 %v649
      %v1248 = vpop.f32.mrf.mxu0
      %v1249 = vadd.f32 %v1088, %v1248
      %v1250 = vpop.f32.mrf.mxu0
      %v1251 = vpop.f32.mrf.mxu0
      %v1252 = vadd.f32 %v1091, %v1251
      %v1253 = vpop.f32.mrf.mxu0
      %1254 = vmatprep.mubr.bf16.mxu0 %v655
      %1255 = vmatmul.mubr.bf16.gmra.mxu0 %v654
      %v1256 = vpop.f32.mrf.mxu0
      %v1257 = vadd.f32 %v1096, %v1256
      %v1258 = vpop.f32.mrf.mxu0
      %v1259 = vpop.f32.mrf.mxu0
      %v1260 = vadd.f32 %v1099, %v1259
      %v1261 = vpop.f32.mrf.mxu0
      %1262 = vmatprep.mubr.bf16.mxu0 %v660
      %1263 = vmatmul.mubr.bf16.gmra.mxu0 %v659
      %v1264 = vpop.f32.mrf.mxu0
      %v1265 = vadd.f32 %v1104, %v1264
      %v1266 = vpop.f32.mrf.mxu0
      %v1267 = vpop.f32.mrf.mxu0
      %v1268 = vadd.f32 %v1107, %v1267
      %v1269 = vpop.f32.mrf.mxu0
      %1270 = vmatprep.mubr.bf16.mxu0 %v665
      %1271 = vmatmul.mubr.bf16.gmra.mxu0 %v664
      %v1272 = vpop.f32.mrf.mxu0
      %v1273 = vadd.f32 %v1112, %v1272
      %v1274 = vpop.f32.mrf.mxu0
      %v1275 = vpop.f32.mrf.mxu0
      %v1276 = vadd.f32 %v1115, %v1275
      %v1277 = vpop.f32.mrf.mxu0
      %1278 = vmatprep.mubr.bf16.mxu0 %v670
      %1279 = vmatmul.mubr.bf16.gmra.mxu0 %v669
      %v1280 = vpop.f32.mrf.mxu0
      %v1281 = vadd.f32 %v1120, %v1280
      %v1282 = vpop.f32.mrf.mxu0
      %v1283 = vpop.f32.mrf.mxu0
      %v1284 = vadd.f32 %v1123, %v1283
      %v1285 = vpop.f32.mrf.mxu0
      %1286 = vmatprep.mubr.bf16.mxu0 %v675
      %1287 = vmatmul.mubr.bf16.gmra.mxu0 %v674
      %v1288 = vpop.f32.mrf.mxu0
      %v1289 = vadd.f32 %v1128, %v1288
      %v1290 = vpop.f32.mrf.mxu0
      %v1291 = vpop.f32.mrf.mxu0
      %v1292 = vadd.f32 %v1131, %v1291
      %v1293 = vpop.f32.mrf.mxu0
      %1294 = vmatprep.mubr.bf16.mxu0 %v680
      %1295 = vmatmul.mubr.bf16.gmra.mxu0 %v679
      %v1296 = vpop.f32.mrf.mxu0
      %v1297 = vadd.f32 %v1136, %v1296
      %v1298 = vpop.f32.mrf.mxu0
      %v1299 = vpop.f32.mrf.mxu0
      %v1300 = vadd.f32 %v1139, %v1299
      %v1301 = vpop.f32.mrf.mxu0
      %1302 = vmatprep.mubr.bf16.mxu0 %v685
      %1303 = vmatmul.mubr.bf16.gmra.mxu0 %v684
      %v1304 = vpop.f32.mrf.mxu0
      %v1305 = vadd.f32 %v1144, %v1304
      %v1306 = vpop.f32.mrf.mxu0
      %v1307 = vpop.f32.mrf.mxu0
      %v1308 = vadd.f32 %v1147, %v1307
      %v1309 = vpop.f32.mrf.mxu0
      %1310 = vmatprep.mubr.bf16.mxu0 %v690
      %1311 = vmatmul.mubr.bf16.gmra.mxu0 %v689
      %v1312 = vpop.f32.mrf.mxu0
      %v1313 = vadd.f32 %v1152, %v1312
      %v1314 = vpop.f32.mrf.mxu0
      %v1315 = vpop.f32.mrf.mxu0
      %v1316 = vadd.f32 %v1155, %v1315
      %v1317 = vpop.f32.mrf.mxu0
      %1318 = vmatprep.mubr.bf16.mxu0 %v695
      %1319 = vmatmul.mubr.bf16.gmra.mxu0 %v694
      %v1320 = vpop.f32.mrf.mxu0
      %v1321 = vadd.f32 %v1160, %v1320
      %v1322 = vpop.f32.mrf.mxu0
      %v1323 = vpop.f32.mrf.mxu0
      %v1324 = vadd.f32 %v1163, %v1323
      %v1325 = vpop.f32.mrf.mxu0
      %1326 = vmatprep.mubr.bf16.mxu0 %v700
      %1327 = vmatmul.mubr.bf16.gmra.mxu0 %v699
      %v1328 = vpop.f32.mrf.mxu0
      %v1329 = vadd.f32 %v1168, %v1328
      %v1330 = vpop.f32.mrf.mxu0
      %v1331 = vpop.f32.mrf.mxu0
      %v1332 = vadd.f32 %v1171, %v1331
      %v1333 = vpop.f32.mrf.mxu0
      %1334 = vmatprep.mubr.bf16.mxu0 %v705
      %1335 = vmatmul.mubr.bf16.gmra.mxu0 %v704
      %v1336 = vpop.f32.mrf.mxu0
      %v1337 = vadd.f32 %v1176, %v1336
      %v1338 = vpop.f32.mrf.mxu0
      %v1339 = vpop.f32.mrf.mxu0
      %v1340 = vadd.f32 %v1179, %v1339
      %v1341 = vpop.f32.mrf.mxu0
      %1342 = vmatprep.mubr.bf16.mxu0 %v710
      %1343 = vmatmul.mubr.bf16.gmra.mxu0 %v709
      %v1344 = vpop.f32.mrf.mxu0
      %v1345 = vadd.f32 %v1184, %v1344
      %v1346 = vpop.f32.mrf.mxu0
      %v1347 = vpop.f32.mrf.mxu0
      %v1348 = vadd.f32 %v1187, %v1347
      %v1349 = vpop.f32.mrf.mxu0
      %1350 = vmatprep.mubr.bf16.mxu0 %v715
      %1351 = vmatmul.mubr.bf16.gmra.mxu0 %v714
      %v1352 = vpop.f32.mrf.mxu0
      %v1353 = vadd.f32 %v1192, %v1352
      %v1354 = vpop.f32.mrf.mxu0
      %v1355 = vpop.f32.mrf.mxu0
      %v1356 = vadd.f32 %v1195, %v1355
      %v1357 = vpop.f32.mrf.mxu0
      %1358 = vdwg.mxu0
      %1359 = vmatprep.subr.bf16.mxu0 0
      %1360 = vmatpush1.bf16.msra.mxu0 %v996
      %1361 = vmatprep.subr.bf16.mxu0 0
      %1362 = vmatpush1.bf16.msra.mxu0 %v995
      %1363 = vmatprep.subr.bf16.mxu0 0
      %1364 = vmatpush1.bf16.msra.mxu0 %v994
      %1365 = vmatprep.subr.bf16.mxu0 0
      %1366 = vmatpush1.bf16.msra.mxu0 %v993
      %1367 = vmatprep.subr.bf16.mxu0 0
      %1368 = vmatpush1.bf16.msra.mxu0 %v992
      %1369 = vmatprep.subr.bf16.mxu0 0
      %1370 = vmatpush1.bf16.msra.mxu0 %v991
      %1371 = vmatprep.subr.bf16.mxu0 0
      %1372 = vmatpush1.bf16.msra.mxu0 %v990
      %1373 = vmatprep.subr.bf16.mxu0 0
      %1374 = vmatpush1.bf16.msra.mxu0 %v989
      %1375 = vmatprep.subr.bf16.mxu0 0
      %1376 = vmatpush2.bf16.msra.mxu0 0
      %1377 = vmatprep.subr.bf16.mxu0 0
      %1378 = vmatpush2.bf16.msra.mxu0 0
      %1379 = vmatprep.subr.bf16.mxu0 0
      %1380 = vmatpush2.bf16.msra.mxu0 0
      %1381 = vmatprep.subr.bf16.mxu0 0
      %1382 = vmatpush2.bf16.msra.mxu0 0
      %1383 = vmatprep.subr.bf16.mxu0 0
      %1384 = vmatpush2.bf16.msra.mxu0 0
      %1385 = vmatprep.subr.bf16.mxu0 0
      %1386 = vmatpush2.bf16.msra.mxu0 0
      %1387 = vmatprep.subr.bf16.mxu0 0
      %1388 = vmatpush2.bf16.msra.mxu0 0
      %1389 = vmatprep.subr.bf16.mxu0 0
      %1390 = vmatpush2.bf16.msra.mxu0 0
      %1391 = vmatprep.mubr.bf16.mxu0 0
      %1392 = vmatmul.mubr.bf16.gmra.mxu0 %v641
      %v1393 = vpop.f32.mrf.mxu0
      %v1394 = vadd.f32 %v1233, %v1393
      %v1395 = vpop.f32.mrf.mxu0
      %v1396 = vpop.f32.mrf.mxu0
      %v1397 = vadd.f32 %v1236, %v1396
      %v1398 = vpop.f32.mrf.mxu0
      %1399 = vmatprep.mubr.bf16.mxu0 0
      %1400 = vmatmul.mubr.bf16.gmra.mxu0 %v646
      %v1401 = vpop.f32.mrf.mxu0
      %v1402 = vadd.f32 %v1241, %v1401
      %v1403 = vpop.f32.mrf.mxu0
      %v1404 = vpop.f32.mrf.mxu0
      %v1405 = vadd.f32 %v1244, %v1404
      %v1406 = vpop.f32.mrf.mxu0
      %1407 = vmatprep.mubr.bf16.mxu0 0
      %1408 = vmatmul.mubr.bf16.gmra.mxu0 %v651
      %v1409 = vpop.f32.mrf.mxu0
      %v1410 = vadd.f32 %v1249, %v1409
      %v1411 = vpop.f32.mrf.mxu0
      %v1412 = vpop.f32.mrf.mxu0
      %v1413 = vadd.f32 %v1252, %v1412
      %v1414 = vpop.f32.mrf.mxu0
      %1415 = vmatprep.mubr.bf16.mxu0 0
      %1416 = vmatmul.mubr.bf16.gmra.mxu0 %v656
      %v1417 = vpop.f32.mrf.mxu0
      %v1418 = vadd.f32 %v1257, %v1417
      %v1419 = vpop.f32.mrf.mxu0
      %v1420 = vpop.f32.mrf.mxu0
      %v1421 = vadd.f32 %v1260, %v1420
      %v1422 = vpop.f32.mrf.mxu0
      %1423 = vmatprep.mubr.bf16.mxu0 0
      %1424 = vmatmul.mubr.bf16.gmra.mxu0 %v661
      %v1425 = vpop.f32.mrf.mxu0
      %v1426 = vadd.f32 %v1265, %v1425
      %v1427 = vpop.f32.mrf.mxu0
      %v1428 = vpop.f32.mrf.mxu0
      %v1429 = vadd.f32 %v1268, %v1428
      %v1430 = vpop.f32.mrf.mxu0
      %1431 = vmatprep.mubr.bf16.mxu0 0
      %1432 = vmatmul.mubr.bf16.gmra.mxu0 %v666
      %v1433 = vpop.f32.mrf.mxu0
      %v1434 = vadd.f32 %v1273, %v1433
      %v1435 = vpop.f32.mrf.mxu0
      %v1436 = vpop.f32.mrf.mxu0
      %v1437 = vadd.f32 %v1276, %v1436
      %v1438 = vpop.f32.mrf.mxu0
      %1439 = vmatprep.mubr.bf16.mxu0 0
      %1440 = vmatmul.mubr.bf16.gmra.mxu0 %v671
      %v1441 = vpop.f32.mrf.mxu0
      %v1442 = vadd.f32 %v1281, %v1441
      %v1443 = vpop.f32.mrf.mxu0
      %v1444 = vpop.f32.mrf.mxu0
      %v1445 = vadd.f32 %v1284, %v1444
      %v1446 = vpop.f32.mrf.mxu0
      %1447 = vmatprep.mubr.bf16.mxu0 0
      %1448 = vmatmul.mubr.bf16.gmra.mxu0 %v676
      %v1449 = vpop.f32.mrf.mxu0
      %v1450 = vadd.f32 %v1289, %v1449
      %v1451 = vpop.f32.mrf.mxu0
      %v1452 = vpop.f32.mrf.mxu0
      %v1453 = vadd.f32 %v1292, %v1452
      %v1454 = vpop.f32.mrf.mxu0
      %1455 = vmatprep.mubr.bf16.mxu0 0
      %1456 = vmatmul.mubr.bf16.gmra.mxu0 %v681
      %v1457 = vpop.f32.mrf.mxu0
      %v1458 = vadd.f32 %v1297, %v1457
      %v1459 = vpop.f32.mrf.mxu0
      %v1460 = vpop.f32.mrf.mxu0
      %v1461 = vadd.f32 %v1300, %v1460
      %v1462 = vpop.f32.mrf.mxu0
      %1463 = vmatprep.mubr.bf16.mxu0 0
      %1464 = vmatmul.mubr.bf16.gmra.mxu0 %v686
      %v1465 = vpop.f32.mrf.mxu0
      %v1466 = vadd.f32 %v1305, %v1465
      %v1467 = vpop.f32.mrf.mxu0
      %v1468 = vpop.f32.mrf.mxu0
      %v1469 = vadd.f32 %v1308, %v1468
      %v1470 = vpop.f32.mrf.mxu0
      %1471 = vmatprep.mubr.bf16.mxu0 0
      %1472 = vmatmul.mubr.bf16.gmra.mxu0 %v691
      %v1473 = vpop.f32.mrf.mxu0
      %v1474 = vadd.f32 %v1313, %v1473
      %v1475 = vpop.f32.mrf.mxu0
      %v1476 = vpop.f32.mrf.mxu0
      %v1477 = vadd.f32 %v1316, %v1476
      %v1478 = vpop.f32.mrf.mxu0
      %1479 = vmatprep.mubr.bf16.mxu0 0
      %1480 = vmatmul.mubr.bf16.gmra.mxu0 %v696
      %v1481 = vpop.f32.mrf.mxu0
      %v1482 = vadd.f32 %v1321, %v1481
      %v1483 = vpop.f32.mrf.mxu0
      %v1484 = vpop.f32.mrf.mxu0
      %v1485 = vadd.f32 %v1324, %v1484
      %v1486 = vpop.f32.mrf.mxu0
      %1487 = vmatprep.mubr.bf16.mxu0 0
      %1488 = vmatmul.mubr.bf16.gmra.mxu0 %v701
      %v1489 = vpop.f32.mrf.mxu0
      %v1490 = vadd.f32 %v1329, %v1489
      %v1491 = vpop.f32.mrf.mxu0
      %v1492 = vpop.f32.mrf.mxu0
      %v1493 = vadd.f32 %v1332, %v1492
      %v1494 = vpop.f32.mrf.mxu0
      %1495 = vmatprep.mubr.bf16.mxu0 0
      %1496 = vmatmul.mubr.bf16.gmra.mxu0 %v706
      %v1497 = vpop.f32.mrf.mxu0
      %v1498 = vadd.f32 %v1337, %v1497
      %v1499 = vpop.f32.mrf.mxu0
      %v1500 = vpop.f32.mrf.mxu0
      %v1501 = vadd.f32 %v1340, %v1500
      %v1502 = vpop.f32.mrf.mxu0
      %1503 = vmatprep.mubr.bf16.mxu0 0
      %1504 = vmatmul.mubr.bf16.gmra.mxu0 %v711
      %v1505 = vpop.f32.mrf.mxu0
      %v1506 = vadd.f32 %v1345, %v1505
      %v1507 = vpop.f32.mrf.mxu0
      %v1508 = vpop.f32.mrf.mxu0
      %v1509 = vadd.f32 %v1348, %v1508
      %v1510 = vpop.f32.mrf.mxu0
      %1511 = vmatprep.mubr.bf16.mxu0 0
      %1512 = vmatmul.mubr.bf16.gmra.mxu0 %v716
      %v1513 = vpop.f32.mrf.mxu0
      %v1514 = vadd.f32 %v1353, %v1513
      %v1515 = vpop.f32.mrf.mxu0
      %v1516 = vpop.f32.mrf.mxu0
      %v1517 = vadd.f32 %v1356, %v1516
      %v1518 = vpop.f32.mrf.mxu0
      %1519 = vdwg.mxu0
      %v1520 = vld [vmem:[%s3] sm:$0x1]
      %v1522 = vlaneseq
      %v1523 = vshrl.u32 %v1522, 7
      %v1524 = vsub.s32 0, %v1523
      %v1525 = vrot.slane %v1520, %v1524
      %v1527 = vmul.f32 %v1394, %v1525
      %v1528 = vmul.f32 %v1397, %v1525
      %v1529 = vmul.f32 %v1402, %v1525
      %v1530 = vmul.f32 %v1405, %v1525
      %v1531 = vmul.f32 %v1410, %v1525
      %v1532 = vmul.f32 %v1413, %v1525
      %v1533 = vmul.f32 %v1418, %v1525
      %v1534 = vmul.f32 %v1421, %v1525
      %v1535 = vmul.f32 %v1426, %v1525
      %v1536 = vmul.f32 %v1429, %v1525
      %v1537 = vmul.f32 %v1434, %v1525
      %v1538 = vmul.f32 %v1437, %v1525
      %v1539 = vmul.f32 %v1442, %v1525
      %v1540 = vmul.f32 %v1445, %v1525
      %v1541 = vmul.f32 %v1450, %v1525
      %v1542 = vmul.f32 %v1453, %v1525
      %v1543 = vmul.f32 %v1458, %v1525
      %v1544 = vmul.f32 %v1461, %v1525
      %v1545 = vmul.f32 %v1466, %v1525
      %v1546 = vmul.f32 %v1469, %v1525
      %v1547 = vmul.f32 %v1474, %v1525
      %v1548 = vmul.f32 %v1477, %v1525
      %v1549 = vmul.f32 %v1482, %v1525
      %v1550 = vmul.f32 %v1485, %v1525
      %v1551 = vmul.f32 %v1490, %v1525
      %v1552 = vmul.f32 %v1493, %v1525
      %v1553 = vmul.f32 %v1498, %v1525
      %v1554 = vmul.f32 %v1501, %v1525
      %v1555 = vmul.f32 %v1506, %v1525
      %v1556 = vmul.f32 %v1509, %v1525
      %v1557 = vmul.f32 %v1514, %v1525
      %v1558 = vmul.f32 %v1517, %v1525
      %v1559 = vld [vmem:[%s2] sm:$0x1]
      %v1561 = vlaneseq
      %v1562 = vshrl.u32 %v1561, 7
      %v1563 = vsub.s32 0, %v1562
      %v1564 = vrot.slane %v1559, %v1563
      %v1566 = vadd.f32 %v1527, %v1564
      %v1567 = vadd.f32 %v1528, %v1564
      %v1568 = vadd.f32 %v1529, %v1564
      %v1569 = vadd.f32 %v1530, %v1564
      %v1570 = vadd.f32 %v1531, %v1564
      %v1571 = vadd.f32 %v1532, %v1564
      %v1572 = vadd.f32 %v1533, %v1564
      %v1573 = vadd.f32 %v1534, %v1564
      %v1574 = vadd.f32 %v1535, %v1564
      %v1575 = vadd.f32 %v1536, %v1564
      %v1576 = vadd.f32 %v1537, %v1564
      %v1577 = vadd.f32 %v1538, %v1564
      %v1578 = vadd.f32 %v1539, %v1564
      %v1579 = vadd.f32 %v1540, %v1564
      %v1580 = vadd.f32 %v1541, %v1564
      %v1581 = vadd.f32 %v1542, %v1564
      %v1582 = vadd.f32 %v1543, %v1564
      %v1583 = vadd.f32 %v1544, %v1564
      %v1584 = vadd.f32 %v1545, %v1564
      %v1585 = vadd.f32 %v1546, %v1564
      %v1586 = vadd.f32 %v1547, %v1564
      %v1587 = vadd.f32 %v1548, %v1564
      %v1588 = vadd.f32 %v1549, %v1564
      %v1589 = vadd.f32 %v1550, %v1564
      %v1590 = vadd.f32 %v1551, %v1564
      %v1591 = vadd.f32 %v1552, %v1564
      %v1592 = vadd.f32 %v1553, %v1564
      %v1593 = vadd.f32 %v1554, %v1564
      %v1594 = vadd.f32 %v1555, %v1564
      %v1595 = vadd.f32 %v1556, %v1564
      %v1596 = vadd.f32 %v1557, %v1564
      %v1597 = vadd.f32 %v1558, %v1564
      %v1598 = vmax.f32 %v1566, 0.0
      %v1599 = vmax.f32 %v1567, 0.0
      %v1600 = vmax.f32 %v1568, 0.0
      %v1601 = vmax.f32 %v1569, 0.0
      %v1602 = vmax.f32 %v1570, 0.0
      %v1603 = vmax.f32 %v1571, 0.0
      %v1604 = vmax.f32 %v1572, 0.0
      %v1605 = vmax.f32 %v1573, 0.0
      %v1606 = vmax.f32 %v1574, 0.0
      %v1607 = vmax.f32 %v1575, 0.0
      %v1608 = vmax.f32 %v1576, 0.0
      %v1609 = vmax.f32 %v1577, 0.0
      %v1610 = vmax.f32 %v1578, 0.0
      %v1611 = vmax.f32 %v1579, 0.0
      %v1612 = vmax.f32 %v1580, 0.0
      %v1613 = vmax.f32 %v1581, 0.0
      %v1614 = vmax.f32 %v1582, 0.0
      %v1615 = vmax.f32 %v1583, 0.0
      %v1616 = vmax.f32 %v1584, 0.0
      %v1617 = vmax.f32 %v1585, 0.0
      %v1618 = vmax.f32 %v1586, 0.0
      %v1619 = vmax.f32 %v1587, 0.0
      %v1620 = vmax.f32 %v1588, 0.0
      %v1621 = vmax.f32 %v1589, 0.0
      %v1622 = vmax.f32 %v1590, 0.0
      %v1623 = vmax.f32 %v1591, 0.0
      %v1624 = vmax.f32 %v1592, 0.0
      %v1625 = vmax.f32 %v1593, 0.0
      %v1626 = vmax.f32 %v1594, 0.0
      %v1627 = vmax.f32 %v1595, 0.0
      %v1628 = vmax.f32 %v1596, 0.0
      %v1629 = vmax.f32 %v1597, 0.0
      %v1630 = vpack.c.bf16 %v1599, %v1598
      %v1631 = vpack.c.bf16 %v1601, %v1600
      %v1632 = vpack.c.bf16 %v1603, %v1602
      %v1633 = vpack.c.bf16 %v1605, %v1604
      %v1634 = vpack.c.bf16 %v1607, %v1606
      %v1635 = vpack.c.bf16 %v1609, %v1608
      %v1636 = vpack.c.bf16 %v1611, %v1610
      %v1637 = vpack.c.bf16 %v1613, %v1612
      %v1638 = vpack.c.bf16 %v1615, %v1614
      %v1639 = vpack.c.bf16 %v1617, %v1616
      %v1640 = vpack.c.bf16 %v1619, %v1618
      %v1641 = vpack.c.bf16 %v1621, %v1620
      %v1642 = vpack.c.bf16 %v1623, %v1622
      %v1643 = vpack.c.bf16 %v1625, %v1624
      %v1644 = vpack.c.bf16 %v1627, %v1626
      %v1645 = vpack.c.bf16 %v1629, %v1628
      %v1662 = vunpack.c.l.b16 %v1630
      %v1663 = vunpack.c.h.b16 %v1630
      %v1664 = vunpack.c.l.b16 %v1631
      %v1665 = vunpack.c.h.b16 %v1631
      %v1666 = vunpack.c.l.b16 %v1632
      %v1667 = vunpack.c.h.b16 %v1632
      %v1668 = vunpack.c.l.b16 %v1633
      %v1669 = vunpack.c.h.b16 %v1633
      %v1670 = vunpack.c.l.b16 %v1634
      %v1671 = vunpack.c.h.b16 %v1634
      %v1672 = vunpack.c.l.b16 %v1635
      %v1673 = vunpack.c.h.b16 %v1635
      %v1674 = vunpack.c.l.b16 %v1636
      %v1675 = vunpack.c.h.b16 %v1636
      %v1676 = vunpack.c.l.b16 %v1637
      %v1677 = vunpack.c.h.b16 %v1637
      %v1678 = vunpack.c.l.b16 %v1638
      %v1679 = vunpack.c.h.b16 %v1638
      %v1680 = vunpack.c.l.b16 %v1639
      %v1681 = vunpack.c.h.b16 %v1639
      %v1682 = vunpack.c.l.b16 %v1640
      %v1683 = vunpack.c.h.b16 %v1640
      %v1684 = vunpack.c.l.b16 %v1641
      %v1685 = vunpack.c.h.b16 %v1641
      %v1686 = vunpack.c.l.b16 %v1642
      %v1687 = vunpack.c.h.b16 %v1642
      %v1688 = vunpack.c.l.b16 %v1643
      %v1689 = vunpack.c.h.b16 %v1643
      %v1690 = vunpack.c.l.b16 %v1644
      %v1691 = vunpack.c.h.b16 %v1644
      %v1692 = vunpack.c.l.b16 %v1645
      %v1693 = vunpack.c.h.b16 %v1645
      %v1694 = vpack.c.b16 %v1662, %v1662
      %v1695 = vpack.c.b16 %v1663, %v1663
      %v1696 = vpack.c.b16 %v1664, %v1664
      %v1697 = vpack.c.b16 %v1665, %v1665
      %v1698 = vpack.c.b16 %v1666, %v1666
      %v1699 = vpack.c.b16 %v1667, %v1667
      %v1700 = vpack.c.b16 %v1668, %v1668
      %v1701 = vpack.c.b16 %v1669, %v1669
      %v1702 = vpack.c.b16 %v1670, %v1670
      %v1703 = vpack.c.b16 %v1671, %v1671
      %v1704 = vpack.c.b16 %v1672, %v1672
      %v1705 = vpack.c.b16 %v1673, %v1673
      %v1706 = vpack.c.b16 %v1674, %v1674
      %v1707 = vpack.c.b16 %v1675, %v1675
      %v1708 = vpack.c.b16 %v1676, %v1676
      %v1709 = vpack.c.b16 %v1677, %v1677
      %v1710 = vpack.c.b16 %v1678, %v1678
      %v1711 = vpack.c.b16 %v1679, %v1679
      %v1712 = vpack.c.b16 %v1680, %v1680
      %v1713 = vpack.c.b16 %v1681, %v1681
      %v1714 = vpack.c.b16 %v1682, %v1682
      %v1715 = vpack.c.b16 %v1683, %v1683
      %v1716 = vpack.c.b16 %v1684, %v1684
      %v1717 = vpack.c.b16 %v1685, %v1685
      %v1718 = vpack.c.b16 %v1686, %v1686
      %v1719 = vpack.c.b16 %v1687, %v1687
      %v1720 = vpack.c.b16 %v1688, %v1688
      %v1721 = vpack.c.b16 %v1689, %v1689
      %v1722 = vpack.c.b16 %v1690, %v1690
      %v1723 = vpack.c.b16 %v1691, %v1691
      %v1724 = vpack.c.b16 %v1692, %v1692
      %v1725 = vpack.c.b16 %v1693, %v1693
      %1758 = vst [vmem:[%s202] sm:$0xf] %v1694
      %1759 = vst [vmem:[%s202 + $0x4] sm:$0xf] %v1695
      %1760 = vst [vmem:[%s202 + $0x8] sm:$0xf] %v1696
      %1761 = vst [vmem:[%s202 + $0xc] sm:$0xf] %v1697
      %1762 = vst [vmem:[%s202 + $0x10] sm:$0xf] %v1698
      %1763 = vst [vmem:[%s202 + $0x14] sm:$0xf] %v1699
      %1764 = vst [vmem:[%s202 + $0x18] sm:$0xf] %v1700
      %1765 = vst [vmem:[%s202 + $0x1c] sm:$0xf] %v1701
      %1766 = vst [vmem:[%s202 + $0x20] sm:$0xf] %v1702
      %1767 = vst [vmem:[%s202 + $0x24] sm:$0xf] %v1703
      %1768 = vst [vmem:[%s202 + $0x28] sm:$0xf] %v1704
      %1769 = vst [vmem:[%s202 + $0x2c] sm:$0xf] %v1705
      %1770 = vst [vmem:[%s202 + $0x30] sm:$0xf] %v1706
      %1771 = vst [vmem:[%s202 + $0x34] sm:$0xf] %v1707
      %1772 = vst [vmem:[%s202 + $0x38] sm:$0xf] %v1708
      %1773 = vst [vmem:[%s202 + $0x3c] sm:$0xf] %v1709
      %1774 = vst [vmem:[%s202 + $0x40] sm:$0xf] %v1710
      %1775 = vst [vmem:[%s202 + $0x44] sm:$0xf] %v1711
      %1776 = vst [vmem:[%s202 + $0x48] sm:$0xf] %v1712
      %1777 = vst [vmem:[%s202 + $0x4c] sm:$0xf] %v1713
      %1778 = vst [vmem:[%s202 + $0x50] sm:$0xf] %v1714
      %1779 = vst [vmem:[%s202 + $0x54] sm:$0xf] %v1715
      %1780 = vst [vmem:[%s202 + $0x58] sm:$0xf] %v1716
      %1781 = vst [vmem:[%s202 + $0x5c] sm:$0xf] %v1717
      %1782 = vst [vmem:[%s202 + $0x60] sm:$0xf] %v1718
      %1783 = vst [vmem:[%s202 + $0x64] sm:$0xf] %v1719
      %1784 = vst [vmem:[%s202 + $0x68] sm:$0xf] %v1720
      %1785 = vst [vmem:[%s202 + $0x6c] sm:$0xf] %v1721
      %1786 = vst [vmem:[%s202 + $0x70] sm:$0xf] %v1722
      %1787 = vst [vmem:[%s202 + $0x74] sm:$0xf] %v1723
      %1788 = vst [vmem:[%s202 + $0x78] sm:$0xf] %v1724
      %1789 = vst [vmem:[%s202 + $0x7c] sm:$0xf] %v1725
      %s1790 = smul.u32 32, %s15
      %p1791 = scmp.lt.s32.totalorder %s1790, 63
      %s1792 = scalar_select %p1791, %s1790, 63
      %s1793 = smul.addr %s1792, 4
      %s1794 = scalar_lea.vmem %s4, %s1793
      // Predicated region
      $region37: #{forward.32} parent=35 // pred_check
        %p1795 = pneg %p122
      $region38: #{forward.32} parent=35 // pred_check_branch
        %1797 = sbr.rel (%p1795) target = $region40
      $region39: #{forward.32} parent=35 // pred_region
        %s1798 = smul.u32 32, %s15
      $region40: #{forward.32} parent=35 // pred_fallthru
        _
    $region36: #{forward.32} parent=5 // pred_fallthru
      _
    %p1799 = scmp.le.s32.totalorder 2, %s10
    // Predicated region
    $region41: #{forward.32} parent=5 // pred_check
      %p1800 = pneg %p1799
    $region42: #{forward.32} parent=5 // pred_check_branch
      %1802 = sbr.rel (%p1800) target = $region44
    $region43: #{forward.32} parent=5 // pred_region
      %s1803 = ssub.s32 %s10, 2
      // Predicated region
      $region45: #{forward.32} parent=43 // pred_check
        %p1804 = pneg %p128
      $region46: #{forward.32} parent=43 // pred_check_branch
        %1806 = sbr.rel (%p1804) target = $region48
      $region47: #{forward.32} parent=43 // pred_region
        %s1807 = smul.u32 32, %s16
        %p1808 = scmp.lt.s32.totalorder %s1807, 63
        %s1809 = scalar_select %p1808, %s1807, 63
        %s1810 = smul.addr %s1809, 4
        %s1811 = scalar_lea.vmem %s4, %s1810
      $region48: #{forward.32} parent=43 // pred_fallthru
        _
    $region44: #{forward.32} parent=5 // pred_fallthru
      _
  $region6: #{forward.32} parent=0 // loop_footer
    %s14 = sadd.s32 1, %s10
  $region7: #{forward.32} parent=0 // loop_footer_branch
    %9 = sbr.rel target = $region3
  $region8: #{forward.32} parent=0 // loop_exit
    _

// kernel: forward.33
$region0: #{forward.33}
  #allocation0 [shape = 'u32[]', space=smem, size = 0x4, offset = 0x4, fixed_abs, tag = 'smem constant byte address 0x4 - core index']
  #allocation1 [shape = 'u32[144,128]{1,0:T(1,128)}', space=vmem, size = 0x12000, scoped, tag = 'internal scratch']
  %s0 = inlined_call_operand.vmem [shape: bf16[512,384], index: 0, kind: input, shape index: {}]
  %s1 = inlined_call_operand.vmem [shape: bf16[384,128], index: 1, kind: input, shape index: {}]
  %s2 = inlined_call_operand.vmem [shape: f32[1,128], index: 2, kind: input, shape index: {}]
  %s3 = inlined_call_operand.vmem [shape: f32[512,128], index: 3, kind: output, shape index: {}]
  %s4 = sld [smem:[#allocation0]]
  $region45: #{forward.33} parent=0
    _
  %s6 = ssub.s32 1, %s4
  %s7 = scalar_select 0, %s6, %s4
  loop: start=0, step=1, limit=4
  $region2: #{forward.33} parent=0 // loop_pre_header
    _
  $region3: #{forward.33} parent=0 // loop_header
    %s9 = sphi 0, %s13
    %p10 = scmp.ge.s32.totalorder %s9, 4
    %s19 = sphi 0, %s21
    %s22 = sphi 0, %s19
    %s23 = sphi 0, %s22
    %s39 = sphi 0, %s23
    %s43 = sphi 0, %s43
    %s45 = sphi 0, %s43
    %s46 = sphi 0, %s45
    %s60 = sphi 0, %s46
    %s64 = sphi 0, %s64
    %s66 = sphi 0, %s64
    %s67 = sphi 0, %s66
    %s81 = sphi 0, %s67
    %s87 = sphi 0, %s89
    %s90 = sphi 0, %s87
    %s91 = sphi 0, %s90
    %s107 = sphi 0, %s91
  $region4: #{forward.33} parent=0 // loop_header_branch
    %12 = sbr.rel (%p10) target = $region8
  $region5: #{forward.33} parent=0 // loop_body
    %s14 = ssub.s32 %s9, 1
    %s15 = ssub.s32 %s9, 2
    %s16 = sadd.s32 %s9, 1
    %s17 = ssub.s32 %s9, %s16
    %p18 = scmp.eq.s32.totalorder %s17, 0
    %s20 = sadd.s32 %s19, 1
    %s21 = scalar_select %p18, %s19, %s20
    %p24 = pneg %p18
    %p25 = scmp.eq.s32.totalorder %s9, 1
    %p26 = por %p24, %p25
    %p27 = scmp.ne.s32.totalorder %s19, %s22
    %p28 = scmp.eq.s32.totalorder %s9, 0
    %p29 = por %p27, %p28
    %p30 = scmp.ne.s32.totalorder %s19, %s22
    %p31 = scmp.eq.s32.totalorder %s14, 1
    %p32 = por %p30, %p31
    %p33 = scmp.ne.s32.totalorder %s22, %s23
    %p34 = scmp.eq.s32.totalorder %s14, 0
    %p35 = por %p33, %p34
    %p36 = scmp.ne.s32.totalorder %s22, %s23
    %p37 = scmp.eq.s32.totalorder %s15, 1
    %p38 = por %p36, %p37
    %p40 = scmp.ne.s32.totalorder %s23, %s39
    %p41 = scmp.eq.s32.totalorder %s15, 0
    %p42 = por %p40, %p41
    %s44 = sadd.s32 %s43, 1
    %p47 = scmp.eq.s32.totalorder %s9, 1
    %p48 = scmp.ne.s32.totalorder %s43, %s45
    %p49 = scmp.eq.s32.totalorder %s9, 0
    %p50 = por %p48, %p49
    %p51 = scmp.ne.s32.totalorder %s43, %s45
    %p52 = scmp.eq.s32.totalorder %s14, 1
    %p53 = por %p51, %p52
    %p54 = scmp.ne.s32.totalorder %s45, %s46
    %p55 = scmp.eq.s32.totalorder %s14, 0
    %p56 = por %p54, %p55
    %p57 = scmp.ne.s32.totalorder %s45, %s46
    %p58 = scmp.eq.s32.totalorder %s15, 1
    %p59 = por %p57, %p58
    %p61 = scmp.ne.s32.totalorder %s46, %s60
    %p62 = scmp.eq.s32.totalorder %s15, 0
    %p63 = por %p61, %p62
    %s65 = sadd.s32 %s64, 1
    %p68 = scmp.eq.s32.totalorder %s9, 1
    %p69 = scmp.ne.s32.totalorder %s64, %s66
    %p70 = scmp.eq.s32.totalorder %s9, 0
    %p71 = por %p69, %p70
    %p72 = scmp.ne.s32.totalorder %s64, %s66
    %p73 = scmp.eq.s32.totalorder %s14, 1
    %p74 = por %p72, %p73
    %p75 = scmp.ne.s32.totalorder %s66, %s67
    %p76 = scmp.eq.s32.totalorder %s14, 0
    %p77 = por %p75, %p76
    %p78 = scmp.ne.s32.totalorder %s66, %s67
    %p79 = scmp.eq.s32.totalorder %s15, 1
    %p80 = por %p78, %p79
    %p82 = scmp.ne.s32.totalorder %s67, %s81
    %p83 = scmp.eq.s32.totalorder %s15, 0
    %p84 = por %p82, %p83
    %s85 = ssub.s32 %s9, %s16
    %p86 = scmp.eq.s32.totalorder %s85, 0
    %s88 = sadd.s32 %s87, 1
    %s89 = scalar_select %p86, %s87, %s88
    %p92 = pneg %p86
    %p93 = scmp.eq.s32.totalorder %s9, 1
    %p94 = por %p92, %p93
    %p95 = scmp.ne.s32.totalorder %s87, %s90
    %p96 = scmp.eq.s32.totalorder %s9, 0
    %p97 = por %p95, %p96
    %p98 = scmp.ne.s32.totalorder %s87, %s90
    %p99 = scmp.eq.s32.totalorder %s14, 1
    %p100 = por %p98, %p99
    %p101 = scmp.ne.s32.totalorder %s90, %s91
    %p102 = scmp.eq.s32.totalorder %s14, 0
    %p103 = por %p101, %p102
    %p104 = scmp.ne.s32.totalorder %s90, %s91
    %p105 = scmp.eq.s32.totalorder %s15, 1
    %p106 = por %p104, %p105
    %p108 = scmp.ne.s32.totalorder %s91, %s107
    %p109 = scmp.eq.s32.totalorder %s15, 0
    %p110 = por %p108, %p109
    %p111 = scmp.le.s32.totalorder 1, %s9
    %p112 = scmp.lt.s32.totalorder %s9, 3
    %p113 = pnand %p111, %p112
    %p114 = pneg %p113
    // Predicated region
    $region9: #{forward.33} parent=5 // pred_check
      _
    $region10: #{forward.33} parent=5 // pred_check_branch
      %116 = sbr.rel (%p113) target = $region12
    $region11: #{forward.33} parent=5 // pred_region
      %s117 = ssub.s32 %s9, 1
      // Predicated region
      $region13: #{forward.33} parent=11 // pred_check
        %p118 = pneg %p56
      $region14: #{forward.33} parent=11 // pred_check_branch
        %120 = sbr.rel (%p118) target = $region16
      $region15: #{forward.33} parent=11 // pred_region
        _
      $region16: #{forward.33} parent=11 // pred_fallthru
        _
      // Predicated region
      $region17: #{forward.33} parent=11 // pred_check
        %p121 = pneg %p77
      $region18: #{forward.33} parent=11 // pred_check_branch
        %123 = sbr.rel (%p121) target = $region20
      $region19: #{forward.33} parent=11 // pred_region
        _
      $region20: #{forward.33} parent=11 // pred_fallthru
        _
    $region12: #{forward.33} parent=5 // pred_fallthru
      _
    %p124 = scmp.lt.s32.totalorder %s9, 2
    // Predicated region
    $region21: #{forward.33} parent=5 // pred_check
      %p125 = pneg %p124
    $region22: #{forward.33} parent=5 // pred_check_branch
      %127 = sbr.rel (%p125) target = $region24
    $region23: #{forward.33} parent=5 // pred_region
      // Predicated region
      $region25: #{forward.33} parent=23 // pred_check
        %p128 = pneg %p29
      $region26: #{forward.33} parent=23 // pred_check_branch
        %130 = sbr.rel (%p128) target = $region28
      $region27: #{forward.33} parent=23 // pred_region
        %s131 = smul.u32 32, %s9
        %p132 = scmp.lt.s32.totalorder %s131, 63
        %s133 = scalar_select %p132, %s131, 63
        %s134 = smul.addr %s133, 3
        %s135 = smul.addr %s134, 4
        %s136 = scalar_lea.vmem %s0, %s135
        %s137 = smul.u32 32, %s9
      $region28: #{forward.33} parent=23 // pred_fallthru
        _
    $region24: #{forward.33} parent=5 // pred_fallthru
      _
    %p138 = scmp.le.s32.totalorder 1, %s9
    %p139 = scmp.lt.s32.totalorder %s9, 3
    %p140 = pnand %p138, %p139
    %p141 = pneg %p140
    // Predicated region
    $region29: #{forward.33} parent=5 // pred_check
      _
    $region30: #{forward.33} parent=5 // pred_check_branch
      %143 = sbr.rel (%p140) target = $region32
    $region31: #{forward.33} parent=5 // pred_region
      %s144 = ssub.s32 %s9, 1
      %s145 = smul.u32 32, %s14
      %p146 = scmp.lt.s32.totalorder %s145, 63
      %s147 = scalar_select %p146, %s145, 63
      %s148 = smul.addr %s147, 3
      %s149 = smul.addr %s148, 4
      %s150 = scalar_lea.vmem %s0, %s149
      %p151 = pneg %p35
      %p152 = pneg %p32
      %p153 = pneg %p56
      %p154 = pneg %p53
      %p155 = pneg %p77
      %p156 = pneg %p74
      %p157 = pneg %p103
      %p158 = pneg %p100
      %s159 = smul.u32 32, %s14
      %p160 = scmp.lt.s32.totalorder %s159, 63
      %s161 = scalar_select %p160, %s159, 63
      %s162 = smul.addr %s161, 8
      %s163 = scalar_lea.vmem %s3, %s162
      %s164 = smul.u32 32, %s14
      %p165 = scmp.lt.s32.totalorder %s164, 63
      %s166 = scalar_select %p165, %s164, 63
      %s167 = smul.addr %s166, 3
      %s168 = smul.addr %s167, 4
      %s169 = scalar_lea.vmem %s0, %s168
      %s170 = smul.u32 32, %s14
      %s171 = smul.u32 32, %s14
      %p172 = scmp.lt.s32.totalorder %s171, 63
      %s173 = scalar_select %p172, %s171, 63
      %s174 = smul.addr %s173, 8
      %s175 = scalar_lea.vmem %s3, %s174
      %s176 = smul.u32 32, %s14
      %v178 = vld [vmem:[%s169] sm:$0xff]
      %v179 = vld [vmem:[%s169 + $0x8] sm:$0xf]
      %v180 = vld [vmem:[%s169 + $0xc] sm:$0xff]
      %v181 = vld [vmem:[%s169 + $0x14] sm:$0xf]
      %v182 = vld [vmem:[%s169 + $0x18] sm:$0xff]
      %v183 = vld [vmem:[%s169 + $0x20] sm:$0xf]
      %v184 = vld [vmem:[%s169 + $0x24] sm:$0xff]
      %v185 = vld [vmem:[%s169 + $0x2c] sm:$0xf]
      %v186 = vld [vmem:[%s169 + $0x30] sm:$0xff]
      %v187 = vld [vmem:[%s169 + $0x38] sm:$0xf]
      %v188 = vld [vmem:[%s169 + $0x3c] sm:$0xff]
      %v189 = vld [vmem:[%s169 + $0x44] sm:$0xf]
      %v190 = vld [vmem:[%s169 + $0x48] sm:$0xff]
      %v191 = vld [vmem:[%s169 + $0x50] sm:$0xf]
      %v192 = vld [vmem:[%s169 + $0x54] sm:$0xff]
      %v193 = vld [vmem:[%s169 + $0x5c] sm:$0xf]
      %v194 = vld [vmem:[%s169 + $0x60] sm:$0xff]
      %v195 = vld [vmem:[%s169 + $0x68] sm:$0xf]
      %v196 = vld [vmem:[%s169 + $0x6c] sm:$0xff]
      %v197 = vld [vmem:[%s169 + $0x74] sm:$0xf]
      %v198 = vld [vmem:[%s169 + $0x78] sm:$0xff]
      %v199 = vld [vmem:[%s169 + $0x80] sm:$0xf]
      %v200 = vld [vmem:[%s169 + $0x84] sm:$0xff]
      %v201 = vld [vmem:[%s169 + $0x8c] sm:$0xf]
      %v202 = vld [vmem:[%s169 + $0x90] sm:$0xff]
      %v203 = vld [vmem:[%s169 + $0x98] sm:$0xf]
      %v204 = vld [vmem:[%s169 + $0x9c] sm:$0xff]
      %v205 = vld [vmem:[%s169 + $0xa4] sm:$0xf]
      %v206 = vld [vmem:[%s169 + $0xa8] sm:$0xff]
      %v207 = vld [vmem:[%s169 + $0xb0] sm:$0xf]
      %v208 = vld [vmem:[%s169 + $0xb4] sm:$0xff]
      %v209 = vld [vmem:[%s169 + $0xbc] sm:$0xf]
      %v210 = vld [vmem:[%s169 + $0xc0] sm:$0xff]
      %v211 = vld [vmem:[%s169 + $0xc8] sm:$0xf]
      %v212 = vld [vmem:[%s169 + $0xcc] sm:$0xff]
      %v213 = vld [vmem:[%s169 + $0xd4] sm:$0xf]
      %v214 = vld [vmem:[%s169 + $0xd8] sm:$0xff]
      %v215 = vld [vmem:[%s169 + $0xe0] sm:$0xf]
      %v216 = vld [vmem:[%s169 + $0xe4] sm:$0xff]
      %v217 = vld [vmem:[%s169 + $0xec] sm:$0xf]
      %v218 = vld [vmem:[%s169 + $0xf0] sm:$0xff]
      %v219 = vld [vmem:[%s169 + $0xf8] sm:$0xf]
      %v220 = vld [vmem:[%s169 + $0xfc] sm:$0xff]
      %v221 = vld [vmem:[%s169 + $0x104] sm:$0xf]
      %v222 = vld [vmem:[%s169 + $0x108] sm:$0xff]
      %v223 = vld [vmem:[%s169 + $0x110] sm:$0xf]
      %v224 = vld [vmem:[%s169 + $0x114] sm:$0xff]
      %v225 = vld [vmem:[%s169 + $0x11c] sm:$0xf]
      %v226 = vld [vmem:[%s169 + $0x120] sm:$0xff]
      %v227 = vld [vmem:[%s169 + $0x128] sm:$0xf]
      %v228 = vld [vmem:[%s169 + $0x12c] sm:$0xff]
      %v229 = vld [vmem:[%s169 + $0x134] sm:$0xf]
      %v230 = vld [vmem:[%s169 + $0x138] sm:$0xff]
      %v231 = vld [vmem:[%s169 + $0x140] sm:$0xf]
      %v232 = vld [vmem:[%s169 + $0x144] sm:$0xff]
      %v233 = vld [vmem:[%s169 + $0x14c] sm:$0xf]
      %v234 = vld [vmem:[%s169 + $0x150] sm:$0xff]
      %v235 = vld [vmem:[%s169 + $0x158] sm:$0xf]
      %v236 = vld [vmem:[%s169 + $0x15c] sm:$0xff]
      %v237 = vld [vmem:[%s169 + $0x164] sm:$0xf]
      %v238 = vld [vmem:[%s169 + $0x168] sm:$0xff]
      %v239 = vld [vmem:[%s169 + $0x170] sm:$0xf]
      %v240 = vld [vmem:[%s169 + $0x174] sm:$0xff]
      %v241 = vld [vmem:[%s169 + $0x17c] sm:$0xf]
      %v242 = vld [vmem:[%s1] sm:$0xf]
      %v243 = vld [vmem:[%s1 + $0x4] sm:$0xf]
      %v244 = vld [vmem:[%s1 + $0x8] sm:$0xf]
      %v245 = vld [vmem:[%s1 + $0xc] sm:$0xf]
      %v246 = vld [vmem:[%s1 + $0x10] sm:$0xf]
      %v247 = vld [vmem:[%s1 + $0x14] sm:$0xf]
      %v248 = vld [vmem:[%s1 + $0x18] sm:$0xf]
      %v249 = vld [vmem:[%s1 + $0x1c] sm:$0xf]
      %v250 = vld [vmem:[%s1 + $0x20] sm:$0xf]
      %v251 = vld [vmem:[%s1 + $0x24] sm:$0xf]
      %v252 = vld [vmem:[%s1 + $0x28] sm:$0xf]
      %v253 = vld [vmem:[%s1 + $0x2c] sm:$0xf]
      %v254 = vld [vmem:[%s1 + $0x30] sm:$0xf]
      %v255 = vld [vmem:[%s1 + $0x34] sm:$0xf]
      %v256 = vld [vmem:[%s1 + $0x38] sm:$0xf]
      %v257 = vld [vmem:[%s1 + $0x3c] sm:$0xf]
      %v258 = vld [vmem:[%s1 + $0x40] sm:$0xf]
      %v259 = vld [vmem:[%s1 + $0x44] sm:$0xf]
      %v260 = vld [vmem:[%s1 + $0x48] sm:$0xf]
      %v261 = vld [vmem:[%s1 + $0x4c] sm:$0xf]
      %v262 = vld [vmem:[%s1 + $0x50] sm:$0xf]
      %v263 = vld [vmem:[%s1 + $0x54] sm:$0xf]
      %v264 = vld [vmem:[%s1 + $0x58] sm:$0xf]
      %v265 = vld [vmem:[%s1 + $0x5c] sm:$0xf]
      %v266 = vld [vmem:[%s1 + $0x60] sm:$0xf]
      %v267 = vld [vmem:[%s1 + $0x64] sm:$0xf]
      %v268 = vld [vmem:[%s1 + $0x68] sm:$0xf]
      %v269 = vld [vmem:[%s1 + $0x6c] sm:$0xf]
      %v270 = vld [vmem:[%s1 + $0x70] sm:$0xf]
      %v271 = vld [vmem:[%s1 + $0x74] sm:$0xf]
      %v272 = vld [vmem:[%s1 + $0x78] sm:$0xf]
      %v273 = vld [vmem:[%s1 + $0x7c] sm:$0xf]
      %v274 = vld [vmem:[%s1 + $0x80] sm:$0xf]
      %v275 = vld [vmem:[%s1 + $0x84] sm:$0xf]
      %v276 = vld [vmem:[%s1 + $0x88] sm:$0xf]
      %v277 = vld [vmem:[%s1 + $0x8c] sm:$0xf]
      %v278 = vld [vmem:[%s1 + $0x90] sm:$0xf]
      %v279 = vld [vmem:[%s1 + $0x94] sm:$0xf]
      %v280 = vld [vmem:[%s1 + $0x98] sm:$0xf]
      %v281 = vld [vmem:[%s1 + $0x9c] sm:$0xf]
      %v282 = vld [vmem:[%s1 + $0xa0] sm:$0xf]
      %v283 = vld [vmem:[%s1 + $0xa4] sm:$0xf]
      %v284 = vld [vmem:[%s1 + $0xa8] sm:$0xf]
      %v285 = vld [vmem:[%s1 + $0xac] sm:$0xf]
      %v286 = vld [vmem:[%s1 + $0xb0] sm:$0xf]
      %v287 = vld [vmem:[%s1 + $0xb4] sm:$0xf]
      %v288 = vld [vmem:[%s1 + $0xb8] sm:$0xf]
      %v289 = vld [vmem:[%s1 + $0xbc] sm:$0xf]
      %v290 = vld [vmem:[%s2] sm:$0x1]
      %v292 = vlaneseq
      %v293 = vshrl.u32 %v292, 7
      %v294 = vsub.s32 0, %v293
      %v295 = vrot.slane %v290, %v294
      %v361 = vunpack.c.l.b16 %v178
      %v362 = vunpack.c.h.b16 %v178
      %v363 = vunpack.c.l.b16 %v179
      %v364 = vunpack.c.l.b16 %v180
      %v365 = vunpack.c.h.b16 %v180
      %v366 = vunpack.c.l.b16 %v181
      %v367 = vunpack.c.l.b16 %v182
      %v368 = vunpack.c.h.b16 %v182
      %v369 = vunpack.c.l.b16 %v183
      %v370 = vunpack.c.l.b16 %v184
      %v371 = vunpack.c.h.b16 %v184
      %v372 = vunpack.c.l.b16 %v185
      %v373 = vunpack.c.l.b16 %v186
      %v374 = vunpack.c.h.b16 %v186
      %v375 = vunpack.c.l.b16 %v187
      %v376 = vunpack.c.l.b16 %v188
      %v377 = vunpack.c.h.b16 %v188
      %v378 = vunpack.c.l.b16 %v189
      %v379 = vunpack.c.l.b16 %v190
      %v380 = vunpack.c.h.b16 %v190
      %v381 = vunpack.c.l.b16 %v191
      %v382 = vunpack.c.l.b16 %v192
      %v383 = vunpack.c.h.b16 %v192
      %v384 = vunpack.c.l.b16 %v193
      %v385 = vunpack.c.l.b16 %v194
      %v386 = vunpack.c.h.b16 %v194
      %v387 = vunpack.c.l.b16 %v195
      %v388 = vunpack.c.l.b16 %v196
      %v389 = vunpack.c.h.b16 %v196
      %v390 = vunpack.c.l.b16 %v197
      %v391 = vunpack.c.l.b16 %v198
      %v392 = vunpack.c.h.b16 %v198
      %v393 = vunpack.c.l.b16 %v199
      %v394 = vunpack.c.l.b16 %v200
      %v395 = vunpack.c.h.b16 %v200
      %v396 = vunpack.c.l.b16 %v201
      %v397 = vunpack.c.l.b16 %v202
      %v398 = vunpack.c.h.b16 %v202
      %v399 = vunpack.c.l.b16 %v203
      %v400 = vunpack.c.l.b16 %v204
      %v401 = vunpack.c.h.b16 %v204
      %v402 = vunpack.c.l.b16 %v205
      %v403 = vunpack.c.l.b16 %v206
      %v404 = vunpack.c.h.b16 %v206
      %v405 = vunpack.c.l.b16 %v207
      %v406 = vunpack.c.l.b16 %v208
      %v407 = vunpack.c.h.b16 %v208
      %v408 = vunpack.c.l.b16 %v209
      %v409 = vunpack.c.l.b16 %v210
      %v410 = vunpack.c.h.b16 %v210
      %v411 = vunpack.c.l.b16 %v211
      %v412 = vunpack.c.l.b16 %v212
      %v413 = vunpack.c.h.b16 %v212
      %v414 = vunpack.c.l.b16 %v213
      %v415 = vunpack.c.l.b16 %v214
      %v416 = vunpack.c.h.b16 %v214
      %v417 = vunpack.c.l.b16 %v215
      %v418 = vunpack.c.l.b16 %v216
      %v419 = vunpack.c.h.b16 %v216
      %v420 = vunpack.c.l.b16 %v217
      %v421 = vunpack.c.l.b16 %v218
      %v422 = vunpack.c.h.b16 %v218
      %v423 = vunpack.c.l.b16 %v219
      %v424 = vunpack.c.l.b16 %v220
      %v425 = vunpack.c.h.b16 %v220
      %v426 = vunpack.c.l.b16 %v221
      %v427 = vunpack.c.l.b16 %v222
      %v428 = vunpack.c.h.b16 %v222
      %v429 = vunpack.c.l.b16 %v223
      %v430 = vunpack.c.l.b16 %v224
      %v431 = vunpack.c.h.b16 %v224
      %v432 = vunpack.c.l.b16 %v225
      %v433 = vunpack.c.l.b16 %v226
      %v434 = vunpack.c.h.b16 %v226
      %v435 = vunpack.c.l.b16 %v227
      %v436 = vunpack.c.l.b16 %v228
      %v437 = vunpack.c.h.b16 %v228
      %v438 = vunpack.c.l.b16 %v229
      %v439 = vunpack.c.l.b16 %v230
      %v440 = vunpack.c.h.b16 %v230
      %v441 = vunpack.c.l.b16 %v231
      %v442 = vunpack.c.l.b16 %v232
      %v443 = vunpack.c.h.b16 %v232
      %v444 = vunpack.c.l.b16 %v233
      %v445 = vunpack.c.l.b16 %v234
      %v446 = vunpack.c.h.b16 %v234
      %v447 = vunpack.c.l.b16 %v235
      %v448 = vunpack.c.l.b16 %v236
      %v449 = vunpack.c.h.b16 %v236
      %v450 = vunpack.c.l.b16 %v237
      %v451 = vunpack.c.l.b16 %v238
      %v452 = vunpack.c.h.b16 %v238
      %v453 = vunpack.c.l.b16 %v239
      %v454 = vunpack.c.l.b16 %v240
      %v455 = vunpack.c.h.b16 %v240
      %v456 = vunpack.c.l.b16 %v241
      %v457 = vpack.c.b16 %v364, %v361
      %v458 = vpack.c.b16 %v365, %v362
      %v459 = vpack.c.b16 %v366, %v363
      %v460 = vpack.c.b16 %v370, %v367
      %v461 = vpack.c.b16 %v371, %v368
      %v462 = vpack.c.b16 %v372, %v369
      %v463 = vpack.c.b16 %v376, %v373
      %v464 = vpack.c.b16 %v377, %v374
      %v465 = vpack.c.b16 %v378, %v375
      %v466 = vpack.c.b16 %v382, %v379
      %v467 = vpack.c.b16 %v383, %v380
      %v468 = vpack.c.b16 %v384, %v381
      %v469 = vpack.c.b16 %v388, %v385
      %v470 = vpack.c.b16 %v389, %v386
      %v471 = vpack.c.b16 %v390, %v387
      %v472 = vpack.c.b16 %v394, %v391
      %v473 = vpack.c.b16 %v395, %v392
      %v474 = vpack.c.b16 %v396, %v393
      %v475 = vpack.c.b16 %v400, %v397
      %v476 = vpack.c.b16 %v401, %v398
      %v477 = vpack.c.b16 %v402, %v399
      %v478 = vpack.c.b16 %v406, %v403
      %v479 = vpack.c.b16 %v407, %v404
      %v480 = vpack.c.b16 %v408, %v405
      %v481 = vpack.c.b16 %v412, %v409
      %v482 = vpack.c.b16 %v413, %v410
      %v483 = vpack.c.b16 %v414, %v411
      %v484 = vpack.c.b16 %v418, %v415
      %v485 = vpack.c.b16 %v419, %v416
      %v486 = vpack.c.b16 %v420, %v417
      %v487 = vpack.c.b16 %v424, %v421
      %v488 = vpack.c.b16 %v425, %v422
      %v489 = vpack.c.b16 %v426, %v423
      %v490 = vpack.c.b16 %v430, %v427
      %v491 = vpack.c.b16 %v431, %v428
      %v492 = vpack.c.b16 %v432, %v429
      %v493 = vpack.c.b16 %v436, %v433
      %v494 = vpack.c.b16 %v437, %v434
      %v495 = vpack.c.b16 %v438, %v435
      %v496 = vpack.c.b16 %v442, %v439
      %v497 = vpack.c.b16 %v443, %v440
      %v498 = vpack.c.b16 %v444, %v441
      %v499 = vpack.c.b16 %v448, %v445
      %v500 = vpack.c.b16 %v449, %v446
      %v501 = vpack.c.b16 %v450, %v447
      %v502 = vpack.c.b16 %v454, %v451
      %v503 = vpack.c.b16 %v455, %v452
      %v504 = vpack.c.b16 %v456, %v453
      %v601 = vunpack.c.l.b16 %v242
      %v602 = vunpack.c.l.b16 %v243
      %v603 = vunpack.c.l.b16 %v244
      %v604 = vunpack.c.l.b16 %v245
      %v605 = vunpack.c.l.b16 %v246
      %v606 = vunpack.c.l.b16 %v247
      %v607 = vunpack.c.l.b16 %v248
      %v608 = vunpack.c.l.b16 %v249
      %v609 = vunpack.c.l.b16 %v250
      %v610 = vunpack.c.l.b16 %v251
      %v611 = vunpack.c.l.b16 %v252
      %v612 = vunpack.c.l.b16 %v253
      %v613 = vunpack.c.l.b16 %v254
      %v614 = vunpack.c.l.b16 %v255
      %v615 = vunpack.c.l.b16 %v256
      %v616 = vunpack.c.l.b16 %v257
      %v617 = vunpack.c.l.b16 %v258
      %v618 = vunpack.c.l.b16 %v259
      %v619 = vunpack.c.l.b16 %v260
      %v620 = vunpack.c.l.b16 %v261
      %v621 = vunpack.c.l.b16 %v262
      %v622 = vunpack.c.l.b16 %v263
      %v623 = vunpack.c.l.b16 %v264
      %v624 = vunpack.c.l.b16 %v265
      %v625 = vunpack.c.l.b16 %v266
      %v626 = vunpack.c.l.b16 %v267
      %v627 = vunpack.c.l.b16 %v268
      %v628 = vunpack.c.l.b16 %v269
      %v629 = vunpack.c.l.b16 %v270
      %v630 = vunpack.c.l.b16 %v271
      %v631 = vunpack.c.l.b16 %v272
      %v632 = vunpack.c.l.b16 %v273
      %v633 = vunpack.c.l.b16 %v274
      %v634 = vunpack.c.l.b16 %v275
      %v635 = vunpack.c.l.b16 %v276
      %v636 = vunpack.c.l.b16 %v277
      %v637 = vunpack.c.l.b16 %v278
      %v638 = vunpack.c.l.b16 %v279
      %v639 = vunpack.c.l.b16 %v280
      %v640 = vunpack.c.l.b16 %v281
      %v641 = vunpack.c.l.b16 %v282
      %v642 = vunpack.c.l.b16 %v283
      %v643 = vunpack.c.l.b16 %v284
      %v644 = vunpack.c.l.b16 %v285
      %v645 = vunpack.c.l.b16 %v286
      %v646 = vunpack.c.l.b16 %v287
      %v647 = vunpack.c.l.b16 %v288
      %v648 = vunpack.c.l.b16 %v289
      %v649 = vpack.c.b16 %v602, %v601
      %v650 = vpack.c.b16 %v604, %v603
      %v651 = vpack.c.b16 %v606, %v605
      %v652 = vpack.c.b16 %v608, %v607
      %v653 = vpack.c.b16 %v610, %v609
      %v654 = vpack.c.b16 %v612, %v611
      %v655 = vpack.c.b16 %v614, %v613
      %v656 = vpack.c.b16 %v616, %v615
      %v657 = vpack.c.b16 %v618, %v617
      %v658 = vpack.c.b16 %v620, %v619
      %v659 = vpack.c.b16 %v622, %v621
      %v660 = vpack.c.b16 %v624, %v623
      %v661 = vpack.c.b16 %v626, %v625
      %v662 = vpack.c.b16 %v628, %v627
      %v663 = vpack.c.b16 %v630, %v629
      %v664 = vpack.c.b16 %v632, %v631
      %v665 = vpack.c.b16 %v634, %v633
      %v666 = vpack.c.b16 %v636, %v635
      %v667 = vpack.c.b16 %v638, %v637
      %v668 = vpack.c.b16 %v640, %v639
      %v669 = vpack.c.b16 %v642, %v641
      %v670 = vpack.c.b16 %v644, %v643
      %v671 = vpack.c.b16 %v646, %v645
      %v672 = vpack.c.b16 %v648, %v647
      %697 = vmatprep.subr.bf16.mxu0 0
      %698 = vmatpush1.bf16.msra.mxu0 %v656
      %699 = vmatprep.subr.bf16.mxu0 0
      %700 = vmatpush1.bf16.msra.mxu0 %v655
      %701 = vmatprep.subr.bf16.mxu0 0
      %702 = vmatpush1.bf16.msra.mxu0 %v654
      %703 = vmatprep.subr.bf16.mxu0 0
      %704 = vmatpush1.bf16.msra.mxu0 %v653
      %705 = vmatprep.subr.bf16.mxu0 0
      %706 = vmatpush1.bf16.msra.mxu0 %v652
      %707 = vmatprep.subr.bf16.mxu0 0
      %708 = vmatpush1.bf16.msra.mxu0 %v651
      %709 = vmatprep.subr.bf16.mxu0 0
      %710 = vmatpush1.bf16.msra.mxu0 %v650
      %711 = vmatprep.subr.bf16.mxu0 0
      %712 = vmatpush1.bf16.msra.mxu0 %v649
      %713 = vmatprep.subr.bf16.mxu0 0
      %714 = vmatpush2.bf16.msra.mxu0 %v664
      %715 = vmatprep.subr.bf16.mxu0 0
      %716 = vmatpush2.bf16.msra.mxu0 %v663
      %717 = vmatprep.subr.bf16.mxu0 0
      %718 = vmatpush2.bf16.msra.mxu0 %v662
      %719 = vmatprep.subr.bf16.mxu0 0
      %720 = vmatpush2.bf16.msra.mxu0 %v661
      %721 = vmatprep.subr.bf16.mxu0 0
      %722 = vmatpush2.bf16.msra.mxu0 %v660
      %723 = vmatprep.subr.bf16.mxu0 0
      %724 = vmatpush2.bf16.msra.mxu0 %v659
      %725 = vmatprep.subr.bf16.mxu0 0
      %726 = vmatpush2.bf16.msra.mxu0 %v658
      %727 = vmatprep.subr.bf16.mxu0 0
      %728 = vmatpush2.bf16.msra.mxu0 %v657
      %729 = vmatprep.mubr.bf16.mxu0 %v458
      %730 = vmatmul.mubr.bf16.gmra.mxu0 %v457
      %v731 = vpop.f32.mrf.mxu0
      %v732 = vadd.f32 %v295, %v731
      %v733 = vpop.f32.mrf.mxu0
      %v734 = vpop.f32.mrf.mxu0
      %v735 = vadd.f32 %v295, %v734
      %v736 = vpop.f32.mrf.mxu0
      %737 = vmatprep.mubr.bf16.mxu0 %v461
      %738 = vmatmul.mubr.bf16.gmra.mxu0 %v460
      %v739 = vpop.f32.mrf.mxu0
      %v740 = vadd.f32 %v295, %v739
      %v741 = vpop.f32.mrf.mxu0
      %v742 = vpop.f32.mrf.mxu0
      %v743 = vadd.f32 %v295, %v742
      %v744 = vpop.f32.mrf.mxu0
      %745 = vmatprep.mubr.bf16.mxu0 %v464
      %746 = vmatmul.mubr.bf16.gmra.mxu0 %v463
      %v747 = vpop.f32.mrf.mxu0
      %v748 = vadd.f32 %v295, %v747
      %v749 = vpop.f32.mrf.mxu0
      %v750 = vpop.f32.mrf.mxu0
      %v751 = vadd.f32 %v295, %v750
      %v752 = vpop.f32.mrf.mxu0
      %753 = vmatprep.mubr.bf16.mxu0 %v467
      %754 = vmatmul.mubr.bf16.gmra.mxu0 %v466
      %v755 = vpop.f32.mrf.mxu0
      %v756 = vadd.f32 %v295, %v755
      %v757 = vpop.f32.mrf.mxu0
      %v758 = vpop.f32.mrf.mxu0
      %v759 = vadd.f32 %v295, %v758
      %v760 = vpop.f32.mrf.mxu0
      %761 = vmatprep.mubr.bf16.mxu0 %v470
      %762 = vmatmul.mubr.bf16.gmra.mxu0 %v469
      %v763 = vpop.f32.mrf.mxu0
      %v764 = vadd.f32 %v295, %v763
      %v765 = vpop.f32.mrf.mxu0
      %v766 = vpop.f32.mrf.mxu0
      %v767 = vadd.f32 %v295, %v766
      %v768 = vpop.f32.mrf.mxu0
      %769 = vmatprep.mubr.bf16.mxu0 %v473
      %770 = vmatmul.mubr.bf16.gmra.mxu0 %v472
      %v771 = vpop.f32.mrf.mxu0
      %v772 = vadd.f32 %v295, %v771
      %v773 = vpop.f32.mrf.mxu0
      %v774 = vpop.f32.mrf.mxu0
      %v775 = vadd.f32 %v295, %v774
      %v776 = vpop.f32.mrf.mxu0
      %777 = vmatprep.mubr.bf16.mxu0 %v476
      %778 = vmatmul.mubr.bf16.gmra.mxu0 %v475
      %v779 = vpop.f32.mrf.mxu0
      %v780 = vadd.f32 %v295, %v779
      %v781 = vpop.f32.mrf.mxu0
      %v782 = vpop.f32.mrf.mxu0
      %v783 = vadd.f32 %v295, %v782
      %v784 = vpop.f32.mrf.mxu0
      %785 = vmatprep.mubr.bf16.mxu0 %v479
      %786 = vmatmul.mubr.bf16.gmra.mxu0 %v478
      %v787 = vpop.f32.mrf.mxu0
      %v788 = vadd.f32 %v295, %v787
      %v789 = vpop.f32.mrf.mxu0
      %v790 = vpop.f32.mrf.mxu0
      %v791 = vadd.f32 %v295, %v790
      %v792 = vpop.f32.mrf.mxu0
      %793 = vmatprep.mubr.bf16.mxu0 %v482
      %794 = vmatmul.mubr.bf16.gmra.mxu0 %v481
      %v795 = vpop.f32.mrf.mxu0
      %v796 = vadd.f32 %v295, %v795
      %v797 = vpop.f32.mrf.mxu0
      %v798 = vpop.f32.mrf.mxu0
      %v799 = vadd.f32 %v295, %v798
      %v800 = vpop.f32.mrf.mxu0
      %801 = vmatprep.mubr.bf16.mxu0 %v485
      %802 = vmatmul.mubr.bf16.gmra.mxu0 %v484
      %v803 = vpop.f32.mrf.mxu0
      %v804 = vadd.f32 %v295, %v803
      %v805 = vpop.f32.mrf.mxu0
      %v806 = vpop.f32.mrf.mxu0
      %v807 = vadd.f32 %v295, %v806
      %v808 = vpop.f32.mrf.mxu0
      %809 = vmatprep.mubr.bf16.mxu0 %v488
      %810 = vmatmul.mubr.bf16.gmra.mxu0 %v487
      %v811 = vpop.f32.mrf.mxu0
      %v812 = vadd.f32 %v295, %v811
      %v813 = vpop.f32.mrf.mxu0
      %v814 = vpop.f32.mrf.mxu0
      %v815 = vadd.f32 %v295, %v814
      %v816 = vpop.f32.mrf.mxu0
      %817 = vmatprep.mubr.bf16.mxu0 %v491
      %818 = vmatmul.mubr.bf16.gmra.mxu0 %v490
      %v819 = vpop.f32.mrf.mxu0
      %v820 = vadd.f32 %v295, %v819
      %v821 = vpop.f32.mrf.mxu0
      %v822 = vpop.f32.mrf.mxu0
      %v823 = vadd.f32 %v295, %v822
      %v824 = vpop.f32.mrf.mxu0
      %825 = vmatprep.mubr.bf16.mxu0 %v494
      %826 = vmatmul.mubr.bf16.gmra.mxu0 %v493
      %v827 = vpop.f32.mrf.mxu0
      %v828 = vadd.f32 %v295, %v827
      %v829 = vpop.f32.mrf.mxu0
      %v830 = vpop.f32.mrf.mxu0
      %v831 = vadd.f32 %v295, %v830
      %v832 = vpop.f32.mrf.mxu0
      %833 = vmatprep.mubr.bf16.mxu0 %v497
      %834 = vmatmul.mubr.bf16.gmra.mxu0 %v496
      %v835 = vpop.f32.mrf.mxu0
      %v836 = vadd.f32 %v295, %v835
      %v837 = vpop.f32.mrf.mxu0
      %v838 = vpop.f32.mrf.mxu0
      %v839 = vadd.f32 %v295, %v838
      %v840 = vpop.f32.mrf.mxu0
      %841 = vmatprep.mubr.bf16.mxu0 %v500
      %842 = vmatmul.mubr.bf16.gmra.mxu0 %v499
      %v843 = vpop.f32.mrf.mxu0
      %v844 = vadd.f32 %v295, %v843
      %v845 = vpop.f32.mrf.mxu0
      %v846 = vpop.f32.mrf.mxu0
      %v847 = vadd.f32 %v295, %v846
      %v848 = vpop.f32.mrf.mxu0
      %849 = vmatprep.mubr.bf16.mxu0 %v503
      %850 = vmatmul.mubr.bf16.gmra.mxu0 %v502
      %v851 = vpop.f32.mrf.mxu0
      %v852 = vadd.f32 %v295, %v851
      %v853 = vpop.f32.mrf.mxu0
      %v854 = vpop.f32.mrf.mxu0
      %v855 = vadd.f32 %v295, %v854
      %v856 = vpop.f32.mrf.mxu0
      %857 = vdwg.mxu0
      %858 = vmatprep.subr.bf16.mxu0 0
      %859 = vmatpush1.bf16.msra.mxu0 %v672
      %860 = vmatprep.subr.bf16.mxu0 0
      %861 = vmatpush1.bf16.msra.mxu0 %v671
      %862 = vmatprep.subr.bf16.mxu0 0
      %863 = vmatpush1.bf16.msra.mxu0 %v670
      %864 = vmatprep.subr.bf16.mxu0 0
      %865 = vmatpush1.bf16.msra.mxu0 %v669
      %866 = vmatprep.subr.bf16.mxu0 0
      %867 = vmatpush1.bf16.msra.mxu0 %v668
      %868 = vmatprep.subr.bf16.mxu0 0
      %869 = vmatpush1.bf16.msra.mxu0 %v667
      %870 = vmatprep.subr.bf16.mxu0 0
      %871 = vmatpush1.bf16.msra.mxu0 %v666
      %872 = vmatprep.subr.bf16.mxu0 0
      %873 = vmatpush1.bf16.msra.mxu0 %v665
      %874 = vmatprep.subr.bf16.mxu0 0
      %875 = vmatpush2.bf16.msra.mxu0 0
      %876 = vmatprep.subr.bf16.mxu0 0
      %877 = vmatpush2.bf16.msra.mxu0 0
      %878 = vmatprep.subr.bf16.mxu0 0
      %879 = vmatpush2.bf16.msra.mxu0 0
      %880 = vmatprep.subr.bf16.mxu0 0
      %881 = vmatpush2.bf16.msra.mxu0 0
      %882 = vmatprep.subr.bf16.mxu0 0
      %883 = vmatpush2.bf16.msra.mxu0 0
      %884 = vmatprep.subr.bf16.mxu0 0
      %885 = vmatpush2.bf16.msra.mxu0 0
      %886 = vmatprep.subr.bf16.mxu0 0
      %887 = vmatpush2.bf16.msra.mxu0 0
      %888 = vmatprep.subr.bf16.mxu0 0
      %889 = vmatpush2.bf16.msra.mxu0 0
      %890 = vmatprep.mubr.bf16.mxu0 0
      %891 = vmatmul.mubr.bf16.gmra.mxu0 %v459
      %v892 = vpop.f32.mrf.mxu0
      %v893 = vadd.f32 %v732, %v892
      %v894 = vpop.f32.mrf.mxu0
      %v895 = vpop.f32.mrf.mxu0
      %v896 = vadd.f32 %v735, %v895
      %v897 = vpop.f32.mrf.mxu0
      %898 = vmatprep.mubr.bf16.mxu0 0
      %899 = vmatmul.mubr.bf16.gmra.mxu0 %v462
      %v900 = vpop.f32.mrf.mxu0
      %v901 = vadd.f32 %v740, %v900
      %v902 = vpop.f32.mrf.mxu0
      %v903 = vpop.f32.mrf.mxu0
      %v904 = vadd.f32 %v743, %v903
      %v905 = vpop.f32.mrf.mxu0
      %906 = vmatprep.mubr.bf16.mxu0 0
      %907 = vmatmul.mubr.bf16.gmra.mxu0 %v465
      %v908 = vpop.f32.mrf.mxu0
      %v909 = vadd.f32 %v748, %v908
      %v910 = vpop.f32.mrf.mxu0
      %v911 = vpop.f32.mrf.mxu0
      %v912 = vadd.f32 %v751, %v911
      %v913 = vpop.f32.mrf.mxu0
      %914 = vmatprep.mubr.bf16.mxu0 0
      %915 = vmatmul.mubr.bf16.gmra.mxu0 %v468
      %v916 = vpop.f32.mrf.mxu0
      %v917 = vadd.f32 %v756, %v916
      %v918 = vpop.f32.mrf.mxu0
      %v919 = vpop.f32.mrf.mxu0
      %v920 = vadd.f32 %v759, %v919
      %v921 = vpop.f32.mrf.mxu0
      %922 = vmatprep.mubr.bf16.mxu0 0
      %923 = vmatmul.mubr.bf16.gmra.mxu0 %v471
      %v924 = vpop.f32.mrf.mxu0
      %v925 = vadd.f32 %v764, %v924
      %v926 = vpop.f32.mrf.mxu0
      %v927 = vpop.f32.mrf.mxu0
      %v928 = vadd.f32 %v767, %v927
      %v929 = vpop.f32.mrf.mxu0
      %930 = vmatprep.mubr.bf16.mxu0 0
      %931 = vmatmul.mubr.bf16.gmra.mxu0 %v474
      %v932 = vpop.f32.mrf.mxu0
      %v933 = vadd.f32 %v772, %v932
      %v934 = vpop.f32.mrf.mxu0
      %v935 = vpop.f32.mrf.mxu0
      %v936 = vadd.f32 %v775, %v935
      %v937 = vpop.f32.mrf.mxu0
      %938 = vmatprep.mubr.bf16.mxu0 0
      %939 = vmatmul.mubr.bf16.gmra.mxu0 %v477
      %v940 = vpop.f32.mrf.mxu0
      %v941 = vadd.f32 %v780, %v940
      %v942 = vpop.f32.mrf.mxu0
      %v943 = vpop.f32.mrf.mxu0
      %v944 = vadd.f32 %v783, %v943
      %v945 = vpop.f32.mrf.mxu0
      %946 = vmatprep.mubr.bf16.mxu0 0
      %947 = vmatmul.mubr.bf16.gmra.mxu0 %v480
      %v948 = vpop.f32.mrf.mxu0
      %v949 = vadd.f32 %v788, %v948
      %v950 = vpop.f32.mrf.mxu0
      %v951 = vpop.f32.mrf.mxu0
      %v952 = vadd.f32 %v791, %v951
      %v953 = vpop.f32.mrf.mxu0
      %954 = vmatprep.mubr.bf16.mxu0 0
      %955 = vmatmul.mubr.bf16.gmra.mxu0 %v483
      %v956 = vpop.f32.mrf.mxu0
      %v957 = vadd.f32 %v796, %v956
      %v958 = vpop.f32.mrf.mxu0
      %v959 = vpop.f32.mrf.mxu0
      %v960 = vadd.f32 %v799, %v959
      %v961 = vpop.f32.mrf.mxu0
      %962 = vmatprep.mubr.bf16.mxu0 0
      %963 = vmatmul.mubr.bf16.gmra.mxu0 %v486
      %v964 = vpop.f32.mrf.mxu0
      %v965 = vadd.f32 %v804, %v964
      %v966 = vpop.f32.mrf.mxu0
      %v967 = vpop.f32.mrf.mxu0
      %v968 = vadd.f32 %v807, %v967
      %v969 = vpop.f32.mrf.mxu0
      %970 = vmatprep.mubr.bf16.mxu0 0
      %971 = vmatmul.mubr.bf16.gmra.mxu0 %v489
      %v972 = vpop.f32.mrf.mxu0
      %v973 = vadd.f32 %v812, %v972
      %v974 = vpop.f32.mrf.mxu0
      %v975 = vpop.f32.mrf.mxu0
      %v976 = vadd.f32 %v815, %v975
      %v977 = vpop.f32.mrf.mxu0
      %978 = vmatprep.mubr.bf16.mxu0 0
      %979 = vmatmul.mubr.bf16.gmra.mxu0 %v492
      %v980 = vpop.f32.mrf.mxu0
      %v981 = vadd.f32 %v820, %v980
      %v982 = vpop.f32.mrf.mxu0
      %v983 = vpop.f32.mrf.mxu0
      %v984 = vadd.f32 %v823, %v983
      %v985 = vpop.f32.mrf.mxu0
      %986 = vmatprep.mubr.bf16.mxu0 0
      %987 = vmatmul.mubr.bf16.gmra.mxu0 %v495
      %v988 = vpop.f32.mrf.mxu0
      %v989 = vadd.f32 %v828, %v988
      %v990 = vpop.f32.mrf.mxu0
      %v991 = vpop.f32.mrf.mxu0
      %v992 = vadd.f32 %v831, %v991
      %v993 = vpop.f32.mrf.mxu0
      %994 = vmatprep.mubr.bf16.mxu0 0
      %995 = vmatmul.mubr.bf16.gmra.mxu0 %v498
      %v996 = vpop.f32.mrf.mxu0
      %v997 = vadd.f32 %v836, %v996
      %v998 = vpop.f32.mrf.mxu0
      %v999 = vpop.f32.mrf.mxu0
      %v1000 = vadd.f32 %v839, %v999
      %v1001 = vpop.f32.mrf.mxu0
      %1002 = vmatprep.mubr.bf16.mxu0 0
      %1003 = vmatmul.mubr.bf16.gmra.mxu0 %v501
      %v1004 = vpop.f32.mrf.mxu0
      %v1005 = vadd.f32 %v844, %v1004
      %v1006 = vpop.f32.mrf.mxu0
      %v1007 = vpop.f32.mrf.mxu0
      %v1008 = vadd.f32 %v847, %v1007
      %v1009 = vpop.f32.mrf.mxu0
      %1010 = vmatprep.mubr.bf16.mxu0 0
      %1011 = vmatmul.mubr.bf16.gmra.mxu0 %v504
      %v1012 = vpop.f32.mrf.mxu0
      %v1013 = vadd.f32 %v852, %v1012
      %v1014 = vpop.f32.mrf.mxu0
      %v1015 = vpop.f32.mrf.mxu0
      %v1016 = vadd.f32 %v855, %v1015
      %v1017 = vpop.f32.mrf.mxu0
      %1018 = vdwg.mxu0
      %1019 = vst [vmem:[%s175] sm:$0xff] %v893
      %1020 = vst [vmem:[%s175 + $0x8] sm:$0xff] %v896
      %1021 = vst [vmem:[%s175 + $0x10] sm:$0xff] %v901
      %1022 = vst [vmem:[%s175 + $0x18] sm:$0xff] %v904
      %1023 = vst [vmem:[%s175 + $0x20] sm:$0xff] %v909
      %1024 = vst [vmem:[%s175 + $0x28] sm:$0xff] %v912
      %1025 = vst [vmem:[%s175 + $0x30] sm:$0xff] %v917
      %1026 = vst [vmem:[%s175 + $0x38] sm:$0xff] %v920
      %1027 = vst [vmem:[%s175 + $0x40] sm:$0xff] %v925
      %1028 = vst [vmem:[%s175 + $0x48] sm:$0xff] %v928
      %1029 = vst [vmem:[%s175 + $0x50] sm:$0xff] %v933
      %1030 = vst [vmem:[%s175 + $0x58] sm:$0xff] %v936
      %1031 = vst [vmem:[%s175 + $0x60] sm:$0xff] %v941
      %1032 = vst [vmem:[%s175 + $0x68] sm:$0xff] %v944
      %1033 = vst [vmem:[%s175 + $0x70] sm:$0xff] %v949
      %1034 = vst [vmem:[%s175 + $0x78] sm:$0xff] %v952
      %1035 = vst [vmem:[%s175 + $0x80] sm:$0xff] %v957
      %1036 = vst [vmem:[%s175 + $0x88] sm:$0xff] %v960
      %1037 = vst [vmem:[%s175 + $0x90] sm:$0xff] %v965
      %1038 = vst [vmem:[%s175 + $0x98] sm:$0xff] %v968
      %1039 = vst [vmem:[%s175 + $0xa0] sm:$0xff] %v973
      %1040 = vst [vmem:[%s175 + $0xa8] sm:$0xff] %v976
      %1041 = vst [vmem:[%s175 + $0xb0] sm:$0xff] %v981
      %1042 = vst [vmem:[%s175 + $0xb8] sm:$0xff] %v984
      %1043 = vst [vmem:[%s175 + $0xc0] sm:$0xff] %v989
      %1044 = vst [vmem:[%s175 + $0xc8] sm:$0xff] %v992
      %1045 = vst [vmem:[%s175 + $0xd0] sm:$0xff] %v997
      %1046 = vst [vmem:[%s175 + $0xd8] sm:$0xff] %v1000
      %1047 = vst [vmem:[%s175 + $0xe0] sm:$0xff] %v1005
      %1048 = vst [vmem:[%s175 + $0xe8] sm:$0xff] %v1008
      %1049 = vst [vmem:[%s175 + $0xf0] sm:$0xff] %v1013
      %1050 = vst [vmem:[%s175 + $0xf8] sm:$0xff] %v1016
      %s1051 = smul.u32 32, %s14
      %p1052 = scmp.lt.s32.totalorder %s1051, 63
      %s1053 = scalar_select %p1052, %s1051, 63
      %s1054 = smul.addr %s1053, 8
      %s1055 = scalar_lea.vmem %s3, %s1054
      // Predicated region
      $region33: #{forward.33} parent=31 // pred_check
        %p1056 = pneg %p100
      $region34: #{forward.33} parent=31 // pred_check_branch
        %1058 = sbr.rel (%p1056) target = $region36
      $region35: #{forward.33} parent=31 // pred_region
        %s1059 = smul.u32 32, %s14
      $region36: #{forward.33} parent=31 // pred_fallthru
        _
    $region32: #{forward.33} parent=5 // pred_fallthru
      _
    %p1060 = scmp.le.s32.totalorder 2, %s9
    // Predicated region
    $region37: #{forward.33} parent=5 // pred_check
      %p1061 = pneg %p1060
    $region38: #{forward.33} parent=5 // pred_check_branch
      %1063 = sbr.rel (%p1061) target = $region40
    $region39: #{forward.33} parent=5 // pred_region
      %s1064 = ssub.s32 %s9, 2
      // Predicated region
      $region41: #{forward.33} parent=39 // pred_check
        %p1065 = pneg %p106
      $region42: #{forward.33} parent=39 // pred_check_branch
        %1067 = sbr.rel (%p1065) target = $region44
      $region43: #{forward.33} parent=39 // pred_region
        %s1068 = smul.u32 32, %s15
        %p1069 = scmp.lt.s32.totalorder %s1068, 63
        %s1070 = scalar_select %p1069, %s1068, 63
        %s1071 = smul.addr %s1070, 8
        %s1072 = scalar_lea.vmem %s3, %s1071
      $region44: #{forward.33} parent=39 // pred_fallthru
        _
    $region40: #{forward.33} parent=5 // pred_fallthru
      _
  $region6: #{forward.33} parent=0 // loop_footer
    %s13 = sadd.s32 1, %s9
  $region7: #{forward.33} parent=0 // loop_footer_branch
    %8 = sbr.rel target = $region3
  $region8: #{forward.33} parent=0 // loop_exit
    _

</llo_original>
